<compile_context>
chip_gen: v7x
topology: tpu7x:2x2x1
jax: 0.10.0
libtpu: 0.0.40
codegen_flags: <defaults>
</compile_context>

<pallas_src>
import jax
import jax.numpy as jnp
from jax import lax
from jax.experimental import pallas as pl
from jax.experimental.pallas import tpu as pltpu


def beautynet_forward(x, conv_w, conv_b, cls_w, cls_b, *,
                      max_batch_tile=64, lane_chunk=2048):
    """x: (N, C_in, H, W) float32, NCHW like the PyTorch module."""
    N, C_in, H, W = x.shape
    C_out, _, KH, KW = conv_w.shape
    num_classes = cls_w.shape[0]
    pad = KH // 2                             # SAME padding, odd kernel, stride 1
    Hp, Wp = H + 2 * pad, W + 2 * pad
    HpWp = Hp * Wp
    Lq = (H - 1) * Wp + W                     # flattened window of valid outputs
    S = ((HpWp + 127) // 128) * 128           # per-image lane stride (128-aligned)
    NC_PAD = ((num_classes + 127) // 128) * 128
    lane_chunk = max(128, (lane_chunk // 128) * 128)

    # --- batch tiling: TB multiple of 8; aim for >=2 grid tiles (v7x 2 TCs) ---
    cap = max(8, (max_batch_tile // 8) * 8)
    tb = max(1, min(cap, -(-N // 2)))
    TB = min(max(8, ((tb + 7) // 8) * 8), cap)
    n_tiles = -(-N // TB)
    N_pad = n_tiles * TB
    Lm = (TB - 1) * S + Lq                    # merged positions evaluated per tile

    # ---------------- host-side layout glue (cheap, no im2col) ----------------
    xf = x.astype(jnp.float32)
    xp = jnp.pad(xf, ((0, N_pad - N), (0, 0), (pad, pad), (pad, pad)))
    x_cm = jnp.transpose(xp, (1, 0, 2, 3)).reshape(C_in, N_pad, HpWp)
    x_cm = jnp.pad(x_cm, ((0, 0), (0, 0), (0, S - HpWp)))
    x_merged = x_cm.reshape(C_in, N_pad * S)                  # (C_in, N_pad*S)

    # per-tap conv weights (KH*KW, C_out, C_in) and conv bias (C_out, 1)
    w_taps = jnp.transpose(conv_w.astype(jnp.float32), (2, 3, 0, 1))
    w_taps = w_taps.reshape(KH * KW, C_out, C_in)
    cb_col = conv_b.reshape(C_out, 1).astype(jnp.float32)

    # classifier, zero-padded to a lane-dense 128-wide slab
    cw_pad = jnp.pad(cls_w.T.astype(jnp.float32),
                     ((0, 0), (0, NC_PAD - num_classes)))     # (C_out, NC_PAD)
    clb_pad = jnp.pad(cls_b.reshape(1, num_classes).astype(jnp.float32),
                      ((0, 0), (0, NC_PAD - num_classes)))    # (1, NC_PAD)

    # pooling matrix: pool_t[b, j] = 1/(H*W) iff merged position j is a valid
    # conv-output position of image b within the tile, else 0.
    j = jnp.arange(Lm)
    r = j % S
    b_of = j // S
    valid = (r < Lq) & ((r % Wp) < W)
    pool_t = ((b_of[None, :] == jnp.arange(TB)[:, None]) & valid[None, :])
    pool_t = pool_t.astype(jnp.float32) * (1.0 / (H * W))     # (TB, Lm)

    # static lane chunks of the merged axis + the 9 tap offsets
    chunks = [(s, min(lane_chunk, Lm - s)) for s in range(0, Lm, lane_chunk)]
    taps = [((k // KW) * Wp + (k % KW)) for k in range(KH * KW)]

    def kernel(x_ref, w_ref, cb_ref, pt_ref, cw_ref, clb_ref, out_ref):
        # x_ref  : (C_in, TB*S)     channel-major merged batch/spatial tile
        # w_ref  : (KH*KW, C_out, C_in)
        # cb_ref : (C_out, 1)
        # pt_ref : (TB, Lm)         pooling matrix (mask / (H*W)), sublane-dense
        # cw_ref : (C_out, NC_PAD)
        # clb_ref: (1, NC_PAD)
        # out_ref: (TB, NC_PAD)     lane-dense logits slab
        wk_all = [w_ref[k] for k in range(len(taps))]          # each (C_out, C_in)
        cb = cb_ref[...]                                       # (C_out, 1)

        pooled_bt = jnp.zeros((TB, C_out), jnp.float32)
        for start, lc in chunks:
            # 3x3 conv over this lane chunk: KH*KW shifted 2-D MXU matmuls,
            # accumulated in vregs (chunk is only lc/128 lane-tiles wide).
            acc = None
            for off, wk in zip(taps, wk_all):
                xs = x_ref[:, start + off:start + off + lc]    # (C_in, lc)
                d = jnp.dot(wk, xs, preferred_element_type=jnp.float32)
                acc = d if acc is None else acc + d
            feat = jnp.maximum(acc + cb, 0.0)                  # (C_out, lc)

            # masked global-average pooling on the MXU: (TB,lc) contract (C_out,lc)
            ptc = pt_ref[:, start:start + lc]                  # (TB, lc)
            pooled_bt = pooled_bt + lax.dot_general(
                ptc, feat, (((1,), (1,)), ((), ())),
                preferred_element_type=jnp.float32)            # (TB, C_out)

        # classifier (Linear) into a lane-dense 128-wide slab
        out_ref[...] = (jnp.dot(pooled_bt, cw_ref[...],
                                preferred_element_type=jnp.float32)
                        + clb_ref[...])

    out = pl.pallas_call(
        kernel,
        out_shape=jax.ShapeDtypeStruct((N_pad, NC_PAD), jnp.float32),
        grid_spec=pltpu.PrefetchScalarGridSpec(
            num_scalar_prefetch=0,
            grid=(n_tiles,),
            in_specs=[
                pl.BlockSpec((C_in, TB * S), lambda i: (0, i)),
                pl.BlockSpec((KH * KW, C_out, C_in), lambda i: (0, 0, 0)),
                pl.BlockSpec((C_out, 1), lambda i: (0, 0)),
                pl.BlockSpec((TB, Lm), lambda i: (0, 0)),
                pl.BlockSpec((C_out, NC_PAD), lambda i: (0, 0)),
                pl.BlockSpec((1, NC_PAD), lambda i: (0, 0)),
            ],
            out_specs=pl.BlockSpec((TB, NC_PAD), lambda i: (i, 0)),
        ),
        compiler_params=pltpu.CompilerParams(
            dimension_semantics=("parallel",),
            vmem_limit_bytes=32 * 1024 * 1024,
        ),
    )(x_merged, w_taps, cb_col, pool_t, cw_pad, clb_pad)

    return out[:N, :num_classes]


def reference_forward(x, conv_w, conv_b, cls_w, cls_b):
    """Plain-JAX reference mirroring the PyTorch forward semantics."""
    feat = jax.lax.conv_general_dilated(
        x, conv_w, window_strides=(1, 1), padding="SAME",
        dimension_numbers=("NCHW", "OIHW", "NCHW"))
    feat = feat + conv_b.reshape(1, -1, 1, 1)
    feat = jnp.maximum(feat, 0.0)                 # feature_extractor output
    vec = jnp.mean(feat, axis=(2, 3))             # adaptive_avg_pool2d + squeeze
    return vec @ cls_w.T + cls_b                  # classifier (Linear)


if __name__ == "__main__":
    N, C_in, H, W = 2, 4, 16, 16
    C_out, K, num_classes = 8, 3, 5

    key = jax.random.PRNGKey(0)
    k_x, k_cw, k_cb, k_lw, k_lb = jax.random.split(key, 5)

    x = jax.random.normal(k_x, (N, C_in, H, W), dtype=jnp.float32)
    conv_w = 0.1 * jax.random.normal(k_cw, (C_out, C_in, K, K), dtype=jnp.float32)
    conv_b = 0.1 * jax.random.normal(k_cb, (C_out,), dtype=jnp.float32)
    cls_w = 0.1 * jax.random.normal(k_lw, (num_classes, C_out), dtype=jnp.float32)
    cls_b = 0.1 * jax.random.normal(k_lb, (num_classes,), dtype=jnp.float32)

    out = beautynet_forward(x, conv_w, conv_b, cls_w, cls_b)
    out = jax.block_until_ready(out)

    ref = reference_forward(x, conv_w, conv_b, cls_w, cls_b)
    assert out.shape == (N, num_classes)
    assert jnp.allclose(out, ref, atol=2e-4, rtol=2e-4), (out, ref)

    print("KERNEL_OK")
</pallas_src>

<mosaic_0001>
module attributes {stable_mosaic.version = 11 : i64} {
  func.func @kernel(%arg0: i32, %arg1: memref<4x3072xf32, #tpu.memory_space<vmem>>, %arg2: memref<9x8x4xf32, #tpu.memory_space<vmem>>, %arg3: memref<8x1xf32, #tpu.memory_space<vmem>>, %arg4: memref<8x2974xf32, #tpu.memory_space<vmem>>, %arg5: memref<8x128xf32, #tpu.memory_space<vmem>>, %arg6: memref<1x128xf32, #tpu.memory_space<vmem>>, %arg7: memref<8x128xf32, #tpu.memory_space<vmem>>) attributes {dimension_semantics = [#tpu.dimension_semantics<parallel>], iteration_bounds = array<i64: 1>, scalar_prefetch = 0 : i64, scratch_operands = 0 : i64, tpu.core_type = #tpu.core_type<tc>, window_params = [{transform_indices = @transform_0, window_bounds = array<i64: 4, 3072>}, {pipeline_mode = #tpu.pipeline_mode<synchronous>, transform_indices = @transform_1, window_bounds = array<i64: 9, 8, 4>}, {pipeline_mode = #tpu.pipeline_mode<synchronous>, transform_indices = @transform_2, window_bounds = array<i64: 8, 1>}, {pipeline_mode = #tpu.pipeline_mode<synchronous>, transform_indices = @transform_3, window_bounds = array<i64: 8, 2974>}, {pipeline_mode = #tpu.pipeline_mode<synchronous>, transform_indices = @transform_4, window_bounds = array<i64: 8, 128>}, {pipeline_mode = #tpu.pipeline_mode<synchronous>, transform_indices = @transform_5, window_bounds = array<i64: 1, 128>}, {transform_indices = @transform_6, window_bounds = array<i64: 8, 128>}]} {
    %c0 = arith.constant 0 : index
    %c0_0 = arith.constant 0 : index
    %c0_1 = arith.constant 0 : index
    %0 = vector.load %arg2[%c0, %c0_0, %c0_1] : memref<9x8x4xf32, #tpu.memory_space<vmem>>, vector<1x8x4xf32>
    %1 = vector.shape_cast %0 : vector<1x8x4xf32> to vector<8x4xf32>
    %c1 = arith.constant 1 : index
    %c0_2 = arith.constant 0 : index
    %c0_3 = arith.constant 0 : index
    %2 = vector.load %arg2[%c1, %c0_2, %c0_3] : memref<9x8x4xf32, #tpu.memory_space<vmem>>, vector<1x8x4xf32>
    %3 = vector.shape_cast %2 : vector<1x8x4xf32> to vector<8x4xf32>
    %c2 = arith.constant 2 : index
    %c0_4 = arith.constant 0 : index
    %c0_5 = arith.constant 0 : index
    %4 = vector.load %arg2[%c2, %c0_4, %c0_5] : memref<9x8x4xf32, #tpu.memory_space<vmem>>, vector<1x8x4xf32>
    %5 = vector.shape_cast %4 : vector<1x8x4xf32> to vector<8x4xf32>
    %c3 = arith.constant 3 : index
    %c0_6 = arith.constant 0 : index
    %c0_7 = arith.constant 0 : index
    %6 = vector.load %arg2[%c3, %c0_6, %c0_7] : memref<9x8x4xf32, #tpu.memory_space<vmem>>, vector<1x8x4xf32>
    %7 = vector.shape_cast %6 : vector<1x8x4xf32> to vector<8x4xf32>
    %c4 = arith.constant 4 : index
    %c0_8 = arith.constant 0 : index
    %c0_9 = arith.constant 0 : index
    %8 = vector.load %arg2[%c4, %c0_8, %c0_9] : memref<9x8x4xf32, #tpu.memory_space<vmem>>, vector<1x8x4xf32>
    %9 = vector.shape_cast %8 : vector<1x8x4xf32> to vector<8x4xf32>
    %c5 = arith.constant 5 : index
    %c0_10 = arith.constant 0 : index
    %c0_11 = arith.constant 0 : index
    %10 = vector.load %arg2[%c5, %c0_10, %c0_11] : memref<9x8x4xf32, #tpu.memory_space<vmem>>, vector<1x8x4xf32>
    %11 = vector.shape_cast %10 : vector<1x8x4xf32> to vector<8x4xf32>
    %c6 = arith.constant 6 : index
    %c0_12 = arith.constant 0 : index
    %c0_13 = arith.constant 0 : index
    %12 = vector.load %arg2[%c6, %c0_12, %c0_13] : memref<9x8x4xf32, #tpu.memory_space<vmem>>, vector<1x8x4xf32>
    %13 = vector.shape_cast %12 : vector<1x8x4xf32> to vector<8x4xf32>
    %c7 = arith.constant 7 : index
    %c0_14 = arith.constant 0 : index
    %c0_15 = arith.constant 0 : index
    %14 = vector.load %arg2[%c7, %c0_14, %c0_15] : memref<9x8x4xf32, #tpu.memory_space<vmem>>, vector<1x8x4xf32>
    %15 = vector.shape_cast %14 : vector<1x8x4xf32> to vector<8x4xf32>
    %c8 = arith.constant 8 : index
    %c0_16 = arith.constant 0 : index
    %c0_17 = arith.constant 0 : index
    %16 = vector.load %arg2[%c8, %c0_16, %c0_17] : memref<9x8x4xf32, #tpu.memory_space<vmem>>, vector<1x8x4xf32>
    %17 = vector.shape_cast %16 : vector<1x8x4xf32> to vector<8x4xf32>
    %c0_18 = arith.constant 0 : index
    %c0_19 = arith.constant 0 : index
    %18 = vector.load %arg3[%c0_18, %c0_19] : memref<8x1xf32, #tpu.memory_space<vmem>>, vector<8x1xf32>
    %cst = arith.constant 0.000000e+00 : f32
    %19 = vector.broadcast %cst : f32 to vector<8x8xf32>
    %c0_20 = arith.constant 0 : index
    %c0_21 = arith.constant 0 : index
    %20 = vector.load %arg1[%c0_20, %c0_21] : memref<4x3072xf32, #tpu.memory_space<vmem>>, vector<4x2048xf32>
    %cst_22 = arith.constant dense<0.000000e+00> : vector<8x2048xf32>
    %21 = tpu.matmul %1, %20, %cst_22 {dimension_numbers = #tpu.dot_dimension_numbers<[1], [0], [0], [1], [0, 0, 1, 1], [], []>} : vector<8x4xf32>, vector<4x2048xf32>, vector<8x2048xf32> -> vector<8x2048xf32>
    %c0_23 = arith.constant 0 : index
    %c1_24 = arith.constant 1 : index
    %22 = vector.load %arg1[%c0_23, %c1_24] : memref<4x3072xf32, #tpu.memory_space<vmem>>, vector<4x2048xf32>
    %cst_25 = arith.constant dense<0.000000e+00> : vector<8x2048xf32>
    %23 = tpu.matmul %3, %22, %cst_25 {dimension_numbers = #tpu.dot_dimension_numbers<[1], [0], [0], [1], [0, 0, 1, 1], [], []>} : vector<8x4xf32>, vector<4x2048xf32>, vector<8x2048xf32> -> vector<8x2048xf32>
    %24 = arith.addf %21, %23 : vector<8x2048xf32>
    %c0_26 = arith.constant 0 : index
    %c2_27 = arith.constant 2 : index
    %25 = vector.load %arg1[%c0_26, %c2_27] : memref<4x3072xf32, #tpu.memory_space<vmem>>, vector<4x2048xf32>
    %cst_28 = arith.constant dense<0.000000e+00> : vector<8x2048xf32>
    %26 = tpu.matmul %5, %25, %cst_28 {dimension_numbers = #tpu.dot_dimension_numbers<[1], [0], [0], [1], [0, 0, 1, 1], [], []>} : vector<8x4xf32>, vector<4x2048xf32>, vector<8x2048xf32> -> vector<8x2048xf32>
    %27 = arith.addf %24, %26 : vector<8x2048xf32>
    %c0_29 = arith.constant 0 : index
    %c18 = arith.constant 18 : index
    %28 = vector.load %arg1[%c0_29, %c18] : memref<4x3072xf32, #tpu.memory_space<vmem>>, vector<4x2048xf32>
    %cst_30 = arith.constant dense<0.000000e+00> : vector<8x2048xf32>
    %29 = tpu.matmul %7, %28, %cst_30 {dimension_numbers = #tpu.dot_dimension_numbers<[1], [0], [0], [1], [0, 0, 1, 1], [], []>} : vector<8x4xf32>, vector<4x2048xf32>, vector<8x2048xf32> -> vector<8x2048xf32>
    %30 = arith.addf %27, %29 : vector<8x2048xf32>
    %c0_31 = arith.constant 0 : index
    %c19 = arith.constant 19 : index
    %31 = vector.load %arg1[%c0_31, %c19] : memref<4x3072xf32, #tpu.memory_space<vmem>>, vector<4x2048xf32>
    %cst_32 = arith.constant dense<0.000000e+00> : vector<8x2048xf32>
    %32 = tpu.matmul %9, %31, %cst_32 {dimension_numbers = #tpu.dot_dimension_numbers<[1], [0], [0], [1], [0, 0, 1, 1], [], []>} : vector<8x4xf32>, vector<4x2048xf32>, vector<8x2048xf32> -> vector<8x2048xf32>
    %33 = arith.addf %30, %32 : vector<8x2048xf32>
    %c0_33 = arith.constant 0 : index
    %c20 = arith.constant 20 : index
    %34 = vector.load %arg1[%c0_33, %c20] : memref<4x3072xf32, #tpu.memory_space<vmem>>, vector<4x2048xf32>
    %cst_34 = arith.constant dense<0.000000e+00> : vector<8x2048xf32>
    %35 = tpu.matmul %11, %34, %cst_34 {dimension_numbers = #tpu.dot_dimension_numbers<[1], [0], [0], [1], [0, 0, 1, 1], [], []>} : vector<8x4xf32>, vector<4x2048xf32>, vector<8x2048xf32> -> vector<8x2048xf32>
    %36 = arith.addf %33, %35 : vector<8x2048xf32>
    %c0_35 = arith.constant 0 : index
    %c36 = arith.constant 36 : index
    %37 = vector.load %arg1[%c0_35, %c36] : memref<4x3072xf32, #tpu.memory_space<vmem>>, vector<4x2048xf32>
    %cst_36 = arith.constant dense<0.000000e+00> : vector<8x2048xf32>
    %38 = tpu.matmul %13, %37, %cst_36 {dimension_numbers = #tpu.dot_dimension_numbers<[1], [0], [0], [1], [0, 0, 1, 1], [], []>} : vector<8x4xf32>, vector<4x2048xf32>, vector<8x2048xf32> -> vector<8x2048xf32>
    %39 = arith.addf %36, %38 : vector<8x2048xf32>
    %c0_37 = arith.constant 0 : index
    %c37 = arith.constant 37 : index
    %40 = vector.load %arg1[%c0_37, %c37] : memref<4x3072xf32, #tpu.memory_space<vmem>>, vector<4x2048xf32>
    %cst_38 = arith.constant dense<0.000000e+00> : vector<8x2048xf32>
    %41 = tpu.matmul %15, %40, %cst_38 {dimension_numbers = #tpu.dot_dimension_numbers<[1], [0], [0], [1], [0, 0, 1, 1], [], []>} : vector<8x4xf32>, vector<4x2048xf32>, vector<8x2048xf32> -> vector<8x2048xf32>
    %42 = arith.addf %39, %41 : vector<8x2048xf32>
    %c0_39 = arith.constant 0 : index
    %c38 = arith.constant 38 : index
    %43 = vector.load %arg1[%c0_39, %c38] : memref<4x3072xf32, #tpu.memory_space<vmem>>, vector<4x2048xf32>
    %cst_40 = arith.constant dense<0.000000e+00> : vector<8x2048xf32>
    %44 = tpu.matmul %17, %43, %cst_40 {dimension_numbers = #tpu.dot_dimension_numbers<[1], [0], [0], [1], [0, 0, 1, 1], [], []>} : vector<8x4xf32>, vector<4x2048xf32>, vector<8x2048xf32> -> vector<8x2048xf32>
    %45 = arith.addf %42, %44 : vector<8x2048xf32>
    %46 = vector.broadcast %18 : vector<8x1xf32> to vector<8x2048xf32>
    %47 = arith.addf %45, %46 : vector<8x2048xf32>
    %cst_41 = arith.constant 0.000000e+00 : f32
    %48 = vector.broadcast %cst_41 : f32 to vector<8x2048xf32>
    %49 = arith.maximumf %47, %48 : vector<8x2048xf32>
    %c0_42 = arith.constant 0 : index
    %c0_43 = arith.constant 0 : index
    %50 = vector.load %arg4[%c0_42, %c0_43] : memref<8x2974xf32, #tpu.memory_space<vmem>>, vector<8x2048xf32>
    %cst_44 = arith.constant dense<0.000000e+00> : vector<8x8xf32>
    %51 = tpu.matmul %50, %49, %cst_44 {dimension_numbers = #tpu.dot_dimension_numbers<[1], [1], [0], [0], [0, 0, 1, 0], [], []>} : vector<8x2048xf32>, vector<8x2048xf32>, vector<8x8xf32> -> vector<8x8xf32>
    %52 = arith.addf %19, %51 : vector<8x8xf32>
    %c0_45 = arith.constant 0 : index
    %c2048 = arith.constant 2048 : index
    %53 = vector.load %arg1[%c0_45, %c2048] : memref<4x3072xf32, #tpu.memory_space<vmem>>, vector<4x926xf32>
    %cst_46 = arith.constant dense<0.000000e+00> : vector<8x926xf32>
    %54 = tpu.matmul %1, %53, %cst_46 {dimension_numbers = #tpu.dot_dimension_numbers<[1], [0], [0], [1], [0, 0, 1, 1], [], []>} : vector<8x4xf32>, vector<4x926xf32>, vector<8x926xf32> -> vector<8x926xf32>
    %c0_47 = arith.constant 0 : index
    %c2049 = arith.constant 2049 : index
    %55 = vector.load %arg1[%c0_47, %c2049] : memref<4x3072xf32, #tpu.memory_space<vmem>>, vector<4x926xf32>
    %cst_48 = arith.constant dense<0.000000e+00> : vector<8x926xf32>
    %56 = tpu.matmul %3, %55, %cst_48 {dimension_numbers = #tpu.dot_dimension_numbers<[1], [0], [0], [1], [0, 0, 1, 1], [], []>} : vector<8x4xf32>, vector<4x926xf32>, vector<8x926xf32> -> vector<8x926xf32>
    %57 = arith.addf %54, %56 : vector<8x926xf32>
    %c0_49 = arith.constant 0 : index
    %c2050 = arith.constant 2050 : index
    %58 = vector.load %arg1[%c0_49, %c2050] : memref<4x3072xf32, #tpu.memory_space<vmem>>, vector<4x926xf32>
    %cst_50 = arith.constant dense<0.000000e+00> : vector<8x926xf32>
    %59 = tpu.matmul %5, %58, %cst_50 {dimension_numbers = #tpu.dot_dimension_numbers<[1], [0], [0], [1], [0, 0, 1, 1], [], []>} : vector<8x4xf32>, vector<4x926xf32>, vector<8x926xf32> -> vector<8x926xf32>
    %60 = arith.addf %57, %59 : vector<8x926xf32>
    %c0_51 = arith.constant 0 : index
    %c2066 = arith.constant 2066 : index
    %61 = vector.load %arg1[%c0_51, %c2066] : memref<4x3072xf32, #tpu.memory_space<vmem>>, vector<4x926xf32>
    %cst_52 = arith.constant dense<0.000000e+00> : vector<8x926xf32>
    %62 = tpu.matmul %7, %61, %cst_52 {dimension_numbers = #tpu.dot_dimension_numbers<[1], [0], [0], [1], [0, 0, 1, 1], [], []>} : vector<8x4xf32>, vector<4x926xf32>, vector<8x926xf32> -> vector<8x926xf32>
    %63 = arith.addf %60, %62 : vector<8x926xf32>
    %c0_53 = arith.constant 0 : index
    %c2067 = arith.constant 2067 : index
    %64 = vector.load %arg1[%c0_53, %c2067] : memref<4x3072xf32, #tpu.memory_space<vmem>>, vector<4x926xf32>
    %cst_54 = arith.constant dense<0.000000e+00> : vector<8x926xf32>
    %65 = tpu.matmul %9, %64, %cst_54 {dimension_numbers = #tpu.dot_dimension_numbers<[1], [0], [0], [1], [0, 0, 1, 1], [], []>} : vector<8x4xf32>, vector<4x926xf32>, vector<8x926xf32> -> vector<8x926xf32>
    %66 = arith.addf %63, %65 : vector<8x926xf32>
    %c0_55 = arith.constant 0 : index
    %c2068 = arith.constant 2068 : index
    %67 = vector.load %arg1[%c0_55, %c2068] : memref<4x3072xf32, #tpu.memory_space<vmem>>, vector<4x926xf32>
    %cst_56 = arith.constant dense<0.000000e+00> : vector<8x926xf32>
    %68 = tpu.matmul %11, %67, %cst_56 {dimension_numbers = #tpu.dot_dimension_numbers<[1], [0], [0], [1], [0, 0, 1, 1], [], []>} : vector<8x4xf32>, vector<4x926xf32>, vector<8x926xf32> -> vector<8x926xf32>
    %69 = arith.addf %66, %68 : vector<8x926xf32>
    %c0_57 = arith.constant 0 : index
    %c2084 = arith.constant 2084 : index
    %70 = vector.load %arg1[%c0_57, %c2084] : memref<4x3072xf32, #tpu.memory_space<vmem>>, vector<4x926xf32>
    %cst_58 = arith.constant dense<0.000000e+00> : vector<8x926xf32>
    %71 = tpu.matmul %13, %70, %cst_58 {dimension_numbers = #tpu.dot_dimension_numbers<[1], [0], [0], [1], [0, 0, 1, 1], [], []>} : vector<8x4xf32>, vector<4x926xf32>, vector<8x926xf32> -> vector<8x926xf32>
    %72 = arith.addf %69, %71 : vector<8x926xf32>
    %c0_59 = arith.constant 0 : index
    %c2085 = arith.constant 2085 : index
    %73 = vector.load %arg1[%c0_59, %c2085] : memref<4x3072xf32, #tpu.memory_space<vmem>>, vector<4x926xf32>
    %cst_60 = arith.constant dense<0.000000e+00> : vector<8x926xf32>
    %74 = tpu.matmul %15, %73, %cst_60 {dimension_numbers = #tpu.dot_dimension_numbers<[1], [0], [0], [1], [0, 0, 1, 1], [], []>} : vector<8x4xf32>, vector<4x926xf32>, vector<8x926xf32> -> vector<8x926xf32>
    %75 = arith.addf %72, %74 : vector<8x926xf32>
    %c0_61 = arith.constant 0 : index
    %c2086 = arith.constant 2086 : index
    %76 = vector.load %arg1[%c0_61, %c2086] : memref<4x3072xf32, #tpu.memory_space<vmem>>, vector<4x926xf32>
    %cst_62 = arith.constant dense<0.000000e+00> : vector<8x926xf32>
    %77 = tpu.matmul %17, %76, %cst_62 {dimension_numbers = #tpu.dot_dimension_numbers<[1], [0], [0], [1], [0, 0, 1, 1], [], []>} : vector<8x4xf32>, vector<4x926xf32>, vector<8x926xf32> -> vector<8x926xf32>
    %78 = arith.addf %75, %77 : vector<8x926xf32>
    %79 = vector.broadcast %18 : vector<8x1xf32> to vector<8x926xf32>
    %80 = arith.addf %78, %79 : vector<8x926xf32>
    %cst_63 = arith.constant 0.000000e+00 : f32
    %81 = vector.broadcast %cst_63 : f32 to vector<8x926xf32>
    %82 = arith.maximumf %80, %81 : vector<8x926xf32>
    %c0_64 = arith.constant 0 : index
    %c2048_65 = arith.constant 2048 : index
    %83 = vector.load %arg4[%c0_64, %c2048_65] : memref<8x2974xf32, #tpu.memory_space<vmem>>, vector<8x926xf32>
    %cst_66 = arith.constant dense<0.000000e+00> : vector<8x8xf32>
    %84 = tpu.matmul %83, %82, %cst_66 {dimension_numbers = #tpu.dot_dimension_numbers<[1], [1], [0], [0], [0, 0, 1, 0], [], []>} : vector<8x926xf32>, vector<8x926xf32>, vector<8x8xf32> -> vector<8x8xf32>
    %85 = arith.addf %52, %84 : vector<8x8xf32>
    %c0_67 = arith.constant 0 : index
    %c0_68 = arith.constant 0 : index
    %86 = vector.load %arg5[%c0_67, %c0_68] : memref<8x128xf32, #tpu.memory_space<vmem>>, vector<8x128xf32>
    %cst_69 = arith.constant dense<0.000000e+00> : vector<8x128xf32>
    %87 = tpu.matmul %85, %86, %cst_69 {dimension_numbers = #tpu.dot_dimension_numbers<[1], [0], [0], [1], [0, 0, 1, 1], [], []>} : vector<8x8xf32>, vector<8x128xf32>, vector<8x128xf32> -> vector<8x128xf32>
    %c0_70 = arith.constant 0 : index
    %c0_71 = arith.constant 0 : index
    %88 = vector.load %arg6[%c0_70, %c0_71] : memref<1x128xf32, #tpu.memory_space<vmem>>, vector<1x128xf32>
    %89 = vector.broadcast %88 : vector<1x128xf32> to vector<8x128xf32>
    %90 = arith.addf %87, %89 : vector<8x128xf32>
    %c0_72 = arith.constant 0 : index
    %c0_73 = arith.constant 0 : index
    %91 = vector.load %arg7[%c0_72, %c0_73] : memref<8x128xf32, #tpu.memory_space<vmem>>, vector<8x128xf32>
    tpu.vector_store %arg7[%c0_72, %c0_73], %90 {strides = array<i32>} : memref<8x128xf32, #tpu.memory_space<vmem>>, vector<8x128xf32>,
    return
  }
  func.func @transform_0(%arg0: i32) -> (i32, i32) {
    %c0_i32 = arith.constant 0 : i32
    %c0_i32_0 = arith.constant 0 : i32
    return %c0_i32, %arg0 : i32, i32
  }
  func.func @transform_1(%arg0: i32) -> (i32, i32, i32) {
    %c0_i32 = arith.constant 0 : i32
    %c0_i32_0 = arith.constant 0 : i32
    %c0_i32_1 = arith.constant 0 : i32
    %c0_i32_2 = arith.constant 0 : i32
    return %c0_i32, %c0_i32_0, %c0_i32_1 : i32, i32, i32
  }
  func.func @transform_2(%arg0: i32) -> (i32, i32) {
    %c0_i32 = arith.constant 0 : i32
    %c0_i32_0 = arith.constant 0 : i32
    %c0_i32_1 = arith.constant 0 : i32
    return %c0_i32, %c0_i32_0 : i32, i32
  }
  func.func @transform_3(%arg0: i32) -> (i32, i32) {
    %c0_i32 = arith.constant 0 : i32
    %c0_i32_0 = arith.constant 0 : i32
    %c0_i32_1 = arith.constant 0 : i32
    return %c0_i32, %c0_i32_0 : i32, i32
  }
  func.func @transform_4(%arg0: i32) -> (i32, i32) {
    %c0_i32 = arith.constant 0 : i32
    %c0_i32_0 = arith.constant 0 : i32
    %c0_i32_1 = arith.constant 0 : i32
    return %c0_i32, %c0_i32_0 : i32, i32
  }
  func.func @transform_5(%arg0: i32) -> (i32, i32) {
    %c0_i32 = arith.constant 0 : i32
    %c0_i32_0 = arith.constant 0 : i32
    %c0_i32_1 = arith.constant 0 : i32
    return %c0_i32, %c0_i32_0 : i32, i32
  }
  func.func @transform_6(%arg0: i32) -> (i32, i32) {
    %c0_i32 = arith.constant 0 : i32
    %c0_i32_0 = arith.constant 0 : i32
    return %arg0, %c0_i32 : i32, i32
  }
}

</mosaic_0001>

<llo_original>
// kernel: tpu_custom_call.1
$region0: #{tpu_custom_call.1}
  #allocation0 [shape = 'u32[]', space=smem, size = 0x4, offset = 0x4, fixed_abs, tag = 'smem constant byte address 0x4 - core index']
  #allocation1 [shape = 'u32[144,128]{1,0:T(1,128)}', space=vmem, size = 0x12000, scoped, tag = 'internal scratch']
  %s0 = inlined_call_operand.vmem [shape: f32[4,3072], index: 0, kind: input, shape index: {}]
  %s1 = inlined_call_operand.vmem [shape: f32[9,8,4], index: 1, kind: input, shape index: {}]
  %s2 = inlined_call_operand.vmem [shape: f32[8,1], index: 2, kind: input, shape index: {}]
  %s3 = inlined_call_operand.hbm [shape: f32[8,2974], index: 3, kind: input, shape index: {}]
  %s4 = inlined_call_operand.vmem [shape: f32[8,128], index: 4, kind: input, shape index: {}]
  %s5 = inlined_call_operand.vmem [shape: f32[1,128], index: 5, kind: input, shape index: {}]
  %s6 = inlined_call_operand.hbm [shape: f32[8,128], index: 6, kind: output, shape index: {}]
  %s7 = sld [smem:[#allocation0]]
  $region38: #{tpu_custom_call.1} parent=0
    _
  %s9 = ssub.s32 1, %s7
  %s10 = scalar_select 0, %s9, %s7
  $region1: #{tpu_custom_call.1} parent=0
    #allocation2 [shape = 'u8[98304]{0}', space=vmem, size = 0x18000, scoped, tag = 'input window, operand 3, single buffered']
    #allocation3 [shape = 's32[1]{0}', space=sflag, size = 0x4, scoped, tag = 'scoped memory for tpu_custom_call.1']
    #allocation4 [shape = 's32[1]{0}', space=sflag, size = 0x4, scoped, tag = 'scoped memory for tpu_custom_call.1']
    #allocation5 [shape = 'u8[4096]{0}', space=vmem, size = 0x1000, scoped, tag = 'output window, operand 0, single buffered']
    %11 = vsyncpa [#allocation3], 0
    %12 = vsyncpa [#allocation4], 0
    // Predicated region
    $region2: #{tpu_custom_call.1} parent=1 // pred_check
      _
    $region3: #{tpu_custom_call.1} parent=1 // pred_check_branch
      %14 = sbr.rel (0) target = $region5
    $region4: #{tpu_custom_call.1} parent=1 // pred_region
      _
    $region5: #{tpu_custom_call.1} parent=1 // pred_fallthru
      _
    // Predicated region
    $region6: #{tpu_custom_call.1} parent=1 // pred_check
      _
    $region7: #{tpu_custom_call.1} parent=1 // pred_check_branch
      %16 = sbr.rel (0) target = $region9
    $region8: #{tpu_custom_call.1} parent=1 // pred_region
      _
    $region9: #{tpu_custom_call.1} parent=1 // pred_fallthru
      _
    // Predicated region
    $region10: #{tpu_custom_call.1} parent=1 // pred_check
      _
    $region11: #{tpu_custom_call.1} parent=1 // pred_check_branch
      %18 = sbr.rel (0) target = $region13
    $region12: #{tpu_custom_call.1} parent=1 // pred_region
      _
    $region13: #{tpu_custom_call.1} parent=1 // pred_fallthru
      _
    // Predicated region
    $region14: #{tpu_custom_call.1} parent=1 // pred_check
      _
    $region15: #{tpu_custom_call.1} parent=1 // pred_check_branch
      %20 = sbr.rel (0) target = $region17
    $region16: #{tpu_custom_call.1} parent=1 // pred_region
      %s22 = ssub.s32 3072, 3072
      %23 = vsyncadd [#allocation3], %s22
      %s25 = sshll.u32 [#allocation2], 4
      %s26 = int_to_ptr.vmem [resolvable:$true] %s25
      %28 = dma.hbm_to_vmem [thread:$0]  %s3, 3072, %s26, [#allocation3]
    $region17: #{tpu_custom_call.1} parent=1 // pred_fallthru
      _
    // Predicated region
    $region18: #{tpu_custom_call.1} parent=1 // pred_check
      _
    $region19: #{tpu_custom_call.1} parent=1 // pred_check_branch
      %30 = sbr.rel (0) target = $region21
    $region20: #{tpu_custom_call.1} parent=1 // pred_region
      _
    $region21: #{tpu_custom_call.1} parent=1 // pred_fallthru
      _
    // Predicated region
    $region22: #{tpu_custom_call.1} parent=1 // pred_check
      _
    $region23: #{tpu_custom_call.1} parent=1 // pred_check_branch
      %32 = sbr.rel (0) target = $region25
    $region24: #{tpu_custom_call.1} parent=1 // pred_region
      _
    $region25: #{tpu_custom_call.1} parent=1 // pred_fallthru
      _
    // Predicated region
    $region26: #{tpu_custom_call.1} parent=1 // pred_check
      _
    $region27: #{tpu_custom_call.1} parent=1 // pred_check_branch
      %34 = sbr.rel (0) target = $region29
    $region28: #{tpu_custom_call.1} parent=1 // pred_region
      %35 = dma.done [#allocation3], 3072
    $region29: #{tpu_custom_call.1} parent=1 // pred_fallthru
      _
    %v36 = vld [vmem:[%s1] sm:$0xff]
    %s37 = scalar_lea.vmem %s1, 8
    %v38 = vld [vmem:[%s37] sm:$0xff]
    %s39 = scalar_lea.vmem %s1, 16
    %v40 = vld [vmem:[%s39] sm:$0xff]
    %s41 = scalar_lea.vmem %s1, 24
    %v42 = vld [vmem:[%s41] sm:$0xff]
    %s43 = scalar_lea.vmem %s1, 32
    %v44 = vld [vmem:[%s43] sm:$0xff]
    %s45 = scalar_lea.vmem %s1, 40
    %v46 = vld [vmem:[%s45] sm:$0xff]
    %s47 = scalar_lea.vmem %s1, 48
    %v48 = vld [vmem:[%s47] sm:$0xff]
    %s49 = scalar_lea.vmem %s1, 56
    %v50 = vld [vmem:[%s49] sm:$0xff]
    %s51 = scalar_lea.vmem %s1, 64
    %v52 = vld [vmem:[%s51] sm:$0xff]
    %v53 = vld [vmem:[%s2] sm:$0xff]
    %v54 = vld [vmem:[%s0] sm:$0xff]
    %v55 = vld [vmem:[%s0 + $0x8] sm:$0xff]
    %v56 = vld [vmem:[%s0 + $0x10] sm:$0xff]
    %v57 = vld [vmem:[%s0 + $0x18] sm:$0xff]
    %v58 = vld [vmem:[%s0 + $0x20] sm:$0xff]
    %v59 = vld [vmem:[%s0 + $0x28] sm:$0xff]
    %v60 = vld [vmem:[%s0 + $0x30] sm:$0xff]
    %v61 = vld [vmem:[%s0 + $0x38] sm:$0xff]
    %v62 = vld [vmem:[%s0 + $0x40] sm:$0xf]
    %v72 = vcombine.high %v54, %v54
    %v73 = vcombine.high %v55, %v55
    %v74 = vcombine.high %v56, %v56
    %v75 = vcombine.high %v57, %v57
    %v76 = vcombine.high %v58, %v58
    %v77 = vcombine.high %v59, %v59
    %v78 = vcombine.high %v60, %v60
    %v79 = vcombine.high %v61, %v61
    %80 = vrot.lane.b32.xlu0 %v54, 127
    %v81 = vpop.permute.xlu0 %80
    %82 = vrot.lane.b32.xlu0 %v72, 127
    %v83 = vpop.permute.xlu0 %82
    %84 = vrot.lane.b32.xlu0 %v55, 127
    %v85 = vpop.permute.xlu0 %84
    %86 = vrot.lane.b32.xlu0 %v73, 127
    %v87 = vpop.permute.xlu0 %86
    %88 = vrot.lane.b32.xlu0 %v56, 127
    %v89 = vpop.permute.xlu0 %88
    %90 = vrot.lane.b32.xlu0 %v74, 127
    %v91 = vpop.permute.xlu0 %90
    %92 = vrot.lane.b32.xlu0 %v57, 127
    %v93 = vpop.permute.xlu0 %92
    %94 = vrot.lane.b32.xlu0 %v75, 127
    %v95 = vpop.permute.xlu0 %94
    %96 = vrot.lane.b32.xlu0 %v58, 127
    %v97 = vpop.permute.xlu0 %96
    %98 = vrot.lane.b32.xlu0 %v76, 127
    %v99 = vpop.permute.xlu0 %98
    %100 = vrot.lane.b32.xlu0 %v59, 127
    %v101 = vpop.permute.xlu0 %100
    %102 = vrot.lane.b32.xlu0 %v77, 127
    %v103 = vpop.permute.xlu0 %102
    %104 = vrot.lane.b32.xlu0 %v60, 127
    %v105 = vpop.permute.xlu0 %104
    %106 = vrot.lane.b32.xlu0 %v78, 127
    %v107 = vpop.permute.xlu0 %106
    %108 = vrot.lane.b32.xlu0 %v61, 127
    %v109 = vpop.permute.xlu0 %108
    %110 = vrot.lane.b32.xlu0 %v79, 127
    %v111 = vpop.permute.xlu0 %110
    %112 = vrot.lane.b32.xlu0 %v62, 127
    %v113 = vpop.permute.xlu0 %112
    %vm114 = vcmask 1039360
    %v115 = vsel %vm114, %v81, %v83
    %v116 = vsel %vm114, %v83, %v85
    %v117 = vsel %vm114, %v85, %v87
    %v118 = vsel %vm114, %v87, %v89
    %v119 = vsel %vm114, %v89, %v91
    %v120 = vsel %vm114, %v91, %v93
    %v121 = vsel %vm114, %v93, %v95
    %v122 = vsel %vm114, %v95, %v97
    %v123 = vsel %vm114, %v97, %v99
    %v124 = vsel %vm114, %v99, %v101
    %v125 = vsel %vm114, %v101, %v103
    %v126 = vsel %vm114, %v103, %v105
    %v127 = vsel %vm114, %v105, %v107
    %v128 = vsel %vm114, %v107, %v109
    %v129 = vsel %vm114, %v109, %v111
    %v130 = vsel %vm114, %v111, %v113
    %vm131 = vcmask 31744
    %v133 = vsel %vm131, %v38, 0
    %vm135 = vcmask 1043456
    %v136 = vsel %vm135, %v115, 0
    %v138 = vsel %vm135, %v116, 0
    %v140 = vsel %vm135, %v117, 0
    %v142 = vsel %vm135, %v118, 0
    %v144 = vsel %vm135, %v119, 0
    %v146 = vsel %vm135, %v120, 0
    %v148 = vsel %vm135, %v121, 0
    %v150 = vsel %vm135, %v122, 0
    %v152 = vsel %vm135, %v123, 0
    %v154 = vsel %vm135, %v124, 0
    %v156 = vsel %vm135, %v125, 0
    %v158 = vsel %vm135, %v126, 0
    %v160 = vsel %vm135, %v127, 0
    %v162 = vsel %vm135, %v128, 0
    %v164 = vsel %vm135, %v129, 0
    %v166 = vsel %vm135, %v130, 0
    %168 = vmatprep.subr.mxu0 %v138
    %169 = vmatpush1.msra.mxu0 %v136
    %170 = vmatprep.subr.mxu0 0.0
    %171 = vmatpush1.msra.mxu0 0.0
    %172 = vmatprep.subr.mxu0 0.0
    %173 = vmatpush1.msra.mxu0 0.0
    %174 = vmatprep.subr.mxu0 0.0
    %175 = vmatpush1.msra.mxu0 0.0
    %176 = vmatprep.subr.mxu0 0.0
    %177 = vmatpush1.msra.mxu0 0.0
    %178 = vmatprep.subr.mxu0 0.0
    %179 = vmatpush1.msra.mxu0 0.0
    %180 = vmatprep.subr.mxu0 0.0
    %181 = vmatpush1.msra.mxu0 0.0
    %182 = vmatprep.subr.mxu0 0.0
    %183 = vmatpush1.msra.mxu0 0.0
    %184 = vmatprep.subr.mxu0 0.0
    %185 = vmatpush1.msra.mxu0 0.0
    %186 = vmatprep.subr.mxu0 0.0
    %187 = vmatpush1.msra.mxu0 0.0
    %188 = vmatprep.subr.mxu0 0.0
    %189 = vmatpush1.msra.mxu0 0.0
    %190 = vmatprep.subr.mxu0 0.0
    %191 = vmatpush1.msra.mxu0 0.0
    %192 = vmatprep.subr.mxu0 0.0
    %193 = vmatpush1.msra.mxu0 0.0
    %194 = vmatprep.subr.mxu0 0.0
    %195 = vmatpush1.msra.mxu0 0.0
    %196 = vmatprep.subr.mxu0 0.0
    %197 = vmatpush1.msra.mxu0 0.0
    %198 = vmatprep.subr.mxu0 0.0
    %199 = vmatpush1.msra.mxu0 0.0
    %200 = vmatprep.subr.mxu0 0.0
    %201 = vmatpush1.msra.mxu0 0.0
    %202 = vmatprep.subr.mxu0 0.0
    %203 = vmatpush1.msra.mxu0 0.0
    %204 = vmatprep.subr.mxu0 0.0
    %205 = vmatpush1.msra.mxu0 0.0
    %206 = vmatprep.subr.mxu0 0.0
    %207 = vmatpush1.msra.mxu0 0.0
    %208 = vmatprep.subr.mxu0 0.0
    %209 = vmatpush1.msra.mxu0 0.0
    %210 = vmatprep.subr.mxu0 0.0
    %211 = vmatpush1.msra.mxu0 0.0
    %212 = vmatprep.subr.mxu0 0.0
    %213 = vmatpush1.msra.mxu0 0.0
    %214 = vmatprep.subr.mxu0 0.0
    %215 = vmatpush1.msra.mxu0 0.0
    %216 = vmatprep.subr.mxu0 0.0
    %217 = vmatpush1.msra.mxu0 0.0
    %218 = vmatprep.subr.mxu0 0.0
    %219 = vmatpush1.msra.mxu0 0.0
    %220 = vmatprep.subr.mxu0 0.0
    %221 = vmatpush1.msra.mxu0 0.0
    %222 = vmatprep.subr.mxu0 0.0
    %223 = vmatpush1.msra.mxu0 0.0
    %224 = vmatprep.subr.mxu0 0.0
    %225 = vmatpush1.msra.mxu0 0.0
    %226 = vmatprep.subr.mxu0 0.0
    %227 = vmatpush1.msra.mxu0 0.0
    %228 = vmatprep.subr.mxu0 0.0
    %229 = vmatpush1.msra.mxu0 0.0
    %230 = vmatprep.subr.mxu0 0.0
    %231 = vmatpush1.msra.mxu0 0.0
    %232 = vmatprep.mubr.f32.mxu0 0.0
    %233 = vmatmul.mubr.f32.gmra.mrb[0].mxu0 %v133
    %v234 = vpop.f32.mrb[0].mxu0
    %v235 = vadd.f32 0.0, %v234
    %v236 = vpop.f32.mrb[0].mxu0
    %v237 = vadd.f32 0.0, %v236
    %238 = vdwg.mxu0
    %239 = vmatprep.subr.mxu0 %v142
    %240 = vmatpush1.msra.mxu0 %v140
    %241 = vmatprep.subr.mxu0 0.0
    %242 = vmatpush1.msra.mxu0 0.0
    %243 = vmatprep.subr.mxu0 0.0
    %244 = vmatpush1.msra.mxu0 0.0
    %245 = vmatprep.subr.mxu0 0.0
    %246 = vmatpush1.msra.mxu0 0.0
    %247 = vmatprep.subr.mxu0 0.0
    %248 = vmatpush1.msra.mxu0 0.0
    %249 = vmatprep.subr.mxu0 0.0
    %250 = vmatpush1.msra.mxu0 0.0
    %251 = vmatprep.subr.mxu0 0.0
    %252 = vmatpush1.msra.mxu0 0.0
    %253 = vmatprep.subr.mxu0 0.0
    %254 = vmatpush1.msra.mxu0 0.0
    %255 = vmatprep.subr.mxu0 0.0
    %256 = vmatpush1.msra.mxu0 0.0
    %257 = vmatprep.subr.mxu0 0.0
    %258 = vmatpush1.msra.mxu0 0.0
    %259 = vmatprep.subr.mxu0 0.0
    %260 = vmatpush1.msra.mxu0 0.0
    %261 = vmatprep.subr.mxu0 0.0
    %262 = vmatpush1.msra.mxu0 0.0
    %263 = vmatprep.subr.mxu0 0.0
    %264 = vmatpush1.msra.mxu0 0.0
    %265 = vmatprep.subr.mxu0 0.0
    %266 = vmatpush1.msra.mxu0 0.0
    %267 = vmatprep.subr.mxu0 0.0
    %268 = vmatpush1.msra.mxu0 0.0
    %269 = vmatprep.subr.mxu0 0.0
    %270 = vmatpush1.msra.mxu0 0.0
    %271 = vmatprep.subr.mxu0 0.0
    %272 = vmatpush1.msra.mxu0 0.0
    %273 = vmatprep.subr.mxu0 0.0
    %274 = vmatpush1.msra.mxu0 0.0
    %275 = vmatprep.subr.mxu0 0.0
    %276 = vmatpush1.msra.mxu0 0.0
    %277 = vmatprep.subr.mxu0 0.0
    %278 = vmatpush1.msra.mxu0 0.0
    %279 = vmatprep.subr.mxu0 0.0
    %280 = vmatpush1.msra.mxu0 0.0
    %281 = vmatprep.subr.mxu0 0.0
    %282 = vmatpush1.msra.mxu0 0.0
    %283 = vmatprep.subr.mxu0 0.0
    %284 = vmatpush1.msra.mxu0 0.0
    %285 = vmatprep.subr.mxu0 0.0
    %286 = vmatpush1.msra.mxu0 0.0
    %287 = vmatprep.subr.mxu0 0.0
    %288 = vmatpush1.msra.mxu0 0.0
    %289 = vmatprep.subr.mxu0 0.0
    %290 = vmatpush1.msra.mxu0 0.0
    %291 = vmatprep.subr.mxu0 0.0
    %292 = vmatpush1.msra.mxu0 0.0
    %293 = vmatprep.subr.mxu0 0.0
    %294 = vmatpush1.msra.mxu0 0.0
    %295 = vmatprep.subr.mxu0 0.0
    %296 = vmatpush1.msra.mxu0 0.0
    %297 = vmatprep.subr.mxu0 0.0
    %298 = vmatpush1.msra.mxu0 0.0
    %299 = vmatprep.subr.mxu0 0.0
    %300 = vmatpush1.msra.mxu0 0.0
    %301 = vmatprep.subr.mxu0 0.0
    %302 = vmatpush1.msra.mxu0 0.0
    %303 = vmatprep.mubr.f32.mxu0 0.0
    %304 = vmatmul.mubr.f32.gmra.mrb[0].mxu0 %v133
    %v305 = vpop.f32.mrb[0].mxu0
    %v306 = vadd.f32 0.0, %v305
    %v307 = vpop.f32.mrb[0].mxu0
    %v308 = vadd.f32 0.0, %v307
    %309 = vdwg.mxu0
    %310 = vmatprep.subr.mxu0 %v146
    %311 = vmatpush1.msra.mxu0 %v144
    %312 = vmatprep.subr.mxu0 0.0
    %313 = vmatpush1.msra.mxu0 0.0
    %314 = vmatprep.subr.mxu0 0.0
    %315 = vmatpush1.msra.mxu0 0.0
    %316 = vmatprep.subr.mxu0 0.0
    %317 = vmatpush1.msra.mxu0 0.0
    %318 = vmatprep.subr.mxu0 0.0
    %319 = vmatpush1.msra.mxu0 0.0
    %320 = vmatprep.subr.mxu0 0.0
    %321 = vmatpush1.msra.mxu0 0.0
    %322 = vmatprep.subr.mxu0 0.0
    %323 = vmatpush1.msra.mxu0 0.0
    %324 = vmatprep.subr.mxu0 0.0
    %325 = vmatpush1.msra.mxu0 0.0
    %326 = vmatprep.subr.mxu0 0.0
    %327 = vmatpush1.msra.mxu0 0.0
    %328 = vmatprep.subr.mxu0 0.0
    %329 = vmatpush1.msra.mxu0 0.0
    %330 = vmatprep.subr.mxu0 0.0
    %331 = vmatpush1.msra.mxu0 0.0
    %332 = vmatprep.subr.mxu0 0.0
    %333 = vmatpush1.msra.mxu0 0.0
    %334 = vmatprep.subr.mxu0 0.0
    %335 = vmatpush1.msra.mxu0 0.0
    %336 = vmatprep.subr.mxu0 0.0
    %337 = vmatpush1.msra.mxu0 0.0
    %338 = vmatprep.subr.mxu0 0.0
    %339 = vmatpush1.msra.mxu0 0.0
    %340 = vmatprep.subr.mxu0 0.0
    %341 = vmatpush1.msra.mxu0 0.0
    %342 = vmatprep.subr.mxu0 0.0
    %343 = vmatpush1.msra.mxu0 0.0
    %344 = vmatprep.subr.mxu0 0.0
    %345 = vmatpush1.msra.mxu0 0.0
    %346 = vmatprep.subr.mxu0 0.0
    %347 = vmatpush1.msra.mxu0 0.0
    %348 = vmatprep.subr.mxu0 0.0
    %349 = vmatpush1.msra.mxu0 0.0
    %350 = vmatprep.subr.mxu0 0.0
    %351 = vmatpush1.msra.mxu0 0.0
    %352 = vmatprep.subr.mxu0 0.0
    %353 = vmatpush1.msra.mxu0 0.0
    %354 = vmatprep.subr.mxu0 0.0
    %355 = vmatpush1.msra.mxu0 0.0
    %356 = vmatprep.subr.mxu0 0.0
    %357 = vmatpush1.msra.mxu0 0.0
    %358 = vmatprep.subr.mxu0 0.0
    %359 = vmatpush1.msra.mxu0 0.0
    %360 = vmatprep.subr.mxu0 0.0
    %361 = vmatpush1.msra.mxu0 0.0
    %362 = vmatprep.subr.mxu0 0.0
    %363 = vmatpush1.msra.mxu0 0.0
    %364 = vmatprep.subr.mxu0 0.0
    %365 = vmatpush1.msra.mxu0 0.0
    %366 = vmatprep.subr.mxu0 0.0
    %367 = vmatpush1.msra.mxu0 0.0
    %368 = vmatprep.subr.mxu0 0.0
    %369 = vmatpush1.msra.mxu0 0.0
    %370 = vmatprep.subr.mxu0 0.0
    %371 = vmatpush1.msra.mxu0 0.0
    %372 = vmatprep.subr.mxu0 0.0
    %373 = vmatpush1.msra.mxu0 0.0
    %374 = vmatprep.mubr.f32.mxu0 0.0
    %375 = vmatmul.mubr.f32.gmra.mrb[0].mxu0 %v133
    %v376 = vpop.f32.mrb[0].mxu0
    %v377 = vadd.f32 0.0, %v376
    %v378 = vpop.f32.mrb[0].mxu0
    %v379 = vadd.f32 0.0, %v378
    %380 = vdwg.mxu0
    %381 = vmatprep.subr.mxu0 %v150
    %382 = vmatpush1.msra.mxu0 %v148
    %383 = vmatprep.subr.mxu0 0.0
    %384 = vmatpush1.msra.mxu0 0.0
    %385 = vmatprep.subr.mxu0 0.0
    %386 = vmatpush1.msra.mxu0 0.0
    %387 = vmatprep.subr.mxu0 0.0
    %388 = vmatpush1.msra.mxu0 0.0
    %389 = vmatprep.subr.mxu0 0.0
    %390 = vmatpush1.msra.mxu0 0.0
    %391 = vmatprep.subr.mxu0 0.0
    %392 = vmatpush1.msra.mxu0 0.0
    %393 = vmatprep.subr.mxu0 0.0
    %394 = vmatpush1.msra.mxu0 0.0
    %395 = vmatprep.subr.mxu0 0.0
    %396 = vmatpush1.msra.mxu0 0.0
    %397 = vmatprep.subr.mxu0 0.0
    %398 = vmatpush1.msra.mxu0 0.0
    %399 = vmatprep.subr.mxu0 0.0
    %400 = vmatpush1.msra.mxu0 0.0
    %401 = vmatprep.subr.mxu0 0.0
    %402 = vmatpush1.msra.mxu0 0.0
    %403 = vmatprep.subr.mxu0 0.0
    %404 = vmatpush1.msra.mxu0 0.0
    %405 = vmatprep.subr.mxu0 0.0
    %406 = vmatpush1.msra.mxu0 0.0
    %407 = vmatprep.subr.mxu0 0.0
    %408 = vmatpush1.msra.mxu0 0.0
    %409 = vmatprep.subr.mxu0 0.0
    %410 = vmatpush1.msra.mxu0 0.0
    %411 = vmatprep.subr.mxu0 0.0
    %412 = vmatpush1.msra.mxu0 0.0
    %413 = vmatprep.subr.mxu0 0.0
    %414 = vmatpush1.msra.mxu0 0.0
    %415 = vmatprep.subr.mxu0 0.0
    %416 = vmatpush1.msra.mxu0 0.0
    %417 = vmatprep.subr.mxu0 0.0
    %418 = vmatpush1.msra.mxu0 0.0
    %419 = vmatprep.subr.mxu0 0.0
    %420 = vmatpush1.msra.mxu0 0.0
    %421 = vmatprep.subr.mxu0 0.0
    %422 = vmatpush1.msra.mxu0 0.0
    %423 = vmatprep.subr.mxu0 0.0
    %424 = vmatpush1.msra.mxu0 0.0
    %425 = vmatprep.subr.mxu0 0.0
    %426 = vmatpush1.msra.mxu0 0.0
    %427 = vmatprep.subr.mxu0 0.0
    %428 = vmatpush1.msra.mxu0 0.0
    %429 = vmatprep.subr.mxu0 0.0
    %430 = vmatpush1.msra.mxu0 0.0
    %431 = vmatprep.subr.mxu0 0.0
    %432 = vmatpush1.msra.mxu0 0.0
    %433 = vmatprep.subr.mxu0 0.0
    %434 = vmatpush1.msra.mxu0 0.0
    %435 = vmatprep.subr.mxu0 0.0
    %436 = vmatpush1.msra.mxu0 0.0
    %437 = vmatprep.subr.mxu0 0.0
    %438 = vmatpush1.msra.mxu0 0.0
    %439 = vmatprep.subr.mxu0 0.0
    %440 = vmatpush1.msra.mxu0 0.0
    %441 = vmatprep.subr.mxu0 0.0
    %442 = vmatpush1.msra.mxu0 0.0
    %443 = vmatprep.subr.mxu0 0.0
    %444 = vmatpush1.msra.mxu0 0.0
    %445 = vmatprep.mubr.f32.mxu0 0.0
    %446 = vmatmul.mubr.f32.gmra.mrb[0].mxu0 %v133
    %v447 = vpop.f32.mrb[0].mxu0
    %v448 = vadd.f32 0.0, %v447
    %v449 = vpop.f32.mrb[0].mxu0
    %v450 = vadd.f32 0.0, %v449
    %451 = vdwg.mxu0
    %452 = vmatprep.subr.mxu0 %v154
    %453 = vmatpush1.msra.mxu0 %v152
    %454 = vmatprep.subr.mxu0 0.0
    %455 = vmatpush1.msra.mxu0 0.0
    %456 = vmatprep.subr.mxu0 0.0
    %457 = vmatpush1.msra.mxu0 0.0
    %458 = vmatprep.subr.mxu0 0.0
    %459 = vmatpush1.msra.mxu0 0.0
    %460 = vmatprep.subr.mxu0 0.0
    %461 = vmatpush1.msra.mxu0 0.0
    %462 = vmatprep.subr.mxu0 0.0
    %463 = vmatpush1.msra.mxu0 0.0
    %464 = vmatprep.subr.mxu0 0.0
    %465 = vmatpush1.msra.mxu0 0.0
    %466 = vmatprep.subr.mxu0 0.0
    %467 = vmatpush1.msra.mxu0 0.0
    %468 = vmatprep.subr.mxu0 0.0
    %469 = vmatpush1.msra.mxu0 0.0
    %470 = vmatprep.subr.mxu0 0.0
    %471 = vmatpush1.msra.mxu0 0.0
    %472 = vmatprep.subr.mxu0 0.0
    %473 = vmatpush1.msra.mxu0 0.0
    %474 = vmatprep.subr.mxu0 0.0
    %475 = vmatpush1.msra.mxu0 0.0
    %476 = vmatprep.subr.mxu0 0.0
    %477 = vmatpush1.msra.mxu0 0.0
    %478 = vmatprep.subr.mxu0 0.0
    %479 = vmatpush1.msra.mxu0 0.0
    %480 = vmatprep.subr.mxu0 0.0
    %481 = vmatpush1.msra.mxu0 0.0
    %482 = vmatprep.subr.mxu0 0.0
    %483 = vmatpush1.msra.mxu0 0.0
    %484 = vmatprep.subr.mxu0 0.0
    %485 = vmatpush1.msra.mxu0 0.0
    %486 = vmatprep.subr.mxu0 0.0
    %487 = vmatpush1.msra.mxu0 0.0
    %488 = vmatprep.subr.mxu0 0.0
    %489 = vmatpush1.msra.mxu0 0.0
    %490 = vmatprep.subr.mxu0 0.0
    %491 = vmatpush1.msra.mxu0 0.0
    %492 = vmatprep.subr.mxu0 0.0
    %493 = vmatpush1.msra.mxu0 0.0
    %494 = vmatprep.subr.mxu0 0.0
    %495 = vmatpush1.msra.mxu0 0.0
    %496 = vmatprep.subr.mxu0 0.0
    %497 = vmatpush1.msra.mxu0 0.0
    %498 = vmatprep.subr.mxu0 0.0
    %499 = vmatpush1.msra.mxu0 0.0
    %500 = vmatprep.subr.mxu0 0.0
    %501 = vmatpush1.msra.mxu0 0.0
    %502 = vmatprep.subr.mxu0 0.0
    %503 = vmatpush1.msra.mxu0 0.0
    %504 = vmatprep.subr.mxu0 0.0
    %505 = vmatpush1.msra.mxu0 0.0
    %506 = vmatprep.subr.mxu0 0.0
    %507 = vmatpush1.msra.mxu0 0.0
    %508 = vmatprep.subr.mxu0 0.0
    %509 = vmatpush1.msra.mxu0 0.0
    %510 = vmatprep.subr.mxu0 0.0
    %511 = vmatpush1.msra.mxu0 0.0
    %512 = vmatprep.subr.mxu0 0.0
    %513 = vmatpush1.msra.mxu0 0.0
    %514 = vmatprep.subr.mxu0 0.0
    %515 = vmatpush1.msra.mxu0 0.0
    %516 = vmatprep.mubr.f32.mxu0 0.0
    %517 = vmatmul.mubr.f32.gmra.mrb[0].mxu0 %v133
    %v518 = vpop.f32.mrb[0].mxu0
    %v519 = vadd.f32 0.0, %v518
    %v520 = vpop.f32.mrb[0].mxu0
    %v521 = vadd.f32 0.0, %v520
    %522 = vdwg.mxu0
    %523 = vmatprep.subr.mxu0 %v158
    %524 = vmatpush1.msra.mxu0 %v156
    %525 = vmatprep.subr.mxu0 0.0
    %526 = vmatpush1.msra.mxu0 0.0
    %527 = vmatprep.subr.mxu0 0.0
    %528 = vmatpush1.msra.mxu0 0.0
    %529 = vmatprep.subr.mxu0 0.0
    %530 = vmatpush1.msra.mxu0 0.0
    %531 = vmatprep.subr.mxu0 0.0
    %532 = vmatpush1.msra.mxu0 0.0
    %533 = vmatprep.subr.mxu0 0.0
    %534 = vmatpush1.msra.mxu0 0.0
    %535 = vmatprep.subr.mxu0 0.0
    %536 = vmatpush1.msra.mxu0 0.0
    %537 = vmatprep.subr.mxu0 0.0
    %538 = vmatpush1.msra.mxu0 0.0
    %539 = vmatprep.subr.mxu0 0.0
    %540 = vmatpush1.msra.mxu0 0.0
    %541 = vmatprep.subr.mxu0 0.0
    %542 = vmatpush1.msra.mxu0 0.0
    %543 = vmatprep.subr.mxu0 0.0
    %544 = vmatpush1.msra.mxu0 0.0
    %545 = vmatprep.subr.mxu0 0.0
    %546 = vmatpush1.msra.mxu0 0.0
    %547 = vmatprep.subr.mxu0 0.0
    %548 = vmatpush1.msra.mxu0 0.0
    %549 = vmatprep.subr.mxu0 0.0
    %550 = vmatpush1.msra.mxu0 0.0
    %551 = vmatprep.subr.mxu0 0.0
    %552 = vmatpush1.msra.mxu0 0.0
    %553 = vmatprep.subr.mxu0 0.0
    %554 = vmatpush1.msra.mxu0 0.0
    %555 = vmatprep.subr.mxu0 0.0
    %556 = vmatpush1.msra.mxu0 0.0
    %557 = vmatprep.subr.mxu0 0.0
    %558 = vmatpush1.msra.mxu0 0.0
    %559 = vmatprep.subr.mxu0 0.0
    %560 = vmatpush1.msra.mxu0 0.0
    %561 = vmatprep.subr.mxu0 0.0
    %562 = vmatpush1.msra.mxu0 0.0
    %563 = vmatprep.subr.mxu0 0.0
    %564 = vmatpush1.msra.mxu0 0.0
    %565 = vmatprep.subr.mxu0 0.0
    %566 = vmatpush1.msra.mxu0 0.0
    %567 = vmatprep.subr.mxu0 0.0
    %568 = vmatpush1.msra.mxu0 0.0
    %569 = vmatprep.subr.mxu0 0.0
    %570 = vmatpush1.msra.mxu0 0.0
    %571 = vmatprep.subr.mxu0 0.0
    %572 = vmatpush1.msra.mxu0 0.0
    %573 = vmatprep.subr.mxu0 0.0
    %574 = vmatpush1.msra.mxu0 0.0
    %575 = vmatprep.subr.mxu0 0.0
    %576 = vmatpush1.msra.mxu0 0.0
    %577 = vmatprep.subr.mxu0 0.0
    %578 = vmatpush1.msra.mxu0 0.0
    %579 = vmatprep.subr.mxu0 0.0
    %580 = vmatpush1.msra.mxu0 0.0
    %581 = vmatprep.subr.mxu0 0.0
    %582 = vmatpush1.msra.mxu0 0.0
    %583 = vmatprep.subr.mxu0 0.0
    %584 = vmatpush1.msra.mxu0 0.0
    %585 = vmatprep.subr.mxu0 0.0
    %586 = vmatpush1.msra.mxu0 0.0
    %587 = vmatprep.mubr.f32.mxu0 0.0
    %588 = vmatmul.mubr.f32.gmra.mrb[0].mxu0 %v133
    %v589 = vpop.f32.mrb[0].mxu0
    %v590 = vadd.f32 0.0, %v589
    %v591 = vpop.f32.mrb[0].mxu0
    %v592 = vadd.f32 0.0, %v591
    %593 = vdwg.mxu0
    %594 = vmatprep.subr.mxu0 %v162
    %595 = vmatpush1.msra.mxu0 %v160
    %596 = vmatprep.subr.mxu0 0.0
    %597 = vmatpush1.msra.mxu0 0.0
    %598 = vmatprep.subr.mxu0 0.0
    %599 = vmatpush1.msra.mxu0 0.0
    %600 = vmatprep.subr.mxu0 0.0
    %601 = vmatpush1.msra.mxu0 0.0
    %602 = vmatprep.subr.mxu0 0.0
    %603 = vmatpush1.msra.mxu0 0.0
    %604 = vmatprep.subr.mxu0 0.0
    %605 = vmatpush1.msra.mxu0 0.0
    %606 = vmatprep.subr.mxu0 0.0
    %607 = vmatpush1.msra.mxu0 0.0
    %608 = vmatprep.subr.mxu0 0.0
    %609 = vmatpush1.msra.mxu0 0.0
    %610 = vmatprep.subr.mxu0 0.0
    %611 = vmatpush1.msra.mxu0 0.0
    %612 = vmatprep.subr.mxu0 0.0
    %613 = vmatpush1.msra.mxu0 0.0
    %614 = vmatprep.subr.mxu0 0.0
    %615 = vmatpush1.msra.mxu0 0.0
    %616 = vmatprep.subr.mxu0 0.0
    %617 = vmatpush1.msra.mxu0 0.0
    %618 = vmatprep.subr.mxu0 0.0
    %619 = vmatpush1.msra.mxu0 0.0
    %620 = vmatprep.subr.mxu0 0.0
    %621 = vmatpush1.msra.mxu0 0.0
    %622 = vmatprep.subr.mxu0 0.0
    %623 = vmatpush1.msra.mxu0 0.0
    %624 = vmatprep.subr.mxu0 0.0
    %625 = vmatpush1.msra.mxu0 0.0
    %626 = vmatprep.subr.mxu0 0.0
    %627 = vmatpush1.msra.mxu0 0.0
    %628 = vmatprep.subr.mxu0 0.0
    %629 = vmatpush1.msra.mxu0 0.0
    %630 = vmatprep.subr.mxu0 0.0
    %631 = vmatpush1.msra.mxu0 0.0
    %632 = vmatprep.subr.mxu0 0.0
    %633 = vmatpush1.msra.mxu0 0.0
    %634 = vmatprep.subr.mxu0 0.0
    %635 = vmatpush1.msra.mxu0 0.0
    %636 = vmatprep.subr.mxu0 0.0
    %637 = vmatpush1.msra.mxu0 0.0
    %638 = vmatprep.subr.mxu0 0.0
    %639 = vmatpush1.msra.mxu0 0.0
    %640 = vmatprep.subr.mxu0 0.0
    %641 = vmatpush1.msra.mxu0 0.0
    %642 = vmatprep.subr.mxu0 0.0
    %643 = vmatpush1.msra.mxu0 0.0
    %644 = vmatprep.subr.mxu0 0.0
    %645 = vmatpush1.msra.mxu0 0.0
    %646 = vmatprep.subr.mxu0 0.0
    %647 = vmatpush1.msra.mxu0 0.0
    %648 = vmatprep.subr.mxu0 0.0
    %649 = vmatpush1.msra.mxu0 0.0
    %650 = vmatprep.subr.mxu0 0.0
    %651 = vmatpush1.msra.mxu0 0.0
    %652 = vmatprep.subr.mxu0 0.0
    %653 = vmatpush1.msra.mxu0 0.0
    %654 = vmatprep.subr.mxu0 0.0
    %655 = vmatpush1.msra.mxu0 0.0
    %656 = vmatprep.subr.mxu0 0.0
    %657 = vmatpush1.msra.mxu0 0.0
    %658 = vmatprep.mubr.f32.mxu0 0.0
    %659 = vmatmul.mubr.f32.gmra.mrb[0].mxu0 %v133
    %v660 = vpop.f32.mrb[0].mxu0
    %v661 = vadd.f32 0.0, %v660
    %v662 = vpop.f32.mrb[0].mxu0
    %v663 = vadd.f32 0.0, %v662
    %664 = vdwg.mxu0
    %665 = vmatprep.subr.mxu0 %v166
    %666 = vmatpush1.msra.mxu0 %v164
    %667 = vmatprep.subr.mxu0 0.0
    %668 = vmatpush1.msra.mxu0 0.0
    %669 = vmatprep.subr.mxu0 0.0
    %670 = vmatpush1.msra.mxu0 0.0
    %671 = vmatprep.subr.mxu0 0.0
    %672 = vmatpush1.msra.mxu0 0.0
    %673 = vmatprep.subr.mxu0 0.0
    %674 = vmatpush1.msra.mxu0 0.0
    %675 = vmatprep.subr.mxu0 0.0
    %676 = vmatpush1.msra.mxu0 0.0
    %677 = vmatprep.subr.mxu0 0.0
    %678 = vmatpush1.msra.mxu0 0.0
    %679 = vmatprep.subr.mxu0 0.0
    %680 = vmatpush1.msra.mxu0 0.0
    %681 = vmatprep.subr.mxu0 0.0
    %682 = vmatpush1.msra.mxu0 0.0
    %683 = vmatprep.subr.mxu0 0.0
    %684 = vmatpush1.msra.mxu0 0.0
    %685 = vmatprep.subr.mxu0 0.0
    %686 = vmatpush1.msra.mxu0 0.0
    %687 = vmatprep.subr.mxu0 0.0
    %688 = vmatpush1.msra.mxu0 0.0
    %689 = vmatprep.subr.mxu0 0.0
    %690 = vmatpush1.msra.mxu0 0.0
    %691 = vmatprep.subr.mxu0 0.0
    %692 = vmatpush1.msra.mxu0 0.0
    %693 = vmatprep.subr.mxu0 0.0
    %694 = vmatpush1.msra.mxu0 0.0
    %695 = vmatprep.subr.mxu0 0.0
    %696 = vmatpush1.msra.mxu0 0.0
    %697 = vmatprep.subr.mxu0 0.0
    %698 = vmatpush1.msra.mxu0 0.0
    %699 = vmatprep.subr.mxu0 0.0
    %700 = vmatpush1.msra.mxu0 0.0
    %701 = vmatprep.subr.mxu0 0.0
    %702 = vmatpush1.msra.mxu0 0.0
    %703 = vmatprep.subr.mxu0 0.0
    %704 = vmatpush1.msra.mxu0 0.0
    %705 = vmatprep.subr.mxu0 0.0
    %706 = vmatpush1.msra.mxu0 0.0
    %707 = vmatprep.subr.mxu0 0.0
    %708 = vmatpush1.msra.mxu0 0.0
    %709 = vmatprep.subr.mxu0 0.0
    %710 = vmatpush1.msra.mxu0 0.0
    %711 = vmatprep.subr.mxu0 0.0
    %712 = vmatpush1.msra.mxu0 0.0
    %713 = vmatprep.subr.mxu0 0.0
    %714 = vmatpush1.msra.mxu0 0.0
    %715 = vmatprep.subr.mxu0 0.0
    %716 = vmatpush1.msra.mxu0 0.0
    %717 = vmatprep.subr.mxu0 0.0
    %718 = vmatpush1.msra.mxu0 0.0
    %719 = vmatprep.subr.mxu0 0.0
    %720 = vmatpush1.msra.mxu0 0.0
    %721 = vmatprep.subr.mxu0 0.0
    %722 = vmatpush1.msra.mxu0 0.0
    %723 = vmatprep.subr.mxu0 0.0
    %724 = vmatpush1.msra.mxu0 0.0
    %725 = vmatprep.subr.mxu0 0.0
    %726 = vmatpush1.msra.mxu0 0.0
    %727 = vmatprep.subr.mxu0 0.0
    %728 = vmatpush1.msra.mxu0 0.0
    %729 = vmatprep.mubr.f32.mxu0 0.0
    %730 = vmatmul.mubr.f32.gmra.mrb[0].mxu0 %v133
    %v731 = vpop.f32.mrb[0].mxu0
    %v732 = vadd.f32 0.0, %v731
    %v733 = vpop.f32.mrb[0].mxu0
    %v734 = vadd.f32 0.0, %v733
    %735 = vdwg.mxu0
    %v737 = vsel %vm131, %v36, 0
    %v739 = vsel %vm135, %v54, 0
    %v741 = vsel %vm135, %v72, 0
    %v743 = vsel %vm135, %v55, 0
    %v745 = vsel %vm135, %v73, 0
    %v747 = vsel %vm135, %v56, 0
    %v749 = vsel %vm135, %v74, 0
    %v751 = vsel %vm135, %v57, 0
    %v753 = vsel %vm135, %v75, 0
    %v755 = vsel %vm135, %v58, 0
    %v757 = vsel %vm135, %v76, 0
    %v759 = vsel %vm135, %v59, 0
    %v761 = vsel %vm135, %v77, 0
    %v763 = vsel %vm135, %v60, 0
    %v765 = vsel %vm135, %v78, 0
    %v767 = vsel %vm135, %v61, 0
    %v769 = vsel %vm135, %v79, 0
    %771 = vmatprep.subr.mxu0 %v741
    %772 = vmatpush1.msra.mxu0 %v739
    %773 = vmatprep.subr.mxu0 0.0
    %774 = vmatpush1.msra.mxu0 0.0
    %775 = vmatprep.subr.mxu0 0.0
    %776 = vmatpush1.msra.mxu0 0.0
    %777 = vmatprep.subr.mxu0 0.0
    %778 = vmatpush1.msra.mxu0 0.0
    %779 = vmatprep.subr.mxu0 0.0
    %780 = vmatpush1.msra.mxu0 0.0
    %781 = vmatprep.subr.mxu0 0.0
    %782 = vmatpush1.msra.mxu0 0.0
    %783 = vmatprep.subr.mxu0 0.0
    %784 = vmatpush1.msra.mxu0 0.0
    %785 = vmatprep.subr.mxu0 0.0
    %786 = vmatpush1.msra.mxu0 0.0
    %787 = vmatprep.subr.mxu0 0.0
    %788 = vmatpush1.msra.mxu0 0.0
    %789 = vmatprep.subr.mxu0 0.0
    %790 = vmatpush1.msra.mxu0 0.0
    %791 = vmatprep.subr.mxu0 0.0
    %792 = vmatpush1.msra.mxu0 0.0
    %793 = vmatprep.subr.mxu0 0.0
    %794 = vmatpush1.msra.mxu0 0.0
    %795 = vmatprep.subr.mxu0 0.0
    %796 = vmatpush1.msra.mxu0 0.0
    %797 = vmatprep.subr.mxu0 0.0
    %798 = vmatpush1.msra.mxu0 0.0
    %799 = vmatprep.subr.mxu0 0.0
    %800 = vmatpush1.msra.mxu0 0.0
    %801 = vmatprep.subr.mxu0 0.0
    %802 = vmatpush1.msra.mxu0 0.0
    %803 = vmatprep.subr.mxu0 0.0
    %804 = vmatpush1.msra.mxu0 0.0
    %805 = vmatprep.subr.mxu0 0.0
    %806 = vmatpush1.msra.mxu0 0.0
    %807 = vmatprep.subr.mxu0 0.0
    %808 = vmatpush1.msra.mxu0 0.0
    %809 = vmatprep.subr.mxu0 0.0
    %810 = vmatpush1.msra.mxu0 0.0
    %811 = vmatprep.subr.mxu0 0.0
    %812 = vmatpush1.msra.mxu0 0.0
    %813 = vmatprep.subr.mxu0 0.0
    %814 = vmatpush1.msra.mxu0 0.0
    %815 = vmatprep.subr.mxu0 0.0
    %816 = vmatpush1.msra.mxu0 0.0
    %817 = vmatprep.subr.mxu0 0.0
    %818 = vmatpush1.msra.mxu0 0.0
    %819 = vmatprep.subr.mxu0 0.0
    %820 = vmatpush1.msra.mxu0 0.0
    %821 = vmatprep.subr.mxu0 0.0
    %822 = vmatpush1.msra.mxu0 0.0
    %823 = vmatprep.subr.mxu0 0.0
    %824 = vmatpush1.msra.mxu0 0.0
    %825 = vmatprep.subr.mxu0 0.0
    %826 = vmatpush1.msra.mxu0 0.0
    %827 = vmatprep.subr.mxu0 0.0
    %828 = vmatpush1.msra.mxu0 0.0
    %829 = vmatprep.subr.mxu0 0.0
    %830 = vmatpush1.msra.mxu0 0.0
    %831 = vmatprep.subr.mxu0 0.0
    %832 = vmatpush1.msra.mxu0 0.0
    %833 = vmatprep.subr.mxu0 0.0
    %834 = vmatpush1.msra.mxu0 0.0
    %835 = vmatprep.mubr.f32.mxu0 0.0
    %836 = vmatmul.mubr.f32.gmra.mrb[0].mxu0 %v737
    %v837 = vpop.f32.mrb[0].mxu0
    %v838 = vadd.f32 %v235, %v837
    %v839 = vpop.f32.mrb[0].mxu0
    %v840 = vadd.f32 %v237, %v839
    %841 = vdwg.mxu0
    %842 = vmatprep.subr.mxu0 %v745
    %843 = vmatpush1.msra.mxu0 %v743
    %844 = vmatprep.subr.mxu0 0.0
    %845 = vmatpush1.msra.mxu0 0.0
    %846 = vmatprep.subr.mxu0 0.0
    %847 = vmatpush1.msra.mxu0 0.0
    %848 = vmatprep.subr.mxu0 0.0
    %849 = vmatpush1.msra.mxu0 0.0
    %850 = vmatprep.subr.mxu0 0.0
    %851 = vmatpush1.msra.mxu0 0.0
    %852 = vmatprep.subr.mxu0 0.0
    %853 = vmatpush1.msra.mxu0 0.0
    %854 = vmatprep.subr.mxu0 0.0
    %855 = vmatpush1.msra.mxu0 0.0
    %856 = vmatprep.subr.mxu0 0.0
    %857 = vmatpush1.msra.mxu0 0.0
    %858 = vmatprep.subr.mxu0 0.0
    %859 = vmatpush1.msra.mxu0 0.0
    %860 = vmatprep.subr.mxu0 0.0
    %861 = vmatpush1.msra.mxu0 0.0
    %862 = vmatprep.subr.mxu0 0.0
    %863 = vmatpush1.msra.mxu0 0.0
    %864 = vmatprep.subr.mxu0 0.0
    %865 = vmatpush1.msra.mxu0 0.0
    %866 = vmatprep.subr.mxu0 0.0
    %867 = vmatpush1.msra.mxu0 0.0
    %868 = vmatprep.subr.mxu0 0.0
    %869 = vmatpush1.msra.mxu0 0.0
    %870 = vmatprep.subr.mxu0 0.0
    %871 = vmatpush1.msra.mxu0 0.0
    %872 = vmatprep.subr.mxu0 0.0
    %873 = vmatpush1.msra.mxu0 0.0
    %874 = vmatprep.subr.mxu0 0.0
    %875 = vmatpush1.msra.mxu0 0.0
    %876 = vmatprep.subr.mxu0 0.0
    %877 = vmatpush1.msra.mxu0 0.0
    %878 = vmatprep.subr.mxu0 0.0
    %879 = vmatpush1.msra.mxu0 0.0
    %880 = vmatprep.subr.mxu0 0.0
    %881 = vmatpush1.msra.mxu0 0.0
    %882 = vmatprep.subr.mxu0 0.0
    %883 = vmatpush1.msra.mxu0 0.0
    %884 = vmatprep.subr.mxu0 0.0
    %885 = vmatpush1.msra.mxu0 0.0
    %886 = vmatprep.subr.mxu0 0.0
    %887 = vmatpush1.msra.mxu0 0.0
    %888 = vmatprep.subr.mxu0 0.0
    %889 = vmatpush1.msra.mxu0 0.0
    %890 = vmatprep.subr.mxu0 0.0
    %891 = vmatpush1.msra.mxu0 0.0
    %892 = vmatprep.subr.mxu0 0.0
    %893 = vmatpush1.msra.mxu0 0.0
    %894 = vmatprep.subr.mxu0 0.0
    %895 = vmatpush1.msra.mxu0 0.0
    %896 = vmatprep.subr.mxu0 0.0
    %897 = vmatpush1.msra.mxu0 0.0
    %898 = vmatprep.subr.mxu0 0.0
    %899 = vmatpush1.msra.mxu0 0.0
    %900 = vmatprep.subr.mxu0 0.0
    %901 = vmatpush1.msra.mxu0 0.0
    %902 = vmatprep.subr.mxu0 0.0
    %903 = vmatpush1.msra.mxu0 0.0
    %904 = vmatprep.subr.mxu0 0.0
    %905 = vmatpush1.msra.mxu0 0.0
    %906 = vmatprep.mubr.f32.mxu0 0.0
    %907 = vmatmul.mubr.f32.gmra.mrb[0].mxu0 %v737
    %v908 = vpop.f32.mrb[0].mxu0
    %v909 = vadd.f32 %v306, %v908
    %v910 = vpop.f32.mrb[0].mxu0
    %v911 = vadd.f32 %v308, %v910
    %912 = vdwg.mxu0
    %913 = vmatprep.subr.mxu0 %v749
    %914 = vmatpush1.msra.mxu0 %v747
    %915 = vmatprep.subr.mxu0 0.0
    %916 = vmatpush1.msra.mxu0 0.0
    %917 = vmatprep.subr.mxu0 0.0
    %918 = vmatpush1.msra.mxu0 0.0
    %919 = vmatprep.subr.mxu0 0.0
    %920 = vmatpush1.msra.mxu0 0.0
    %921 = vmatprep.subr.mxu0 0.0
    %922 = vmatpush1.msra.mxu0 0.0
    %923 = vmatprep.subr.mxu0 0.0
    %924 = vmatpush1.msra.mxu0 0.0
    %925 = vmatprep.subr.mxu0 0.0
    %926 = vmatpush1.msra.mxu0 0.0
    %927 = vmatprep.subr.mxu0 0.0
    %928 = vmatpush1.msra.mxu0 0.0
    %929 = vmatprep.subr.mxu0 0.0
    %930 = vmatpush1.msra.mxu0 0.0
    %931 = vmatprep.subr.mxu0 0.0
    %932 = vmatpush1.msra.mxu0 0.0
    %933 = vmatprep.subr.mxu0 0.0
    %934 = vmatpush1.msra.mxu0 0.0
    %935 = vmatprep.subr.mxu0 0.0
    %936 = vmatpush1.msra.mxu0 0.0
    %937 = vmatprep.subr.mxu0 0.0
    %938 = vmatpush1.msra.mxu0 0.0
    %939 = vmatprep.subr.mxu0 0.0
    %940 = vmatpush1.msra.mxu0 0.0
    %941 = vmatprep.subr.mxu0 0.0
    %942 = vmatpush1.msra.mxu0 0.0
    %943 = vmatprep.subr.mxu0 0.0
    %944 = vmatpush1.msra.mxu0 0.0
    %945 = vmatprep.subr.mxu0 0.0
    %946 = vmatpush1.msra.mxu0 0.0
    %947 = vmatprep.subr.mxu0 0.0
    %948 = vmatpush1.msra.mxu0 0.0
    %949 = vmatprep.subr.mxu0 0.0
    %950 = vmatpush1.msra.mxu0 0.0
    %951 = vmatprep.subr.mxu0 0.0
    %952 = vmatpush1.msra.mxu0 0.0
    %953 = vmatprep.subr.mxu0 0.0
    %954 = vmatpush1.msra.mxu0 0.0
    %955 = vmatprep.subr.mxu0 0.0
    %956 = vmatpush1.msra.mxu0 0.0
    %957 = vmatprep.subr.mxu0 0.0
    %958 = vmatpush1.msra.mxu0 0.0
    %959 = vmatprep.subr.mxu0 0.0
    %960 = vmatpush1.msra.mxu0 0.0
    %961 = vmatprep.subr.mxu0 0.0
    %962 = vmatpush1.msra.mxu0 0.0
    %963 = vmatprep.subr.mxu0 0.0
    %964 = vmatpush1.msra.mxu0 0.0
    %965 = vmatprep.subr.mxu0 0.0
    %966 = vmatpush1.msra.mxu0 0.0
    %967 = vmatprep.subr.mxu0 0.0
    %968 = vmatpush1.msra.mxu0 0.0
    %969 = vmatprep.subr.mxu0 0.0
    %970 = vmatpush1.msra.mxu0 0.0
    %971 = vmatprep.subr.mxu0 0.0
    %972 = vmatpush1.msra.mxu0 0.0
    %973 = vmatprep.subr.mxu0 0.0
    %974 = vmatpush1.msra.mxu0 0.0
    %975 = vmatprep.subr.mxu0 0.0
    %976 = vmatpush1.msra.mxu0 0.0
    %977 = vmatprep.mubr.f32.mxu0 0.0
    %978 = vmatmul.mubr.f32.gmra.mrb[0].mxu0 %v737
    %v979 = vpop.f32.mrb[0].mxu0
    %v980 = vadd.f32 %v377, %v979
    %v981 = vpop.f32.mrb[0].mxu0
    %v982 = vadd.f32 %v379, %v981
    %983 = vdwg.mxu0
    %984 = vmatprep.subr.mxu0 %v753
    %985 = vmatpush1.msra.mxu0 %v751
    %986 = vmatprep.subr.mxu0 0.0
    %987 = vmatpush1.msra.mxu0 0.0
    %988 = vmatprep.subr.mxu0 0.0
    %989 = vmatpush1.msra.mxu0 0.0
    %990 = vmatprep.subr.mxu0 0.0
    %991 = vmatpush1.msra.mxu0 0.0
    %992 = vmatprep.subr.mxu0 0.0
    %993 = vmatpush1.msra.mxu0 0.0
    %994 = vmatprep.subr.mxu0 0.0
    %995 = vmatpush1.msra.mxu0 0.0
    %996 = vmatprep.subr.mxu0 0.0
    %997 = vmatpush1.msra.mxu0 0.0
    %998 = vmatprep.subr.mxu0 0.0
    %999 = vmatpush1.msra.mxu0 0.0
    %1000 = vmatprep.subr.mxu0 0.0
    %1001 = vmatpush1.msra.mxu0 0.0
    %1002 = vmatprep.subr.mxu0 0.0
    %1003 = vmatpush1.msra.mxu0 0.0
    %1004 = vmatprep.subr.mxu0 0.0
    %1005 = vmatpush1.msra.mxu0 0.0
    %1006 = vmatprep.subr.mxu0 0.0
    %1007 = vmatpush1.msra.mxu0 0.0
    %1008 = vmatprep.subr.mxu0 0.0
    %1009 = vmatpush1.msra.mxu0 0.0
    %1010 = vmatprep.subr.mxu0 0.0
    %1011 = vmatpush1.msra.mxu0 0.0
    %1012 = vmatprep.subr.mxu0 0.0
    %1013 = vmatpush1.msra.mxu0 0.0
    %1014 = vmatprep.subr.mxu0 0.0
    %1015 = vmatpush1.msra.mxu0 0.0
    %1016 = vmatprep.subr.mxu0 0.0
    %1017 = vmatpush1.msra.mxu0 0.0
    %1018 = vmatprep.subr.mxu0 0.0
    %1019 = vmatpush1.msra.mxu0 0.0
    %1020 = vmatprep.subr.mxu0 0.0
    %1021 = vmatpush1.msra.mxu0 0.0
    %1022 = vmatprep.subr.mxu0 0.0
    %1023 = vmatpush1.msra.mxu0 0.0
    %1024 = vmatprep.subr.mxu0 0.0
    %1025 = vmatpush1.msra.mxu0 0.0
    %1026 = vmatprep.subr.mxu0 0.0
    %1027 = vmatpush1.msra.mxu0 0.0
    %1028 = vmatprep.subr.mxu0 0.0
    %1029 = vmatpush1.msra.mxu0 0.0
    %1030 = vmatprep.subr.mxu0 0.0
    %1031 = vmatpush1.msra.mxu0 0.0
    %1032 = vmatprep.subr.mxu0 0.0
    %1033 = vmatpush1.msra.mxu0 0.0
    %1034 = vmatprep.subr.mxu0 0.0
    %1035 = vmatpush1.msra.mxu0 0.0
    %1036 = vmatprep.subr.mxu0 0.0
    %1037 = vmatpush1.msra.mxu0 0.0
    %1038 = vmatprep.subr.mxu0 0.0
    %1039 = vmatpush1.msra.mxu0 0.0
    %1040 = vmatprep.subr.mxu0 0.0
    %1041 = vmatpush1.msra.mxu0 0.0
    %1042 = vmatprep.subr.mxu0 0.0
    %1043 = vmatpush1.msra.mxu0 0.0
    %1044 = vmatprep.subr.mxu0 0.0
    %1045 = vmatpush1.msra.mxu0 0.0
    %1046 = vmatprep.subr.mxu0 0.0
    %1047 = vmatpush1.msra.mxu0 0.0
    %1048 = vmatprep.mubr.f32.mxu0 0.0
    %1049 = vmatmul.mubr.f32.gmra.mrb[0].mxu0 %v737
    %v1050 = vpop.f32.mrb[0].mxu0
    %v1051 = vadd.f32 %v448, %v1050
    %v1052 = vpop.f32.mrb[0].mxu0
    %v1053 = vadd.f32 %v450, %v1052
    %1054 = vdwg.mxu0
    %1055 = vmatprep.subr.mxu0 %v757
    %1056 = vmatpush1.msra.mxu0 %v755
    %1057 = vmatprep.subr.mxu0 0.0
    %1058 = vmatpush1.msra.mxu0 0.0
    %1059 = vmatprep.subr.mxu0 0.0
    %1060 = vmatpush1.msra.mxu0 0.0
    %1061 = vmatprep.subr.mxu0 0.0
    %1062 = vmatpush1.msra.mxu0 0.0
    %1063 = vmatprep.subr.mxu0 0.0
    %1064 = vmatpush1.msra.mxu0 0.0
    %1065 = vmatprep.subr.mxu0 0.0
    %1066 = vmatpush1.msra.mxu0 0.0
    %1067 = vmatprep.subr.mxu0 0.0
    %1068 = vmatpush1.msra.mxu0 0.0
    %1069 = vmatprep.subr.mxu0 0.0
    %1070 = vmatpush1.msra.mxu0 0.0
    %1071 = vmatprep.subr.mxu0 0.0
    %1072 = vmatpush1.msra.mxu0 0.0
    %1073 = vmatprep.subr.mxu0 0.0
    %1074 = vmatpush1.msra.mxu0 0.0
    %1075 = vmatprep.subr.mxu0 0.0
    %1076 = vmatpush1.msra.mxu0 0.0
    %1077 = vmatprep.subr.mxu0 0.0
    %1078 = vmatpush1.msra.mxu0 0.0
    %1079 = vmatprep.subr.mxu0 0.0
    %1080 = vmatpush1.msra.mxu0 0.0
    %1081 = vmatprep.subr.mxu0 0.0
    %1082 = vmatpush1.msra.mxu0 0.0
    %1083 = vmatprep.subr.mxu0 0.0
    %1084 = vmatpush1.msra.mxu0 0.0
    %1085 = vmatprep.subr.mxu0 0.0
    %1086 = vmatpush1.msra.mxu0 0.0
    %1087 = vmatprep.subr.mxu0 0.0
    %1088 = vmatpush1.msra.mxu0 0.0
    %1089 = vmatprep.subr.mxu0 0.0
    %1090 = vmatpush1.msra.mxu0 0.0
    %1091 = vmatprep.subr.mxu0 0.0
    %1092 = vmatpush1.msra.mxu0 0.0
    %1093 = vmatprep.subr.mxu0 0.0
    %1094 = vmatpush1.msra.mxu0 0.0
    %1095 = vmatprep.subr.mxu0 0.0
    %1096 = vmatpush1.msra.mxu0 0.0
    %1097 = vmatprep.subr.mxu0 0.0
    %1098 = vmatpush1.msra.mxu0 0.0
    %1099 = vmatprep.subr.mxu0 0.0
    %1100 = vmatpush1.msra.mxu0 0.0
    %1101 = vmatprep.subr.mxu0 0.0
    %1102 = vmatpush1.msra.mxu0 0.0
    %1103 = vmatprep.subr.mxu0 0.0
    %1104 = vmatpush1.msra.mxu0 0.0
    %1105 = vmatprep.subr.mxu0 0.0
    %1106 = vmatpush1.msra.mxu0 0.0
    %1107 = vmatprep.subr.mxu0 0.0
    %1108 = vmatpush1.msra.mxu0 0.0
    %1109 = vmatprep.subr.mxu0 0.0
    %1110 = vmatpush1.msra.mxu0 0.0
    %1111 = vmatprep.subr.mxu0 0.0
    %1112 = vmatpush1.msra.mxu0 0.0
    %1113 = vmatprep.subr.mxu0 0.0
    %1114 = vmatpush1.msra.mxu0 0.0
    %1115 = vmatprep.subr.mxu0 0.0
    %1116 = vmatpush1.msra.mxu0 0.0
    %1117 = vmatprep.subr.mxu0 0.0
    %1118 = vmatpush1.msra.mxu0 0.0
    %1119 = vmatprep.mubr.f32.mxu0 0.0
    %1120 = vmatmul.mubr.f32.gmra.mrb[0].mxu0 %v737
    %v1121 = vpop.f32.mrb[0].mxu0
    %v1122 = vadd.f32 %v519, %v1121
    %v1123 = vpop.f32.mrb[0].mxu0
    %v1124 = vadd.f32 %v521, %v1123
    %1125 = vdwg.mxu0
    %1126 = vmatprep.subr.mxu0 %v761
    %1127 = vmatpush1.msra.mxu0 %v759
    %1128 = vmatprep.subr.mxu0 0.0
    %1129 = vmatpush1.msra.mxu0 0.0
    %1130 = vmatprep.subr.mxu0 0.0
    %1131 = vmatpush1.msra.mxu0 0.0
    %1132 = vmatprep.subr.mxu0 0.0
    %1133 = vmatpush1.msra.mxu0 0.0
    %1134 = vmatprep.subr.mxu0 0.0
    %1135 = vmatpush1.msra.mxu0 0.0
    %1136 = vmatprep.subr.mxu0 0.0
    %1137 = vmatpush1.msra.mxu0 0.0
    %1138 = vmatprep.subr.mxu0 0.0
    %1139 = vmatpush1.msra.mxu0 0.0
    %1140 = vmatprep.subr.mxu0 0.0
    %1141 = vmatpush1.msra.mxu0 0.0
    %1142 = vmatprep.subr.mxu0 0.0
    %1143 = vmatpush1.msra.mxu0 0.0
    %1144 = vmatprep.subr.mxu0 0.0
    %1145 = vmatpush1.msra.mxu0 0.0
    %1146 = vmatprep.subr.mxu0 0.0
    %1147 = vmatpush1.msra.mxu0 0.0
    %1148 = vmatprep.subr.mxu0 0.0
    %1149 = vmatpush1.msra.mxu0 0.0
    %1150 = vmatprep.subr.mxu0 0.0
    %1151 = vmatpush1.msra.mxu0 0.0
    %1152 = vmatprep.subr.mxu0 0.0
    %1153 = vmatpush1.msra.mxu0 0.0
    %1154 = vmatprep.subr.mxu0 0.0
    %1155 = vmatpush1.msra.mxu0 0.0
    %1156 = vmatprep.subr.mxu0 0.0
    %1157 = vmatpush1.msra.mxu0 0.0
    %1158 = vmatprep.subr.mxu0 0.0
    %1159 = vmatpush1.msra.mxu0 0.0
    %1160 = vmatprep.subr.mxu0 0.0
    %1161 = vmatpush1.msra.mxu0 0.0
    %1162 = vmatprep.subr.mxu0 0.0
    %1163 = vmatpush1.msra.mxu0 0.0
    %1164 = vmatprep.subr.mxu0 0.0
    %1165 = vmatpush1.msra.mxu0 0.0
    %1166 = vmatprep.subr.mxu0 0.0
    %1167 = vmatpush1.msra.mxu0 0.0
    %1168 = vmatprep.subr.mxu0 0.0
    %1169 = vmatpush1.msra.mxu0 0.0
    %1170 = vmatprep.subr.mxu0 0.0
    %1171 = vmatpush1.msra.mxu0 0.0
    %1172 = vmatprep.subr.mxu0 0.0
    %1173 = vmatpush1.msra.mxu0 0.0
    %1174 = vmatprep.subr.mxu0 0.0
    %1175 = vmatpush1.msra.mxu0 0.0
    %1176 = vmatprep.subr.mxu0 0.0
    %1177 = vmatpush1.msra.mxu0 0.0
    %1178 = vmatprep.subr.mxu0 0.0
    %1179 = vmatpush1.msra.mxu0 0.0
    %1180 = vmatprep.subr.mxu0 0.0
    %1181 = vmatpush1.msra.mxu0 0.0
    %1182 = vmatprep.subr.mxu0 0.0
    %1183 = vmatpush1.msra.mxu0 0.0
    %1184 = vmatprep.subr.mxu0 0.0
    %1185 = vmatpush1.msra.mxu0 0.0
    %1186 = vmatprep.subr.mxu0 0.0
    %1187 = vmatpush1.msra.mxu0 0.0
    %1188 = vmatprep.subr.mxu0 0.0
    %1189 = vmatpush1.msra.mxu0 0.0
    %1190 = vmatprep.mubr.f32.mxu0 0.0
    %1191 = vmatmul.mubr.f32.gmra.mrb[0].mxu0 %v737
    %v1192 = vpop.f32.mrb[0].mxu0
    %v1193 = vadd.f32 %v590, %v1192
    %v1194 = vpop.f32.mrb[0].mxu0
    %v1195 = vadd.f32 %v592, %v1194
    %1196 = vdwg.mxu0
    %1197 = vmatprep.subr.mxu0 %v765
    %1198 = vmatpush1.msra.mxu0 %v763
    %1199 = vmatprep.subr.mxu0 0.0
    %1200 = vmatpush1.msra.mxu0 0.0
    %1201 = vmatprep.subr.mxu0 0.0
    %1202 = vmatpush1.msra.mxu0 0.0
    %1203 = vmatprep.subr.mxu0 0.0
    %1204 = vmatpush1.msra.mxu0 0.0
    %1205 = vmatprep.subr.mxu0 0.0
    %1206 = vmatpush1.msra.mxu0 0.0
    %1207 = vmatprep.subr.mxu0 0.0
    %1208 = vmatpush1.msra.mxu0 0.0
    %1209 = vmatprep.subr.mxu0 0.0
    %1210 = vmatpush1.msra.mxu0 0.0
    %1211 = vmatprep.subr.mxu0 0.0
    %1212 = vmatpush1.msra.mxu0 0.0
    %1213 = vmatprep.subr.mxu0 0.0
    %1214 = vmatpush1.msra.mxu0 0.0
    %1215 = vmatprep.subr.mxu0 0.0
    %1216 = vmatpush1.msra.mxu0 0.0
    %1217 = vmatprep.subr.mxu0 0.0
    %1218 = vmatpush1.msra.mxu0 0.0
    %1219 = vmatprep.subr.mxu0 0.0
    %1220 = vmatpush1.msra.mxu0 0.0
    %1221 = vmatprep.subr.mxu0 0.0
    %1222 = vmatpush1.msra.mxu0 0.0
    %1223 = vmatprep.subr.mxu0 0.0
    %1224 = vmatpush1.msra.mxu0 0.0
    %1225 = vmatprep.subr.mxu0 0.0
    %1226 = vmatpush1.msra.mxu0 0.0
    %1227 = vmatprep.subr.mxu0 0.0
    %1228 = vmatpush1.msra.mxu0 0.0
    %1229 = vmatprep.subr.mxu0 0.0
    %1230 = vmatpush1.msra.mxu0 0.0
    %1231 = vmatprep.subr.mxu0 0.0
    %1232 = vmatpush1.msra.mxu0 0.0
    %1233 = vmatprep.subr.mxu0 0.0
    %1234 = vmatpush1.msra.mxu0 0.0
    %1235 = vmatprep.subr.mxu0 0.0
    %1236 = vmatpush1.msra.mxu0 0.0
    %1237 = vmatprep.subr.mxu0 0.0
    %1238 = vmatpush1.msra.mxu0 0.0
    %1239 = vmatprep.subr.mxu0 0.0
    %1240 = vmatpush1.msra.mxu0 0.0
    %1241 = vmatprep.subr.mxu0 0.0
    %1242 = vmatpush1.msra.mxu0 0.0
    %1243 = vmatprep.subr.mxu0 0.0
    %1244 = vmatpush1.msra.mxu0 0.0
    %1245 = vmatprep.subr.mxu0 0.0
    %1246 = vmatpush1.msra.mxu0 0.0
    %1247 = vmatprep.subr.mxu0 0.0
    %1248 = vmatpush1.msra.mxu0 0.0
    %1249 = vmatprep.subr.mxu0 0.0
    %1250 = vmatpush1.msra.mxu0 0.0
    %1251 = vmatprep.subr.mxu0 0.0
    %1252 = vmatpush1.msra.mxu0 0.0
    %1253 = vmatprep.subr.mxu0 0.0
    %1254 = vmatpush1.msra.mxu0 0.0
    %1255 = vmatprep.subr.mxu0 0.0
    %1256 = vmatpush1.msra.mxu0 0.0
    %1257 = vmatprep.subr.mxu0 0.0
    %1258 = vmatpush1.msra.mxu0 0.0
    %1259 = vmatprep.subr.mxu0 0.0
    %1260 = vmatpush1.msra.mxu0 0.0
    %1261 = vmatprep.mubr.f32.mxu0 0.0
    %1262 = vmatmul.mubr.f32.gmra.mrb[0].mxu0 %v737
    %v1263 = vpop.f32.mrb[0].mxu0
    %v1264 = vadd.f32 %v661, %v1263
    %v1265 = vpop.f32.mrb[0].mxu0
    %v1266 = vadd.f32 %v663, %v1265
    %1267 = vdwg.mxu0
    %1268 = vmatprep.subr.mxu0 %v769
    %1269 = vmatpush1.msra.mxu0 %v767
    %1270 = vmatprep.subr.mxu0 0.0
    %1271 = vmatpush1.msra.mxu0 0.0
    %1272 = vmatprep.subr.mxu0 0.0
    %1273 = vmatpush1.msra.mxu0 0.0
    %1274 = vmatprep.subr.mxu0 0.0
    %1275 = vmatpush1.msra.mxu0 0.0
    %1276 = vmatprep.subr.mxu0 0.0
    %1277 = vmatpush1.msra.mxu0 0.0
    %1278 = vmatprep.subr.mxu0 0.0
    %1279 = vmatpush1.msra.mxu0 0.0
    %1280 = vmatprep.subr.mxu0 0.0
    %1281 = vmatpush1.msra.mxu0 0.0
    %1282 = vmatprep.subr.mxu0 0.0
    %1283 = vmatpush1.msra.mxu0 0.0
    %1284 = vmatprep.subr.mxu0 0.0
    %1285 = vmatpush1.msra.mxu0 0.0
    %1286 = vmatprep.subr.mxu0 0.0
    %1287 = vmatpush1.msra.mxu0 0.0
    %1288 = vmatprep.subr.mxu0 0.0
    %1289 = vmatpush1.msra.mxu0 0.0
    %1290 = vmatprep.subr.mxu0 0.0
    %1291 = vmatpush1.msra.mxu0 0.0
    %1292 = vmatprep.subr.mxu0 0.0
    %1293 = vmatpush1.msra.mxu0 0.0
    %1294 = vmatprep.subr.mxu0 0.0
    %1295 = vmatpush1.msra.mxu0 0.0
    %1296 = vmatprep.subr.mxu0 0.0
    %1297 = vmatpush1.msra.mxu0 0.0
    %1298 = vmatprep.subr.mxu0 0.0
    %1299 = vmatpush1.msra.mxu0 0.0
    %1300 = vmatprep.subr.mxu0 0.0
    %1301 = vmatpush1.msra.mxu0 0.0
    %1302 = vmatprep.subr.mxu0 0.0
    %1303 = vmatpush1.msra.mxu0 0.0
    %1304 = vmatprep.subr.mxu0 0.0
    %1305 = vmatpush1.msra.mxu0 0.0
    %1306 = vmatprep.subr.mxu0 0.0
    %1307 = vmatpush1.msra.mxu0 0.0
    %1308 = vmatprep.subr.mxu0 0.0
    %1309 = vmatpush1.msra.mxu0 0.0
    %1310 = vmatprep.subr.mxu0 0.0
    %1311 = vmatpush1.msra.mxu0 0.0
    %1312 = vmatprep.subr.mxu0 0.0
    %1313 = vmatpush1.msra.mxu0 0.0
    %1314 = vmatprep.subr.mxu0 0.0
    %1315 = vmatpush1.msra.mxu0 0.0
    %1316 = vmatprep.subr.mxu0 0.0
    %1317 = vmatpush1.msra.mxu0 0.0
    %1318 = vmatprep.subr.mxu0 0.0
    %1319 = vmatpush1.msra.mxu0 0.0
    %1320 = vmatprep.subr.mxu0 0.0
    %1321 = vmatpush1.msra.mxu0 0.0
    %1322 = vmatprep.subr.mxu0 0.0
    %1323 = vmatpush1.msra.mxu0 0.0
    %1324 = vmatprep.subr.mxu0 0.0
    %1325 = vmatpush1.msra.mxu0 0.0
    %1326 = vmatprep.subr.mxu0 0.0
    %1327 = vmatpush1.msra.mxu0 0.0
    %1328 = vmatprep.subr.mxu0 0.0
    %1329 = vmatpush1.msra.mxu0 0.0
    %1330 = vmatprep.subr.mxu0 0.0
    %1331 = vmatpush1.msra.mxu0 0.0
    %1332 = vmatprep.mubr.f32.mxu0 0.0
    %1333 = vmatmul.mubr.f32.gmra.mrb[0].mxu0 %v737
    %v1334 = vpop.f32.mrb[0].mxu0
    %v1335 = vadd.f32 %v732, %v1334
    %v1336 = vpop.f32.mrb[0].mxu0
    %v1337 = vadd.f32 %v734, %v1336
    %1338 = vdwg.mxu0
    %v1339 = vld [vmem:[%s0] sm:$0xff]
    %v1340 = vld [vmem:[%s0 + $0x8] sm:$0xff]
    %v1341 = vld [vmem:[%s0 + $0x10] sm:$0xff]
    %v1342 = vld [vmem:[%s0 + $0x18] sm:$0xff]
    %v1343 = vld [vmem:[%s0 + $0x20] sm:$0xff]
    %v1344 = vld [vmem:[%s0 + $0x28] sm:$0xff]
    %v1345 = vld [vmem:[%s0 + $0x30] sm:$0xff]
    %v1346 = vld [vmem:[%s0 + $0x38] sm:$0xff]
    %v1347 = vld [vmem:[%s0 + $0x40] sm:$0xf]
    %v1357 = vcombine.high %v1339, %v1339
    %v1358 = vcombine.high %v1340, %v1340
    %v1359 = vcombine.high %v1341, %v1341
    %v1360 = vcombine.high %v1342, %v1342
    %v1361 = vcombine.high %v1343, %v1343
    %v1362 = vcombine.high %v1344, %v1344
    %v1363 = vcombine.high %v1345, %v1345
    %v1364 = vcombine.high %v1346, %v1346
    %1365 = vrot.lane.b32.xlu0 %v1339, 126
    %v1366 = vpop.permute.xlu0 %1365
    %1367 = vrot.lane.b32.xlu0 %v1357, 126
    %v1368 = vpop.permute.xlu0 %1367
    %1369 = vrot.lane.b32.xlu0 %v1340, 126
    %v1370 = vpop.permute.xlu0 %1369
    %1371 = vrot.lane.b32.xlu0 %v1358, 126
    %v1372 = vpop.permute.xlu0 %1371
    %1373 = vrot.lane.b32.xlu0 %v1341, 126
    %v1374 = vpop.permute.xlu0 %1373
    %1375 = vrot.lane.b32.xlu0 %v1359, 126
    %v1376 = vpop.permute.xlu0 %1375
    %1377 = vrot.lane.b32.xlu0 %v1342, 126
    %v1378 = vpop.permute.xlu0 %1377
    %1379 = vrot.lane.b32.xlu0 %v1360, 126
    %v1380 = vpop.permute.xlu0 %1379
    %1381 = vrot.lane.b32.xlu0 %v1343, 126
    %v1382 = vpop.permute.xlu0 %1381
    %1383 = vrot.lane.b32.xlu0 %v1361, 126
    %v1384 = vpop.permute.xlu0 %1383
    %1385 = vrot.lane.b32.xlu0 %v1344, 126
    %v1386 = vpop.permute.xlu0 %1385
    %1387 = vrot.lane.b32.xlu0 %v1362, 126
    %v1388 = vpop.permute.xlu0 %1387
    %1389 = vrot.lane.b32.xlu0 %v1345, 126
    %v1390 = vpop.permute.xlu0 %1389
    %1391 = vrot.lane.b32.xlu0 %v1363, 126
    %v1392 = vpop.permute.xlu0 %1391
    %1393 = vrot.lane.b32.xlu0 %v1346, 126
    %v1394 = vpop.permute.xlu0 %1393
    %1395 = vrot.lane.b32.xlu0 %v1364, 126
    %v1396 = vpop.permute.xlu0 %1395
    %1397 = vrot.lane.b32.xlu0 %v1347, 126
    %v1398 = vpop.permute.xlu0 %1397
    %vm1399 = vcmask 1031168
    %v1400 = vsel %vm1399, %v1366, %v1368
    %v1401 = vsel %vm1399, %v1368, %v1370
    %v1402 = vsel %vm1399, %v1370, %v1372
    %v1403 = vsel %vm1399, %v1372, %v1374
    %v1404 = vsel %vm1399, %v1374, %v1376
    %v1405 = vsel %vm1399, %v1376, %v1378
    %v1406 = vsel %vm1399, %v1378, %v1380
    %v1407 = vsel %vm1399, %v1380, %v1382
    %v1408 = vsel %vm1399, %v1382, %v1384
    %v1409 = vsel %vm1399, %v1384, %v1386
    %v1410 = vsel %vm1399, %v1386, %v1388
    %v1411 = vsel %vm1399, %v1388, %v1390
    %v1412 = vsel %vm1399, %v1390, %v1392
    %v1413 = vsel %vm1399, %v1392, %v1394
    %v1414 = vsel %vm1399, %v1394, %v1396
    %v1415 = vsel %vm1399, %v1396, %v1398
    %v1417 = vsel %vm131, %v40, 0
    %v1419 = vsel %vm135, %v1400, 0
    %v1421 = vsel %vm135, %v1401, 0
    %v1423 = vsel %vm135, %v1402, 0
    %v1425 = vsel %vm135, %v1403, 0
    %v1427 = vsel %vm135, %v1404, 0
    %v1429 = vsel %vm135, %v1405, 0
    %v1431 = vsel %vm135, %v1406, 0
    %v1433 = vsel %vm135, %v1407, 0
    %v1435 = vsel %vm135, %v1408, 0
    %v1437 = vsel %vm135, %v1409, 0
    %v1439 = vsel %vm135, %v1410, 0
    %v1441 = vsel %vm135, %v1411, 0
    %v1443 = vsel %vm135, %v1412, 0
    %v1445 = vsel %vm135, %v1413, 0
    %v1447 = vsel %vm135, %v1414, 0
    %v1449 = vsel %vm135, %v1415, 0
    %1451 = vmatprep.subr.mxu0 %v1421
    %1452 = vmatpush1.msra.mxu0 %v1419
    %1453 = vmatprep.subr.mxu0 0.0
    %1454 = vmatpush1.msra.mxu0 0.0
    %1455 = vmatprep.subr.mxu0 0.0
    %1456 = vmatpush1.msra.mxu0 0.0
    %1457 = vmatprep.subr.mxu0 0.0
    %1458 = vmatpush1.msra.mxu0 0.0
    %1459 = vmatprep.subr.mxu0 0.0
    %1460 = vmatpush1.msra.mxu0 0.0
    %1461 = vmatprep.subr.mxu0 0.0
    %1462 = vmatpush1.msra.mxu0 0.0
    %1463 = vmatprep.subr.mxu0 0.0
    %1464 = vmatpush1.msra.mxu0 0.0
    %1465 = vmatprep.subr.mxu0 0.0
    %1466 = vmatpush1.msra.mxu0 0.0
    %1467 = vmatprep.subr.mxu0 0.0
    %1468 = vmatpush1.msra.mxu0 0.0
    %1469 = vmatprep.subr.mxu0 0.0
    %1470 = vmatpush1.msra.mxu0 0.0
    %1471 = vmatprep.subr.mxu0 0.0
    %1472 = vmatpush1.msra.mxu0 0.0
    %1473 = vmatprep.subr.mxu0 0.0
    %1474 = vmatpush1.msra.mxu0 0.0
    %1475 = vmatprep.subr.mxu0 0.0
    %1476 = vmatpush1.msra.mxu0 0.0
    %1477 = vmatprep.subr.mxu0 0.0
    %1478 = vmatpush1.msra.mxu0 0.0
    %1479 = vmatprep.subr.mxu0 0.0
    %1480 = vmatpush1.msra.mxu0 0.0
    %1481 = vmatprep.subr.mxu0 0.0
    %1482 = vmatpush1.msra.mxu0 0.0
    %1483 = vmatprep.subr.mxu0 0.0
    %1484 = vmatpush1.msra.mxu0 0.0
    %1485 = vmatprep.subr.mxu0 0.0
    %1486 = vmatpush1.msra.mxu0 0.0
    %1487 = vmatprep.subr.mxu0 0.0
    %1488 = vmatpush1.msra.mxu0 0.0
    %1489 = vmatprep.subr.mxu0 0.0
    %1490 = vmatpush1.msra.mxu0 0.0
    %1491 = vmatprep.subr.mxu0 0.0
    %1492 = vmatpush1.msra.mxu0 0.0
    %1493 = vmatprep.subr.mxu0 0.0
    %1494 = vmatpush1.msra.mxu0 0.0
    %1495 = vmatprep.subr.mxu0 0.0
    %1496 = vmatpush1.msra.mxu0 0.0
    %1497 = vmatprep.subr.mxu0 0.0
    %1498 = vmatpush1.msra.mxu0 0.0
    %1499 = vmatprep.subr.mxu0 0.0
    %1500 = vmatpush1.msra.mxu0 0.0
    %1501 = vmatprep.subr.mxu0 0.0
    %1502 = vmatpush1.msra.mxu0 0.0
    %1503 = vmatprep.subr.mxu0 0.0
    %1504 = vmatpush1.msra.mxu0 0.0
    %1505 = vmatprep.subr.mxu0 0.0
    %1506 = vmatpush1.msra.mxu0 0.0
    %1507 = vmatprep.subr.mxu0 0.0
    %1508 = vmatpush1.msra.mxu0 0.0
    %1509 = vmatprep.subr.mxu0 0.0
    %1510 = vmatpush1.msra.mxu0 0.0
    %1511 = vmatprep.subr.mxu0 0.0
    %1512 = vmatpush1.msra.mxu0 0.0
    %1513 = vmatprep.subr.mxu0 0.0
    %1514 = vmatpush1.msra.mxu0 0.0
    %1515 = vmatprep.mubr.f32.mxu0 0.0
    %1516 = vmatmul.mubr.f32.gmra.mrb[0].mxu0 %v1417
    %v1517 = vpop.f32.mrb[0].mxu0
    %v1518 = vadd.f32 0.0, %v1517
    %v1519 = vpop.f32.mrb[0].mxu0
    %v1520 = vadd.f32 0.0, %v1519
    %1521 = vdwg.mxu0
    %1522 = vmatprep.subr.mxu0 %v1425
    %1523 = vmatpush1.msra.mxu0 %v1423
    %1524 = vmatprep.subr.mxu0 0.0
    %1525 = vmatpush1.msra.mxu0 0.0
    %1526 = vmatprep.subr.mxu0 0.0
    %1527 = vmatpush1.msra.mxu0 0.0
    %1528 = vmatprep.subr.mxu0 0.0
    %1529 = vmatpush1.msra.mxu0 0.0
    %1530 = vmatprep.subr.mxu0 0.0
    %1531 = vmatpush1.msra.mxu0 0.0
    %1532 = vmatprep.subr.mxu0 0.0
    %1533 = vmatpush1.msra.mxu0 0.0
    %1534 = vmatprep.subr.mxu0 0.0
    %1535 = vmatpush1.msra.mxu0 0.0
    %1536 = vmatprep.subr.mxu0 0.0
    %1537 = vmatpush1.msra.mxu0 0.0
    %1538 = vmatprep.subr.mxu0 0.0
    %1539 = vmatpush1.msra.mxu0 0.0
    %1540 = vmatprep.subr.mxu0 0.0
    %1541 = vmatpush1.msra.mxu0 0.0
    %1542 = vmatprep.subr.mxu0 0.0
    %1543 = vmatpush1.msra.mxu0 0.0
    %1544 = vmatprep.subr.mxu0 0.0
    %1545 = vmatpush1.msra.mxu0 0.0
    %1546 = vmatprep.subr.mxu0 0.0
    %1547 = vmatpush1.msra.mxu0 0.0
    %1548 = vmatprep.subr.mxu0 0.0
    %1549 = vmatpush1.msra.mxu0 0.0
    %1550 = vmatprep.subr.mxu0 0.0
    %1551 = vmatpush1.msra.mxu0 0.0
    %1552 = vmatprep.subr.mxu0 0.0
    %1553 = vmatpush1.msra.mxu0 0.0
    %1554 = vmatprep.subr.mxu0 0.0
    %1555 = vmatpush1.msra.mxu0 0.0
    %1556 = vmatprep.subr.mxu0 0.0
    %1557 = vmatpush1.msra.mxu0 0.0
    %1558 = vmatprep.subr.mxu0 0.0
    %1559 = vmatpush1.msra.mxu0 0.0
    %1560 = vmatprep.subr.mxu0 0.0
    %1561 = vmatpush1.msra.mxu0 0.0
    %1562 = vmatprep.subr.mxu0 0.0
    %1563 = vmatpush1.msra.mxu0 0.0
    %1564 = vmatprep.subr.mxu0 0.0
    %1565 = vmatpush1.msra.mxu0 0.0
    %1566 = vmatprep.subr.mxu0 0.0
    %1567 = vmatpush1.msra.mxu0 0.0
    %1568 = vmatprep.subr.mxu0 0.0
    %1569 = vmatpush1.msra.mxu0 0.0
    %1570 = vmatprep.subr.mxu0 0.0
    %1571 = vmatpush1.msra.mxu0 0.0
    %1572 = vmatprep.subr.mxu0 0.0
    %1573 = vmatpush1.msra.mxu0 0.0
    %1574 = vmatprep.subr.mxu0 0.0
    %1575 = vmatpush1.msra.mxu0 0.0
    %1576 = vmatprep.subr.mxu0 0.0
    %1577 = vmatpush1.msra.mxu0 0.0
    %1578 = vmatprep.subr.mxu0 0.0
    %1579 = vmatpush1.msra.mxu0 0.0
    %1580 = vmatprep.subr.mxu0 0.0
    %1581 = vmatpush1.msra.mxu0 0.0
    %1582 = vmatprep.subr.mxu0 0.0
    %1583 = vmatpush1.msra.mxu0 0.0
    %1584 = vmatprep.subr.mxu0 0.0
    %1585 = vmatpush1.msra.mxu0 0.0
    %1586 = vmatprep.mubr.f32.mxu0 0.0
    %1587 = vmatmul.mubr.f32.gmra.mrb[0].mxu0 %v1417
    %v1588 = vpop.f32.mrb[0].mxu0
    %v1589 = vadd.f32 0.0, %v1588
    %v1590 = vpop.f32.mrb[0].mxu0
    %v1591 = vadd.f32 0.0, %v1590
    %1592 = vdwg.mxu0
    %1593 = vmatprep.subr.mxu0 %v1429
    %1594 = vmatpush1.msra.mxu0 %v1427
    %1595 = vmatprep.subr.mxu0 0.0
    %1596 = vmatpush1.msra.mxu0 0.0
    %1597 = vmatprep.subr.mxu0 0.0
    %1598 = vmatpush1.msra.mxu0 0.0
    %1599 = vmatprep.subr.mxu0 0.0
    %1600 = vmatpush1.msra.mxu0 0.0
    %1601 = vmatprep.subr.mxu0 0.0
    %1602 = vmatpush1.msra.mxu0 0.0
    %1603 = vmatprep.subr.mxu0 0.0
    %1604 = vmatpush1.msra.mxu0 0.0
    %1605 = vmatprep.subr.mxu0 0.0
    %1606 = vmatpush1.msra.mxu0 0.0
    %1607 = vmatprep.subr.mxu0 0.0
    %1608 = vmatpush1.msra.mxu0 0.0
    %1609 = vmatprep.subr.mxu0 0.0
    %1610 = vmatpush1.msra.mxu0 0.0
    %1611 = vmatprep.subr.mxu0 0.0
    %1612 = vmatpush1.msra.mxu0 0.0
    %1613 = vmatprep.subr.mxu0 0.0
    %1614 = vmatpush1.msra.mxu0 0.0
    %1615 = vmatprep.subr.mxu0 0.0
    %1616 = vmatpush1.msra.mxu0 0.0
    %1617 = vmatprep.subr.mxu0 0.0
    %1618 = vmatpush1.msra.mxu0 0.0
    %1619 = vmatprep.subr.mxu0 0.0
    %1620 = vmatpush1.msra.mxu0 0.0
    %1621 = vmatprep.subr.mxu0 0.0
    %1622 = vmatpush1.msra.mxu0 0.0
    %1623 = vmatprep.subr.mxu0 0.0
    %1624 = vmatpush1.msra.mxu0 0.0
    %1625 = vmatprep.subr.mxu0 0.0
    %1626 = vmatpush1.msra.mxu0 0.0
    %1627 = vmatprep.subr.mxu0 0.0
    %1628 = vmatpush1.msra.mxu0 0.0
    %1629 = vmatprep.subr.mxu0 0.0
    %1630 = vmatpush1.msra.mxu0 0.0
    %1631 = vmatprep.subr.mxu0 0.0
    %1632 = vmatpush1.msra.mxu0 0.0
    %1633 = vmatprep.subr.mxu0 0.0
    %1634 = vmatpush1.msra.mxu0 0.0
    %1635 = vmatprep.subr.mxu0 0.0
    %1636 = vmatpush1.msra.mxu0 0.0
    %1637 = vmatprep.subr.mxu0 0.0
    %1638 = vmatpush1.msra.mxu0 0.0
    %1639 = vmatprep.subr.mxu0 0.0
    %1640 = vmatpush1.msra.mxu0 0.0
    %1641 = vmatprep.subr.mxu0 0.0
    %1642 = vmatpush1.msra.mxu0 0.0
    %1643 = vmatprep.subr.mxu0 0.0
    %1644 = vmatpush1.msra.mxu0 0.0
    %1645 = vmatprep.subr.mxu0 0.0
    %1646 = vmatpush1.msra.mxu0 0.0
    %1647 = vmatprep.subr.mxu0 0.0
    %1648 = vmatpush1.msra.mxu0 0.0
    %1649 = vmatprep.subr.mxu0 0.0
    %1650 = vmatpush1.msra.mxu0 0.0
    %1651 = vmatprep.subr.mxu0 0.0
    %1652 = vmatpush1.msra.mxu0 0.0
    %1653 = vmatprep.subr.mxu0 0.0
    %1654 = vmatpush1.msra.mxu0 0.0
    %1655 = vmatprep.subr.mxu0 0.0
    %1656 = vmatpush1.msra.mxu0 0.0
    %1657 = vmatprep.mubr.f32.mxu0 0.0
    %1658 = vmatmul.mubr.f32.gmra.mrb[0].mxu0 %v1417
    %v1659 = vpop.f32.mrb[0].mxu0
    %v1660 = vadd.f32 0.0, %v1659
    %v1661 = vpop.f32.mrb[0].mxu0
    %v1662 = vadd.f32 0.0, %v1661
    %1663 = vdwg.mxu0
    %1664 = vmatprep.subr.mxu0 %v1433
    %1665 = vmatpush1.msra.mxu0 %v1431
    %1666 = vmatprep.subr.mxu0 0.0
    %1667 = vmatpush1.msra.mxu0 0.0
    %1668 = vmatprep.subr.mxu0 0.0
    %1669 = vmatpush1.msra.mxu0 0.0
    %1670 = vmatprep.subr.mxu0 0.0
    %1671 = vmatpush1.msra.mxu0 0.0
    %1672 = vmatprep.subr.mxu0 0.0
    %1673 = vmatpush1.msra.mxu0 0.0
    %1674 = vmatprep.subr.mxu0 0.0
    %1675 = vmatpush1.msra.mxu0 0.0
    %1676 = vmatprep.subr.mxu0 0.0
    %1677 = vmatpush1.msra.mxu0 0.0
    %1678 = vmatprep.subr.mxu0 0.0
    %1679 = vmatpush1.msra.mxu0 0.0
    %1680 = vmatprep.subr.mxu0 0.0
    %1681 = vmatpush1.msra.mxu0 0.0
    %1682 = vmatprep.subr.mxu0 0.0
    %1683 = vmatpush1.msra.mxu0 0.0
    %1684 = vmatprep.subr.mxu0 0.0
    %1685 = vmatpush1.msra.mxu0 0.0
    %1686 = vmatprep.subr.mxu0 0.0
    %1687 = vmatpush1.msra.mxu0 0.0
    %1688 = vmatprep.subr.mxu0 0.0
    %1689 = vmatpush1.msra.mxu0 0.0
    %1690 = vmatprep.subr.mxu0 0.0
    %1691 = vmatpush1.msra.mxu0 0.0
    %1692 = vmatprep.subr.mxu0 0.0
    %1693 = vmatpush1.msra.mxu0 0.0
    %1694 = vmatprep.subr.mxu0 0.0
    %1695 = vmatpush1.msra.mxu0 0.0
    %1696 = vmatprep.subr.mxu0 0.0
    %1697 = vmatpush1.msra.mxu0 0.0
    %1698 = vmatprep.subr.mxu0 0.0
    %1699 = vmatpush1.msra.mxu0 0.0
    %1700 = vmatprep.subr.mxu0 0.0
    %1701 = vmatpush1.msra.mxu0 0.0
    %1702 = vmatprep.subr.mxu0 0.0
    %1703 = vmatpush1.msra.mxu0 0.0
    %1704 = vmatprep.subr.mxu0 0.0
    %1705 = vmatpush1.msra.mxu0 0.0
    %1706 = vmatprep.subr.mxu0 0.0
    %1707 = vmatpush1.msra.mxu0 0.0
    %1708 = vmatprep.subr.mxu0 0.0
    %1709 = vmatpush1.msra.mxu0 0.0
    %1710 = vmatprep.subr.mxu0 0.0
    %1711 = vmatpush1.msra.mxu0 0.0
    %1712 = vmatprep.subr.mxu0 0.0
    %1713 = vmatpush1.msra.mxu0 0.0
    %1714 = vmatprep.subr.mxu0 0.0
    %1715 = vmatpush1.msra.mxu0 0.0
    %1716 = vmatprep.subr.mxu0 0.0
    %1717 = vmatpush1.msra.mxu0 0.0
    %1718 = vmatprep.subr.mxu0 0.0
    %1719 = vmatpush1.msra.mxu0 0.0
    %1720 = vmatprep.subr.mxu0 0.0
    %1721 = vmatpush1.msra.mxu0 0.0
    %1722 = vmatprep.subr.mxu0 0.0
    %1723 = vmatpush1.msra.mxu0 0.0
    %1724 = vmatprep.subr.mxu0 0.0
    %1725 = vmatpush1.msra.mxu0 0.0
    %1726 = vmatprep.subr.mxu0 0.0
    %1727 = vmatpush1.msra.mxu0 0.0
    %1728 = vmatprep.mubr.f32.mxu0 0.0
    %1729 = vmatmul.mubr.f32.gmra.mrb[0].mxu0 %v1417
    %v1730 = vpop.f32.mrb[0].mxu0
    %v1731 = vadd.f32 0.0, %v1730
    %v1732 = vpop.f32.mrb[0].mxu0
    %v1733 = vadd.f32 0.0, %v1732
    %1734 = vdwg.mxu0
    %1735 = vmatprep.subr.mxu0 %v1437
    %1736 = vmatpush1.msra.mxu0 %v1435
    %1737 = vmatprep.subr.mxu0 0.0
    %1738 = vmatpush1.msra.mxu0 0.0
    %1739 = vmatprep.subr.mxu0 0.0
    %1740 = vmatpush1.msra.mxu0 0.0
    %1741 = vmatprep.subr.mxu0 0.0
    %1742 = vmatpush1.msra.mxu0 0.0
    %1743 = vmatprep.subr.mxu0 0.0
    %1744 = vmatpush1.msra.mxu0 0.0
    %1745 = vmatprep.subr.mxu0 0.0
    %1746 = vmatpush1.msra.mxu0 0.0
    %1747 = vmatprep.subr.mxu0 0.0
    %1748 = vmatpush1.msra.mxu0 0.0
    %1749 = vmatprep.subr.mxu0 0.0
    %1750 = vmatpush1.msra.mxu0 0.0
    %1751 = vmatprep.subr.mxu0 0.0
    %1752 = vmatpush1.msra.mxu0 0.0
    %1753 = vmatprep.subr.mxu0 0.0
    %1754 = vmatpush1.msra.mxu0 0.0
    %1755 = vmatprep.subr.mxu0 0.0
    %1756 = vmatpush1.msra.mxu0 0.0
    %1757 = vmatprep.subr.mxu0 0.0
    %1758 = vmatpush1.msra.mxu0 0.0
    %1759 = vmatprep.subr.mxu0 0.0
    %1760 = vmatpush1.msra.mxu0 0.0
    %1761 = vmatprep.subr.mxu0 0.0
    %1762 = vmatpush1.msra.mxu0 0.0
    %1763 = vmatprep.subr.mxu0 0.0
    %1764 = vmatpush1.msra.mxu0 0.0
    %1765 = vmatprep.subr.mxu0 0.0
    %1766 = vmatpush1.msra.mxu0 0.0
    %1767 = vmatprep.subr.mxu0 0.0
    %1768 = vmatpush1.msra.mxu0 0.0
    %1769 = vmatprep.subr.mxu0 0.0
    %1770 = vmatpush1.msra.mxu0 0.0
    %1771 = vmatprep.subr.mxu0 0.0
    %1772 = vmatpush1.msra.mxu0 0.0
    %1773 = vmatprep.subr.mxu0 0.0
    %1774 = vmatpush1.msra.mxu0 0.0
    %1775 = vmatprep.subr.mxu0 0.0
    %1776 = vmatpush1.msra.mxu0 0.0
    %1777 = vmatprep.subr.mxu0 0.0
    %1778 = vmatpush1.msra.mxu0 0.0
    %1779 = vmatprep.subr.mxu0 0.0
    %1780 = vmatpush1.msra.mxu0 0.0
    %1781 = vmatprep.subr.mxu0 0.0
    %1782 = vmatpush1.msra.mxu0 0.0
    %1783 = vmatprep.subr.mxu0 0.0
    %1784 = vmatpush1.msra.mxu0 0.0
    %1785 = vmatprep.subr.mxu0 0.0
    %1786 = vmatpush1.msra.mxu0 0.0
    %1787 = vmatprep.subr.mxu0 0.0
    %1788 = vmatpush1.msra.mxu0 0.0
    %1789 = vmatprep.subr.mxu0 0.0
    %1790 = vmatpush1.msra.mxu0 0.0
    %1791 = vmatprep.subr.mxu0 0.0
    %1792 = vmatpush1.msra.mxu0 0.0
    %1793 = vmatprep.subr.mxu0 0.0
    %1794 = vmatpush1.msra.mxu0 0.0
    %1795 = vmatprep.subr.mxu0 0.0
    %1796 = vmatpush1.msra.mxu0 0.0
    %1797 = vmatprep.subr.mxu0 0.0
    %1798 = vmatpush1.msra.mxu0 0.0
    %1799 = vmatprep.mubr.f32.mxu0 0.0
    %1800 = vmatmul.mubr.f32.gmra.mrb[0].mxu0 %v1417
    %v1801 = vpop.f32.mrb[0].mxu0
    %v1802 = vadd.f32 0.0, %v1801
    %v1803 = vpop.f32.mrb[0].mxu0
    %v1804 = vadd.f32 0.0, %v1803
    %1805 = vdwg.mxu0
    %1806 = vmatprep.subr.mxu0 %v1441
    %1807 = vmatpush1.msra.mxu0 %v1439
    %1808 = vmatprep.subr.mxu0 0.0
    %1809 = vmatpush1.msra.mxu0 0.0
    %1810 = vmatprep.subr.mxu0 0.0
    %1811 = vmatpush1.msra.mxu0 0.0
    %1812 = vmatprep.subr.mxu0 0.0
    %1813 = vmatpush1.msra.mxu0 0.0
    %1814 = vmatprep.subr.mxu0 0.0
    %1815 = vmatpush1.msra.mxu0 0.0
    %1816 = vmatprep.subr.mxu0 0.0
    %1817 = vmatpush1.msra.mxu0 0.0
    %1818 = vmatprep.subr.mxu0 0.0
    %1819 = vmatpush1.msra.mxu0 0.0
    %1820 = vmatprep.subr.mxu0 0.0
    %1821 = vmatpush1.msra.mxu0 0.0
    %1822 = vmatprep.subr.mxu0 0.0
    %1823 = vmatpush1.msra.mxu0 0.0
    %1824 = vmatprep.subr.mxu0 0.0
    %1825 = vmatpush1.msra.mxu0 0.0
    %1826 = vmatprep.subr.mxu0 0.0
    %1827 = vmatpush1.msra.mxu0 0.0
    %1828 = vmatprep.subr.mxu0 0.0
    %1829 = vmatpush1.msra.mxu0 0.0
    %1830 = vmatprep.subr.mxu0 0.0
    %1831 = vmatpush1.msra.mxu0 0.0
    %1832 = vmatprep.subr.mxu0 0.0
    %1833 = vmatpush1.msra.mxu0 0.0
    %1834 = vmatprep.subr.mxu0 0.0
    %1835 = vmatpush1.msra.mxu0 0.0
    %1836 = vmatprep.subr.mxu0 0.0
    %1837 = vmatpush1.msra.mxu0 0.0
    %1838 = vmatprep.subr.mxu0 0.0
    %1839 = vmatpush1.msra.mxu0 0.0
    %1840 = vmatprep.subr.mxu0 0.0
    %1841 = vmatpush1.msra.mxu0 0.0
    %1842 = vmatprep.subr.mxu0 0.0
    %1843 = vmatpush1.msra.mxu0 0.0
    %1844 = vmatprep.subr.mxu0 0.0
    %1845 = vmatpush1.msra.mxu0 0.0
    %1846 = vmatprep.subr.mxu0 0.0
    %1847 = vmatpush1.msra.mxu0 0.0
    %1848 = vmatprep.subr.mxu0 0.0
    %1849 = vmatpush1.msra.mxu0 0.0
    %1850 = vmatprep.subr.mxu0 0.0
    %1851 = vmatpush1.msra.mxu0 0.0
    %1852 = vmatprep.subr.mxu0 0.0
    %1853 = vmatpush1.msra.mxu0 0.0
    %1854 = vmatprep.subr.mxu0 0.0
    %1855 = vmatpush1.msra.mxu0 0.0
    %1856 = vmatprep.subr.mxu0 0.0
    %1857 = vmatpush1.msra.mxu0 0.0
    %1858 = vmatprep.subr.mxu0 0.0
    %1859 = vmatpush1.msra.mxu0 0.0
    %1860 = vmatprep.subr.mxu0 0.0
    %1861 = vmatpush1.msra.mxu0 0.0
    %1862 = vmatprep.subr.mxu0 0.0
    %1863 = vmatpush1.msra.mxu0 0.0
    %1864 = vmatprep.subr.mxu0 0.0
    %1865 = vmatpush1.msra.mxu0 0.0
    %1866 = vmatprep.subr.mxu0 0.0
    %1867 = vmatpush1.msra.mxu0 0.0
    %1868 = vmatprep.subr.mxu0 0.0
    %1869 = vmatpush1.msra.mxu0 0.0
    %1870 = vmatprep.mubr.f32.mxu0 0.0
    %1871 = vmatmul.mubr.f32.gmra.mrb[0].mxu0 %v1417
    %v1872 = vpop.f32.mrb[0].mxu0
    %v1873 = vadd.f32 0.0, %v1872
    %v1874 = vpop.f32.mrb[0].mxu0
    %v1875 = vadd.f32 0.0, %v1874
    %1876 = vdwg.mxu0
    %1877 = vmatprep.subr.mxu0 %v1445
    %1878 = vmatpush1.msra.mxu0 %v1443
    %1879 = vmatprep.subr.mxu0 0.0
    %1880 = vmatpush1.msra.mxu0 0.0
    %1881 = vmatprep.subr.mxu0 0.0
    %1882 = vmatpush1.msra.mxu0 0.0
    %1883 = vmatprep.subr.mxu0 0.0
    %1884 = vmatpush1.msra.mxu0 0.0
    %1885 = vmatprep.subr.mxu0 0.0
    %1886 = vmatpush1.msra.mxu0 0.0
    %1887 = vmatprep.subr.mxu0 0.0
    %1888 = vmatpush1.msra.mxu0 0.0
    %1889 = vmatprep.subr.mxu0 0.0
    %1890 = vmatpush1.msra.mxu0 0.0
    %1891 = vmatprep.subr.mxu0 0.0
    %1892 = vmatpush1.msra.mxu0 0.0
    %1893 = vmatprep.subr.mxu0 0.0
    %1894 = vmatpush1.msra.mxu0 0.0
    %1895 = vmatprep.subr.mxu0 0.0
    %1896 = vmatpush1.msra.mxu0 0.0
    %1897 = vmatprep.subr.mxu0 0.0
    %1898 = vmatpush1.msra.mxu0 0.0
    %1899 = vmatprep.subr.mxu0 0.0
    %1900 = vmatpush1.msra.mxu0 0.0
    %1901 = vmatprep.subr.mxu0 0.0
    %1902 = vmatpush1.msra.mxu0 0.0
    %1903 = vmatprep.subr.mxu0 0.0
    %1904 = vmatpush1.msra.mxu0 0.0
    %1905 = vmatprep.subr.mxu0 0.0
    %1906 = vmatpush1.msra.mxu0 0.0
    %1907 = vmatprep.subr.mxu0 0.0
    %1908 = vmatpush1.msra.mxu0 0.0
    %1909 = vmatprep.subr.mxu0 0.0
    %1910 = vmatpush1.msra.mxu0 0.0
    %1911 = vmatprep.subr.mxu0 0.0
    %1912 = vmatpush1.msra.mxu0 0.0
    %1913 = vmatprep.subr.mxu0 0.0
    %1914 = vmatpush1.msra.mxu0 0.0
    %1915 = vmatprep.subr.mxu0 0.0
    %1916 = vmatpush1.msra.mxu0 0.0
    %1917 = vmatprep.subr.mxu0 0.0
    %1918 = vmatpush1.msra.mxu0 0.0
    %1919 = vmatprep.subr.mxu0 0.0
    %1920 = vmatpush1.msra.mxu0 0.0
    %1921 = vmatprep.subr.mxu0 0.0
    %1922 = vmatpush1.msra.mxu0 0.0
    %1923 = vmatprep.subr.mxu0 0.0
    %1924 = vmatpush1.msra.mxu0 0.0
    %1925 = vmatprep.subr.mxu0 0.0
    %1926 = vmatpush1.msra.mxu0 0.0
    %1927 = vmatprep.subr.mxu0 0.0
    %1928 = vmatpush1.msra.mxu0 0.0
    %1929 = vmatprep.subr.mxu0 0.0
    %1930 = vmatpush1.msra.mxu0 0.0
    %1931 = vmatprep.subr.mxu0 0.0
    %1932 = vmatpush1.msra.mxu0 0.0
    %1933 = vmatprep.subr.mxu0 0.0
    %1934 = vmatpush1.msra.mxu0 0.0
    %1935 = vmatprep.subr.mxu0 0.0
    %1936 = vmatpush1.msra.mxu0 0.0
    %1937 = vmatprep.subr.mxu0 0.0
    %1938 = vmatpush1.msra.mxu0 0.0
    %1939 = vmatprep.subr.mxu0 0.0
    %1940 = vmatpush1.msra.mxu0 0.0
    %1941 = vmatprep.mubr.f32.mxu0 0.0
    %1942 = vmatmul.mubr.f32.gmra.mrb[0].mxu0 %v1417
    %v1943 = vpop.f32.mrb[0].mxu0
    %v1944 = vadd.f32 0.0, %v1943
    %v1945 = vpop.f32.mrb[0].mxu0
    %v1946 = vadd.f32 0.0, %v1945
    %1947 = vdwg.mxu0
    %1948 = vmatprep.subr.mxu0 %v1449
    %1949 = vmatpush1.msra.mxu0 %v1447
    %1950 = vmatprep.subr.mxu0 0.0
    %1951 = vmatpush1.msra.mxu0 0.0
    %1952 = vmatprep.subr.mxu0 0.0
    %1953 = vmatpush1.msra.mxu0 0.0
    %1954 = vmatprep.subr.mxu0 0.0
    %1955 = vmatpush1.msra.mxu0 0.0
    %1956 = vmatprep.subr.mxu0 0.0
    %1957 = vmatpush1.msra.mxu0 0.0
    %1958 = vmatprep.subr.mxu0 0.0
    %1959 = vmatpush1.msra.mxu0 0.0
    %1960 = vmatprep.subr.mxu0 0.0
    %1961 = vmatpush1.msra.mxu0 0.0
    %1962 = vmatprep.subr.mxu0 0.0
    %1963 = vmatpush1.msra.mxu0 0.0
    %1964 = vmatprep.subr.mxu0 0.0
    %1965 = vmatpush1.msra.mxu0 0.0
    %1966 = vmatprep.subr.mxu0 0.0
    %1967 = vmatpush1.msra.mxu0 0.0
    %1968 = vmatprep.subr.mxu0 0.0
    %1969 = vmatpush1.msra.mxu0 0.0
    %1970 = vmatprep.subr.mxu0 0.0
    %1971 = vmatpush1.msra.mxu0 0.0
    %1972 = vmatprep.subr.mxu0 0.0
    %1973 = vmatpush1.msra.mxu0 0.0
    %1974 = vmatprep.subr.mxu0 0.0
    %1975 = vmatpush1.msra.mxu0 0.0
    %1976 = vmatprep.subr.mxu0 0.0
    %1977 = vmatpush1.msra.mxu0 0.0
    %1978 = vmatprep.subr.mxu0 0.0
    %1979 = vmatpush1.msra.mxu0 0.0
    %1980 = vmatprep.subr.mxu0 0.0
    %1981 = vmatpush1.msra.mxu0 0.0
    %1982 = vmatprep.subr.mxu0 0.0
    %1983 = vmatpush1.msra.mxu0 0.0
    %1984 = vmatprep.subr.mxu0 0.0
    %1985 = vmatpush1.msra.mxu0 0.0
    %1986 = vmatprep.subr.mxu0 0.0
    %1987 = vmatpush1.msra.mxu0 0.0
    %1988 = vmatprep.subr.mxu0 0.0
    %1989 = vmatpush1.msra.mxu0 0.0
    %1990 = vmatprep.subr.mxu0 0.0
    %1991 = vmatpush1.msra.mxu0 0.0
    %1992 = vmatprep.subr.mxu0 0.0
    %1993 = vmatpush1.msra.mxu0 0.0
    %1994 = vmatprep.subr.mxu0 0.0
    %1995 = vmatpush1.msra.mxu0 0.0
    %1996 = vmatprep.subr.mxu0 0.0
    %1997 = vmatpush1.msra.mxu0 0.0
    %1998 = vmatprep.subr.mxu0 0.0
    %1999 = vmatpush1.msra.mxu0 0.0
    %2000 = vmatprep.subr.mxu0 0.0
    %2001 = vmatpush1.msra.mxu0 0.0
    %2002 = vmatprep.subr.mxu0 0.0
    %2003 = vmatpush1.msra.mxu0 0.0
    %2004 = vmatprep.subr.mxu0 0.0
    %2005 = vmatpush1.msra.mxu0 0.0
    %2006 = vmatprep.subr.mxu0 0.0
    %2007 = vmatpush1.msra.mxu0 0.0
    %2008 = vmatprep.subr.mxu0 0.0
    %2009 = vmatpush1.msra.mxu0 0.0
    %2010 = vmatprep.subr.mxu0 0.0
    %2011 = vmatpush1.msra.mxu0 0.0
    %2012 = vmatprep.mubr.f32.mxu0 0.0
    %2013 = vmatmul.mubr.f32.gmra.mrb[0].mxu0 %v1417
    %v2014 = vpop.f32.mrb[0].mxu0
    %v2015 = vadd.f32 0.0, %v2014
    %v2016 = vpop.f32.mrb[0].mxu0
    %v2017 = vadd.f32 0.0, %v2016
    %2018 = vdwg.mxu0
    %v2019 = vadd.f32 %v838, %v1518
    %v2020 = vadd.f32 %v840, %v1520
    %v2021 = vadd.f32 %v909, %v1589
    %v2022 = vadd.f32 %v911, %v1591
    %v2023 = vadd.f32 %v980, %v1660
    %v2024 = vadd.f32 %v982, %v1662
    %v2025 = vadd.f32 %v1051, %v1731
    %v2026 = vadd.f32 %v1053, %v1733
    %v2027 = vadd.f32 %v1122, %v1802
    %v2028 = vadd.f32 %v1124, %v1804
    %v2029 = vadd.f32 %v1193, %v1873
    %v2030 = vadd.f32 %v1195, %v1875
    %v2031 = vadd.f32 %v1264, %v1944
    %v2032 = vadd.f32 %v1266, %v1946
    %v2033 = vadd.f32 %v1335, %v2015
    %v2034 = vadd.f32 %v1337, %v2017
    %v2035 = vld [vmem:[%s0] sm:$0xff]
    %v2036 = vld [vmem:[%s0 + $0x8] sm:$0xff]
    %v2037 = vld [vmem:[%s0 + $0x10] sm:$0xff]
    %v2038 = vld [vmem:[%s0 + $0x18] sm:$0xff]
    %v2039 = vld [vmem:[%s0 + $0x20] sm:$0xff]
    %v2040 = vld [vmem:[%s0 + $0x28] sm:$0xff]
    %v2041 = vld [vmem:[%s0 + $0x30] sm:$0xff]
    %v2042 = vld [vmem:[%s0 + $0x38] sm:$0xff]
    %v2043 = vld [vmem:[%s0 + $0x40] sm:$0xf]
    %v2053 = vcombine.high %v2035, %v2035
    %v2054 = vcombine.high %v2036, %v2036
    %v2055 = vcombine.high %v2037, %v2037
    %v2056 = vcombine.high %v2038, %v2038
    %v2057 = vcombine.high %v2039, %v2039
    %v2058 = vcombine.high %v2040, %v2040
    %v2059 = vcombine.high %v2041, %v2041
    %v2060 = vcombine.high %v2042, %v2042
    %2061 = vrot.lane.b32.xlu0 %v2035, 110
    %v2062 = vpop.permute.xlu0 %2061
    %2063 = vrot.lane.b32.xlu0 %v2053, 110
    %v2064 = vpop.permute.xlu0 %2063
    %2065 = vrot.lane.b32.xlu0 %v2036, 110
    %v2066 = vpop.permute.xlu0 %2065
    %2067 = vrot.lane.b32.xlu0 %v2054, 110
    %v2068 = vpop.permute.xlu0 %2067
    %2069 = vrot.lane.b32.xlu0 %v2037, 110
    %v2070 = vpop.permute.xlu0 %2069
    %2071 = vrot.lane.b32.xlu0 %v2055, 110
    %v2072 = vpop.permute.xlu0 %2071
    %2073 = vrot.lane.b32.xlu0 %v2038, 110
    %v2074 = vpop.permute.xlu0 %2073
    %2075 = vrot.lane.b32.xlu0 %v2056, 110
    %v2076 = vpop.permute.xlu0 %2075
    %2077 = vrot.lane.b32.xlu0 %v2039, 110
    %v2078 = vpop.permute.xlu0 %2077
    %2079 = vrot.lane.b32.xlu0 %v2057, 110
    %v2080 = vpop.permute.xlu0 %2079
    %2081 = vrot.lane.b32.xlu0 %v2040, 110
    %v2082 = vpop.permute.xlu0 %2081
    %2083 = vrot.lane.b32.xlu0 %v2058, 110
    %v2084 = vpop.permute.xlu0 %2083
    %2085 = vrot.lane.b32.xlu0 %v2041, 110
    %v2086 = vpop.permute.xlu0 %2085
    %2087 = vrot.lane.b32.xlu0 %v2059, 110
    %v2088 = vpop.permute.xlu0 %2087
    %2089 = vrot.lane.b32.xlu0 %v2042, 110
    %v2090 = vpop.permute.xlu0 %2089
    %2091 = vrot.lane.b32.xlu0 %v2060, 110
    %v2092 = vpop.permute.xlu0 %2091
    %2093 = vrot.lane.b32.xlu0 %v2043, 110
    %v2094 = vpop.permute.xlu0 %2093
    %vm2095 = vcmask 900096
    %v2096 = vsel %vm2095, %v2062, %v2064
    %v2097 = vsel %vm2095, %v2064, %v2066
    %v2098 = vsel %vm2095, %v2066, %v2068
    %v2099 = vsel %vm2095, %v2068, %v2070
    %v2100 = vsel %vm2095, %v2070, %v2072
    %v2101 = vsel %vm2095, %v2072, %v2074
    %v2102 = vsel %vm2095, %v2074, %v2076
    %v2103 = vsel %vm2095, %v2076, %v2078
    %v2104 = vsel %vm2095, %v2078, %v2080
    %v2105 = vsel %vm2095, %v2080, %v2082
    %v2106 = vsel %vm2095, %v2082, %v2084
    %v2107 = vsel %vm2095, %v2084, %v2086
    %v2108 = vsel %vm2095, %v2086, %v2088
    %v2109 = vsel %vm2095, %v2088, %v2090
    %v2110 = vsel %vm2095, %v2090, %v2092
    %v2111 = vsel %vm2095, %v2092, %v2094
    %v2113 = vsel %vm131, %v42, 0
    %v2115 = vsel %vm135, %v2096, 0
    %v2117 = vsel %vm135, %v2097, 0
    %v2119 = vsel %vm135, %v2098, 0
    %v2121 = vsel %vm135, %v2099, 0
    %v2123 = vsel %vm135, %v2100, 0
    %v2125 = vsel %vm135, %v2101, 0
    %v2127 = vsel %vm135, %v2102, 0
    %v2129 = vsel %vm135, %v2103, 0
    %v2131 = vsel %vm135, %v2104, 0
    %v2133 = vsel %vm135, %v2105, 0
    %v2135 = vsel %vm135, %v2106, 0
    %v2137 = vsel %vm135, %v2107, 0
    %v2139 = vsel %vm135, %v2108, 0
    %v2141 = vsel %vm135, %v2109, 0
    %v2143 = vsel %vm135, %v2110, 0
    %v2145 = vsel %vm135, %v2111, 0
    %2147 = vmatprep.subr.mxu0 %v2117
    %2148 = vmatpush1.msra.mxu0 %v2115
    %2149 = vmatprep.subr.mxu0 0.0
    %2150 = vmatpush1.msra.mxu0 0.0
    %2151 = vmatprep.subr.mxu0 0.0
    %2152 = vmatpush1.msra.mxu0 0.0
    %2153 = vmatprep.subr.mxu0 0.0
    %2154 = vmatpush1.msra.mxu0 0.0
    %2155 = vmatprep.subr.mxu0 0.0
    %2156 = vmatpush1.msra.mxu0 0.0
    %2157 = vmatprep.subr.mxu0 0.0
    %2158 = vmatpush1.msra.mxu0 0.0
    %2159 = vmatprep.subr.mxu0 0.0
    %2160 = vmatpush1.msra.mxu0 0.0
    %2161 = vmatprep.subr.mxu0 0.0
    %2162 = vmatpush1.msra.mxu0 0.0
    %2163 = vmatprep.subr.mxu0 0.0
    %2164 = vmatpush1.msra.mxu0 0.0
    %2165 = vmatprep.subr.mxu0 0.0
    %2166 = vmatpush1.msra.mxu0 0.0
    %2167 = vmatprep.subr.mxu0 0.0
    %2168 = vmatpush1.msra.mxu0 0.0
    %2169 = vmatprep.subr.mxu0 0.0
    %2170 = vmatpush1.msra.mxu0 0.0
    %2171 = vmatprep.subr.mxu0 0.0
    %2172 = vmatpush1.msra.mxu0 0.0
    %2173 = vmatprep.subr.mxu0 0.0
    %2174 = vmatpush1.msra.mxu0 0.0
    %2175 = vmatprep.subr.mxu0 0.0
    %2176 = vmatpush1.msra.mxu0 0.0
    %2177 = vmatprep.subr.mxu0 0.0
    %2178 = vmatpush1.msra.mxu0 0.0
    %2179 = vmatprep.subr.mxu0 0.0
    %2180 = vmatpush1.msra.mxu0 0.0
    %2181 = vmatprep.subr.mxu0 0.0
    %2182 = vmatpush1.msra.mxu0 0.0
    %2183 = vmatprep.subr.mxu0 0.0
    %2184 = vmatpush1.msra.mxu0 0.0
    %2185 = vmatprep.subr.mxu0 0.0
    %2186 = vmatpush1.msra.mxu0 0.0
    %2187 = vmatprep.subr.mxu0 0.0
    %2188 = vmatpush1.msra.mxu0 0.0
    %2189 = vmatprep.subr.mxu0 0.0
    %2190 = vmatpush1.msra.mxu0 0.0
    %2191 = vmatprep.subr.mxu0 0.0
    %2192 = vmatpush1.msra.mxu0 0.0
    %2193 = vmatprep.subr.mxu0 0.0
    %2194 = vmatpush1.msra.mxu0 0.0
    %2195 = vmatprep.subr.mxu0 0.0
    %2196 = vmatpush1.msra.mxu0 0.0
    %2197 = vmatprep.subr.mxu0 0.0
    %2198 = vmatpush1.msra.mxu0 0.0
    %2199 = vmatprep.subr.mxu0 0.0
    %2200 = vmatpush1.msra.mxu0 0.0
    %2201 = vmatprep.subr.mxu0 0.0
    %2202 = vmatpush1.msra.mxu0 0.0
    %2203 = vmatprep.subr.mxu0 0.0
    %2204 = vmatpush1.msra.mxu0 0.0
    %2205 = vmatprep.subr.mxu0 0.0
    %2206 = vmatpush1.msra.mxu0 0.0
    %2207 = vmatprep.subr.mxu0 0.0
    %2208 = vmatpush1.msra.mxu0 0.0
    %2209 = vmatprep.subr.mxu0 0.0
    %2210 = vmatpush1.msra.mxu0 0.0
    %2211 = vmatprep.mubr.f32.mxu0 0.0
    %2212 = vmatmul.mubr.f32.gmra.mrb[0].mxu0 %v2113
    %v2213 = vpop.f32.mrb[0].mxu0
    %v2214 = vadd.f32 0.0, %v2213
    %v2215 = vpop.f32.mrb[0].mxu0
    %v2216 = vadd.f32 0.0, %v2215
    %2217 = vdwg.mxu0
    %2218 = vmatprep.subr.mxu0 %v2121
    %2219 = vmatpush1.msra.mxu0 %v2119
    %2220 = vmatprep.subr.mxu0 0.0
    %2221 = vmatpush1.msra.mxu0 0.0
    %2222 = vmatprep.subr.mxu0 0.0
    %2223 = vmatpush1.msra.mxu0 0.0
    %2224 = vmatprep.subr.mxu0 0.0
    %2225 = vmatpush1.msra.mxu0 0.0
    %2226 = vmatprep.subr.mxu0 0.0
    %2227 = vmatpush1.msra.mxu0 0.0
    %2228 = vmatprep.subr.mxu0 0.0
    %2229 = vmatpush1.msra.mxu0 0.0
    %2230 = vmatprep.subr.mxu0 0.0
    %2231 = vmatpush1.msra.mxu0 0.0
    %2232 = vmatprep.subr.mxu0 0.0
    %2233 = vmatpush1.msra.mxu0 0.0
    %2234 = vmatprep.subr.mxu0 0.0
    %2235 = vmatpush1.msra.mxu0 0.0
    %2236 = vmatprep.subr.mxu0 0.0
    %2237 = vmatpush1.msra.mxu0 0.0
    %2238 = vmatprep.subr.mxu0 0.0
    %2239 = vmatpush1.msra.mxu0 0.0
    %2240 = vmatprep.subr.mxu0 0.0
    %2241 = vmatpush1.msra.mxu0 0.0
    %2242 = vmatprep.subr.mxu0 0.0
    %2243 = vmatpush1.msra.mxu0 0.0
    %2244 = vmatprep.subr.mxu0 0.0
    %2245 = vmatpush1.msra.mxu0 0.0
    %2246 = vmatprep.subr.mxu0 0.0
    %2247 = vmatpush1.msra.mxu0 0.0
    %2248 = vmatprep.subr.mxu0 0.0
    %2249 = vmatpush1.msra.mxu0 0.0
    %2250 = vmatprep.subr.mxu0 0.0
    %2251 = vmatpush1.msra.mxu0 0.0
    %2252 = vmatprep.subr.mxu0 0.0
    %2253 = vmatpush1.msra.mxu0 0.0
    %2254 = vmatprep.subr.mxu0 0.0
    %2255 = vmatpush1.msra.mxu0 0.0
    %2256 = vmatprep.subr.mxu0 0.0
    %2257 = vmatpush1.msra.mxu0 0.0
    %2258 = vmatprep.subr.mxu0 0.0
    %2259 = vmatpush1.msra.mxu0 0.0
    %2260 = vmatprep.subr.mxu0 0.0
    %2261 = vmatpush1.msra.mxu0 0.0
    %2262 = vmatprep.subr.mxu0 0.0
    %2263 = vmatpush1.msra.mxu0 0.0
    %2264 = vmatprep.subr.mxu0 0.0
    %2265 = vmatpush1.msra.mxu0 0.0
    %2266 = vmatprep.subr.mxu0 0.0
    %2267 = vmatpush1.msra.mxu0 0.0
    %2268 = vmatprep.subr.mxu0 0.0
    %2269 = vmatpush1.msra.mxu0 0.0
    %2270 = vmatprep.subr.mxu0 0.0
    %2271 = vmatpush1.msra.mxu0 0.0
    %2272 = vmatprep.subr.mxu0 0.0
    %2273 = vmatpush1.msra.mxu0 0.0
    %2274 = vmatprep.subr.mxu0 0.0
    %2275 = vmatpush1.msra.mxu0 0.0
    %2276 = vmatprep.subr.mxu0 0.0
    %2277 = vmatpush1.msra.mxu0 0.0
    %2278 = vmatprep.subr.mxu0 0.0
    %2279 = vmatpush1.msra.mxu0 0.0
    %2280 = vmatprep.subr.mxu0 0.0
    %2281 = vmatpush1.msra.mxu0 0.0
    %2282 = vmatprep.mubr.f32.mxu0 0.0
    %2283 = vmatmul.mubr.f32.gmra.mrb[0].mxu0 %v2113
    %v2284 = vpop.f32.mrb[0].mxu0
    %v2285 = vadd.f32 0.0, %v2284
    %v2286 = vpop.f32.mrb[0].mxu0
    %v2287 = vadd.f32 0.0, %v2286
    %2288 = vdwg.mxu0
    %2289 = vmatprep.subr.mxu0 %v2125
    %2290 = vmatpush1.msra.mxu0 %v2123
    %2291 = vmatprep.subr.mxu0 0.0
    %2292 = vmatpush1.msra.mxu0 0.0
    %2293 = vmatprep.subr.mxu0 0.0
    %2294 = vmatpush1.msra.mxu0 0.0
    %2295 = vmatprep.subr.mxu0 0.0
    %2296 = vmatpush1.msra.mxu0 0.0
    %2297 = vmatprep.subr.mxu0 0.0
    %2298 = vmatpush1.msra.mxu0 0.0
    %2299 = vmatprep.subr.mxu0 0.0
    %2300 = vmatpush1.msra.mxu0 0.0
    %2301 = vmatprep.subr.mxu0 0.0
    %2302 = vmatpush1.msra.mxu0 0.0
    %2303 = vmatprep.subr.mxu0 0.0
    %2304 = vmatpush1.msra.mxu0 0.0
    %2305 = vmatprep.subr.mxu0 0.0
    %2306 = vmatpush1.msra.mxu0 0.0
    %2307 = vmatprep.subr.mxu0 0.0
    %2308 = vmatpush1.msra.mxu0 0.0
    %2309 = vmatprep.subr.mxu0 0.0
    %2310 = vmatpush1.msra.mxu0 0.0
    %2311 = vmatprep.subr.mxu0 0.0
    %2312 = vmatpush1.msra.mxu0 0.0
    %2313 = vmatprep.subr.mxu0 0.0
    %2314 = vmatpush1.msra.mxu0 0.0
    %2315 = vmatprep.subr.mxu0 0.0
    %2316 = vmatpush1.msra.mxu0 0.0
    %2317 = vmatprep.subr.mxu0 0.0
    %2318 = vmatpush1.msra.mxu0 0.0
    %2319 = vmatprep.subr.mxu0 0.0
    %2320 = vmatpush1.msra.mxu0 0.0
    %2321 = vmatprep.subr.mxu0 0.0
    %2322 = vmatpush1.msra.mxu0 0.0
    %2323 = vmatprep.subr.mxu0 0.0
    %2324 = vmatpush1.msra.mxu0 0.0
    %2325 = vmatprep.subr.mxu0 0.0
    %2326 = vmatpush1.msra.mxu0 0.0
    %2327 = vmatprep.subr.mxu0 0.0
    %2328 = vmatpush1.msra.mxu0 0.0
    %2329 = vmatprep.subr.mxu0 0.0
    %2330 = vmatpush1.msra.mxu0 0.0
    %2331 = vmatprep.subr.mxu0 0.0
    %2332 = vmatpush1.msra.mxu0 0.0
    %2333 = vmatprep.subr.mxu0 0.0
    %2334 = vmatpush1.msra.mxu0 0.0
    %2335 = vmatprep.subr.mxu0 0.0
    %2336 = vmatpush1.msra.mxu0 0.0
    %2337 = vmatprep.subr.mxu0 0.0
    %2338 = vmatpush1.msra.mxu0 0.0
    %2339 = vmatprep.subr.mxu0 0.0
    %2340 = vmatpush1.msra.mxu0 0.0
    %2341 = vmatprep.subr.mxu0 0.0
    %2342 = vmatpush1.msra.mxu0 0.0
    %2343 = vmatprep.subr.mxu0 0.0
    %2344 = vmatpush1.msra.mxu0 0.0
    %2345 = vmatprep.subr.mxu0 0.0
    %2346 = vmatpush1.msra.mxu0 0.0
    %2347 = vmatprep.subr.mxu0 0.0
    %2348 = vmatpush1.msra.mxu0 0.0
    %2349 = vmatprep.subr.mxu0 0.0
    %2350 = vmatpush1.msra.mxu0 0.0
    %2351 = vmatprep.subr.mxu0 0.0
    %2352 = vmatpush1.msra.mxu0 0.0
    %2353 = vmatprep.mubr.f32.mxu0 0.0
    %2354 = vmatmul.mubr.f32.gmra.mrb[0].mxu0 %v2113
    %v2355 = vpop.f32.mrb[0].mxu0
    %v2356 = vadd.f32 0.0, %v2355
    %v2357 = vpop.f32.mrb[0].mxu0
    %v2358 = vadd.f32 0.0, %v2357
    %2359 = vdwg.mxu0
    %2360 = vmatprep.subr.mxu0 %v2129
    %2361 = vmatpush1.msra.mxu0 %v2127
    %2362 = vmatprep.subr.mxu0 0.0
    %2363 = vmatpush1.msra.mxu0 0.0
    %2364 = vmatprep.subr.mxu0 0.0
    %2365 = vmatpush1.msra.mxu0 0.0
    %2366 = vmatprep.subr.mxu0 0.0
    %2367 = vmatpush1.msra.mxu0 0.0
    %2368 = vmatprep.subr.mxu0 0.0
    %2369 = vmatpush1.msra.mxu0 0.0
    %2370 = vmatprep.subr.mxu0 0.0
    %2371 = vmatpush1.msra.mxu0 0.0
    %2372 = vmatprep.subr.mxu0 0.0
    %2373 = vmatpush1.msra.mxu0 0.0
    %2374 = vmatprep.subr.mxu0 0.0
    %2375 = vmatpush1.msra.mxu0 0.0
    %2376 = vmatprep.subr.mxu0 0.0
    %2377 = vmatpush1.msra.mxu0 0.0
    %2378 = vmatprep.subr.mxu0 0.0
    %2379 = vmatpush1.msra.mxu0 0.0
    %2380 = vmatprep.subr.mxu0 0.0
    %2381 = vmatpush1.msra.mxu0 0.0
    %2382 = vmatprep.subr.mxu0 0.0
    %2383 = vmatpush1.msra.mxu0 0.0
    %2384 = vmatprep.subr.mxu0 0.0
    %2385 = vmatpush1.msra.mxu0 0.0
    %2386 = vmatprep.subr.mxu0 0.0
    %2387 = vmatpush1.msra.mxu0 0.0
    %2388 = vmatprep.subr.mxu0 0.0
    %2389 = vmatpush1.msra.mxu0 0.0
    %2390 = vmatprep.subr.mxu0 0.0
    %2391 = vmatpush1.msra.mxu0 0.0
    %2392 = vmatprep.subr.mxu0 0.0
    %2393 = vmatpush1.msra.mxu0 0.0
    %2394 = vmatprep.subr.mxu0 0.0
    %2395 = vmatpush1.msra.mxu0 0.0
    %2396 = vmatprep.subr.mxu0 0.0
    %2397 = vmatpush1.msra.mxu0 0.0
    %2398 = vmatprep.subr.mxu0 0.0
    %2399 = vmatpush1.msra.mxu0 0.0
    %2400 = vmatprep.subr.mxu0 0.0
    %2401 = vmatpush1.msra.mxu0 0.0
    %2402 = vmatprep.subr.mxu0 0.0
    %2403 = vmatpush1.msra.mxu0 0.0
    %2404 = vmatprep.subr.mxu0 0.0
    %2405 = vmatpush1.msra.mxu0 0.0
    %2406 = vmatprep.subr.mxu0 0.0
    %2407 = vmatpush1.msra.mxu0 0.0
    %2408 = vmatprep.subr.mxu0 0.0
    %2409 = vmatpush1.msra.mxu0 0.0
    %2410 = vmatprep.subr.mxu0 0.0
    %2411 = vmatpush1.msra.mxu0 0.0
    %2412 = vmatprep.subr.mxu0 0.0
    %2413 = vmatpush1.msra.mxu0 0.0
    %2414 = vmatprep.subr.mxu0 0.0
    %2415 = vmatpush1.msra.mxu0 0.0
    %2416 = vmatprep.subr.mxu0 0.0
    %2417 = vmatpush1.msra.mxu0 0.0
    %2418 = vmatprep.subr.mxu0 0.0
    %2419 = vmatpush1.msra.mxu0 0.0
    %2420 = vmatprep.subr.mxu0 0.0
    %2421 = vmatpush1.msra.mxu0 0.0
    %2422 = vmatprep.subr.mxu0 0.0
    %2423 = vmatpush1.msra.mxu0 0.0
    %2424 = vmatprep.mubr.f32.mxu0 0.0
    %2425 = vmatmul.mubr.f32.gmra.mrb[0].mxu0 %v2113
    %v2426 = vpop.f32.mrb[0].mxu0
    %v2427 = vadd.f32 0.0, %v2426
    %v2428 = vpop.f32.mrb[0].mxu0
    %v2429 = vadd.f32 0.0, %v2428
    %2430 = vdwg.mxu0
    %2431 = vmatprep.subr.mxu0 %v2133
    %2432 = vmatpush1.msra.mxu0 %v2131
    %2433 = vmatprep.subr.mxu0 0.0
    %2434 = vmatpush1.msra.mxu0 0.0
    %2435 = vmatprep.subr.mxu0 0.0
    %2436 = vmatpush1.msra.mxu0 0.0
    %2437 = vmatprep.subr.mxu0 0.0
    %2438 = vmatpush1.msra.mxu0 0.0
    %2439 = vmatprep.subr.mxu0 0.0
    %2440 = vmatpush1.msra.mxu0 0.0
    %2441 = vmatprep.subr.mxu0 0.0
    %2442 = vmatpush1.msra.mxu0 0.0
    %2443 = vmatprep.subr.mxu0 0.0
    %2444 = vmatpush1.msra.mxu0 0.0
    %2445 = vmatprep.subr.mxu0 0.0
    %2446 = vmatpush1.msra.mxu0 0.0
    %2447 = vmatprep.subr.mxu0 0.0
    %2448 = vmatpush1.msra.mxu0 0.0
    %2449 = vmatprep.subr.mxu0 0.0
    %2450 = vmatpush1.msra.mxu0 0.0
    %2451 = vmatprep.subr.mxu0 0.0
    %2452 = vmatpush1.msra.mxu0 0.0
    %2453 = vmatprep.subr.mxu0 0.0
    %2454 = vmatpush1.msra.mxu0 0.0
    %2455 = vmatprep.subr.mxu0 0.0
    %2456 = vmatpush1.msra.mxu0 0.0
    %2457 = vmatprep.subr.mxu0 0.0
    %2458 = vmatpush1.msra.mxu0 0.0
    %2459 = vmatprep.subr.mxu0 0.0
    %2460 = vmatpush1.msra.mxu0 0.0
    %2461 = vmatprep.subr.mxu0 0.0
    %2462 = vmatpush1.msra.mxu0 0.0
    %2463 = vmatprep.subr.mxu0 0.0
    %2464 = vmatpush1.msra.mxu0 0.0
    %2465 = vmatprep.subr.mxu0 0.0
    %2466 = vmatpush1.msra.mxu0 0.0
    %2467 = vmatprep.subr.mxu0 0.0
    %2468 = vmatpush1.msra.mxu0 0.0
    %2469 = vmatprep.subr.mxu0 0.0
    %2470 = vmatpush1.msra.mxu0 0.0
    %2471 = vmatprep.subr.mxu0 0.0
    %2472 = vmatpush1.msra.mxu0 0.0
    %2473 = vmatprep.subr.mxu0 0.0
    %2474 = vmatpush1.msra.mxu0 0.0
    %2475 = vmatprep.subr.mxu0 0.0
    %2476 = vmatpush1.msra.mxu0 0.0
    %2477 = vmatprep.subr.mxu0 0.0
    %2478 = vmatpush1.msra.mxu0 0.0
    %2479 = vmatprep.subr.mxu0 0.0
    %2480 = vmatpush1.msra.mxu0 0.0
    %2481 = vmatprep.subr.mxu0 0.0
    %2482 = vmatpush1.msra.mxu0 0.0
    %2483 = vmatprep.subr.mxu0 0.0
    %2484 = vmatpush1.msra.mxu0 0.0
    %2485 = vmatprep.subr.mxu0 0.0
    %2486 = vmatpush1.msra.mxu0 0.0
    %2487 = vmatprep.subr.mxu0 0.0
    %2488 = vmatpush1.msra.mxu0 0.0
    %2489 = vmatprep.subr.mxu0 0.0
    %2490 = vmatpush1.msra.mxu0 0.0
    %2491 = vmatprep.subr.mxu0 0.0
    %2492 = vmatpush1.msra.mxu0 0.0
    %2493 = vmatprep.subr.mxu0 0.0
    %2494 = vmatpush1.msra.mxu0 0.0
    %2495 = vmatprep.mubr.f32.mxu0 0.0
    %2496 = vmatmul.mubr.f32.gmra.mrb[0].mxu0 %v2113
    %v2497 = vpop.f32.mrb[0].mxu0
    %v2498 = vadd.f32 0.0, %v2497
    %v2499 = vpop.f32.mrb[0].mxu0
    %v2500 = vadd.f32 0.0, %v2499
    %2501 = vdwg.mxu0
    %2502 = vmatprep.subr.mxu0 %v2137
    %2503 = vmatpush1.msra.mxu0 %v2135
    %2504 = vmatprep.subr.mxu0 0.0
    %2505 = vmatpush1.msra.mxu0 0.0
    %2506 = vmatprep.subr.mxu0 0.0
    %2507 = vmatpush1.msra.mxu0 0.0
    %2508 = vmatprep.subr.mxu0 0.0
    %2509 = vmatpush1.msra.mxu0 0.0
    %2510 = vmatprep.subr.mxu0 0.0
    %2511 = vmatpush1.msra.mxu0 0.0
    %2512 = vmatprep.subr.mxu0 0.0
    %2513 = vmatpush1.msra.mxu0 0.0
    %2514 = vmatprep.subr.mxu0 0.0
    %2515 = vmatpush1.msra.mxu0 0.0
    %2516 = vmatprep.subr.mxu0 0.0
    %2517 = vmatpush1.msra.mxu0 0.0
    %2518 = vmatprep.subr.mxu0 0.0
    %2519 = vmatpush1.msra.mxu0 0.0
    %2520 = vmatprep.subr.mxu0 0.0
    %2521 = vmatpush1.msra.mxu0 0.0
    %2522 = vmatprep.subr.mxu0 0.0
    %2523 = vmatpush1.msra.mxu0 0.0
    %2524 = vmatprep.subr.mxu0 0.0
    %2525 = vmatpush1.msra.mxu0 0.0
    %2526 = vmatprep.subr.mxu0 0.0
    %2527 = vmatpush1.msra.mxu0 0.0
    %2528 = vmatprep.subr.mxu0 0.0
    %2529 = vmatpush1.msra.mxu0 0.0
    %2530 = vmatprep.subr.mxu0 0.0
    %2531 = vmatpush1.msra.mxu0 0.0
    %2532 = vmatprep.subr.mxu0 0.0
    %2533 = vmatpush1.msra.mxu0 0.0
    %2534 = vmatprep.subr.mxu0 0.0
    %2535 = vmatpush1.msra.mxu0 0.0
    %2536 = vmatprep.subr.mxu0 0.0
    %2537 = vmatpush1.msra.mxu0 0.0
    %2538 = vmatprep.subr.mxu0 0.0
    %2539 = vmatpush1.msra.mxu0 0.0
    %2540 = vmatprep.subr.mxu0 0.0
    %2541 = vmatpush1.msra.mxu0 0.0
    %2542 = vmatprep.subr.mxu0 0.0
    %2543 = vmatpush1.msra.mxu0 0.0
    %2544 = vmatprep.subr.mxu0 0.0
    %2545 = vmatpush1.msra.mxu0 0.0
    %2546 = vmatprep.subr.mxu0 0.0
    %2547 = vmatpush1.msra.mxu0 0.0
    %2548 = vmatprep.subr.mxu0 0.0
    %2549 = vmatpush1.msra.mxu0 0.0
    %2550 = vmatprep.subr.mxu0 0.0
    %2551 = vmatpush1.msra.mxu0 0.0
    %2552 = vmatprep.subr.mxu0 0.0
    %2553 = vmatpush1.msra.mxu0 0.0
    %2554 = vmatprep.subr.mxu0 0.0
    %2555 = vmatpush1.msra.mxu0 0.0
    %2556 = vmatprep.subr.mxu0 0.0
    %2557 = vmatpush1.msra.mxu0 0.0
    %2558 = vmatprep.subr.mxu0 0.0
    %2559 = vmatpush1.msra.mxu0 0.0
    %2560 = vmatprep.subr.mxu0 0.0
    %2561 = vmatpush1.msra.mxu0 0.0
    %2562 = vmatprep.subr.mxu0 0.0
    %2563 = vmatpush1.msra.mxu0 0.0
    %2564 = vmatprep.subr.mxu0 0.0
    %2565 = vmatpush1.msra.mxu0 0.0
    %2566 = vmatprep.mubr.f32.mxu0 0.0
    %2567 = vmatmul.mubr.f32.gmra.mrb[0].mxu0 %v2113
    %v2568 = vpop.f32.mrb[0].mxu0
    %v2569 = vadd.f32 0.0, %v2568
    %v2570 = vpop.f32.mrb[0].mxu0
    %v2571 = vadd.f32 0.0, %v2570
    %2572 = vdwg.mxu0
    %2573 = vmatprep.subr.mxu0 %v2141
    %2574 = vmatpush1.msra.mxu0 %v2139
    %2575 = vmatprep.subr.mxu0 0.0
    %2576 = vmatpush1.msra.mxu0 0.0
    %2577 = vmatprep.subr.mxu0 0.0
    %2578 = vmatpush1.msra.mxu0 0.0
    %2579 = vmatprep.subr.mxu0 0.0
    %2580 = vmatpush1.msra.mxu0 0.0
    %2581 = vmatprep.subr.mxu0 0.0
    %2582 = vmatpush1.msra.mxu0 0.0
    %2583 = vmatprep.subr.mxu0 0.0
    %2584 = vmatpush1.msra.mxu0 0.0
    %2585 = vmatprep.subr.mxu0 0.0
    %2586 = vmatpush1.msra.mxu0 0.0
    %2587 = vmatprep.subr.mxu0 0.0
    %2588 = vmatpush1.msra.mxu0 0.0
    %2589 = vmatprep.subr.mxu0 0.0
    %2590 = vmatpush1.msra.mxu0 0.0
    %2591 = vmatprep.subr.mxu0 0.0
    %2592 = vmatpush1.msra.mxu0 0.0
    %2593 = vmatprep.subr.mxu0 0.0
    %2594 = vmatpush1.msra.mxu0 0.0
    %2595 = vmatprep.subr.mxu0 0.0
    %2596 = vmatpush1.msra.mxu0 0.0
    %2597 = vmatprep.subr.mxu0 0.0
    %2598 = vmatpush1.msra.mxu0 0.0
    %2599 = vmatprep.subr.mxu0 0.0
    %2600 = vmatpush1.msra.mxu0 0.0
    %2601 = vmatprep.subr.mxu0 0.0
    %2602 = vmatpush1.msra.mxu0 0.0
    %2603 = vmatprep.subr.mxu0 0.0
    %2604 = vmatpush1.msra.mxu0 0.0
    %2605 = vmatprep.subr.mxu0 0.0
    %2606 = vmatpush1.msra.mxu0 0.0
    %2607 = vmatprep.subr.mxu0 0.0
    %2608 = vmatpush1.msra.mxu0 0.0
    %2609 = vmatprep.subr.mxu0 0.0
    %2610 = vmatpush1.msra.mxu0 0.0
    %2611 = vmatprep.subr.mxu0 0.0
    %2612 = vmatpush1.msra.mxu0 0.0
    %2613 = vmatprep.subr.mxu0 0.0
    %2614 = vmatpush1.msra.mxu0 0.0
    %2615 = vmatprep.subr.mxu0 0.0
    %2616 = vmatpush1.msra.mxu0 0.0
    %2617 = vmatprep.subr.mxu0 0.0
    %2618 = vmatpush1.msra.mxu0 0.0
    %2619 = vmatprep.subr.mxu0 0.0
    %2620 = vmatpush1.msra.mxu0 0.0
    %2621 = vmatprep.subr.mxu0 0.0
    %2622 = vmatpush1.msra.mxu0 0.0
    %2623 = vmatprep.subr.mxu0 0.0
    %2624 = vmatpush1.msra.mxu0 0.0
    %2625 = vmatprep.subr.mxu0 0.0
    %2626 = vmatpush1.msra.mxu0 0.0
    %2627 = vmatprep.subr.mxu0 0.0
    %2628 = vmatpush1.msra.mxu0 0.0
    %2629 = vmatprep.subr.mxu0 0.0
    %2630 = vmatpush1.msra.mxu0 0.0
    %2631 = vmatprep.subr.mxu0 0.0
    %2632 = vmatpush1.msra.mxu0 0.0
    %2633 = vmatprep.subr.mxu0 0.0
    %2634 = vmatpush1.msra.mxu0 0.0
    %2635 = vmatprep.subr.mxu0 0.0
    %2636 = vmatpush1.msra.mxu0 0.0
    %2637 = vmatprep.mubr.f32.mxu0 0.0
    %2638 = vmatmul.mubr.f32.gmra.mrb[0].mxu0 %v2113
    %v2639 = vpop.f32.mrb[0].mxu0
    %v2640 = vadd.f32 0.0, %v2639
    %v2641 = vpop.f32.mrb[0].mxu0
    %v2642 = vadd.f32 0.0, %v2641
    %2643 = vdwg.mxu0
    %2644 = vmatprep.subr.mxu0 %v2145
    %2645 = vmatpush1.msra.mxu0 %v2143
    %2646 = vmatprep.subr.mxu0 0.0
    %2647 = vmatpush1.msra.mxu0 0.0
    %2648 = vmatprep.subr.mxu0 0.0
    %2649 = vmatpush1.msra.mxu0 0.0
    %2650 = vmatprep.subr.mxu0 0.0
    %2651 = vmatpush1.msra.mxu0 0.0
    %2652 = vmatprep.subr.mxu0 0.0
    %2653 = vmatpush1.msra.mxu0 0.0
    %2654 = vmatprep.subr.mxu0 0.0
    %2655 = vmatpush1.msra.mxu0 0.0
    %2656 = vmatprep.subr.mxu0 0.0
    %2657 = vmatpush1.msra.mxu0 0.0
    %2658 = vmatprep.subr.mxu0 0.0
    %2659 = vmatpush1.msra.mxu0 0.0
    %2660 = vmatprep.subr.mxu0 0.0
    %2661 = vmatpush1.msra.mxu0 0.0
    %2662 = vmatprep.subr.mxu0 0.0
    %2663 = vmatpush1.msra.mxu0 0.0
    %2664 = vmatprep.subr.mxu0 0.0
    %2665 = vmatpush1.msra.mxu0 0.0
    %2666 = vmatprep.subr.mxu0 0.0
    %2667 = vmatpush1.msra.mxu0 0.0
    %2668 = vmatprep.subr.mxu0 0.0
    %2669 = vmatpush1.msra.mxu0 0.0
    %2670 = vmatprep.subr.mxu0 0.0
    %2671 = vmatpush1.msra.mxu0 0.0
    %2672 = vmatprep.subr.mxu0 0.0
    %2673 = vmatpush1.msra.mxu0 0.0
    %2674 = vmatprep.subr.mxu0 0.0
    %2675 = vmatpush1.msra.mxu0 0.0
    %2676 = vmatprep.subr.mxu0 0.0
    %2677 = vmatpush1.msra.mxu0 0.0
    %2678 = vmatprep.subr.mxu0 0.0
    %2679 = vmatpush1.msra.mxu0 0.0
    %2680 = vmatprep.subr.mxu0 0.0
    %2681 = vmatpush1.msra.mxu0 0.0
    %2682 = vmatprep.subr.mxu0 0.0
    %2683 = vmatpush1.msra.mxu0 0.0
    %2684 = vmatprep.subr.mxu0 0.0
    %2685 = vmatpush1.msra.mxu0 0.0
    %2686 = vmatprep.subr.mxu0 0.0
    %2687 = vmatpush1.msra.mxu0 0.0
    %2688 = vmatprep.subr.mxu0 0.0
    %2689 = vmatpush1.msra.mxu0 0.0
    %2690 = vmatprep.subr.mxu0 0.0
    %2691 = vmatpush1.msra.mxu0 0.0
    %2692 = vmatprep.subr.mxu0 0.0
    %2693 = vmatpush1.msra.mxu0 0.0
    %2694 = vmatprep.subr.mxu0 0.0
    %2695 = vmatpush1.msra.mxu0 0.0
    %2696 = vmatprep.subr.mxu0 0.0
    %2697 = vmatpush1.msra.mxu0 0.0
    %2698 = vmatprep.subr.mxu0 0.0
    %2699 = vmatpush1.msra.mxu0 0.0
    %2700 = vmatprep.subr.mxu0 0.0
    %2701 = vmatpush1.msra.mxu0 0.0
    %2702 = vmatprep.subr.mxu0 0.0
    %2703 = vmatpush1.msra.mxu0 0.0
    %2704 = vmatprep.subr.mxu0 0.0
    %2705 = vmatpush1.msra.mxu0 0.0
    %2706 = vmatprep.subr.mxu0 0.0
    %2707 = vmatpush1.msra.mxu0 0.0
    %2708 = vmatprep.mubr.f32.mxu0 0.0
    %2709 = vmatmul.mubr.f32.gmra.mrb[0].mxu0 %v2113
    %v2710 = vpop.f32.mrb[0].mxu0
    %v2711 = vadd.f32 0.0, %v2710
    %v2712 = vpop.f32.mrb[0].mxu0
    %v2713 = vadd.f32 0.0, %v2712
    %2714 = vdwg.mxu0
    %v2715 = vadd.f32 %v2019, %v2214
    %v2716 = vadd.f32 %v2020, %v2216
    %v2717 = vadd.f32 %v2021, %v2285
    %v2718 = vadd.f32 %v2022, %v2287
    %v2719 = vadd.f32 %v2023, %v2356
    %v2720 = vadd.f32 %v2024, %v2358
    %v2721 = vadd.f32 %v2025, %v2427
    %v2722 = vadd.f32 %v2026, %v2429
    %v2723 = vadd.f32 %v2027, %v2498
    %v2724 = vadd.f32 %v2028, %v2500
    %v2725 = vadd.f32 %v2029, %v2569
    %v2726 = vadd.f32 %v2030, %v2571
    %v2727 = vadd.f32 %v2031, %v2640
    %v2728 = vadd.f32 %v2032, %v2642
    %v2729 = vadd.f32 %v2033, %v2711
    %v2730 = vadd.f32 %v2034, %v2713
    %v2731 = vld [vmem:[%s0] sm:$0xff]
    %v2732 = vld [vmem:[%s0 + $0x8] sm:$0xff]
    %v2733 = vld [vmem:[%s0 + $0x10] sm:$0xff]
    %v2734 = vld [vmem:[%s0 + $0x18] sm:$0xff]
    %v2735 = vld [vmem:[%s0 + $0x20] sm:$0xff]
    %v2736 = vld [vmem:[%s0 + $0x28] sm:$0xff]
    %v2737 = vld [vmem:[%s0 + $0x30] sm:$0xff]
    %v2738 = vld [vmem:[%s0 + $0x38] sm:$0xff]
    %v2739 = vld [vmem:[%s0 + $0x40] sm:$0xf]
    %v2749 = vcombine.high %v2731, %v2731
    %v2750 = vcombine.high %v2732, %v2732
    %v2751 = vcombine.high %v2733, %v2733
    %v2752 = vcombine.high %v2734, %v2734
    %v2753 = vcombine.high %v2735, %v2735
    %v2754 = vcombine.high %v2736, %v2736
    %v2755 = vcombine.high %v2737, %v2737
    %v2756 = vcombine.high %v2738, %v2738
    %2757 = vrot.lane.b32.xlu0 %v2731, 109
    %v2758 = vpop.permute.xlu0 %2757
    %2759 = vrot.lane.b32.xlu0 %v2749, 109
    %v2760 = vpop.permute.xlu0 %2759
    %2761 = vrot.lane.b32.xlu0 %v2732, 109
    %v2762 = vpop.permute.xlu0 %2761
    %2763 = vrot.lane.b32.xlu0 %v2750, 109
    %v2764 = vpop.permute.xlu0 %2763
    %2765 = vrot.lane.b32.xlu0 %v2733, 109
    %v2766 = vpop.permute.xlu0 %2765
    %2767 = vrot.lane.b32.xlu0 %v2751, 109
    %v2768 = vpop.permute.xlu0 %2767
    %2769 = vrot.lane.b32.xlu0 %v2734, 109
    %v2770 = vpop.permute.xlu0 %2769
    %2771 = vrot.lane.b32.xlu0 %v2752, 109
    %v2772 = vpop.permute.xlu0 %2771
    %2773 = vrot.lane.b32.xlu0 %v2735, 109
    %v2774 = vpop.permute.xlu0 %2773
    %2775 = vrot.lane.b32.xlu0 %v2753, 109
    %v2776 = vpop.permute.xlu0 %2775
    %2777 = vrot.lane.b32.xlu0 %v2736, 109
    %v2778 = vpop.permute.xlu0 %2777
    %2779 = vrot.lane.b32.xlu0 %v2754, 109
    %v2780 = vpop.permute.xlu0 %2779
    %2781 = vrot.lane.b32.xlu0 %v2737, 109
    %v2782 = vpop.permute.xlu0 %2781
    %2783 = vrot.lane.b32.xlu0 %v2755, 109
    %v2784 = vpop.permute.xlu0 %2783
    %2785 = vrot.lane.b32.xlu0 %v2738, 109
    %v2786 = vpop.permute.xlu0 %2785
    %2787 = vrot.lane.b32.xlu0 %v2756, 109
    %v2788 = vpop.permute.xlu0 %2787
    %2789 = vrot.lane.b32.xlu0 %v2739, 109
    %v2790 = vpop.permute.xlu0 %2789
    %vm2791 = vcmask 891904
    %v2792 = vsel %vm2791, %v2758, %v2760
    %v2793 = vsel %vm2791, %v2760, %v2762
    %v2794 = vsel %vm2791, %v2762, %v2764
    %v2795 = vsel %vm2791, %v2764, %v2766
    %v2796 = vsel %vm2791, %v2766, %v2768
    %v2797 = vsel %vm2791, %v2768, %v2770
    %v2798 = vsel %vm2791, %v2770, %v2772
    %v2799 = vsel %vm2791, %v2772, %v2774
    %v2800 = vsel %vm2791, %v2774, %v2776
    %v2801 = vsel %vm2791, %v2776, %v2778
    %v2802 = vsel %vm2791, %v2778, %v2780
    %v2803 = vsel %vm2791, %v2780, %v2782
    %v2804 = vsel %vm2791, %v2782, %v2784
    %v2805 = vsel %vm2791, %v2784, %v2786
    %v2806 = vsel %vm2791, %v2786, %v2788
    %v2807 = vsel %vm2791, %v2788, %v2790
    %v2809 = vsel %vm131, %v44, 0
    %v2811 = vsel %vm135, %v2792, 0
    %v2813 = vsel %vm135, %v2793, 0
    %v2815 = vsel %vm135, %v2794, 0
    %v2817 = vsel %vm135, %v2795, 0
    %v2819 = vsel %vm135, %v2796, 0
    %v2821 = vsel %vm135, %v2797, 0
    %v2823 = vsel %vm135, %v2798, 0
    %v2825 = vsel %vm135, %v2799, 0
    %v2827 = vsel %vm135, %v2800, 0
    %v2829 = vsel %vm135, %v2801, 0
    %v2831 = vsel %vm135, %v2802, 0
    %v2833 = vsel %vm135, %v2803, 0
    %v2835 = vsel %vm135, %v2804, 0
    %v2837 = vsel %vm135, %v2805, 0
    %v2839 = vsel %vm135, %v2806, 0
    %v2841 = vsel %vm135, %v2807, 0
    %2843 = vmatprep.subr.mxu0 %v2813
    %2844 = vmatpush1.msra.mxu0 %v2811
    %2845 = vmatprep.subr.mxu0 0.0
    %2846 = vmatpush1.msra.mxu0 0.0
    %2847 = vmatprep.subr.mxu0 0.0
    %2848 = vmatpush1.msra.mxu0 0.0
    %2849 = vmatprep.subr.mxu0 0.0
    %2850 = vmatpush1.msra.mxu0 0.0
    %2851 = vmatprep.subr.mxu0 0.0
    %2852 = vmatpush1.msra.mxu0 0.0
    %2853 = vmatprep.subr.mxu0 0.0
    %2854 = vmatpush1.msra.mxu0 0.0
    %2855 = vmatprep.subr.mxu0 0.0
    %2856 = vmatpush1.msra.mxu0 0.0
    %2857 = vmatprep.subr.mxu0 0.0
    %2858 = vmatpush1.msra.mxu0 0.0
    %2859 = vmatprep.subr.mxu0 0.0
    %2860 = vmatpush1.msra.mxu0 0.0
    %2861 = vmatprep.subr.mxu0 0.0
    %2862 = vmatpush1.msra.mxu0 0.0
    %2863 = vmatprep.subr.mxu0 0.0
    %2864 = vmatpush1.msra.mxu0 0.0
    %2865 = vmatprep.subr.mxu0 0.0
    %2866 = vmatpush1.msra.mxu0 0.0
    %2867 = vmatprep.subr.mxu0 0.0
    %2868 = vmatpush1.msra.mxu0 0.0
    %2869 = vmatprep.subr.mxu0 0.0
    %2870 = vmatpush1.msra.mxu0 0.0
    %2871 = vmatprep.subr.mxu0 0.0
    %2872 = vmatpush1.msra.mxu0 0.0
    %2873 = vmatprep.subr.mxu0 0.0
    %2874 = vmatpush1.msra.mxu0 0.0
    %2875 = vmatprep.subr.mxu0 0.0
    %2876 = vmatpush1.msra.mxu0 0.0
    %2877 = vmatprep.subr.mxu0 0.0
    %2878 = vmatpush1.msra.mxu0 0.0
    %2879 = vmatprep.subr.mxu0 0.0
    %2880 = vmatpush1.msra.mxu0 0.0
    %2881 = vmatprep.subr.mxu0 0.0
    %2882 = vmatpush1.msra.mxu0 0.0
    %2883 = vmatprep.subr.mxu0 0.0
    %2884 = vmatpush1.msra.mxu0 0.0
    %2885 = vmatprep.subr.mxu0 0.0
    %2886 = vmatpush1.msra.mxu0 0.0
    %2887 = vmatprep.subr.mxu0 0.0
    %2888 = vmatpush1.msra.mxu0 0.0
    %2889 = vmatprep.subr.mxu0 0.0
    %2890 = vmatpush1.msra.mxu0 0.0
    %2891 = vmatprep.subr.mxu0 0.0
    %2892 = vmatpush1.msra.mxu0 0.0
    %2893 = vmatprep.subr.mxu0 0.0
    %2894 = vmatpush1.msra.mxu0 0.0
    %2895 = vmatprep.subr.mxu0 0.0
    %2896 = vmatpush1.msra.mxu0 0.0
    %2897 = vmatprep.subr.mxu0 0.0
    %2898 = vmatpush1.msra.mxu0 0.0
    %2899 = vmatprep.subr.mxu0 0.0
    %2900 = vmatpush1.msra.mxu0 0.0
    %2901 = vmatprep.subr.mxu0 0.0
    %2902 = vmatpush1.msra.mxu0 0.0
    %2903 = vmatprep.subr.mxu0 0.0
    %2904 = vmatpush1.msra.mxu0 0.0
    %2905 = vmatprep.subr.mxu0 0.0
    %2906 = vmatpush1.msra.mxu0 0.0
    %2907 = vmatprep.mubr.f32.mxu0 0.0
    %2908 = vmatmul.mubr.f32.gmra.mrb[0].mxu0 %v2809
    %v2909 = vpop.f32.mrb[0].mxu0
    %v2910 = vadd.f32 0.0, %v2909
    %v2911 = vpop.f32.mrb[0].mxu0
    %v2912 = vadd.f32 0.0, %v2911
    %2913 = vdwg.mxu0
    %2914 = vmatprep.subr.mxu0 %v2817
    %2915 = vmatpush1.msra.mxu0 %v2815
    %2916 = vmatprep.subr.mxu0 0.0
    %2917 = vmatpush1.msra.mxu0 0.0
    %2918 = vmatprep.subr.mxu0 0.0
    %2919 = vmatpush1.msra.mxu0 0.0
    %2920 = vmatprep.subr.mxu0 0.0
    %2921 = vmatpush1.msra.mxu0 0.0
    %2922 = vmatprep.subr.mxu0 0.0
    %2923 = vmatpush1.msra.mxu0 0.0
    %2924 = vmatprep.subr.mxu0 0.0
    %2925 = vmatpush1.msra.mxu0 0.0
    %2926 = vmatprep.subr.mxu0 0.0
    %2927 = vmatpush1.msra.mxu0 0.0
    %2928 = vmatprep.subr.mxu0 0.0
    %2929 = vmatpush1.msra.mxu0 0.0
    %2930 = vmatprep.subr.mxu0 0.0
    %2931 = vmatpush1.msra.mxu0 0.0
    %2932 = vmatprep.subr.mxu0 0.0
    %2933 = vmatpush1.msra.mxu0 0.0
    %2934 = vmatprep.subr.mxu0 0.0
    %2935 = vmatpush1.msra.mxu0 0.0
    %2936 = vmatprep.subr.mxu0 0.0
    %2937 = vmatpush1.msra.mxu0 0.0
    %2938 = vmatprep.subr.mxu0 0.0
    %2939 = vmatpush1.msra.mxu0 0.0
    %2940 = vmatprep.subr.mxu0 0.0
    %2941 = vmatpush1.msra.mxu0 0.0
    %2942 = vmatprep.subr.mxu0 0.0
    %2943 = vmatpush1.msra.mxu0 0.0
    %2944 = vmatprep.subr.mxu0 0.0
    %2945 = vmatpush1.msra.mxu0 0.0
    %2946 = vmatprep.subr.mxu0 0.0
    %2947 = vmatpush1.msra.mxu0 0.0
    %2948 = vmatprep.subr.mxu0 0.0
    %2949 = vmatpush1.msra.mxu0 0.0
    %2950 = vmatprep.subr.mxu0 0.0
    %2951 = vmatpush1.msra.mxu0 0.0
    %2952 = vmatprep.subr.mxu0 0.0
    %2953 = vmatpush1.msra.mxu0 0.0
    %2954 = vmatprep.subr.mxu0 0.0
    %2955 = vmatpush1.msra.mxu0 0.0
    %2956 = vmatprep.subr.mxu0 0.0
    %2957 = vmatpush1.msra.mxu0 0.0
    %2958 = vmatprep.subr.mxu0 0.0
    %2959 = vmatpush1.msra.mxu0 0.0
    %2960 = vmatprep.subr.mxu0 0.0
    %2961 = vmatpush1.msra.mxu0 0.0
    %2962 = vmatprep.subr.mxu0 0.0
    %2963 = vmatpush1.msra.mxu0 0.0
    %2964 = vmatprep.subr.mxu0 0.0
    %2965 = vmatpush1.msra.mxu0 0.0
    %2966 = vmatprep.subr.mxu0 0.0
    %2967 = vmatpush1.msra.mxu0 0.0
    %2968 = vmatprep.subr.mxu0 0.0
    %2969 = vmatpush1.msra.mxu0 0.0
    %2970 = vmatprep.subr.mxu0 0.0
    %2971 = vmatpush1.msra.mxu0 0.0
    %2972 = vmatprep.subr.mxu0 0.0
    %2973 = vmatpush1.msra.mxu0 0.0
    %2974 = vmatprep.subr.mxu0 0.0
    %2975 = vmatpush1.msra.mxu0 0.0
    %2976 = vmatprep.subr.mxu0 0.0
    %2977 = vmatpush1.msra.mxu0 0.0
    %2978 = vmatprep.mubr.f32.mxu0 0.0
    %2979 = vmatmul.mubr.f32.gmra.mrb[0].mxu0 %v2809
    %v2980 = vpop.f32.mrb[0].mxu0
    %v2981 = vadd.f32 0.0, %v2980
    %v2982 = vpop.f32.mrb[0].mxu0
    %v2983 = vadd.f32 0.0, %v2982
    %2984 = vdwg.mxu0
    %2985 = vmatprep.subr.mxu0 %v2821
    %2986 = vmatpush1.msra.mxu0 %v2819
    %2987 = vmatprep.subr.mxu0 0.0
    %2988 = vmatpush1.msra.mxu0 0.0
    %2989 = vmatprep.subr.mxu0 0.0
    %2990 = vmatpush1.msra.mxu0 0.0
    %2991 = vmatprep.subr.mxu0 0.0
    %2992 = vmatpush1.msra.mxu0 0.0
    %2993 = vmatprep.subr.mxu0 0.0
    %2994 = vmatpush1.msra.mxu0 0.0
    %2995 = vmatprep.subr.mxu0 0.0
    %2996 = vmatpush1.msra.mxu0 0.0
    %2997 = vmatprep.subr.mxu0 0.0
    %2998 = vmatpush1.msra.mxu0 0.0
    %2999 = vmatprep.subr.mxu0 0.0
    %3000 = vmatpush1.msra.mxu0 0.0
    %3001 = vmatprep.subr.mxu0 0.0
    %3002 = vmatpush1.msra.mxu0 0.0
    %3003 = vmatprep.subr.mxu0 0.0
    %3004 = vmatpush1.msra.mxu0 0.0
    %3005 = vmatprep.subr.mxu0 0.0
    %3006 = vmatpush1.msra.mxu0 0.0
    %3007 = vmatprep.subr.mxu0 0.0
    %3008 = vmatpush1.msra.mxu0 0.0
    %3009 = vmatprep.subr.mxu0 0.0
    %3010 = vmatpush1.msra.mxu0 0.0
    %3011 = vmatprep.subr.mxu0 0.0
    %3012 = vmatpush1.msra.mxu0 0.0
    %3013 = vmatprep.subr.mxu0 0.0
    %3014 = vmatpush1.msra.mxu0 0.0
    %3015 = vmatprep.subr.mxu0 0.0
    %3016 = vmatpush1.msra.mxu0 0.0
    %3017 = vmatprep.subr.mxu0 0.0
    %3018 = vmatpush1.msra.mxu0 0.0
    %3019 = vmatprep.subr.mxu0 0.0
    %3020 = vmatpush1.msra.mxu0 0.0
    %3021 = vmatprep.subr.mxu0 0.0
    %3022 = vmatpush1.msra.mxu0 0.0
    %3023 = vmatprep.subr.mxu0 0.0
    %3024 = vmatpush1.msra.mxu0 0.0
    %3025 = vmatprep.subr.mxu0 0.0
    %3026 = vmatpush1.msra.mxu0 0.0
    %3027 = vmatprep.subr.mxu0 0.0
    %3028 = vmatpush1.msra.mxu0 0.0
    %3029 = vmatprep.subr.mxu0 0.0
    %3030 = vmatpush1.msra.mxu0 0.0
    %3031 = vmatprep.subr.mxu0 0.0
    %3032 = vmatpush1.msra.mxu0 0.0
    %3033 = vmatprep.subr.mxu0 0.0
    %3034 = vmatpush1.msra.mxu0 0.0
    %3035 = vmatprep.subr.mxu0 0.0
    %3036 = vmatpush1.msra.mxu0 0.0
    %3037 = vmatprep.subr.mxu0 0.0
    %3038 = vmatpush1.msra.mxu0 0.0
    %3039 = vmatprep.subr.mxu0 0.0
    %3040 = vmatpush1.msra.mxu0 0.0
    %3041 = vmatprep.subr.mxu0 0.0
    %3042 = vmatpush1.msra.mxu0 0.0
    %3043 = vmatprep.subr.mxu0 0.0
    %3044 = vmatpush1.msra.mxu0 0.0
    %3045 = vmatprep.subr.mxu0 0.0
    %3046 = vmatpush1.msra.mxu0 0.0
    %3047 = vmatprep.subr.mxu0 0.0
    %3048 = vmatpush1.msra.mxu0 0.0
    %3049 = vmatprep.mubr.f32.mxu0 0.0
    %3050 = vmatmul.mubr.f32.gmra.mrb[0].mxu0 %v2809
    %v3051 = vpop.f32.mrb[0].mxu0
    %v3052 = vadd.f32 0.0, %v3051
    %v3053 = vpop.f32.mrb[0].mxu0
    %v3054 = vadd.f32 0.0, %v3053
    %3055 = vdwg.mxu0
    %3056 = vmatprep.subr.mxu0 %v2825
    %3057 = vmatpush1.msra.mxu0 %v2823
    %3058 = vmatprep.subr.mxu0 0.0
    %3059 = vmatpush1.msra.mxu0 0.0
    %3060 = vmatprep.subr.mxu0 0.0
    %3061 = vmatpush1.msra.mxu0 0.0
    %3062 = vmatprep.subr.mxu0 0.0
    %3063 = vmatpush1.msra.mxu0 0.0
    %3064 = vmatprep.subr.mxu0 0.0
    %3065 = vmatpush1.msra.mxu0 0.0
    %3066 = vmatprep.subr.mxu0 0.0
    %3067 = vmatpush1.msra.mxu0 0.0
    %3068 = vmatprep.subr.mxu0 0.0
    %3069 = vmatpush1.msra.mxu0 0.0
    %3070 = vmatprep.subr.mxu0 0.0
    %3071 = vmatpush1.msra.mxu0 0.0
    %3072 = vmatprep.subr.mxu0 0.0
    %3073 = vmatpush1.msra.mxu0 0.0
    %3074 = vmatprep.subr.mxu0 0.0
    %3075 = vmatpush1.msra.mxu0 0.0
    %3076 = vmatprep.subr.mxu0 0.0
    %3077 = vmatpush1.msra.mxu0 0.0
    %3078 = vmatprep.subr.mxu0 0.0
    %3079 = vmatpush1.msra.mxu0 0.0
    %3080 = vmatprep.subr.mxu0 0.0
    %3081 = vmatpush1.msra.mxu0 0.0
    %3082 = vmatprep.subr.mxu0 0.0
    %3083 = vmatpush1.msra.mxu0 0.0
    %3084 = vmatprep.subr.mxu0 0.0
    %3085 = vmatpush1.msra.mxu0 0.0
    %3086 = vmatprep.subr.mxu0 0.0
    %3087 = vmatpush1.msra.mxu0 0.0
    %3088 = vmatprep.subr.mxu0 0.0
    %3089 = vmatpush1.msra.mxu0 0.0
    %3090 = vmatprep.subr.mxu0 0.0
    %3091 = vmatpush1.msra.mxu0 0.0
    %3092 = vmatprep.subr.mxu0 0.0
    %3093 = vmatpush1.msra.mxu0 0.0
    %3094 = vmatprep.subr.mxu0 0.0
    %3095 = vmatpush1.msra.mxu0 0.0
    %3096 = vmatprep.subr.mxu0 0.0
    %3097 = vmatpush1.msra.mxu0 0.0
    %3098 = vmatprep.subr.mxu0 0.0
    %3099 = vmatpush1.msra.mxu0 0.0
    %3100 = vmatprep.subr.mxu0 0.0
    %3101 = vmatpush1.msra.mxu0 0.0
    %3102 = vmatprep.subr.mxu0 0.0
    %3103 = vmatpush1.msra.mxu0 0.0
    %3104 = vmatprep.subr.mxu0 0.0
    %3105 = vmatpush1.msra.mxu0 0.0
    %3106 = vmatprep.subr.mxu0 0.0
    %3107 = vmatpush1.msra.mxu0 0.0
    %3108 = vmatprep.subr.mxu0 0.0
    %3109 = vmatpush1.msra.mxu0 0.0
    %3110 = vmatprep.subr.mxu0 0.0
    %3111 = vmatpush1.msra.mxu0 0.0
    %3112 = vmatprep.subr.mxu0 0.0
    %3113 = vmatpush1.msra.mxu0 0.0
    %3114 = vmatprep.subr.mxu0 0.0
    %3115 = vmatpush1.msra.mxu0 0.0
    %3116 = vmatprep.subr.mxu0 0.0
    %3117 = vmatpush1.msra.mxu0 0.0
    %3118 = vmatprep.subr.mxu0 0.0
    %3119 = vmatpush1.msra.mxu0 0.0
    %3120 = vmatprep.mubr.f32.mxu0 0.0
    %3121 = vmatmul.mubr.f32.gmra.mrb[0].mxu0 %v2809
    %v3122 = vpop.f32.mrb[0].mxu0
    %v3123 = vadd.f32 0.0, %v3122
    %v3124 = vpop.f32.mrb[0].mxu0
    %v3125 = vadd.f32 0.0, %v3124
    %3126 = vdwg.mxu0
    %3127 = vmatprep.subr.mxu0 %v2829
    %3128 = vmatpush1.msra.mxu0 %v2827
    %3129 = vmatprep.subr.mxu0 0.0
    %3130 = vmatpush1.msra.mxu0 0.0
    %3131 = vmatprep.subr.mxu0 0.0
    %3132 = vmatpush1.msra.mxu0 0.0
    %3133 = vmatprep.subr.mxu0 0.0
    %3134 = vmatpush1.msra.mxu0 0.0
    %3135 = vmatprep.subr.mxu0 0.0
    %3136 = vmatpush1.msra.mxu0 0.0
    %3137 = vmatprep.subr.mxu0 0.0
    %3138 = vmatpush1.msra.mxu0 0.0
    %3139 = vmatprep.subr.mxu0 0.0
    %3140 = vmatpush1.msra.mxu0 0.0
    %3141 = vmatprep.subr.mxu0 0.0
    %3142 = vmatpush1.msra.mxu0 0.0
    %3143 = vmatprep.subr.mxu0 0.0
    %3144 = vmatpush1.msra.mxu0 0.0
    %3145 = vmatprep.subr.mxu0 0.0
    %3146 = vmatpush1.msra.mxu0 0.0
    %3147 = vmatprep.subr.mxu0 0.0
    %3148 = vmatpush1.msra.mxu0 0.0
    %3149 = vmatprep.subr.mxu0 0.0
    %3150 = vmatpush1.msra.mxu0 0.0
    %3151 = vmatprep.subr.mxu0 0.0
    %3152 = vmatpush1.msra.mxu0 0.0
    %3153 = vmatprep.subr.mxu0 0.0
    %3154 = vmatpush1.msra.mxu0 0.0
    %3155 = vmatprep.subr.mxu0 0.0
    %3156 = vmatpush1.msra.mxu0 0.0
    %3157 = vmatprep.subr.mxu0 0.0
    %3158 = vmatpush1.msra.mxu0 0.0
    %3159 = vmatprep.subr.mxu0 0.0
    %3160 = vmatpush1.msra.mxu0 0.0
    %3161 = vmatprep.subr.mxu0 0.0
    %3162 = vmatpush1.msra.mxu0 0.0
    %3163 = vmatprep.subr.mxu0 0.0
    %3164 = vmatpush1.msra.mxu0 0.0
    %3165 = vmatprep.subr.mxu0 0.0
    %3166 = vmatpush1.msra.mxu0 0.0
    %3167 = vmatprep.subr.mxu0 0.0
    %3168 = vmatpush1.msra.mxu0 0.0
    %3169 = vmatprep.subr.mxu0 0.0
    %3170 = vmatpush1.msra.mxu0 0.0
    %3171 = vmatprep.subr.mxu0 0.0
    %3172 = vmatpush1.msra.mxu0 0.0
    %3173 = vmatprep.subr.mxu0 0.0
    %3174 = vmatpush1.msra.mxu0 0.0
    %3175 = vmatprep.subr.mxu0 0.0
    %3176 = vmatpush1.msra.mxu0 0.0
    %3177 = vmatprep.subr.mxu0 0.0
    %3178 = vmatpush1.msra.mxu0 0.0
    %3179 = vmatprep.subr.mxu0 0.0
    %3180 = vmatpush1.msra.mxu0 0.0
    %3181 = vmatprep.subr.mxu0 0.0
    %3182 = vmatpush1.msra.mxu0 0.0
    %3183 = vmatprep.subr.mxu0 0.0
    %3184 = vmatpush1.msra.mxu0 0.0
    %3185 = vmatprep.subr.mxu0 0.0
    %3186 = vmatpush1.msra.mxu0 0.0
    %3187 = vmatprep.subr.mxu0 0.0
    %3188 = vmatpush1.msra.mxu0 0.0
    %3189 = vmatprep.subr.mxu0 0.0
    %3190 = vmatpush1.msra.mxu0 0.0
    %3191 = vmatprep.mubr.f32.mxu0 0.0
    %3192 = vmatmul.mubr.f32.gmra.mrb[0].mxu0 %v2809
    %v3193 = vpop.f32.mrb[0].mxu0
    %v3194 = vadd.f32 0.0, %v3193
    %v3195 = vpop.f32.mrb[0].mxu0
    %v3196 = vadd.f32 0.0, %v3195
    %3197 = vdwg.mxu0
    %3198 = vmatprep.subr.mxu0 %v2833
    %3199 = vmatpush1.msra.mxu0 %v2831
    %3200 = vmatprep.subr.mxu0 0.0
    %3201 = vmatpush1.msra.mxu0 0.0
    %3202 = vmatprep.subr.mxu0 0.0
    %3203 = vmatpush1.msra.mxu0 0.0
    %3204 = vmatprep.subr.mxu0 0.0
    %3205 = vmatpush1.msra.mxu0 0.0
    %3206 = vmatprep.subr.mxu0 0.0
    %3207 = vmatpush1.msra.mxu0 0.0
    %3208 = vmatprep.subr.mxu0 0.0
    %3209 = vmatpush1.msra.mxu0 0.0
    %3210 = vmatprep.subr.mxu0 0.0
    %3211 = vmatpush1.msra.mxu0 0.0
    %3212 = vmatprep.subr.mxu0 0.0
    %3213 = vmatpush1.msra.mxu0 0.0
    %3214 = vmatprep.subr.mxu0 0.0
    %3215 = vmatpush1.msra.mxu0 0.0
    %3216 = vmatprep.subr.mxu0 0.0
    %3217 = vmatpush1.msra.mxu0 0.0
    %3218 = vmatprep.subr.mxu0 0.0
    %3219 = vmatpush1.msra.mxu0 0.0
    %3220 = vmatprep.subr.mxu0 0.0
    %3221 = vmatpush1.msra.mxu0 0.0
    %3222 = vmatprep.subr.mxu0 0.0
    %3223 = vmatpush1.msra.mxu0 0.0
    %3224 = vmatprep.subr.mxu0 0.0
    %3225 = vmatpush1.msra.mxu0 0.0
    %3226 = vmatprep.subr.mxu0 0.0
    %3227 = vmatpush1.msra.mxu0 0.0
    %3228 = vmatprep.subr.mxu0 0.0
    %3229 = vmatpush1.msra.mxu0 0.0
    %3230 = vmatprep.subr.mxu0 0.0
    %3231 = vmatpush1.msra.mxu0 0.0
    %3232 = vmatprep.subr.mxu0 0.0
    %3233 = vmatpush1.msra.mxu0 0.0
    %3234 = vmatprep.subr.mxu0 0.0
    %3235 = vmatpush1.msra.mxu0 0.0
    %3236 = vmatprep.subr.mxu0 0.0
    %3237 = vmatpush1.msra.mxu0 0.0
    %3238 = vmatprep.subr.mxu0 0.0
    %3239 = vmatpush1.msra.mxu0 0.0
    %3240 = vmatprep.subr.mxu0 0.0
    %3241 = vmatpush1.msra.mxu0 0.0
    %3242 = vmatprep.subr.mxu0 0.0
    %3243 = vmatpush1.msra.mxu0 0.0
    %3244 = vmatprep.subr.mxu0 0.0
    %3245 = vmatpush1.msra.mxu0 0.0
    %3246 = vmatprep.subr.mxu0 0.0
    %3247 = vmatpush1.msra.mxu0 0.0
    %3248 = vmatprep.subr.mxu0 0.0
    %3249 = vmatpush1.msra.mxu0 0.0
    %3250 = vmatprep.subr.mxu0 0.0
    %3251 = vmatpush1.msra.mxu0 0.0
    %3252 = vmatprep.subr.mxu0 0.0
    %3253 = vmatpush1.msra.mxu0 0.0
    %3254 = vmatprep.subr.mxu0 0.0
    %3255 = vmatpush1.msra.mxu0 0.0
    %3256 = vmatprep.subr.mxu0 0.0
    %3257 = vmatpush1.msra.mxu0 0.0
    %3258 = vmatprep.subr.mxu0 0.0
    %3259 = vmatpush1.msra.mxu0 0.0
    %3260 = vmatprep.subr.mxu0 0.0
    %3261 = vmatpush1.msra.mxu0 0.0
    %3262 = vmatprep.mubr.f32.mxu0 0.0
    %3263 = vmatmul.mubr.f32.gmra.mrb[0].mxu0 %v2809
    %v3264 = vpop.f32.mrb[0].mxu0
    %v3265 = vadd.f32 0.0, %v3264
    %v3266 = vpop.f32.mrb[0].mxu0
    %v3267 = vadd.f32 0.0, %v3266
    %3268 = vdwg.mxu0
    %3269 = vmatprep.subr.mxu0 %v2837
    %3270 = vmatpush1.msra.mxu0 %v2835
    %3271 = vmatprep.subr.mxu0 0.0
    %3272 = vmatpush1.msra.mxu0 0.0
    %3273 = vmatprep.subr.mxu0 0.0
    %3274 = vmatpush1.msra.mxu0 0.0
    %3275 = vmatprep.subr.mxu0 0.0
    %3276 = vmatpush1.msra.mxu0 0.0
    %3277 = vmatprep.subr.mxu0 0.0
    %3278 = vmatpush1.msra.mxu0 0.0
    %3279 = vmatprep.subr.mxu0 0.0
    %3280 = vmatpush1.msra.mxu0 0.0
    %3281 = vmatprep.subr.mxu0 0.0
    %3282 = vmatpush1.msra.mxu0 0.0
    %3283 = vmatprep.subr.mxu0 0.0
    %3284 = vmatpush1.msra.mxu0 0.0
    %3285 = vmatprep.subr.mxu0 0.0
    %3286 = vmatpush1.msra.mxu0 0.0
    %3287 = vmatprep.subr.mxu0 0.0
    %3288 = vmatpush1.msra.mxu0 0.0
    %3289 = vmatprep.subr.mxu0 0.0
    %3290 = vmatpush1.msra.mxu0 0.0
    %3291 = vmatprep.subr.mxu0 0.0
    %3292 = vmatpush1.msra.mxu0 0.0
    %3293 = vmatprep.subr.mxu0 0.0
    %3294 = vmatpush1.msra.mxu0 0.0
    %3295 = vmatprep.subr.mxu0 0.0
    %3296 = vmatpush1.msra.mxu0 0.0
    %3297 = vmatprep.subr.mxu0 0.0
    %3298 = vmatpush1.msra.mxu0 0.0
    %3299 = vmatprep.subr.mxu0 0.0
    %3300 = vmatpush1.msra.mxu0 0.0
    %3301 = vmatprep.subr.mxu0 0.0
    %3302 = vmatpush1.msra.mxu0 0.0
    %3303 = vmatprep.subr.mxu0 0.0
    %3304 = vmatpush1.msra.mxu0 0.0
    %3305 = vmatprep.subr.mxu0 0.0
    %3306 = vmatpush1.msra.mxu0 0.0
    %3307 = vmatprep.subr.mxu0 0.0
    %3308 = vmatpush1.msra.mxu0 0.0
    %3309 = vmatprep.subr.mxu0 0.0
    %3310 = vmatpush1.msra.mxu0 0.0
    %3311 = vmatprep.subr.mxu0 0.0
    %3312 = vmatpush1.msra.mxu0 0.0
    %3313 = vmatprep.subr.mxu0 0.0
    %3314 = vmatpush1.msra.mxu0 0.0
    %3315 = vmatprep.subr.mxu0 0.0
    %3316 = vmatpush1.msra.mxu0 0.0
    %3317 = vmatprep.subr.mxu0 0.0
    %3318 = vmatpush1.msra.mxu0 0.0
    %3319 = vmatprep.subr.mxu0 0.0
    %3320 = vmatpush1.msra.mxu0 0.0
    %3321 = vmatprep.subr.mxu0 0.0
    %3322 = vmatpush1.msra.mxu0 0.0
    %3323 = vmatprep.subr.mxu0 0.0
    %3324 = vmatpush1.msra.mxu0 0.0
    %3325 = vmatprep.subr.mxu0 0.0
    %3326 = vmatpush1.msra.mxu0 0.0
    %3327 = vmatprep.subr.mxu0 0.0
    %3328 = vmatpush1.msra.mxu0 0.0
    %3329 = vmatprep.subr.mxu0 0.0
    %3330 = vmatpush1.msra.mxu0 0.0
    %3331 = vmatprep.subr.mxu0 0.0
    %3332 = vmatpush1.msra.mxu0 0.0
    %3333 = vmatprep.mubr.f32.mxu0 0.0
    %3334 = vmatmul.mubr.f32.gmra.mrb[0].mxu0 %v2809
    %v3335 = vpop.f32.mrb[0].mxu0
    %v3336 = vadd.f32 0.0, %v3335
    %v3337 = vpop.f32.mrb[0].mxu0
    %v3338 = vadd.f32 0.0, %v3337
    %3339 = vdwg.mxu0
    %3340 = vmatprep.subr.mxu0 %v2841
    %3341 = vmatpush1.msra.mxu0 %v2839
    %3342 = vmatprep.subr.mxu0 0.0
    %3343 = vmatpush1.msra.mxu0 0.0
    %3344 = vmatprep.subr.mxu0 0.0
    %3345 = vmatpush1.msra.mxu0 0.0
    %3346 = vmatprep.subr.mxu0 0.0
    %3347 = vmatpush1.msra.mxu0 0.0
    %3348 = vmatprep.subr.mxu0 0.0
    %3349 = vmatpush1.msra.mxu0 0.0
    %3350 = vmatprep.subr.mxu0 0.0
    %3351 = vmatpush1.msra.mxu0 0.0
    %3352 = vmatprep.subr.mxu0 0.0
    %3353 = vmatpush1.msra.mxu0 0.0
    %3354 = vmatprep.subr.mxu0 0.0
    %3355 = vmatpush1.msra.mxu0 0.0
    %3356 = vmatprep.subr.mxu0 0.0
    %3357 = vmatpush1.msra.mxu0 0.0
    %3358 = vmatprep.subr.mxu0 0.0
    %3359 = vmatpush1.msra.mxu0 0.0
    %3360 = vmatprep.subr.mxu0 0.0
    %3361 = vmatpush1.msra.mxu0 0.0
    %3362 = vmatprep.subr.mxu0 0.0
    %3363 = vmatpush1.msra.mxu0 0.0
    %3364 = vmatprep.subr.mxu0 0.0
    %3365 = vmatpush1.msra.mxu0 0.0
    %3366 = vmatprep.subr.mxu0 0.0
    %3367 = vmatpush1.msra.mxu0 0.0
    %3368 = vmatprep.subr.mxu0 0.0
    %3369 = vmatpush1.msra.mxu0 0.0
    %3370 = vmatprep.subr.mxu0 0.0
    %3371 = vmatpush1.msra.mxu0 0.0
    %3372 = vmatprep.subr.mxu0 0.0
    %3373 = vmatpush1.msra.mxu0 0.0
    %3374 = vmatprep.subr.mxu0 0.0
    %3375 = vmatpush1.msra.mxu0 0.0
    %3376 = vmatprep.subr.mxu0 0.0
    %3377 = vmatpush1.msra.mxu0 0.0
    %3378 = vmatprep.subr.mxu0 0.0
    %3379 = vmatpush1.msra.mxu0 0.0
    %3380 = vmatprep.subr.mxu0 0.0
    %3381 = vmatpush1.msra.mxu0 0.0
    %3382 = vmatprep.subr.mxu0 0.0
    %3383 = vmatpush1.msra.mxu0 0.0
    %3384 = vmatprep.subr.mxu0 0.0
    %3385 = vmatpush1.msra.mxu0 0.0
    %3386 = vmatprep.subr.mxu0 0.0
    %3387 = vmatpush1.msra.mxu0 0.0
    %3388 = vmatprep.subr.mxu0 0.0
    %3389 = vmatpush1.msra.mxu0 0.0
    %3390 = vmatprep.subr.mxu0 0.0
    %3391 = vmatpush1.msra.mxu0 0.0
    %3392 = vmatprep.subr.mxu0 0.0
    %3393 = vmatpush1.msra.mxu0 0.0
    %3394 = vmatprep.subr.mxu0 0.0
    %3395 = vmatpush1.msra.mxu0 0.0
    %3396 = vmatprep.subr.mxu0 0.0
    %3397 = vmatpush1.msra.mxu0 0.0
    %3398 = vmatprep.subr.mxu0 0.0
    %3399 = vmatpush1.msra.mxu0 0.0
    %3400 = vmatprep.subr.mxu0 0.0
    %3401 = vmatpush1.msra.mxu0 0.0
    %3402 = vmatprep.subr.mxu0 0.0
    %3403 = vmatpush1.msra.mxu0 0.0
    %3404 = vmatprep.mubr.f32.mxu0 0.0
    %3405 = vmatmul.mubr.f32.gmra.mrb[0].mxu0 %v2809
    %v3406 = vpop.f32.mrb[0].mxu0
    %v3407 = vadd.f32 0.0, %v3406
    %v3408 = vpop.f32.mrb[0].mxu0
    %v3409 = vadd.f32 0.0, %v3408
    %3410 = vdwg.mxu0
    %v3411 = vadd.f32 %v2715, %v2910
    %v3412 = vadd.f32 %v2716, %v2912
    %v3413 = vadd.f32 %v2717, %v2981
    %v3414 = vadd.f32 %v2718, %v2983
    %v3415 = vadd.f32 %v2719, %v3052
    %v3416 = vadd.f32 %v2720, %v3054
    %v3417 = vadd.f32 %v2721, %v3123
    %v3418 = vadd.f32 %v2722, %v3125
    %v3419 = vadd.f32 %v2723, %v3194
    %v3420 = vadd.f32 %v2724, %v3196
    %v3421 = vadd.f32 %v2725, %v3265
    %v3422 = vadd.f32 %v2726, %v3267
    %v3423 = vadd.f32 %v2727, %v3336
    %v3424 = vadd.f32 %v2728, %v3338
    %v3425 = vadd.f32 %v2729, %v3407
    %v3426 = vadd.f32 %v2730, %v3409
    %v3427 = vld [vmem:[%s0] sm:$0xff]
    %v3428 = vld [vmem:[%s0 + $0x8] sm:$0xff]
    %v3429 = vld [vmem:[%s0 + $0x10] sm:$0xff]
    %v3430 = vld [vmem:[%s0 + $0x18] sm:$0xff]
    %v3431 = vld [vmem:[%s0 + $0x20] sm:$0xff]
    %v3432 = vld [vmem:[%s0 + $0x28] sm:$0xff]
    %v3433 = vld [vmem:[%s0 + $0x30] sm:$0xff]
    %v3434 = vld [vmem:[%s0 + $0x38] sm:$0xff]
    %v3435 = vld [vmem:[%s0 + $0x40] sm:$0xf]
    %v3445 = vcombine.high %v3427, %v3427
    %v3446 = vcombine.high %v3428, %v3428
    %v3447 = vcombine.high %v3429, %v3429
    %v3448 = vcombine.high %v3430, %v3430
    %v3449 = vcombine.high %v3431, %v3431
    %v3450 = vcombine.high %v3432, %v3432
    %v3451 = vcombine.high %v3433, %v3433
    %v3452 = vcombine.high %v3434, %v3434
    %3453 = vrot.lane.b32.xlu0 %v3427, 108
    %v3454 = vpop.permute.xlu0 %3453
    %3455 = vrot.lane.b32.xlu0 %v3445, 108
    %v3456 = vpop.permute.xlu0 %3455
    %3457 = vrot.lane.b32.xlu0 %v3428, 108
    %v3458 = vpop.permute.xlu0 %3457
    %3459 = vrot.lane.b32.xlu0 %v3446, 108
    %v3460 = vpop.permute.xlu0 %3459
    %3461 = vrot.lane.b32.xlu0 %v3429, 108
    %v3462 = vpop.permute.xlu0 %3461
    %3463 = vrot.lane.b32.xlu0 %v3447, 108
    %v3464 = vpop.permute.xlu0 %3463
    %3465 = vrot.lane.b32.xlu0 %v3430, 108
    %v3466 = vpop.permute.xlu0 %3465
    %3467 = vrot.lane.b32.xlu0 %v3448, 108
    %v3468 = vpop.permute.xlu0 %3467
    %3469 = vrot.lane.b32.xlu0 %v3431, 108
    %v3470 = vpop.permute.xlu0 %3469
    %3471 = vrot.lane.b32.xlu0 %v3449, 108
    %v3472 = vpop.permute.xlu0 %3471
    %3473 = vrot.lane.b32.xlu0 %v3432, 108
    %v3474 = vpop.permute.xlu0 %3473
    %3475 = vrot.lane.b32.xlu0 %v3450, 108
    %v3476 = vpop.permute.xlu0 %3475
    %3477 = vrot.lane.b32.xlu0 %v3433, 108
    %v3478 = vpop.permute.xlu0 %3477
    %3479 = vrot.lane.b32.xlu0 %v3451, 108
    %v3480 = vpop.permute.xlu0 %3479
    %3481 = vrot.lane.b32.xlu0 %v3434, 108
    %v3482 = vpop.permute.xlu0 %3481
    %3483 = vrot.lane.b32.xlu0 %v3452, 108
    %v3484 = vpop.permute.xlu0 %3483
    %3485 = vrot.lane.b32.xlu0 %v3435, 108
    %v3486 = vpop.permute.xlu0 %3485
    %vm3487 = vcmask 883712
    %v3488 = vsel %vm3487, %v3454, %v3456
    %v3489 = vsel %vm3487, %v3456, %v3458
    %v3490 = vsel %vm3487, %v3458, %v3460
    %v3491 = vsel %vm3487, %v3460, %v3462
    %v3492 = vsel %vm3487, %v3462, %v3464
    %v3493 = vsel %vm3487, %v3464, %v3466
    %v3494 = vsel %vm3487, %v3466, %v3468
    %v3495 = vsel %vm3487, %v3468, %v3470
    %v3496 = vsel %vm3487, %v3470, %v3472
    %v3497 = vsel %vm3487, %v3472, %v3474
    %v3498 = vsel %vm3487, %v3474, %v3476
    %v3499 = vsel %vm3487, %v3476, %v3478
    %v3500 = vsel %vm3487, %v3478, %v3480
    %v3501 = vsel %vm3487, %v3480, %v3482
    %v3502 = vsel %vm3487, %v3482, %v3484
    %v3503 = vsel %vm3487, %v3484, %v3486
    %v3505 = vsel %vm131, %v46, 0
    %v3507 = vsel %vm135, %v3488, 0
    %v3509 = vsel %vm135, %v3489, 0
    %v3511 = vsel %vm135, %v3490, 0
    %v3513 = vsel %vm135, %v3491, 0
    %v3515 = vsel %vm135, %v3492, 0
    %v3517 = vsel %vm135, %v3493, 0
    %v3519 = vsel %vm135, %v3494, 0
    %v3521 = vsel %vm135, %v3495, 0
    %v3523 = vsel %vm135, %v3496, 0
    %v3525 = vsel %vm135, %v3497, 0
    %v3527 = vsel %vm135, %v3498, 0
    %v3529 = vsel %vm135, %v3499, 0
    %v3531 = vsel %vm135, %v3500, 0
    %v3533 = vsel %vm135, %v3501, 0
    %v3535 = vsel %vm135, %v3502, 0
    %v3537 = vsel %vm135, %v3503, 0
    %3539 = vmatprep.subr.mxu0 %v3509
    %3540 = vmatpush1.msra.mxu0 %v3507
    %3541 = vmatprep.subr.mxu0 0.0
    %3542 = vmatpush1.msra.mxu0 0.0
    %3543 = vmatprep.subr.mxu0 0.0
    %3544 = vmatpush1.msra.mxu0 0.0
    %3545 = vmatprep.subr.mxu0 0.0
    %3546 = vmatpush1.msra.mxu0 0.0
    %3547 = vmatprep.subr.mxu0 0.0
    %3548 = vmatpush1.msra.mxu0 0.0
    %3549 = vmatprep.subr.mxu0 0.0
    %3550 = vmatpush1.msra.mxu0 0.0
    %3551 = vmatprep.subr.mxu0 0.0
    %3552 = vmatpush1.msra.mxu0 0.0
    %3553 = vmatprep.subr.mxu0 0.0
    %3554 = vmatpush1.msra.mxu0 0.0
    %3555 = vmatprep.subr.mxu0 0.0
    %3556 = vmatpush1.msra.mxu0 0.0
    %3557 = vmatprep.subr.mxu0 0.0
    %3558 = vmatpush1.msra.mxu0 0.0
    %3559 = vmatprep.subr.mxu0 0.0
    %3560 = vmatpush1.msra.mxu0 0.0
    %3561 = vmatprep.subr.mxu0 0.0
    %3562 = vmatpush1.msra.mxu0 0.0
    %3563 = vmatprep.subr.mxu0 0.0
    %3564 = vmatpush1.msra.mxu0 0.0
    %3565 = vmatprep.subr.mxu0 0.0
    %3566 = vmatpush1.msra.mxu0 0.0
    %3567 = vmatprep.subr.mxu0 0.0
    %3568 = vmatpush1.msra.mxu0 0.0
    %3569 = vmatprep.subr.mxu0 0.0
    %3570 = vmatpush1.msra.mxu0 0.0
    %3571 = vmatprep.subr.mxu0 0.0
    %3572 = vmatpush1.msra.mxu0 0.0
    %3573 = vmatprep.subr.mxu0 0.0
    %3574 = vmatpush1.msra.mxu0 0.0
    %3575 = vmatprep.subr.mxu0 0.0
    %3576 = vmatpush1.msra.mxu0 0.0
    %3577 = vmatprep.subr.mxu0 0.0
    %3578 = vmatpush1.msra.mxu0 0.0
    %3579 = vmatprep.subr.mxu0 0.0
    %3580 = vmatpush1.msra.mxu0 0.0
    %3581 = vmatprep.subr.mxu0 0.0
    %3582 = vmatpush1.msra.mxu0 0.0
    %3583 = vmatprep.subr.mxu0 0.0
    %3584 = vmatpush1.msra.mxu0 0.0
    %3585 = vmatprep.subr.mxu0 0.0
    %3586 = vmatpush1.msra.mxu0 0.0
    %3587 = vmatprep.subr.mxu0 0.0
    %3588 = vmatpush1.msra.mxu0 0.0
    %3589 = vmatprep.subr.mxu0 0.0
    %3590 = vmatpush1.msra.mxu0 0.0
    %3591 = vmatprep.subr.mxu0 0.0
    %3592 = vmatpush1.msra.mxu0 0.0
    %3593 = vmatprep.subr.mxu0 0.0
    %3594 = vmatpush1.msra.mxu0 0.0
    %3595 = vmatprep.subr.mxu0 0.0
    %3596 = vmatpush1.msra.mxu0 0.0
    %3597 = vmatprep.subr.mxu0 0.0
    %3598 = vmatpush1.msra.mxu0 0.0
    %3599 = vmatprep.subr.mxu0 0.0
    %3600 = vmatpush1.msra.mxu0 0.0
    %3601 = vmatprep.subr.mxu0 0.0
    %3602 = vmatpush1.msra.mxu0 0.0
    %3603 = vmatprep.mubr.f32.mxu0 0.0
    %3604 = vmatmul.mubr.f32.gmra.mrb[0].mxu0 %v3505
    %v3605 = vpop.f32.mrb[0].mxu0
    %v3606 = vadd.f32 0.0, %v3605
    %v3607 = vpop.f32.mrb[0].mxu0
    %v3608 = vadd.f32 0.0, %v3607
    %3609 = vdwg.mxu0
    %3610 = vmatprep.subr.mxu0 %v3513
    %3611 = vmatpush1.msra.mxu0 %v3511
    %3612 = vmatprep.subr.mxu0 0.0
    %3613 = vmatpush1.msra.mxu0 0.0
    %3614 = vmatprep.subr.mxu0 0.0
    %3615 = vmatpush1.msra.mxu0 0.0
    %3616 = vmatprep.subr.mxu0 0.0
    %3617 = vmatpush1.msra.mxu0 0.0
    %3618 = vmatprep.subr.mxu0 0.0
    %3619 = vmatpush1.msra.mxu0 0.0
    %3620 = vmatprep.subr.mxu0 0.0
    %3621 = vmatpush1.msra.mxu0 0.0
    %3622 = vmatprep.subr.mxu0 0.0
    %3623 = vmatpush1.msra.mxu0 0.0
    %3624 = vmatprep.subr.mxu0 0.0
    %3625 = vmatpush1.msra.mxu0 0.0
    %3626 = vmatprep.subr.mxu0 0.0
    %3627 = vmatpush1.msra.mxu0 0.0
    %3628 = vmatprep.subr.mxu0 0.0
    %3629 = vmatpush1.msra.mxu0 0.0
    %3630 = vmatprep.subr.mxu0 0.0
    %3631 = vmatpush1.msra.mxu0 0.0
    %3632 = vmatprep.subr.mxu0 0.0
    %3633 = vmatpush1.msra.mxu0 0.0
    %3634 = vmatprep.subr.mxu0 0.0
    %3635 = vmatpush1.msra.mxu0 0.0
    %3636 = vmatprep.subr.mxu0 0.0
    %3637 = vmatpush1.msra.mxu0 0.0
    %3638 = vmatprep.subr.mxu0 0.0
    %3639 = vmatpush1.msra.mxu0 0.0
    %3640 = vmatprep.subr.mxu0 0.0
    %3641 = vmatpush1.msra.mxu0 0.0
    %3642 = vmatprep.subr.mxu0 0.0
    %3643 = vmatpush1.msra.mxu0 0.0
    %3644 = vmatprep.subr.mxu0 0.0
    %3645 = vmatpush1.msra.mxu0 0.0
    %3646 = vmatprep.subr.mxu0 0.0
    %3647 = vmatpush1.msra.mxu0 0.0
    %3648 = vmatprep.subr.mxu0 0.0
    %3649 = vmatpush1.msra.mxu0 0.0
    %3650 = vmatprep.subr.mxu0 0.0
    %3651 = vmatpush1.msra.mxu0 0.0
    %3652 = vmatprep.subr.mxu0 0.0
    %3653 = vmatpush1.msra.mxu0 0.0
    %3654 = vmatprep.subr.mxu0 0.0
    %3655 = vmatpush1.msra.mxu0 0.0
    %3656 = vmatprep.subr.mxu0 0.0
    %3657 = vmatpush1.msra.mxu0 0.0
    %3658 = vmatprep.subr.mxu0 0.0
    %3659 = vmatpush1.msra.mxu0 0.0
    %3660 = vmatprep.subr.mxu0 0.0
    %3661 = vmatpush1.msra.mxu0 0.0
    %3662 = vmatprep.subr.mxu0 0.0
    %3663 = vmatpush1.msra.mxu0 0.0
    %3664 = vmatprep.subr.mxu0 0.0
    %3665 = vmatpush1.msra.mxu0 0.0
    %3666 = vmatprep.subr.mxu0 0.0
    %3667 = vmatpush1.msra.mxu0 0.0
    %3668 = vmatprep.subr.mxu0 0.0
    %3669 = vmatpush1.msra.mxu0 0.0
    %3670 = vmatprep.subr.mxu0 0.0
    %3671 = vmatpush1.msra.mxu0 0.0
    %3672 = vmatprep.subr.mxu0 0.0
    %3673 = vmatpush1.msra.mxu0 0.0
    %3674 = vmatprep.mubr.f32.mxu0 0.0
    %3675 = vmatmul.mubr.f32.gmra.mrb[0].mxu0 %v3505
    %v3676 = vpop.f32.mrb[0].mxu0
    %v3677 = vadd.f32 0.0, %v3676
    %v3678 = vpop.f32.mrb[0].mxu0
    %v3679 = vadd.f32 0.0, %v3678
    %3680 = vdwg.mxu0
    %3681 = vmatprep.subr.mxu0 %v3517
    %3682 = vmatpush1.msra.mxu0 %v3515
    %3683 = vmatprep.subr.mxu0 0.0
    %3684 = vmatpush1.msra.mxu0 0.0
    %3685 = vmatprep.subr.mxu0 0.0
    %3686 = vmatpush1.msra.mxu0 0.0
    %3687 = vmatprep.subr.mxu0 0.0
    %3688 = vmatpush1.msra.mxu0 0.0
    %3689 = vmatprep.subr.mxu0 0.0
    %3690 = vmatpush1.msra.mxu0 0.0
    %3691 = vmatprep.subr.mxu0 0.0
    %3692 = vmatpush1.msra.mxu0 0.0
    %3693 = vmatprep.subr.mxu0 0.0
    %3694 = vmatpush1.msra.mxu0 0.0
    %3695 = vmatprep.subr.mxu0 0.0
    %3696 = vmatpush1.msra.mxu0 0.0
    %3697 = vmatprep.subr.mxu0 0.0
    %3698 = vmatpush1.msra.mxu0 0.0
    %3699 = vmatprep.subr.mxu0 0.0
    %3700 = vmatpush1.msra.mxu0 0.0
    %3701 = vmatprep.subr.mxu0 0.0
    %3702 = vmatpush1.msra.mxu0 0.0
    %3703 = vmatprep.subr.mxu0 0.0
    %3704 = vmatpush1.msra.mxu0 0.0
    %3705 = vmatprep.subr.mxu0 0.0
    %3706 = vmatpush1.msra.mxu0 0.0
    %3707 = vmatprep.subr.mxu0 0.0
    %3708 = vmatpush1.msra.mxu0 0.0
    %3709 = vmatprep.subr.mxu0 0.0
    %3710 = vmatpush1.msra.mxu0 0.0
    %3711 = vmatprep.subr.mxu0 0.0
    %3712 = vmatpush1.msra.mxu0 0.0
    %3713 = vmatprep.subr.mxu0 0.0
    %3714 = vmatpush1.msra.mxu0 0.0
    %3715 = vmatprep.subr.mxu0 0.0
    %3716 = vmatpush1.msra.mxu0 0.0
    %3717 = vmatprep.subr.mxu0 0.0
    %3718 = vmatpush1.msra.mxu0 0.0
    %3719 = vmatprep.subr.mxu0 0.0
    %3720 = vmatpush1.msra.mxu0 0.0
    %3721 = vmatprep.subr.mxu0 0.0
    %3722 = vmatpush1.msra.mxu0 0.0
    %3723 = vmatprep.subr.mxu0 0.0
    %3724 = vmatpush1.msra.mxu0 0.0
    %3725 = vmatprep.subr.mxu0 0.0
    %3726 = vmatpush1.msra.mxu0 0.0
    %3727 = vmatprep.subr.mxu0 0.0
    %3728 = vmatpush1.msra.mxu0 0.0
    %3729 = vmatprep.subr.mxu0 0.0
    %3730 = vmatpush1.msra.mxu0 0.0
    %3731 = vmatprep.subr.mxu0 0.0
    %3732 = vmatpush1.msra.mxu0 0.0
    %3733 = vmatprep.subr.mxu0 0.0
    %3734 = vmatpush1.msra.mxu0 0.0
    %3735 = vmatprep.subr.mxu0 0.0
    %3736 = vmatpush1.msra.mxu0 0.0
    %3737 = vmatprep.subr.mxu0 0.0
    %3738 = vmatpush1.msra.mxu0 0.0
    %3739 = vmatprep.subr.mxu0 0.0
    %3740 = vmatpush1.msra.mxu0 0.0
    %3741 = vmatprep.subr.mxu0 0.0
    %3742 = vmatpush1.msra.mxu0 0.0
    %3743 = vmatprep.subr.mxu0 0.0
    %3744 = vmatpush1.msra.mxu0 0.0
    %3745 = vmatprep.mubr.f32.mxu0 0.0
    %3746 = vmatmul.mubr.f32.gmra.mrb[0].mxu0 %v3505
    %v3747 = vpop.f32.mrb[0].mxu0
    %v3748 = vadd.f32 0.0, %v3747
    %v3749 = vpop.f32.mrb[0].mxu0
    %v3750 = vadd.f32 0.0, %v3749
    %3751 = vdwg.mxu0
    %3752 = vmatprep.subr.mxu0 %v3521
    %3753 = vmatpush1.msra.mxu0 %v3519
    %3754 = vmatprep.subr.mxu0 0.0
    %3755 = vmatpush1.msra.mxu0 0.0
    %3756 = vmatprep.subr.mxu0 0.0
    %3757 = vmatpush1.msra.mxu0 0.0
    %3758 = vmatprep.subr.mxu0 0.0
    %3759 = vmatpush1.msra.mxu0 0.0
    %3760 = vmatprep.subr.mxu0 0.0
    %3761 = vmatpush1.msra.mxu0 0.0
    %3762 = vmatprep.subr.mxu0 0.0
    %3763 = vmatpush1.msra.mxu0 0.0
    %3764 = vmatprep.subr.mxu0 0.0
    %3765 = vmatpush1.msra.mxu0 0.0
    %3766 = vmatprep.subr.mxu0 0.0
    %3767 = vmatpush1.msra.mxu0 0.0
    %3768 = vmatprep.subr.mxu0 0.0
    %3769 = vmatpush1.msra.mxu0 0.0
    %3770 = vmatprep.subr.mxu0 0.0
    %3771 = vmatpush1.msra.mxu0 0.0
    %3772 = vmatprep.subr.mxu0 0.0
    %3773 = vmatpush1.msra.mxu0 0.0
    %3774 = vmatprep.subr.mxu0 0.0
    %3775 = vmatpush1.msra.mxu0 0.0
    %3776 = vmatprep.subr.mxu0 0.0
    %3777 = vmatpush1.msra.mxu0 0.0
    %3778 = vmatprep.subr.mxu0 0.0
    %3779 = vmatpush1.msra.mxu0 0.0
    %3780 = vmatprep.subr.mxu0 0.0
    %3781 = vmatpush1.msra.mxu0 0.0
    %3782 = vmatprep.subr.mxu0 0.0
    %3783 = vmatpush1.msra.mxu0 0.0
    %3784 = vmatprep.subr.mxu0 0.0
    %3785 = vmatpush1.msra.mxu0 0.0
    %3786 = vmatprep.subr.mxu0 0.0
    %3787 = vmatpush1.msra.mxu0 0.0
    %3788 = vmatprep.subr.mxu0 0.0
    %3789 = vmatpush1.msra.mxu0 0.0
    %3790 = vmatprep.subr.mxu0 0.0
    %3791 = vmatpush1.msra.mxu0 0.0
    %3792 = vmatprep.subr.mxu0 0.0
    %3793 = vmatpush1.msra.mxu0 0.0
    %3794 = vmatprep.subr.mxu0 0.0
    %3795 = vmatpush1.msra.mxu0 0.0
    %3796 = vmatprep.subr.mxu0 0.0
    %3797 = vmatpush1.msra.mxu0 0.0
    %3798 = vmatprep.subr.mxu0 0.0
    %3799 = vmatpush1.msra.mxu0 0.0
    %3800 = vmatprep.subr.mxu0 0.0
    %3801 = vmatpush1.msra.mxu0 0.0
    %3802 = vmatprep.subr.mxu0 0.0
    %3803 = vmatpush1.msra.mxu0 0.0
    %3804 = vmatprep.subr.mxu0 0.0
    %3805 = vmatpush1.msra.mxu0 0.0
    %3806 = vmatprep.subr.mxu0 0.0
    %3807 = vmatpush1.msra.mxu0 0.0
    %3808 = vmatprep.subr.mxu0 0.0
    %3809 = vmatpush1.msra.mxu0 0.0
    %3810 = vmatprep.subr.mxu0 0.0
    %3811 = vmatpush1.msra.mxu0 0.0
    %3812 = vmatprep.subr.mxu0 0.0
    %3813 = vmatpush1.msra.mxu0 0.0
    %3814 = vmatprep.subr.mxu0 0.0
    %3815 = vmatpush1.msra.mxu0 0.0
    %3816 = vmatprep.mubr.f32.mxu0 0.0
    %3817 = vmatmul.mubr.f32.gmra.mrb[0].mxu0 %v3505
    %v3818 = vpop.f32.mrb[0].mxu0
    %v3819 = vadd.f32 0.0, %v3818
    %v3820 = vpop.f32.mrb[0].mxu0
    %v3821 = vadd.f32 0.0, %v3820
    %3822 = vdwg.mxu0
    %3823 = vmatprep.subr.mxu0 %v3525
    %3824 = vmatpush1.msra.mxu0 %v3523
    %3825 = vmatprep.subr.mxu0 0.0
    %3826 = vmatpush1.msra.mxu0 0.0
    %3827 = vmatprep.subr.mxu0 0.0
    %3828 = vmatpush1.msra.mxu0 0.0
    %3829 = vmatprep.subr.mxu0 0.0
    %3830 = vmatpush1.msra.mxu0 0.0
    %3831 = vmatprep.subr.mxu0 0.0
    %3832 = vmatpush1.msra.mxu0 0.0
    %3833 = vmatprep.subr.mxu0 0.0
    %3834 = vmatpush1.msra.mxu0 0.0
    %3835 = vmatprep.subr.mxu0 0.0
    %3836 = vmatpush1.msra.mxu0 0.0
    %3837 = vmatprep.subr.mxu0 0.0
    %3838 = vmatpush1.msra.mxu0 0.0
    %3839 = vmatprep.subr.mxu0 0.0
    %3840 = vmatpush1.msra.mxu0 0.0
    %3841 = vmatprep.subr.mxu0 0.0
    %3842 = vmatpush1.msra.mxu0 0.0
    %3843 = vmatprep.subr.mxu0 0.0
    %3844 = vmatpush1.msra.mxu0 0.0
    %3845 = vmatprep.subr.mxu0 0.0
    %3846 = vmatpush1.msra.mxu0 0.0
    %3847 = vmatprep.subr.mxu0 0.0
    %3848 = vmatpush1.msra.mxu0 0.0
    %3849 = vmatprep.subr.mxu0 0.0
    %3850 = vmatpush1.msra.mxu0 0.0
    %3851 = vmatprep.subr.mxu0 0.0
    %3852 = vmatpush1.msra.mxu0 0.0
    %3853 = vmatprep.subr.mxu0 0.0
    %3854 = vmatpush1.msra.mxu0 0.0
    %3855 = vmatprep.subr.mxu0 0.0
    %3856 = vmatpush1.msra.mxu0 0.0
    %3857 = vmatprep.subr.mxu0 0.0
    %3858 = vmatpush1.msra.mxu0 0.0
    %3859 = vmatprep.subr.mxu0 0.0
    %3860 = vmatpush1.msra.mxu0 0.0
    %3861 = vmatprep.subr.mxu0 0.0
    %3862 = vmatpush1.msra.mxu0 0.0
    %3863 = vmatprep.subr.mxu0 0.0
    %3864 = vmatpush1.msra.mxu0 0.0
    %3865 = vmatprep.subr.mxu0 0.0
    %3866 = vmatpush1.msra.mxu0 0.0
    %3867 = vmatprep.subr.mxu0 0.0
    %3868 = vmatpush1.msra.mxu0 0.0
    %3869 = vmatprep.subr.mxu0 0.0
    %3870 = vmatpush1.msra.mxu0 0.0
    %3871 = vmatprep.subr.mxu0 0.0
    %3872 = vmatpush1.msra.mxu0 0.0
    %3873 = vmatprep.subr.mxu0 0.0
    %3874 = vmatpush1.msra.mxu0 0.0
    %3875 = vmatprep.subr.mxu0 0.0
    %3876 = vmatpush1.msra.mxu0 0.0
    %3877 = vmatprep.subr.mxu0 0.0
    %3878 = vmatpush1.msra.mxu0 0.0
    %3879 = vmatprep.subr.mxu0 0.0
    %3880 = vmatpush1.msra.mxu0 0.0
    %3881 = vmatprep.subr.mxu0 0.0
    %3882 = vmatpush1.msra.mxu0 0.0
    %3883 = vmatprep.subr.mxu0 0.0
    %3884 = vmatpush1.msra.mxu0 0.0
    %3885 = vmatprep.subr.mxu0 0.0
    %3886 = vmatpush1.msra.mxu0 0.0
    %3887 = vmatprep.mubr.f32.mxu0 0.0
    %3888 = vmatmul.mubr.f32.gmra.mrb[0].mxu0 %v3505
    %v3889 = vpop.f32.mrb[0].mxu0
    %v3890 = vadd.f32 0.0, %v3889
    %v3891 = vpop.f32.mrb[0].mxu0
    %v3892 = vadd.f32 0.0, %v3891
    %3893 = vdwg.mxu0
    %3894 = vmatprep.subr.mxu0 %v3529
    %3895 = vmatpush1.msra.mxu0 %v3527
    %3896 = vmatprep.subr.mxu0 0.0
    %3897 = vmatpush1.msra.mxu0 0.0
    %3898 = vmatprep.subr.mxu0 0.0
    %3899 = vmatpush1.msra.mxu0 0.0
    %3900 = vmatprep.subr.mxu0 0.0
    %3901 = vmatpush1.msra.mxu0 0.0
    %3902 = vmatprep.subr.mxu0 0.0
    %3903 = vmatpush1.msra.mxu0 0.0
    %3904 = vmatprep.subr.mxu0 0.0
    %3905 = vmatpush1.msra.mxu0 0.0
    %3906 = vmatprep.subr.mxu0 0.0
    %3907 = vmatpush1.msra.mxu0 0.0
    %3908 = vmatprep.subr.mxu0 0.0
    %3909 = vmatpush1.msra.mxu0 0.0
    %3910 = vmatprep.subr.mxu0 0.0
    %3911 = vmatpush1.msra.mxu0 0.0
    %3912 = vmatprep.subr.mxu0 0.0
    %3913 = vmatpush1.msra.mxu0 0.0
    %3914 = vmatprep.subr.mxu0 0.0
    %3915 = vmatpush1.msra.mxu0 0.0
    %3916 = vmatprep.subr.mxu0 0.0
    %3917 = vmatpush1.msra.mxu0 0.0
    %3918 = vmatprep.subr.mxu0 0.0
    %3919 = vmatpush1.msra.mxu0 0.0
    %3920 = vmatprep.subr.mxu0 0.0
    %3921 = vmatpush1.msra.mxu0 0.0
    %3922 = vmatprep.subr.mxu0 0.0
    %3923 = vmatpush1.msra.mxu0 0.0
    %3924 = vmatprep.subr.mxu0 0.0
    %3925 = vmatpush1.msra.mxu0 0.0
    %3926 = vmatprep.subr.mxu0 0.0
    %3927 = vmatpush1.msra.mxu0 0.0
    %3928 = vmatprep.subr.mxu0 0.0
    %3929 = vmatpush1.msra.mxu0 0.0
    %3930 = vmatprep.subr.mxu0 0.0
    %3931 = vmatpush1.msra.mxu0 0.0
    %3932 = vmatprep.subr.mxu0 0.0
    %3933 = vmatpush1.msra.mxu0 0.0
    %3934 = vmatprep.subr.mxu0 0.0
    %3935 = vmatpush1.msra.mxu0 0.0
    %3936 = vmatprep.subr.mxu0 0.0
    %3937 = vmatpush1.msra.mxu0 0.0
    %3938 = vmatprep.subr.mxu0 0.0
    %3939 = vmatpush1.msra.mxu0 0.0
    %3940 = vmatprep.subr.mxu0 0.0
    %3941 = vmatpush1.msra.mxu0 0.0
    %3942 = vmatprep.subr.mxu0 0.0
    %3943 = vmatpush1.msra.mxu0 0.0
    %3944 = vmatprep.subr.mxu0 0.0
    %3945 = vmatpush1.msra.mxu0 0.0
    %3946 = vmatprep.subr.mxu0 0.0
    %3947 = vmatpush1.msra.mxu0 0.0
    %3948 = vmatprep.subr.mxu0 0.0
    %3949 = vmatpush1.msra.mxu0 0.0
    %3950 = vmatprep.subr.mxu0 0.0
    %3951 = vmatpush1.msra.mxu0 0.0
    %3952 = vmatprep.subr.mxu0 0.0
    %3953 = vmatpush1.msra.mxu0 0.0
    %3954 = vmatprep.subr.mxu0 0.0
    %3955 = vmatpush1.msra.mxu0 0.0
    %3956 = vmatprep.subr.mxu0 0.0
    %3957 = vmatpush1.msra.mxu0 0.0
    %3958 = vmatprep.mubr.f32.mxu0 0.0
    %3959 = vmatmul.mubr.f32.gmra.mrb[0].mxu0 %v3505
    %v3960 = vpop.f32.mrb[0].mxu0
    %v3961 = vadd.f32 0.0, %v3960
    %v3962 = vpop.f32.mrb[0].mxu0
    %v3963 = vadd.f32 0.0, %v3962
    %3964 = vdwg.mxu0
    %3965 = vmatprep.subr.mxu0 %v3533
    %3966 = vmatpush1.msra.mxu0 %v3531
    %3967 = vmatprep.subr.mxu0 0.0
    %3968 = vmatpush1.msra.mxu0 0.0
    %3969 = vmatprep.subr.mxu0 0.0
    %3970 = vmatpush1.msra.mxu0 0.0
    %3971 = vmatprep.subr.mxu0 0.0
    %3972 = vmatpush1.msra.mxu0 0.0
    %3973 = vmatprep.subr.mxu0 0.0
    %3974 = vmatpush1.msra.mxu0 0.0
    %3975 = vmatprep.subr.mxu0 0.0
    %3976 = vmatpush1.msra.mxu0 0.0
    %3977 = vmatprep.subr.mxu0 0.0
    %3978 = vmatpush1.msra.mxu0 0.0
    %3979 = vmatprep.subr.mxu0 0.0
    %3980 = vmatpush1.msra.mxu0 0.0
    %3981 = vmatprep.subr.mxu0 0.0
    %3982 = vmatpush1.msra.mxu0 0.0
    %3983 = vmatprep.subr.mxu0 0.0
    %3984 = vmatpush1.msra.mxu0 0.0
    %3985 = vmatprep.subr.mxu0 0.0
    %3986 = vmatpush1.msra.mxu0 0.0
    %3987 = vmatprep.subr.mxu0 0.0
    %3988 = vmatpush1.msra.mxu0 0.0
    %3989 = vmatprep.subr.mxu0 0.0
    %3990 = vmatpush1.msra.mxu0 0.0
    %3991 = vmatprep.subr.mxu0 0.0
    %3992 = vmatpush1.msra.mxu0 0.0
    %3993 = vmatprep.subr.mxu0 0.0
    %3994 = vmatpush1.msra.mxu0 0.0
    %3995 = vmatprep.subr.mxu0 0.0
    %3996 = vmatpush1.msra.mxu0 0.0
    %3997 = vmatprep.subr.mxu0 0.0
    %3998 = vmatpush1.msra.mxu0 0.0
    %3999 = vmatprep.subr.mxu0 0.0
    %4000 = vmatpush1.msra.mxu0 0.0
    %4001 = vmatprep.subr.mxu0 0.0
    %4002 = vmatpush1.msra.mxu0 0.0
    %4003 = vmatprep.subr.mxu0 0.0
    %4004 = vmatpush1.msra.mxu0 0.0
    %4005 = vmatprep.subr.mxu0 0.0
    %4006 = vmatpush1.msra.mxu0 0.0
    %4007 = vmatprep.subr.mxu0 0.0
    %4008 = vmatpush1.msra.mxu0 0.0
    %4009 = vmatprep.subr.mxu0 0.0
    %4010 = vmatpush1.msra.mxu0 0.0
    %4011 = vmatprep.subr.mxu0 0.0
    %4012 = vmatpush1.msra.mxu0 0.0
    %4013 = vmatprep.subr.mxu0 0.0
    %4014 = vmatpush1.msra.mxu0 0.0
    %4015 = vmatprep.subr.mxu0 0.0
    %4016 = vmatpush1.msra.mxu0 0.0
    %4017 = vmatprep.subr.mxu0 0.0
    %4018 = vmatpush1.msra.mxu0 0.0
    %4019 = vmatprep.subr.mxu0 0.0
    %4020 = vmatpush1.msra.mxu0 0.0
    %4021 = vmatprep.subr.mxu0 0.0
    %4022 = vmatpush1.msra.mxu0 0.0
    %4023 = vmatprep.subr.mxu0 0.0
    %4024 = vmatpush1.msra.mxu0 0.0
    %4025 = vmatprep.subr.mxu0 0.0
    %4026 = vmatpush1.msra.mxu0 0.0
    %4027 = vmatprep.subr.mxu0 0.0
    %4028 = vmatpush1.msra.mxu0 0.0
    %4029 = vmatprep.mubr.f32.mxu0 0.0
    %4030 = vmatmul.mubr.f32.gmra.mrb[0].mxu0 %v3505
    %v4031 = vpop.f32.mrb[0].mxu0
    %v4032 = vadd.f32 0.0, %v4031
    %v4033 = vpop.f32.mrb[0].mxu0
    %v4034 = vadd.f32 0.0, %v4033
    %4035 = vdwg.mxu0
    %4036 = vmatprep.subr.mxu0 %v3537
    %4037 = vmatpush1.msra.mxu0 %v3535
    %4038 = vmatprep.subr.mxu0 0.0
    %4039 = vmatpush1.msra.mxu0 0.0
    %4040 = vmatprep.subr.mxu0 0.0
    %4041 = vmatpush1.msra.mxu0 0.0
    %4042 = vmatprep.subr.mxu0 0.0
    %4043 = vmatpush1.msra.mxu0 0.0
    %4044 = vmatprep.subr.mxu0 0.0
    %4045 = vmatpush1.msra.mxu0 0.0
    %4046 = vmatprep.subr.mxu0 0.0
    %4047 = vmatpush1.msra.mxu0 0.0
    %4048 = vmatprep.subr.mxu0 0.0
    %4049 = vmatpush1.msra.mxu0 0.0
    %4050 = vmatprep.subr.mxu0 0.0
    %4051 = vmatpush1.msra.mxu0 0.0
    %4052 = vmatprep.subr.mxu0 0.0
    %4053 = vmatpush1.msra.mxu0 0.0
    %4054 = vmatprep.subr.mxu0 0.0
    %4055 = vmatpush1.msra.mxu0 0.0
    %4056 = vmatprep.subr.mxu0 0.0
    %4057 = vmatpush1.msra.mxu0 0.0
    %4058 = vmatprep.subr.mxu0 0.0
    %4059 = vmatpush1.msra.mxu0 0.0
    %4060 = vmatprep.subr.mxu0 0.0
    %4061 = vmatpush1.msra.mxu0 0.0
    %4062 = vmatprep.subr.mxu0 0.0
    %4063 = vmatpush1.msra.mxu0 0.0
    %4064 = vmatprep.subr.mxu0 0.0
    %4065 = vmatpush1.msra.mxu0 0.0
    %4066 = vmatprep.subr.mxu0 0.0
    %4067 = vmatpush1.msra.mxu0 0.0
    %4068 = vmatprep.subr.mxu0 0.0
    %4069 = vmatpush1.msra.mxu0 0.0
    %4070 = vmatprep.subr.mxu0 0.0
    %4071 = vmatpush1.msra.mxu0 0.0
    %4072 = vmatprep.subr.mxu0 0.0
    %4073 = vmatpush1.msra.mxu0 0.0
    %4074 = vmatprep.subr.mxu0 0.0
    %4075 = vmatpush1.msra.mxu0 0.0
    %4076 = vmatprep.subr.mxu0 0.0
    %4077 = vmatpush1.msra.mxu0 0.0
    %4078 = vmatprep.subr.mxu0 0.0
    %4079 = vmatpush1.msra.mxu0 0.0
    %4080 = vmatprep.subr.mxu0 0.0
    %4081 = vmatpush1.msra.mxu0 0.0
    %4082 = vmatprep.subr.mxu0 0.0
    %4083 = vmatpush1.msra.mxu0 0.0
    %4084 = vmatprep.subr.mxu0 0.0
    %4085 = vmatpush1.msra.mxu0 0.0
    %4086 = vmatprep.subr.mxu0 0.0
    %4087 = vmatpush1.msra.mxu0 0.0
    %4088 = vmatprep.subr.mxu0 0.0
    %4089 = vmatpush1.msra.mxu0 0.0
    %4090 = vmatprep.subr.mxu0 0.0
    %4091 = vmatpush1.msra.mxu0 0.0
    %4092 = vmatprep.subr.mxu0 0.0
    %4093 = vmatpush1.msra.mxu0 0.0
    %4094 = vmatprep.subr.mxu0 0.0
    %4095 = vmatpush1.msra.mxu0 0.0
    %4096 = vmatprep.subr.mxu0 0.0
    %4097 = vmatpush1.msra.mxu0 0.0
    %4098 = vmatprep.subr.mxu0 0.0
    %4099 = vmatpush1.msra.mxu0 0.0
    %4100 = vmatprep.mubr.f32.mxu0 0.0
    %4101 = vmatmul.mubr.f32.gmra.mrb[0].mxu0 %v3505
    %v4102 = vpop.f32.mrb[0].mxu0
    %v4103 = vadd.f32 0.0, %v4102
    %v4104 = vpop.f32.mrb[0].mxu0
    %v4105 = vadd.f32 0.0, %v4104
    %4106 = vdwg.mxu0
    %v4107 = vadd.f32 %v3411, %v3606
    %v4108 = vadd.f32 %v3412, %v3608
    %v4109 = vadd.f32 %v3413, %v3677
    %v4110 = vadd.f32 %v3414, %v3679
    %v4111 = vadd.f32 %v3415, %v3748
    %v4112 = vadd.f32 %v3416, %v3750
    %v4113 = vadd.f32 %v3417, %v3819
    %v4114 = vadd.f32 %v3418, %v3821
    %v4115 = vadd.f32 %v3419, %v3890
    %v4116 = vadd.f32 %v3420, %v3892
    %v4117 = vadd.f32 %v3421, %v3961
    %v4118 = vadd.f32 %v3422, %v3963
    %v4119 = vadd.f32 %v3423, %v4032
    %v4120 = vadd.f32 %v3424, %v4034
    %v4121 = vadd.f32 %v3425, %v4103
    %v4122 = vadd.f32 %v3426, %v4105
    %v4123 = vld [vmem:[%s0] sm:$0xff]
    %v4124 = vld [vmem:[%s0 + $0x8] sm:$0xff]
    %v4125 = vld [vmem:[%s0 + $0x10] sm:$0xff]
    %v4126 = vld [vmem:[%s0 + $0x18] sm:$0xff]
    %v4127 = vld [vmem:[%s0 + $0x20] sm:$0xff]
    %v4128 = vld [vmem:[%s0 + $0x28] sm:$0xff]
    %v4129 = vld [vmem:[%s0 + $0x30] sm:$0xff]
    %v4130 = vld [vmem:[%s0 + $0x38] sm:$0xff]
    %v4131 = vld [vmem:[%s0 + $0x40] sm:$0xf]
    %v4141 = vcombine.high %v4123, %v4123
    %v4142 = vcombine.high %v4124, %v4124
    %v4143 = vcombine.high %v4125, %v4125
    %v4144 = vcombine.high %v4126, %v4126
    %v4145 = vcombine.high %v4127, %v4127
    %v4146 = vcombine.high %v4128, %v4128
    %v4147 = vcombine.high %v4129, %v4129
    %v4148 = vcombine.high %v4130, %v4130
    %4149 = vrot.lane.b32.xlu0 %v4123, 92
    %v4150 = vpop.permute.xlu0 %4149
    %4151 = vrot.lane.b32.xlu0 %v4141, 92
    %v4152 = vpop.permute.xlu0 %4151
    %4153 = vrot.lane.b32.xlu0 %v4124, 92
    %v4154 = vpop.permute.xlu0 %4153
    %4155 = vrot.lane.b32.xlu0 %v4142, 92
    %v4156 = vpop.permute.xlu0 %4155
    %4157 = vrot.lane.b32.xlu0 %v4125, 92
    %v4158 = vpop.permute.xlu0 %4157
    %4159 = vrot.lane.b32.xlu0 %v4143, 92
    %v4160 = vpop.permute.xlu0 %4159
    %4161 = vrot.lane.b32.xlu0 %v4126, 92
    %v4162 = vpop.permute.xlu0 %4161
    %4163 = vrot.lane.b32.xlu0 %v4144, 92
    %v4164 = vpop.permute.xlu0 %4163
    %4165 = vrot.lane.b32.xlu0 %v4127, 92
    %v4166 = vpop.permute.xlu0 %4165
    %4167 = vrot.lane.b32.xlu0 %v4145, 92
    %v4168 = vpop.permute.xlu0 %4167
    %4169 = vrot.lane.b32.xlu0 %v4128, 92
    %v4170 = vpop.permute.xlu0 %4169
    %4171 = vrot.lane.b32.xlu0 %v4146, 92
    %v4172 = vpop.permute.xlu0 %4171
    %4173 = vrot.lane.b32.xlu0 %v4129, 92
    %v4174 = vpop.permute.xlu0 %4173
    %4175 = vrot.lane.b32.xlu0 %v4147, 92
    %v4176 = vpop.permute.xlu0 %4175
    %4177 = vrot.lane.b32.xlu0 %v4130, 92
    %v4178 = vpop.permute.xlu0 %4177
    %4179 = vrot.lane.b32.xlu0 %v4148, 92
    %v4180 = vpop.permute.xlu0 %4179
    %4181 = vrot.lane.b32.xlu0 %v4131, 92
    %v4182 = vpop.permute.xlu0 %4181
    %vm4183 = vcmask 752640
    %v4184 = vsel %vm4183, %v4150, %v4152
    %v4185 = vsel %vm4183, %v4152, %v4154
    %v4186 = vsel %vm4183, %v4154, %v4156
    %v4187 = vsel %vm4183, %v4156, %v4158
    %v4188 = vsel %vm4183, %v4158, %v4160
    %v4189 = vsel %vm4183, %v4160, %v4162
    %v4190 = vsel %vm4183, %v4162, %v4164
    %v4191 = vsel %vm4183, %v4164, %v4166
    %v4192 = vsel %vm4183, %v4166, %v4168
    %v4193 = vsel %vm4183, %v4168, %v4170
    %v4194 = vsel %vm4183, %v4170, %v4172
    %v4195 = vsel %vm4183, %v4172, %v4174
    %v4196 = vsel %vm4183, %v4174, %v4176
    %v4197 = vsel %vm4183, %v4176, %v4178
    %v4198 = vsel %vm4183, %v4178, %v4180
    %v4199 = vsel %vm4183, %v4180, %v4182
    %v4201 = vsel %vm131, %v48, 0
    %v4203 = vsel %vm135, %v4184, 0
    %v4205 = vsel %vm135, %v4185, 0
    %v4207 = vsel %vm135, %v4186, 0
    %v4209 = vsel %vm135, %v4187, 0
    %v4211 = vsel %vm135, %v4188, 0
    %v4213 = vsel %vm135, %v4189, 0
    %v4215 = vsel %vm135, %v4190, 0
    %v4217 = vsel %vm135, %v4191, 0
    %v4219 = vsel %vm135, %v4192, 0
    %v4221 = vsel %vm135, %v4193, 0
    %v4223 = vsel %vm135, %v4194, 0
    %v4225 = vsel %vm135, %v4195, 0
    %v4227 = vsel %vm135, %v4196, 0
    %v4229 = vsel %vm135, %v4197, 0
    %v4231 = vsel %vm135, %v4198, 0
    %v4233 = vsel %vm135, %v4199, 0
    %4235 = vmatprep.subr.mxu0 %v4205
    %4236 = vmatpush1.msra.mxu0 %v4203
    %4237 = vmatprep.subr.mxu0 0.0
    %4238 = vmatpush1.msra.mxu0 0.0
    %4239 = vmatprep.subr.mxu0 0.0
    %4240 = vmatpush1.msra.mxu0 0.0
    %4241 = vmatprep.subr.mxu0 0.0
    %4242 = vmatpush1.msra.mxu0 0.0
    %4243 = vmatprep.subr.mxu0 0.0
    %4244 = vmatpush1.msra.mxu0 0.0
    %4245 = vmatprep.subr.mxu0 0.0
    %4246 = vmatpush1.msra.mxu0 0.0
    %4247 = vmatprep.subr.mxu0 0.0
    %4248 = vmatpush1.msra.mxu0 0.0
    %4249 = vmatprep.subr.mxu0 0.0
    %4250 = vmatpush1.msra.mxu0 0.0
    %4251 = vmatprep.subr.mxu0 0.0
    %4252 = vmatpush1.msra.mxu0 0.0
    %4253 = vmatprep.subr.mxu0 0.0
    %4254 = vmatpush1.msra.mxu0 0.0
    %4255 = vmatprep.subr.mxu0 0.0
    %4256 = vmatpush1.msra.mxu0 0.0
    %4257 = vmatprep.subr.mxu0 0.0
    %4258 = vmatpush1.msra.mxu0 0.0
    %4259 = vmatprep.subr.mxu0 0.0
    %4260 = vmatpush1.msra.mxu0 0.0
    %4261 = vmatprep.subr.mxu0 0.0
    %4262 = vmatpush1.msra.mxu0 0.0
    %4263 = vmatprep.subr.mxu0 0.0
    %4264 = vmatpush1.msra.mxu0 0.0
    %4265 = vmatprep.subr.mxu0 0.0
    %4266 = vmatpush1.msra.mxu0 0.0
    %4267 = vmatprep.subr.mxu0 0.0
    %4268 = vmatpush1.msra.mxu0 0.0
    %4269 = vmatprep.subr.mxu0 0.0
    %4270 = vmatpush1.msra.mxu0 0.0
    %4271 = vmatprep.subr.mxu0 0.0
    %4272 = vmatpush1.msra.mxu0 0.0
    %4273 = vmatprep.subr.mxu0 0.0
    %4274 = vmatpush1.msra.mxu0 0.0
    %4275 = vmatprep.subr.mxu0 0.0
    %4276 = vmatpush1.msra.mxu0 0.0
    %4277 = vmatprep.subr.mxu0 0.0
    %4278 = vmatpush1.msra.mxu0 0.0
    %4279 = vmatprep.subr.mxu0 0.0
    %4280 = vmatpush1.msra.mxu0 0.0
    %4281 = vmatprep.subr.mxu0 0.0
    %4282 = vmatpush1.msra.mxu0 0.0
    %4283 = vmatprep.subr.mxu0 0.0
    %4284 = vmatpush1.msra.mxu0 0.0
    %4285 = vmatprep.subr.mxu0 0.0
    %4286 = vmatpush1.msra.mxu0 0.0
    %4287 = vmatprep.subr.mxu0 0.0
    %4288 = vmatpush1.msra.mxu0 0.0
    %4289 = vmatprep.subr.mxu0 0.0
    %4290 = vmatpush1.msra.mxu0 0.0
    %4291 = vmatprep.subr.mxu0 0.0
    %4292 = vmatpush1.msra.mxu0 0.0
    %4293 = vmatprep.subr.mxu0 0.0
    %4294 = vmatpush1.msra.mxu0 0.0
    %4295 = vmatprep.subr.mxu0 0.0
    %4296 = vmatpush1.msra.mxu0 0.0
    %4297 = vmatprep.subr.mxu0 0.0
    %4298 = vmatpush1.msra.mxu0 0.0
    %4299 = vmatprep.mubr.f32.mxu0 0.0
    %4300 = vmatmul.mubr.f32.gmra.mrb[0].mxu0 %v4201
    %v4301 = vpop.f32.mrb[0].mxu0
    %v4302 = vadd.f32 0.0, %v4301
    %v4303 = vpop.f32.mrb[0].mxu0
    %v4304 = vadd.f32 0.0, %v4303
    %4305 = vdwg.mxu0
    %4306 = vmatprep.subr.mxu0 %v4209
    %4307 = vmatpush1.msra.mxu0 %v4207
    %4308 = vmatprep.subr.mxu0 0.0
    %4309 = vmatpush1.msra.mxu0 0.0
    %4310 = vmatprep.subr.mxu0 0.0
    %4311 = vmatpush1.msra.mxu0 0.0
    %4312 = vmatprep.subr.mxu0 0.0
    %4313 = vmatpush1.msra.mxu0 0.0
    %4314 = vmatprep.subr.mxu0 0.0
    %4315 = vmatpush1.msra.mxu0 0.0
    %4316 = vmatprep.subr.mxu0 0.0
    %4317 = vmatpush1.msra.mxu0 0.0
    %4318 = vmatprep.subr.mxu0 0.0
    %4319 = vmatpush1.msra.mxu0 0.0
    %4320 = vmatprep.subr.mxu0 0.0
    %4321 = vmatpush1.msra.mxu0 0.0
    %4322 = vmatprep.subr.mxu0 0.0
    %4323 = vmatpush1.msra.mxu0 0.0
    %4324 = vmatprep.subr.mxu0 0.0
    %4325 = vmatpush1.msra.mxu0 0.0
    %4326 = vmatprep.subr.mxu0 0.0
    %4327 = vmatpush1.msra.mxu0 0.0
    %4328 = vmatprep.subr.mxu0 0.0
    %4329 = vmatpush1.msra.mxu0 0.0
    %4330 = vmatprep.subr.mxu0 0.0
    %4331 = vmatpush1.msra.mxu0 0.0
    %4332 = vmatprep.subr.mxu0 0.0
    %4333 = vmatpush1.msra.mxu0 0.0
    %4334 = vmatprep.subr.mxu0 0.0
    %4335 = vmatpush1.msra.mxu0 0.0
    %4336 = vmatprep.subr.mxu0 0.0
    %4337 = vmatpush1.msra.mxu0 0.0
    %4338 = vmatprep.subr.mxu0 0.0
    %4339 = vmatpush1.msra.mxu0 0.0
    %4340 = vmatprep.subr.mxu0 0.0
    %4341 = vmatpush1.msra.mxu0 0.0
    %4342 = vmatprep.subr.mxu0 0.0
    %4343 = vmatpush1.msra.mxu0 0.0
    %4344 = vmatprep.subr.mxu0 0.0
    %4345 = vmatpush1.msra.mxu0 0.0
    %4346 = vmatprep.subr.mxu0 0.0
    %4347 = vmatpush1.msra.mxu0 0.0
    %4348 = vmatprep.subr.mxu0 0.0
    %4349 = vmatpush1.msra.mxu0 0.0
    %4350 = vmatprep.subr.mxu0 0.0
    %4351 = vmatpush1.msra.mxu0 0.0
    %4352 = vmatprep.subr.mxu0 0.0
    %4353 = vmatpush1.msra.mxu0 0.0
    %4354 = vmatprep.subr.mxu0 0.0
    %4355 = vmatpush1.msra.mxu0 0.0
    %4356 = vmatprep.subr.mxu0 0.0
    %4357 = vmatpush1.msra.mxu0 0.0
    %4358 = vmatprep.subr.mxu0 0.0
    %4359 = vmatpush1.msra.mxu0 0.0
    %4360 = vmatprep.subr.mxu0 0.0
    %4361 = vmatpush1.msra.mxu0 0.0
    %4362 = vmatprep.subr.mxu0 0.0
    %4363 = vmatpush1.msra.mxu0 0.0
    %4364 = vmatprep.subr.mxu0 0.0
    %4365 = vmatpush1.msra.mxu0 0.0
    %4366 = vmatprep.subr.mxu0 0.0
    %4367 = vmatpush1.msra.mxu0 0.0
    %4368 = vmatprep.subr.mxu0 0.0
    %4369 = vmatpush1.msra.mxu0 0.0
    %4370 = vmatprep.mubr.f32.mxu0 0.0
    %4371 = vmatmul.mubr.f32.gmra.mrb[0].mxu0 %v4201
    %v4372 = vpop.f32.mrb[0].mxu0
    %v4373 = vadd.f32 0.0, %v4372
    %v4374 = vpop.f32.mrb[0].mxu0
    %v4375 = vadd.f32 0.0, %v4374
    %4376 = vdwg.mxu0
    %4377 = vmatprep.subr.mxu0 %v4213
    %4378 = vmatpush1.msra.mxu0 %v4211
    %4379 = vmatprep.subr.mxu0 0.0
    %4380 = vmatpush1.msra.mxu0 0.0
    %4381 = vmatprep.subr.mxu0 0.0
    %4382 = vmatpush1.msra.mxu0 0.0
    %4383 = vmatprep.subr.mxu0 0.0
    %4384 = vmatpush1.msra.mxu0 0.0
    %4385 = vmatprep.subr.mxu0 0.0
    %4386 = vmatpush1.msra.mxu0 0.0
    %4387 = vmatprep.subr.mxu0 0.0
    %4388 = vmatpush1.msra.mxu0 0.0
    %4389 = vmatprep.subr.mxu0 0.0
    %4390 = vmatpush1.msra.mxu0 0.0
    %4391 = vmatprep.subr.mxu0 0.0
    %4392 = vmatpush1.msra.mxu0 0.0
    %4393 = vmatprep.subr.mxu0 0.0
    %4394 = vmatpush1.msra.mxu0 0.0
    %4395 = vmatprep.subr.mxu0 0.0
    %4396 = vmatpush1.msra.mxu0 0.0
    %4397 = vmatprep.subr.mxu0 0.0
    %4398 = vmatpush1.msra.mxu0 0.0
    %4399 = vmatprep.subr.mxu0 0.0
    %4400 = vmatpush1.msra.mxu0 0.0
    %4401 = vmatprep.subr.mxu0 0.0
    %4402 = vmatpush1.msra.mxu0 0.0
    %4403 = vmatprep.subr.mxu0 0.0
    %4404 = vmatpush1.msra.mxu0 0.0
    %4405 = vmatprep.subr.mxu0 0.0
    %4406 = vmatpush1.msra.mxu0 0.0
    %4407 = vmatprep.subr.mxu0 0.0
    %4408 = vmatpush1.msra.mxu0 0.0
    %4409 = vmatprep.subr.mxu0 0.0
    %4410 = vmatpush1.msra.mxu0 0.0
    %4411 = vmatprep.subr.mxu0 0.0
    %4412 = vmatpush1.msra.mxu0 0.0
    %4413 = vmatprep.subr.mxu0 0.0
    %4414 = vmatpush1.msra.mxu0 0.0
    %4415 = vmatprep.subr.mxu0 0.0
    %4416 = vmatpush1.msra.mxu0 0.0
    %4417 = vmatprep.subr.mxu0 0.0
    %4418 = vmatpush1.msra.mxu0 0.0
    %4419 = vmatprep.subr.mxu0 0.0
    %4420 = vmatpush1.msra.mxu0 0.0
    %4421 = vmatprep.subr.mxu0 0.0
    %4422 = vmatpush1.msra.mxu0 0.0
    %4423 = vmatprep.subr.mxu0 0.0
    %4424 = vmatpush1.msra.mxu0 0.0
    %4425 = vmatprep.subr.mxu0 0.0
    %4426 = vmatpush1.msra.mxu0 0.0
    %4427 = vmatprep.subr.mxu0 0.0
    %4428 = vmatpush1.msra.mxu0 0.0
    %4429 = vmatprep.subr.mxu0 0.0
    %4430 = vmatpush1.msra.mxu0 0.0
    %4431 = vmatprep.subr.mxu0 0.0
    %4432 = vmatpush1.msra.mxu0 0.0
    %4433 = vmatprep.subr.mxu0 0.0
    %4434 = vmatpush1.msra.mxu0 0.0
    %4435 = vmatprep.subr.mxu0 0.0
    %4436 = vmatpush1.msra.mxu0 0.0
    %4437 = vmatprep.subr.mxu0 0.0
    %4438 = vmatpush1.msra.mxu0 0.0
    %4439 = vmatprep.subr.mxu0 0.0
    %4440 = vmatpush1.msra.mxu0 0.0
    %4441 = vmatprep.mubr.f32.mxu0 0.0
    %4442 = vmatmul.mubr.f32.gmra.mrb[0].mxu0 %v4201
    %v4443 = vpop.f32.mrb[0].mxu0
    %v4444 = vadd.f32 0.0, %v4443
    %v4445 = vpop.f32.mrb[0].mxu0
    %v4446 = vadd.f32 0.0, %v4445
    %4447 = vdwg.mxu0
    %4448 = vmatprep.subr.mxu0 %v4217
    %4449 = vmatpush1.msra.mxu0 %v4215
    %4450 = vmatprep.subr.mxu0 0.0
    %4451 = vmatpush1.msra.mxu0 0.0
    %4452 = vmatprep.subr.mxu0 0.0
    %4453 = vmatpush1.msra.mxu0 0.0
    %4454 = vmatprep.subr.mxu0 0.0
    %4455 = vmatpush1.msra.mxu0 0.0
    %4456 = vmatprep.subr.mxu0 0.0
    %4457 = vmatpush1.msra.mxu0 0.0
    %4458 = vmatprep.subr.mxu0 0.0
    %4459 = vmatpush1.msra.mxu0 0.0
    %4460 = vmatprep.subr.mxu0 0.0
    %4461 = vmatpush1.msra.mxu0 0.0
    %4462 = vmatprep.subr.mxu0 0.0
    %4463 = vmatpush1.msra.mxu0 0.0
    %4464 = vmatprep.subr.mxu0 0.0
    %4465 = vmatpush1.msra.mxu0 0.0
    %4466 = vmatprep.subr.mxu0 0.0
    %4467 = vmatpush1.msra.mxu0 0.0
    %4468 = vmatprep.subr.mxu0 0.0
    %4469 = vmatpush1.msra.mxu0 0.0
    %4470 = vmatprep.subr.mxu0 0.0
    %4471 = vmatpush1.msra.mxu0 0.0
    %4472 = vmatprep.subr.mxu0 0.0
    %4473 = vmatpush1.msra.mxu0 0.0
    %4474 = vmatprep.subr.mxu0 0.0
    %4475 = vmatpush1.msra.mxu0 0.0
    %4476 = vmatprep.subr.mxu0 0.0
    %4477 = vmatpush1.msra.mxu0 0.0
    %4478 = vmatprep.subr.mxu0 0.0
    %4479 = vmatpush1.msra.mxu0 0.0
    %4480 = vmatprep.subr.mxu0 0.0
    %4481 = vmatpush1.msra.mxu0 0.0
    %4482 = vmatprep.subr.mxu0 0.0
    %4483 = vmatpush1.msra.mxu0 0.0
    %4484 = vmatprep.subr.mxu0 0.0
    %4485 = vmatpush1.msra.mxu0 0.0
    %4486 = vmatprep.subr.mxu0 0.0
    %4487 = vmatpush1.msra.mxu0 0.0
    %4488 = vmatprep.subr.mxu0 0.0
    %4489 = vmatpush1.msra.mxu0 0.0
    %4490 = vmatprep.subr.mxu0 0.0
    %4491 = vmatpush1.msra.mxu0 0.0
    %4492 = vmatprep.subr.mxu0 0.0
    %4493 = vmatpush1.msra.mxu0 0.0
    %4494 = vmatprep.subr.mxu0 0.0
    %4495 = vmatpush1.msra.mxu0 0.0
    %4496 = vmatprep.subr.mxu0 0.0
    %4497 = vmatpush1.msra.mxu0 0.0
    %4498 = vmatprep.subr.mxu0 0.0
    %4499 = vmatpush1.msra.mxu0 0.0
    %4500 = vmatprep.subr.mxu0 0.0
    %4501 = vmatpush1.msra.mxu0 0.0
    %4502 = vmatprep.subr.mxu0 0.0
    %4503 = vmatpush1.msra.mxu0 0.0
    %4504 = vmatprep.subr.mxu0 0.0
    %4505 = vmatpush1.msra.mxu0 0.0
    %4506 = vmatprep.subr.mxu0 0.0
    %4507 = vmatpush1.msra.mxu0 0.0
    %4508 = vmatprep.subr.mxu0 0.0
    %4509 = vmatpush1.msra.mxu0 0.0
    %4510 = vmatprep.subr.mxu0 0.0
    %4511 = vmatpush1.msra.mxu0 0.0
    %4512 = vmatprep.mubr.f32.mxu0 0.0
    %4513 = vmatmul.mubr.f32.gmra.mrb[0].mxu0 %v4201
    %v4514 = vpop.f32.mrb[0].mxu0
    %v4515 = vadd.f32 0.0, %v4514
    %v4516 = vpop.f32.mrb[0].mxu0
    %v4517 = vadd.f32 0.0, %v4516
    %4518 = vdwg.mxu0
    %4519 = vmatprep.subr.mxu0 %v4221
    %4520 = vmatpush1.msra.mxu0 %v4219
    %4521 = vmatprep.subr.mxu0 0.0
    %4522 = vmatpush1.msra.mxu0 0.0
    %4523 = vmatprep.subr.mxu0 0.0
    %4524 = vmatpush1.msra.mxu0 0.0
    %4525 = vmatprep.subr.mxu0 0.0
    %4526 = vmatpush1.msra.mxu0 0.0
    %4527 = vmatprep.subr.mxu0 0.0
    %4528 = vmatpush1.msra.mxu0 0.0
    %4529 = vmatprep.subr.mxu0 0.0
    %4530 = vmatpush1.msra.mxu0 0.0
    %4531 = vmatprep.subr.mxu0 0.0
    %4532 = vmatpush1.msra.mxu0 0.0
    %4533 = vmatprep.subr.mxu0 0.0
    %4534 = vmatpush1.msra.mxu0 0.0
    %4535 = vmatprep.subr.mxu0 0.0
    %4536 = vmatpush1.msra.mxu0 0.0
    %4537 = vmatprep.subr.mxu0 0.0
    %4538 = vmatpush1.msra.mxu0 0.0
    %4539 = vmatprep.subr.mxu0 0.0
    %4540 = vmatpush1.msra.mxu0 0.0
    %4541 = vmatprep.subr.mxu0 0.0
    %4542 = vmatpush1.msra.mxu0 0.0
    %4543 = vmatprep.subr.mxu0 0.0
    %4544 = vmatpush1.msra.mxu0 0.0
    %4545 = vmatprep.subr.mxu0 0.0
    %4546 = vmatpush1.msra.mxu0 0.0
    %4547 = vmatprep.subr.mxu0 0.0
    %4548 = vmatpush1.msra.mxu0 0.0
    %4549 = vmatprep.subr.mxu0 0.0
    %4550 = vmatpush1.msra.mxu0 0.0
    %4551 = vmatprep.subr.mxu0 0.0
    %4552 = vmatpush1.msra.mxu0 0.0
    %4553 = vmatprep.subr.mxu0 0.0
    %4554 = vmatpush1.msra.mxu0 0.0
    %4555 = vmatprep.subr.mxu0 0.0
    %4556 = vmatpush1.msra.mxu0 0.0
    %4557 = vmatprep.subr.mxu0 0.0
    %4558 = vmatpush1.msra.mxu0 0.0
    %4559 = vmatprep.subr.mxu0 0.0
    %4560 = vmatpush1.msra.mxu0 0.0
    %4561 = vmatprep.subr.mxu0 0.0
    %4562 = vmatpush1.msra.mxu0 0.0
    %4563 = vmatprep.subr.mxu0 0.0
    %4564 = vmatpush1.msra.mxu0 0.0
    %4565 = vmatprep.subr.mxu0 0.0
    %4566 = vmatpush1.msra.mxu0 0.0
    %4567 = vmatprep.subr.mxu0 0.0
    %4568 = vmatpush1.msra.mxu0 0.0
    %4569 = vmatprep.subr.mxu0 0.0
    %4570 = vmatpush1.msra.mxu0 0.0
    %4571 = vmatprep.subr.mxu0 0.0
    %4572 = vmatpush1.msra.mxu0 0.0
    %4573 = vmatprep.subr.mxu0 0.0
    %4574 = vmatpush1.msra.mxu0 0.0
    %4575 = vmatprep.subr.mxu0 0.0
    %4576 = vmatpush1.msra.mxu0 0.0
    %4577 = vmatprep.subr.mxu0 0.0
    %4578 = vmatpush1.msra.mxu0 0.0
    %4579 = vmatprep.subr.mxu0 0.0
    %4580 = vmatpush1.msra.mxu0 0.0
    %4581 = vmatprep.subr.mxu0 0.0
    %4582 = vmatpush1.msra.mxu0 0.0
    %4583 = vmatprep.mubr.f32.mxu0 0.0
    %4584 = vmatmul.mubr.f32.gmra.mrb[0].mxu0 %v4201
    %v4585 = vpop.f32.mrb[0].mxu0
    %v4586 = vadd.f32 0.0, %v4585
    %v4587 = vpop.f32.mrb[0].mxu0
    %v4588 = vadd.f32 0.0, %v4587
    %4589 = vdwg.mxu0
    %4590 = vmatprep.subr.mxu0 %v4225
    %4591 = vmatpush1.msra.mxu0 %v4223
    %4592 = vmatprep.subr.mxu0 0.0
    %4593 = vmatpush1.msra.mxu0 0.0
    %4594 = vmatprep.subr.mxu0 0.0
    %4595 = vmatpush1.msra.mxu0 0.0
    %4596 = vmatprep.subr.mxu0 0.0
    %4597 = vmatpush1.msra.mxu0 0.0
    %4598 = vmatprep.subr.mxu0 0.0
    %4599 = vmatpush1.msra.mxu0 0.0
    %4600 = vmatprep.subr.mxu0 0.0
    %4601 = vmatpush1.msra.mxu0 0.0
    %4602 = vmatprep.subr.mxu0 0.0
    %4603 = vmatpush1.msra.mxu0 0.0
    %4604 = vmatprep.subr.mxu0 0.0
    %4605 = vmatpush1.msra.mxu0 0.0
    %4606 = vmatprep.subr.mxu0 0.0
    %4607 = vmatpush1.msra.mxu0 0.0
    %4608 = vmatprep.subr.mxu0 0.0
    %4609 = vmatpush1.msra.mxu0 0.0
    %4610 = vmatprep.subr.mxu0 0.0
    %4611 = vmatpush1.msra.mxu0 0.0
    %4612 = vmatprep.subr.mxu0 0.0
    %4613 = vmatpush1.msra.mxu0 0.0
    %4614 = vmatprep.subr.mxu0 0.0
    %4615 = vmatpush1.msra.mxu0 0.0
    %4616 = vmatprep.subr.mxu0 0.0
    %4617 = vmatpush1.msra.mxu0 0.0
    %4618 = vmatprep.subr.mxu0 0.0
    %4619 = vmatpush1.msra.mxu0 0.0
    %4620 = vmatprep.subr.mxu0 0.0
    %4621 = vmatpush1.msra.mxu0 0.0
    %4622 = vmatprep.subr.mxu0 0.0
    %4623 = vmatpush1.msra.mxu0 0.0
    %4624 = vmatprep.subr.mxu0 0.0
    %4625 = vmatpush1.msra.mxu0 0.0
    %4626 = vmatprep.subr.mxu0 0.0
    %4627 = vmatpush1.msra.mxu0 0.0
    %4628 = vmatprep.subr.mxu0 0.0
    %4629 = vmatpush1.msra.mxu0 0.0
    %4630 = vmatprep.subr.mxu0 0.0
    %4631 = vmatpush1.msra.mxu0 0.0
    %4632 = vmatprep.subr.mxu0 0.0
    %4633 = vmatpush1.msra.mxu0 0.0
    %4634 = vmatprep.subr.mxu0 0.0
    %4635 = vmatpush1.msra.mxu0 0.0
    %4636 = vmatprep.subr.mxu0 0.0
    %4637 = vmatpush1.msra.mxu0 0.0
    %4638 = vmatprep.subr.mxu0 0.0
    %4639 = vmatpush1.msra.mxu0 0.0
    %4640 = vmatprep.subr.mxu0 0.0
    %4641 = vmatpush1.msra.mxu0 0.0
    %4642 = vmatprep.subr.mxu0 0.0
    %4643 = vmatpush1.msra.mxu0 0.0
    %4644 = vmatprep.subr.mxu0 0.0
    %4645 = vmatpush1.msra.mxu0 0.0
    %4646 = vmatprep.subr.mxu0 0.0
    %4647 = vmatpush1.msra.mxu0 0.0
    %4648 = vmatprep.subr.mxu0 0.0
    %4649 = vmatpush1.msra.mxu0 0.0
    %4650 = vmatprep.subr.mxu0 0.0
    %4651 = vmatpush1.msra.mxu0 0.0
    %4652 = vmatprep.subr.mxu0 0.0
    %4653 = vmatpush1.msra.mxu0 0.0
    %4654 = vmatprep.mubr.f32.mxu0 0.0
    %4655 = vmatmul.mubr.f32.gmra.mrb[0].mxu0 %v4201
    %v4656 = vpop.f32.mrb[0].mxu0
    %v4657 = vadd.f32 0.0, %v4656
    %v4658 = vpop.f32.mrb[0].mxu0
    %v4659 = vadd.f32 0.0, %v4658
    %4660 = vdwg.mxu0
    %4661 = vmatprep.subr.mxu0 %v4229
    %4662 = vmatpush1.msra.mxu0 %v4227
    %4663 = vmatprep.subr.mxu0 0.0
    %4664 = vmatpush1.msra.mxu0 0.0
    %4665 = vmatprep.subr.mxu0 0.0
    %4666 = vmatpush1.msra.mxu0 0.0
    %4667 = vmatprep.subr.mxu0 0.0
    %4668 = vmatpush1.msra.mxu0 0.0
    %4669 = vmatprep.subr.mxu0 0.0
    %4670 = vmatpush1.msra.mxu0 0.0
    %4671 = vmatprep.subr.mxu0 0.0
    %4672 = vmatpush1.msra.mxu0 0.0
    %4673 = vmatprep.subr.mxu0 0.0
    %4674 = vmatpush1.msra.mxu0 0.0
    %4675 = vmatprep.subr.mxu0 0.0
    %4676 = vmatpush1.msra.mxu0 0.0
    %4677 = vmatprep.subr.mxu0 0.0
    %4678 = vmatpush1.msra.mxu0 0.0
    %4679 = vmatprep.subr.mxu0 0.0
    %4680 = vmatpush1.msra.mxu0 0.0
    %4681 = vmatprep.subr.mxu0 0.0
    %4682 = vmatpush1.msra.mxu0 0.0
    %4683 = vmatprep.subr.mxu0 0.0
    %4684 = vmatpush1.msra.mxu0 0.0
    %4685 = vmatprep.subr.mxu0 0.0
    %4686 = vmatpush1.msra.mxu0 0.0
    %4687 = vmatprep.subr.mxu0 0.0
    %4688 = vmatpush1.msra.mxu0 0.0
    %4689 = vmatprep.subr.mxu0 0.0
    %4690 = vmatpush1.msra.mxu0 0.0
    %4691 = vmatprep.subr.mxu0 0.0
    %4692 = vmatpush1.msra.mxu0 0.0
    %4693 = vmatprep.subr.mxu0 0.0
    %4694 = vmatpush1.msra.mxu0 0.0
    %4695 = vmatprep.subr.mxu0 0.0
    %4696 = vmatpush1.msra.mxu0 0.0
    %4697 = vmatprep.subr.mxu0 0.0
    %4698 = vmatpush1.msra.mxu0 0.0
    %4699 = vmatprep.subr.mxu0 0.0
    %4700 = vmatpush1.msra.mxu0 0.0
    %4701 = vmatprep.subr.mxu0 0.0
    %4702 = vmatpush1.msra.mxu0 0.0
    %4703 = vmatprep.subr.mxu0 0.0
    %4704 = vmatpush1.msra.mxu0 0.0
    %4705 = vmatprep.subr.mxu0 0.0
    %4706 = vmatpush1.msra.mxu0 0.0
    %4707 = vmatprep.subr.mxu0 0.0
    %4708 = vmatpush1.msra.mxu0 0.0
    %4709 = vmatprep.subr.mxu0 0.0
    %4710 = vmatpush1.msra.mxu0 0.0
    %4711 = vmatprep.subr.mxu0 0.0
    %4712 = vmatpush1.msra.mxu0 0.0
    %4713 = vmatprep.subr.mxu0 0.0
    %4714 = vmatpush1.msra.mxu0 0.0
    %4715 = vmatprep.subr.mxu0 0.0
    %4716 = vmatpush1.msra.mxu0 0.0
    %4717 = vmatprep.subr.mxu0 0.0
    %4718 = vmatpush1.msra.mxu0 0.0
    %4719 = vmatprep.subr.mxu0 0.0
    %4720 = vmatpush1.msra.mxu0 0.0
    %4721 = vmatprep.subr.mxu0 0.0
    %4722 = vmatpush1.msra.mxu0 0.0
    %4723 = vmatprep.subr.mxu0 0.0
    %4724 = vmatpush1.msra.mxu0 0.0
    %4725 = vmatprep.mubr.f32.mxu0 0.0
    %4726 = vmatmul.mubr.f32.gmra.mrb[0].mxu0 %v4201
    %v4727 = vpop.f32.mrb[0].mxu0
    %v4728 = vadd.f32 0.0, %v4727
    %v4729 = vpop.f32.mrb[0].mxu0
    %v4730 = vadd.f32 0.0, %v4729
    %4731 = vdwg.mxu0
    %4732 = vmatprep.subr.mxu0 %v4233
    %4733 = vmatpush1.msra.mxu0 %v4231
    %4734 = vmatprep.subr.mxu0 0.0
    %4735 = vmatpush1.msra.mxu0 0.0
    %4736 = vmatprep.subr.mxu0 0.0
    %4737 = vmatpush1.msra.mxu0 0.0
    %4738 = vmatprep.subr.mxu0 0.0
    %4739 = vmatpush1.msra.mxu0 0.0
    %4740 = vmatprep.subr.mxu0 0.0
    %4741 = vmatpush1.msra.mxu0 0.0
    %4742 = vmatprep.subr.mxu0 0.0
    %4743 = vmatpush1.msra.mxu0 0.0
    %4744 = vmatprep.subr.mxu0 0.0
    %4745 = vmatpush1.msra.mxu0 0.0
    %4746 = vmatprep.subr.mxu0 0.0
    %4747 = vmatpush1.msra.mxu0 0.0
    %4748 = vmatprep.subr.mxu0 0.0
    %4749 = vmatpush1.msra.mxu0 0.0
    %4750 = vmatprep.subr.mxu0 0.0
    %4751 = vmatpush1.msra.mxu0 0.0
    %4752 = vmatprep.subr.mxu0 0.0
    %4753 = vmatpush1.msra.mxu0 0.0
    %4754 = vmatprep.subr.mxu0 0.0
    %4755 = vmatpush1.msra.mxu0 0.0
    %4756 = vmatprep.subr.mxu0 0.0
    %4757 = vmatpush1.msra.mxu0 0.0
    %4758 = vmatprep.subr.mxu0 0.0
    %4759 = vmatpush1.msra.mxu0 0.0
    %4760 = vmatprep.subr.mxu0 0.0
    %4761 = vmatpush1.msra.mxu0 0.0
    %4762 = vmatprep.subr.mxu0 0.0
    %4763 = vmatpush1.msra.mxu0 0.0
    %4764 = vmatprep.subr.mxu0 0.0
    %4765 = vmatpush1.msra.mxu0 0.0
    %4766 = vmatprep.subr.mxu0 0.0
    %4767 = vmatpush1.msra.mxu0 0.0
    %4768 = vmatprep.subr.mxu0 0.0
    %4769 = vmatpush1.msra.mxu0 0.0
    %4770 = vmatprep.subr.mxu0 0.0
    %4771 = vmatpush1.msra.mxu0 0.0
    %4772 = vmatprep.subr.mxu0 0.0
    %4773 = vmatpush1.msra.mxu0 0.0
    %4774 = vmatprep.subr.mxu0 0.0
    %4775 = vmatpush1.msra.mxu0 0.0
    %4776 = vmatprep.subr.mxu0 0.0
    %4777 = vmatpush1.msra.mxu0 0.0
    %4778 = vmatprep.subr.mxu0 0.0
    %4779 = vmatpush1.msra.mxu0 0.0
    %4780 = vmatprep.subr.mxu0 0.0
    %4781 = vmatpush1.msra.mxu0 0.0
    %4782 = vmatprep.subr.mxu0 0.0
    %4783 = vmatpush1.msra.mxu0 0.0
    %4784 = vmatprep.subr.mxu0 0.0
    %4785 = vmatpush1.msra.mxu0 0.0
    %4786 = vmatprep.subr.mxu0 0.0
    %4787 = vmatpush1.msra.mxu0 0.0
    %4788 = vmatprep.subr.mxu0 0.0
    %4789 = vmatpush1.msra.mxu0 0.0
    %4790 = vmatprep.subr.mxu0 0.0
    %4791 = vmatpush1.msra.mxu0 0.0
    %4792 = vmatprep.subr.mxu0 0.0
    %4793 = vmatpush1.msra.mxu0 0.0
    %4794 = vmatprep.subr.mxu0 0.0
    %4795 = vmatpush1.msra.mxu0 0.0
    %4796 = vmatprep.mubr.f32.mxu0 0.0
    %4797 = vmatmul.mubr.f32.gmra.mrb[0].mxu0 %v4201
    %v4798 = vpop.f32.mrb[0].mxu0
    %v4799 = vadd.f32 0.0, %v4798
    %v4800 = vpop.f32.mrb[0].mxu0
    %v4801 = vadd.f32 0.0, %v4800
    %4802 = vdwg.mxu0
    %v4803 = vadd.f32 %v4107, %v4302
    %v4804 = vadd.f32 %v4108, %v4304
    %v4805 = vadd.f32 %v4109, %v4373
    %v4806 = vadd.f32 %v4110, %v4375
    %v4807 = vadd.f32 %v4111, %v4444
    %v4808 = vadd.f32 %v4112, %v4446
    %v4809 = vadd.f32 %v4113, %v4515
    %v4810 = vadd.f32 %v4114, %v4517
    %v4811 = vadd.f32 %v4115, %v4586
    %v4812 = vadd.f32 %v4116, %v4588
    %v4813 = vadd.f32 %v4117, %v4657
    %v4814 = vadd.f32 %v4118, %v4659
    %v4815 = vadd.f32 %v4119, %v4728
    %v4816 = vadd.f32 %v4120, %v4730
    %v4817 = vadd.f32 %v4121, %v4799
    %v4818 = vadd.f32 %v4122, %v4801
    %v4819 = vld [vmem:[%s0] sm:$0xff]
    %v4820 = vld [vmem:[%s0 + $0x8] sm:$0xff]
    %v4821 = vld [vmem:[%s0 + $0x10] sm:$0xff]
    %v4822 = vld [vmem:[%s0 + $0x18] sm:$0xff]
    %v4823 = vld [vmem:[%s0 + $0x20] sm:$0xff]
    %v4824 = vld [vmem:[%s0 + $0x28] sm:$0xff]
    %v4825 = vld [vmem:[%s0 + $0x30] sm:$0xff]
    %v4826 = vld [vmem:[%s0 + $0x38] sm:$0xff]
    %v4827 = vld [vmem:[%s0 + $0x40] sm:$0xf]
    %v4837 = vcombine.high %v4819, %v4819
    %v4838 = vcombine.high %v4820, %v4820
    %v4839 = vcombine.high %v4821, %v4821
    %v4840 = vcombine.high %v4822, %v4822
    %v4841 = vcombine.high %v4823, %v4823
    %v4842 = vcombine.high %v4824, %v4824
    %v4843 = vcombine.high %v4825, %v4825
    %v4844 = vcombine.high %v4826, %v4826
    %4845 = vrot.lane.b32.xlu0 %v4819, 91
    %v4846 = vpop.permute.xlu0 %4845
    %4847 = vrot.lane.b32.xlu0 %v4837, 91
    %v4848 = vpop.permute.xlu0 %4847
    %4849 = vrot.lane.b32.xlu0 %v4820, 91
    %v4850 = vpop.permute.xlu0 %4849
    %4851 = vrot.lane.b32.xlu0 %v4838, 91
    %v4852 = vpop.permute.xlu0 %4851
    %4853 = vrot.lane.b32.xlu0 %v4821, 91
    %v4854 = vpop.permute.xlu0 %4853
    %4855 = vrot.lane.b32.xlu0 %v4839, 91
    %v4856 = vpop.permute.xlu0 %4855
    %4857 = vrot.lane.b32.xlu0 %v4822, 91
    %v4858 = vpop.permute.xlu0 %4857
    %4859 = vrot.lane.b32.xlu0 %v4840, 91
    %v4860 = vpop.permute.xlu0 %4859
    %4861 = vrot.lane.b32.xlu0 %v4823, 91
    %v4862 = vpop.permute.xlu0 %4861
    %4863 = vrot.lane.b32.xlu0 %v4841, 91
    %v4864 = vpop.permute.xlu0 %4863
    %4865 = vrot.lane.b32.xlu0 %v4824, 91
    %v4866 = vpop.permute.xlu0 %4865
    %4867 = vrot.lane.b32.xlu0 %v4842, 91
    %v4868 = vpop.permute.xlu0 %4867
    %4869 = vrot.lane.b32.xlu0 %v4825, 91
    %v4870 = vpop.permute.xlu0 %4869
    %4871 = vrot.lane.b32.xlu0 %v4843, 91
    %v4872 = vpop.permute.xlu0 %4871
    %4873 = vrot.lane.b32.xlu0 %v4826, 91
    %v4874 = vpop.permute.xlu0 %4873
    %4875 = vrot.lane.b32.xlu0 %v4844, 91
    %v4876 = vpop.permute.xlu0 %4875
    %4877 = vrot.lane.b32.xlu0 %v4827, 91
    %v4878 = vpop.permute.xlu0 %4877
    %vm4879 = vcmask 744448
    %v4880 = vsel %vm4879, %v4846, %v4848
    %v4881 = vsel %vm4879, %v4848, %v4850
    %v4882 = vsel %vm4879, %v4850, %v4852
    %v4883 = vsel %vm4879, %v4852, %v4854
    %v4884 = vsel %vm4879, %v4854, %v4856
    %v4885 = vsel %vm4879, %v4856, %v4858
    %v4886 = vsel %vm4879, %v4858, %v4860
    %v4887 = vsel %vm4879, %v4860, %v4862
    %v4888 = vsel %vm4879, %v4862, %v4864
    %v4889 = vsel %vm4879, %v4864, %v4866
    %v4890 = vsel %vm4879, %v4866, %v4868
    %v4891 = vsel %vm4879, %v4868, %v4870
    %v4892 = vsel %vm4879, %v4870, %v4872
    %v4893 = vsel %vm4879, %v4872, %v4874
    %v4894 = vsel %vm4879, %v4874, %v4876
    %v4895 = vsel %vm4879, %v4876, %v4878
    %v4897 = vsel %vm131, %v50, 0
    %v4899 = vsel %vm135, %v4880, 0
    %v4901 = vsel %vm135, %v4881, 0
    %v4903 = vsel %vm135, %v4882, 0
    %v4905 = vsel %vm135, %v4883, 0
    %v4907 = vsel %vm135, %v4884, 0
    %v4909 = vsel %vm135, %v4885, 0
    %v4911 = vsel %vm135, %v4886, 0
    %v4913 = vsel %vm135, %v4887, 0
    %v4915 = vsel %vm135, %v4888, 0
    %v4917 = vsel %vm135, %v4889, 0
    %v4919 = vsel %vm135, %v4890, 0
    %v4921 = vsel %vm135, %v4891, 0
    %v4923 = vsel %vm135, %v4892, 0
    %v4925 = vsel %vm135, %v4893, 0
    %v4927 = vsel %vm135, %v4894, 0
    %v4929 = vsel %vm135, %v4895, 0
    %4931 = vmatprep.subr.mxu0 %v4901
    %4932 = vmatpush1.msra.mxu0 %v4899
    %4933 = vmatprep.subr.mxu0 0.0
    %4934 = vmatpush1.msra.mxu0 0.0
    %4935 = vmatprep.subr.mxu0 0.0
    %4936 = vmatpush1.msra.mxu0 0.0
    %4937 = vmatprep.subr.mxu0 0.0
    %4938 = vmatpush1.msra.mxu0 0.0
    %4939 = vmatprep.subr.mxu0 0.0
    %4940 = vmatpush1.msra.mxu0 0.0
    %4941 = vmatprep.subr.mxu0 0.0
    %4942 = vmatpush1.msra.mxu0 0.0
    %4943 = vmatprep.subr.mxu0 0.0
    %4944 = vmatpush1.msra.mxu0 0.0
    %4945 = vmatprep.subr.mxu0 0.0
    %4946 = vmatpush1.msra.mxu0 0.0
    %4947 = vmatprep.subr.mxu0 0.0
    %4948 = vmatpush1.msra.mxu0 0.0
    %4949 = vmatprep.subr.mxu0 0.0
    %4950 = vmatpush1.msra.mxu0 0.0
    %4951 = vmatprep.subr.mxu0 0.0
    %4952 = vmatpush1.msra.mxu0 0.0
    %4953 = vmatprep.subr.mxu0 0.0
    %4954 = vmatpush1.msra.mxu0 0.0
    %4955 = vmatprep.subr.mxu0 0.0
    %4956 = vmatpush1.msra.mxu0 0.0
    %4957 = vmatprep.subr.mxu0 0.0
    %4958 = vmatpush1.msra.mxu0 0.0
    %4959 = vmatprep.subr.mxu0 0.0
    %4960 = vmatpush1.msra.mxu0 0.0
    %4961 = vmatprep.subr.mxu0 0.0
    %4962 = vmatpush1.msra.mxu0 0.0
    %4963 = vmatprep.subr.mxu0 0.0
    %4964 = vmatpush1.msra.mxu0 0.0
    %4965 = vmatprep.subr.mxu0 0.0
    %4966 = vmatpush1.msra.mxu0 0.0
    %4967 = vmatprep.subr.mxu0 0.0
    %4968 = vmatpush1.msra.mxu0 0.0
    %4969 = vmatprep.subr.mxu0 0.0
    %4970 = vmatpush1.msra.mxu0 0.0
    %4971 = vmatprep.subr.mxu0 0.0
    %4972 = vmatpush1.msra.mxu0 0.0
    %4973 = vmatprep.subr.mxu0 0.0
    %4974 = vmatpush1.msra.mxu0 0.0
    %4975 = vmatprep.subr.mxu0 0.0
    %4976 = vmatpush1.msra.mxu0 0.0
    %4977 = vmatprep.subr.mxu0 0.0
    %4978 = vmatpush1.msra.mxu0 0.0
    %4979 = vmatprep.subr.mxu0 0.0
    %4980 = vmatpush1.msra.mxu0 0.0
    %4981 = vmatprep.subr.mxu0 0.0
    %4982 = vmatpush1.msra.mxu0 0.0
    %4983 = vmatprep.subr.mxu0 0.0
    %4984 = vmatpush1.msra.mxu0 0.0
    %4985 = vmatprep.subr.mxu0 0.0
    %4986 = vmatpush1.msra.mxu0 0.0
    %4987 = vmatprep.subr.mxu0 0.0
    %4988 = vmatpush1.msra.mxu0 0.0
    %4989 = vmatprep.subr.mxu0 0.0
    %4990 = vmatpush1.msra.mxu0 0.0
    %4991 = vmatprep.subr.mxu0 0.0
    %4992 = vmatpush1.msra.mxu0 0.0
    %4993 = vmatprep.subr.mxu0 0.0
    %4994 = vmatpush1.msra.mxu0 0.0
    %4995 = vmatprep.mubr.f32.mxu0 0.0
    %4996 = vmatmul.mubr.f32.gmra.mrb[0].mxu0 %v4897
    %v4997 = vpop.f32.mrb[0].mxu0
    %v4998 = vadd.f32 0.0, %v4997
    %v4999 = vpop.f32.mrb[0].mxu0
    %v5000 = vadd.f32 0.0, %v4999
    %5001 = vdwg.mxu0
    %5002 = vmatprep.subr.mxu0 %v4905
    %5003 = vmatpush1.msra.mxu0 %v4903
    %5004 = vmatprep.subr.mxu0 0.0
    %5005 = vmatpush1.msra.mxu0 0.0
    %5006 = vmatprep.subr.mxu0 0.0
    %5007 = vmatpush1.msra.mxu0 0.0
    %5008 = vmatprep.subr.mxu0 0.0
    %5009 = vmatpush1.msra.mxu0 0.0
    %5010 = vmatprep.subr.mxu0 0.0
    %5011 = vmatpush1.msra.mxu0 0.0
    %5012 = vmatprep.subr.mxu0 0.0
    %5013 = vmatpush1.msra.mxu0 0.0
    %5014 = vmatprep.subr.mxu0 0.0
    %5015 = vmatpush1.msra.mxu0 0.0
    %5016 = vmatprep.subr.mxu0 0.0
    %5017 = vmatpush1.msra.mxu0 0.0
    %5018 = vmatprep.subr.mxu0 0.0
    %5019 = vmatpush1.msra.mxu0 0.0
    %5020 = vmatprep.subr.mxu0 0.0
    %5021 = vmatpush1.msra.mxu0 0.0
    %5022 = vmatprep.subr.mxu0 0.0
    %5023 = vmatpush1.msra.mxu0 0.0
    %5024 = vmatprep.subr.mxu0 0.0
    %5025 = vmatpush1.msra.mxu0 0.0
    %5026 = vmatprep.subr.mxu0 0.0
    %5027 = vmatpush1.msra.mxu0 0.0
    %5028 = vmatprep.subr.mxu0 0.0
    %5029 = vmatpush1.msra.mxu0 0.0
    %5030 = vmatprep.subr.mxu0 0.0
    %5031 = vmatpush1.msra.mxu0 0.0
    %5032 = vmatprep.subr.mxu0 0.0
    %5033 = vmatpush1.msra.mxu0 0.0
    %5034 = vmatprep.subr.mxu0 0.0
    %5035 = vmatpush1.msra.mxu0 0.0
    %5036 = vmatprep.subr.mxu0 0.0
    %5037 = vmatpush1.msra.mxu0 0.0
    %5038 = vmatprep.subr.mxu0 0.0
    %5039 = vmatpush1.msra.mxu0 0.0
    %5040 = vmatprep.subr.mxu0 0.0
    %5041 = vmatpush1.msra.mxu0 0.0
    %5042 = vmatprep.subr.mxu0 0.0
    %5043 = vmatpush1.msra.mxu0 0.0
    %5044 = vmatprep.subr.mxu0 0.0
    %5045 = vmatpush1.msra.mxu0 0.0
    %5046 = vmatprep.subr.mxu0 0.0
    %5047 = vmatpush1.msra.mxu0 0.0
    %5048 = vmatprep.subr.mxu0 0.0
    %5049 = vmatpush1.msra.mxu0 0.0
    %5050 = vmatprep.subr.mxu0 0.0
    %5051 = vmatpush1.msra.mxu0 0.0
    %5052 = vmatprep.subr.mxu0 0.0
    %5053 = vmatpush1.msra.mxu0 0.0
    %5054 = vmatprep.subr.mxu0 0.0
    %5055 = vmatpush1.msra.mxu0 0.0
    %5056 = vmatprep.subr.mxu0 0.0
    %5057 = vmatpush1.msra.mxu0 0.0
    %5058 = vmatprep.subr.mxu0 0.0
    %5059 = vmatpush1.msra.mxu0 0.0
    %5060 = vmatprep.subr.mxu0 0.0
    %5061 = vmatpush1.msra.mxu0 0.0
    %5062 = vmatprep.subr.mxu0 0.0
    %5063 = vmatpush1.msra.mxu0 0.0
    %5064 = vmatprep.subr.mxu0 0.0
    %5065 = vmatpush1.msra.mxu0 0.0
    %5066 = vmatprep.mubr.f32.mxu0 0.0
    %5067 = vmatmul.mubr.f32.gmra.mrb[0].mxu0 %v4897
    %v5068 = vpop.f32.mrb[0].mxu0
    %v5069 = vadd.f32 0.0, %v5068
    %v5070 = vpop.f32.mrb[0].mxu0
    %v5071 = vadd.f32 0.0, %v5070
    %5072 = vdwg.mxu0
    %5073 = vmatprep.subr.mxu0 %v4909
    %5074 = vmatpush1.msra.mxu0 %v4907
    %5075 = vmatprep.subr.mxu0 0.0
    %5076 = vmatpush1.msra.mxu0 0.0
    %5077 = vmatprep.subr.mxu0 0.0
    %5078 = vmatpush1.msra.mxu0 0.0
    %5079 = vmatprep.subr.mxu0 0.0
    %5080 = vmatpush1.msra.mxu0 0.0
    %5081 = vmatprep.subr.mxu0 0.0
    %5082 = vmatpush1.msra.mxu0 0.0
    %5083 = vmatprep.subr.mxu0 0.0
    %5084 = vmatpush1.msra.mxu0 0.0
    %5085 = vmatprep.subr.mxu0 0.0
    %5086 = vmatpush1.msra.mxu0 0.0
    %5087 = vmatprep.subr.mxu0 0.0
    %5088 = vmatpush1.msra.mxu0 0.0
    %5089 = vmatprep.subr.mxu0 0.0
    %5090 = vmatpush1.msra.mxu0 0.0
    %5091 = vmatprep.subr.mxu0 0.0
    %5092 = vmatpush1.msra.mxu0 0.0
    %5093 = vmatprep.subr.mxu0 0.0
    %5094 = vmatpush1.msra.mxu0 0.0
    %5095 = vmatprep.subr.mxu0 0.0
    %5096 = vmatpush1.msra.mxu0 0.0
    %5097 = vmatprep.subr.mxu0 0.0
    %5098 = vmatpush1.msra.mxu0 0.0
    %5099 = vmatprep.subr.mxu0 0.0
    %5100 = vmatpush1.msra.mxu0 0.0
    %5101 = vmatprep.subr.mxu0 0.0
    %5102 = vmatpush1.msra.mxu0 0.0
    %5103 = vmatprep.subr.mxu0 0.0
    %5104 = vmatpush1.msra.mxu0 0.0
    %5105 = vmatprep.subr.mxu0 0.0
    %5106 = vmatpush1.msra.mxu0 0.0
    %5107 = vmatprep.subr.mxu0 0.0
    %5108 = vmatpush1.msra.mxu0 0.0
    %5109 = vmatprep.subr.mxu0 0.0
    %5110 = vmatpush1.msra.mxu0 0.0
    %5111 = vmatprep.subr.mxu0 0.0
    %5112 = vmatpush1.msra.mxu0 0.0
    %5113 = vmatprep.subr.mxu0 0.0
    %5114 = vmatpush1.msra.mxu0 0.0
    %5115 = vmatprep.subr.mxu0 0.0
    %5116 = vmatpush1.msra.mxu0 0.0
    %5117 = vmatprep.subr.mxu0 0.0
    %5118 = vmatpush1.msra.mxu0 0.0
    %5119 = vmatprep.subr.mxu0 0.0
    %5120 = vmatpush1.msra.mxu0 0.0
    %5121 = vmatprep.subr.mxu0 0.0
    %5122 = vmatpush1.msra.mxu0 0.0
    %5123 = vmatprep.subr.mxu0 0.0
    %5124 = vmatpush1.msra.mxu0 0.0
    %5125 = vmatprep.subr.mxu0 0.0
    %5126 = vmatpush1.msra.mxu0 0.0
    %5127 = vmatprep.subr.mxu0 0.0
    %5128 = vmatpush1.msra.mxu0 0.0
    %5129 = vmatprep.subr.mxu0 0.0
    %5130 = vmatpush1.msra.mxu0 0.0
    %5131 = vmatprep.subr.mxu0 0.0
    %5132 = vmatpush1.msra.mxu0 0.0
    %5133 = vmatprep.subr.mxu0 0.0
    %5134 = vmatpush1.msra.mxu0 0.0
    %5135 = vmatprep.subr.mxu0 0.0
    %5136 = vmatpush1.msra.mxu0 0.0
    %5137 = vmatprep.mubr.f32.mxu0 0.0
    %5138 = vmatmul.mubr.f32.gmra.mrb[0].mxu0 %v4897
    %v5139 = vpop.f32.mrb[0].mxu0
    %v5140 = vadd.f32 0.0, %v5139
    %v5141 = vpop.f32.mrb[0].mxu0
    %v5142 = vadd.f32 0.0, %v5141
    %5143 = vdwg.mxu0
    %5144 = vmatprep.subr.mxu0 %v4913
    %5145 = vmatpush1.msra.mxu0 %v4911
    %5146 = vmatprep.subr.mxu0 0.0
    %5147 = vmatpush1.msra.mxu0 0.0
    %5148 = vmatprep.subr.mxu0 0.0
    %5149 = vmatpush1.msra.mxu0 0.0
    %5150 = vmatprep.subr.mxu0 0.0
    %5151 = vmatpush1.msra.mxu0 0.0
    %5152 = vmatprep.subr.mxu0 0.0
    %5153 = vmatpush1.msra.mxu0 0.0
    %5154 = vmatprep.subr.mxu0 0.0
    %5155 = vmatpush1.msra.mxu0 0.0
    %5156 = vmatprep.subr.mxu0 0.0
    %5157 = vmatpush1.msra.mxu0 0.0
    %5158 = vmatprep.subr.mxu0 0.0
    %5159 = vmatpush1.msra.mxu0 0.0
    %5160 = vmatprep.subr.mxu0 0.0
    %5161 = vmatpush1.msra.mxu0 0.0
    %5162 = vmatprep.subr.mxu0 0.0
    %5163 = vmatpush1.msra.mxu0 0.0
    %5164 = vmatprep.subr.mxu0 0.0
    %5165 = vmatpush1.msra.mxu0 0.0
    %5166 = vmatprep.subr.mxu0 0.0
    %5167 = vmatpush1.msra.mxu0 0.0
    %5168 = vmatprep.subr.mxu0 0.0
    %5169 = vmatpush1.msra.mxu0 0.0
    %5170 = vmatprep.subr.mxu0 0.0
    %5171 = vmatpush1.msra.mxu0 0.0
    %5172 = vmatprep.subr.mxu0 0.0
    %5173 = vmatpush1.msra.mxu0 0.0
    %5174 = vmatprep.subr.mxu0 0.0
    %5175 = vmatpush1.msra.mxu0 0.0
    %5176 = vmatprep.subr.mxu0 0.0
    %5177 = vmatpush1.msra.mxu0 0.0
    %5178 = vmatprep.subr.mxu0 0.0
    %5179 = vmatpush1.msra.mxu0 0.0
    %5180 = vmatprep.subr.mxu0 0.0
    %5181 = vmatpush1.msra.mxu0 0.0
    %5182 = vmatprep.subr.mxu0 0.0
    %5183 = vmatpush1.msra.mxu0 0.0
    %5184 = vmatprep.subr.mxu0 0.0
    %5185 = vmatpush1.msra.mxu0 0.0
    %5186 = vmatprep.subr.mxu0 0.0
    %5187 = vmatpush1.msra.mxu0 0.0
    %5188 = vmatprep.subr.mxu0 0.0
    %5189 = vmatpush1.msra.mxu0 0.0
    %5190 = vmatprep.subr.mxu0 0.0
    %5191 = vmatpush1.msra.mxu0 0.0
    %5192 = vmatprep.subr.mxu0 0.0
    %5193 = vmatpush1.msra.mxu0 0.0
    %5194 = vmatprep.subr.mxu0 0.0
    %5195 = vmatpush1.msra.mxu0 0.0
    %5196 = vmatprep.subr.mxu0 0.0
    %5197 = vmatpush1.msra.mxu0 0.0
    %5198 = vmatprep.subr.mxu0 0.0
    %5199 = vmatpush1.msra.mxu0 0.0
    %5200 = vmatprep.subr.mxu0 0.0
    %5201 = vmatpush1.msra.mxu0 0.0
    %5202 = vmatprep.subr.mxu0 0.0
    %5203 = vmatpush1.msra.mxu0 0.0
    %5204 = vmatprep.subr.mxu0 0.0
    %5205 = vmatpush1.msra.mxu0 0.0
    %5206 = vmatprep.subr.mxu0 0.0
    %5207 = vmatpush1.msra.mxu0 0.0
    %5208 = vmatprep.mubr.f32.mxu0 0.0
    %5209 = vmatmul.mubr.f32.gmra.mrb[0].mxu0 %v4897
    %v5210 = vpop.f32.mrb[0].mxu0
    %v5211 = vadd.f32 0.0, %v5210
    %v5212 = vpop.f32.mrb[0].mxu0
    %v5213 = vadd.f32 0.0, %v5212
    %5214 = vdwg.mxu0
    %5215 = vmatprep.subr.mxu0 %v4917
    %5216 = vmatpush1.msra.mxu0 %v4915
    %5217 = vmatprep.subr.mxu0 0.0
    %5218 = vmatpush1.msra.mxu0 0.0
    %5219 = vmatprep.subr.mxu0 0.0
    %5220 = vmatpush1.msra.mxu0 0.0
    %5221 = vmatprep.subr.mxu0 0.0
    %5222 = vmatpush1.msra.mxu0 0.0
    %5223 = vmatprep.subr.mxu0 0.0
    %5224 = vmatpush1.msra.mxu0 0.0
    %5225 = vmatprep.subr.mxu0 0.0
    %5226 = vmatpush1.msra.mxu0 0.0
    %5227 = vmatprep.subr.mxu0 0.0
    %5228 = vmatpush1.msra.mxu0 0.0
    %5229 = vmatprep.subr.mxu0 0.0
    %5230 = vmatpush1.msra.mxu0 0.0
    %5231 = vmatprep.subr.mxu0 0.0
    %5232 = vmatpush1.msra.mxu0 0.0
    %5233 = vmatprep.subr.mxu0 0.0
    %5234 = vmatpush1.msra.mxu0 0.0
    %5235 = vmatprep.subr.mxu0 0.0
    %5236 = vmatpush1.msra.mxu0 0.0
    %5237 = vmatprep.subr.mxu0 0.0
    %5238 = vmatpush1.msra.mxu0 0.0
    %5239 = vmatprep.subr.mxu0 0.0
    %5240 = vmatpush1.msra.mxu0 0.0
    %5241 = vmatprep.subr.mxu0 0.0
    %5242 = vmatpush1.msra.mxu0 0.0
    %5243 = vmatprep.subr.mxu0 0.0
    %5244 = vmatpush1.msra.mxu0 0.0
    %5245 = vmatprep.subr.mxu0 0.0
    %5246 = vmatpush1.msra.mxu0 0.0
    %5247 = vmatprep.subr.mxu0 0.0
    %5248 = vmatpush1.msra.mxu0 0.0
    %5249 = vmatprep.subr.mxu0 0.0
    %5250 = vmatpush1.msra.mxu0 0.0
    %5251 = vmatprep.subr.mxu0 0.0
    %5252 = vmatpush1.msra.mxu0 0.0
    %5253 = vmatprep.subr.mxu0 0.0
    %5254 = vmatpush1.msra.mxu0 0.0
    %5255 = vmatprep.subr.mxu0 0.0
    %5256 = vmatpush1.msra.mxu0 0.0
    %5257 = vmatprep.subr.mxu0 0.0
    %5258 = vmatpush1.msra.mxu0 0.0
    %5259 = vmatprep.subr.mxu0 0.0
    %5260 = vmatpush1.msra.mxu0 0.0
    %5261 = vmatprep.subr.mxu0 0.0
    %5262 = vmatpush1.msra.mxu0 0.0
    %5263 = vmatprep.subr.mxu0 0.0
    %5264 = vmatpush1.msra.mxu0 0.0
    %5265 = vmatprep.subr.mxu0 0.0
    %5266 = vmatpush1.msra.mxu0 0.0
    %5267 = vmatprep.subr.mxu0 0.0
    %5268 = vmatpush1.msra.mxu0 0.0
    %5269 = vmatprep.subr.mxu0 0.0
    %5270 = vmatpush1.msra.mxu0 0.0
    %5271 = vmatprep.subr.mxu0 0.0
    %5272 = vmatpush1.msra.mxu0 0.0
    %5273 = vmatprep.subr.mxu0 0.0
    %5274 = vmatpush1.msra.mxu0 0.0
    %5275 = vmatprep.subr.mxu0 0.0
    %5276 = vmatpush1.msra.mxu0 0.0
    %5277 = vmatprep.subr.mxu0 0.0
    %5278 = vmatpush1.msra.mxu0 0.0
    %5279 = vmatprep.mubr.f32.mxu0 0.0
    %5280 = vmatmul.mubr.f32.gmra.mrb[0].mxu0 %v4897
    %v5281 = vpop.f32.mrb[0].mxu0
    %v5282 = vadd.f32 0.0, %v5281
    %v5283 = vpop.f32.mrb[0].mxu0
    %v5284 = vadd.f32 0.0, %v5283
    %5285 = vdwg.mxu0
    %5286 = vmatprep.subr.mxu0 %v4921
    %5287 = vmatpush1.msra.mxu0 %v4919
    %5288 = vmatprep.subr.mxu0 0.0
    %5289 = vmatpush1.msra.mxu0 0.0
    %5290 = vmatprep.subr.mxu0 0.0
    %5291 = vmatpush1.msra.mxu0 0.0
    %5292 = vmatprep.subr.mxu0 0.0
    %5293 = vmatpush1.msra.mxu0 0.0
    %5294 = vmatprep.subr.mxu0 0.0
    %5295 = vmatpush1.msra.mxu0 0.0
    %5296 = vmatprep.subr.mxu0 0.0
    %5297 = vmatpush1.msra.mxu0 0.0
    %5298 = vmatprep.subr.mxu0 0.0
    %5299 = vmatpush1.msra.mxu0 0.0
    %5300 = vmatprep.subr.mxu0 0.0
    %5301 = vmatpush1.msra.mxu0 0.0
    %5302 = vmatprep.subr.mxu0 0.0
    %5303 = vmatpush1.msra.mxu0 0.0
    %5304 = vmatprep.subr.mxu0 0.0
    %5305 = vmatpush1.msra.mxu0 0.0
    %5306 = vmatprep.subr.mxu0 0.0
    %5307 = vmatpush1.msra.mxu0 0.0
    %5308 = vmatprep.subr.mxu0 0.0
    %5309 = vmatpush1.msra.mxu0 0.0
    %5310 = vmatprep.subr.mxu0 0.0
    %5311 = vmatpush1.msra.mxu0 0.0
    %5312 = vmatprep.subr.mxu0 0.0
    %5313 = vmatpush1.msra.mxu0 0.0
    %5314 = vmatprep.subr.mxu0 0.0
    %5315 = vmatpush1.msra.mxu0 0.0
    %5316 = vmatprep.subr.mxu0 0.0
    %5317 = vmatpush1.msra.mxu0 0.0
    %5318 = vmatprep.subr.mxu0 0.0
    %5319 = vmatpush1.msra.mxu0 0.0
    %5320 = vmatprep.subr.mxu0 0.0
    %5321 = vmatpush1.msra.mxu0 0.0
    %5322 = vmatprep.subr.mxu0 0.0
    %5323 = vmatpush1.msra.mxu0 0.0
    %5324 = vmatprep.subr.mxu0 0.0
    %5325 = vmatpush1.msra.mxu0 0.0
    %5326 = vmatprep.subr.mxu0 0.0
    %5327 = vmatpush1.msra.mxu0 0.0
    %5328 = vmatprep.subr.mxu0 0.0
    %5329 = vmatpush1.msra.mxu0 0.0
    %5330 = vmatprep.subr.mxu0 0.0
    %5331 = vmatpush1.msra.mxu0 0.0
    %5332 = vmatprep.subr.mxu0 0.0
    %5333 = vmatpush1.msra.mxu0 0.0
    %5334 = vmatprep.subr.mxu0 0.0
    %5335 = vmatpush1.msra.mxu0 0.0
    %5336 = vmatprep.subr.mxu0 0.0
    %5337 = vmatpush1.msra.mxu0 0.0
    %5338 = vmatprep.subr.mxu0 0.0
    %5339 = vmatpush1.msra.mxu0 0.0
    %5340 = vmatprep.subr.mxu0 0.0
    %5341 = vmatpush1.msra.mxu0 0.0
    %5342 = vmatprep.subr.mxu0 0.0
    %5343 = vmatpush1.msra.mxu0 0.0
    %5344 = vmatprep.subr.mxu0 0.0
    %5345 = vmatpush1.msra.mxu0 0.0
    %5346 = vmatprep.subr.mxu0 0.0
    %5347 = vmatpush1.msra.mxu0 0.0
    %5348 = vmatprep.subr.mxu0 0.0
    %5349 = vmatpush1.msra.mxu0 0.0
    %5350 = vmatprep.mubr.f32.mxu0 0.0
    %5351 = vmatmul.mubr.f32.gmra.mrb[0].mxu0 %v4897
    %v5352 = vpop.f32.mrb[0].mxu0
    %v5353 = vadd.f32 0.0, %v5352
    %v5354 = vpop.f32.mrb[0].mxu0
    %v5355 = vadd.f32 0.0, %v5354
    %5356 = vdwg.mxu0
    %5357 = vmatprep.subr.mxu0 %v4925
    %5358 = vmatpush1.msra.mxu0 %v4923
    %5359 = vmatprep.subr.mxu0 0.0
    %5360 = vmatpush1.msra.mxu0 0.0
    %5361 = vmatprep.subr.mxu0 0.0
    %5362 = vmatpush1.msra.mxu0 0.0
    %5363 = vmatprep.subr.mxu0 0.0
    %5364 = vmatpush1.msra.mxu0 0.0
    %5365 = vmatprep.subr.mxu0 0.0
    %5366 = vmatpush1.msra.mxu0 0.0
    %5367 = vmatprep.subr.mxu0 0.0
    %5368 = vmatpush1.msra.mxu0 0.0
    %5369 = vmatprep.subr.mxu0 0.0
    %5370 = vmatpush1.msra.mxu0 0.0
    %5371 = vmatprep.subr.mxu0 0.0
    %5372 = vmatpush1.msra.mxu0 0.0
    %5373 = vmatprep.subr.mxu0 0.0
    %5374 = vmatpush1.msra.mxu0 0.0
    %5375 = vmatprep.subr.mxu0 0.0
    %5376 = vmatpush1.msra.mxu0 0.0
    %5377 = vmatprep.subr.mxu0 0.0
    %5378 = vmatpush1.msra.mxu0 0.0
    %5379 = vmatprep.subr.mxu0 0.0
    %5380 = vmatpush1.msra.mxu0 0.0
    %5381 = vmatprep.subr.mxu0 0.0
    %5382 = vmatpush1.msra.mxu0 0.0
    %5383 = vmatprep.subr.mxu0 0.0
    %5384 = vmatpush1.msra.mxu0 0.0
    %5385 = vmatprep.subr.mxu0 0.0
    %5386 = vmatpush1.msra.mxu0 0.0
    %5387 = vmatprep.subr.mxu0 0.0
    %5388 = vmatpush1.msra.mxu0 0.0
    %5389 = vmatprep.subr.mxu0 0.0
    %5390 = vmatpush1.msra.mxu0 0.0
    %5391 = vmatprep.subr.mxu0 0.0
    %5392 = vmatpush1.msra.mxu0 0.0
    %5393 = vmatprep.subr.mxu0 0.0
    %5394 = vmatpush1.msra.mxu0 0.0
    %5395 = vmatprep.subr.mxu0 0.0
    %5396 = vmatpush1.msra.mxu0 0.0
    %5397 = vmatprep.subr.mxu0 0.0
    %5398 = vmatpush1.msra.mxu0 0.0
    %5399 = vmatprep.subr.mxu0 0.0
    %5400 = vmatpush1.msra.mxu0 0.0
    %5401 = vmatprep.subr.mxu0 0.0
    %5402 = vmatpush1.msra.mxu0 0.0
    %5403 = vmatprep.subr.mxu0 0.0
    %5404 = vmatpush1.msra.mxu0 0.0
    %5405 = vmatprep.subr.mxu0 0.0
    %5406 = vmatpush1.msra.mxu0 0.0
    %5407 = vmatprep.subr.mxu0 0.0
    %5408 = vmatpush1.msra.mxu0 0.0
    %5409 = vmatprep.subr.mxu0 0.0
    %5410 = vmatpush1.msra.mxu0 0.0
    %5411 = vmatprep.subr.mxu0 0.0
    %5412 = vmatpush1.msra.mxu0 0.0
    %5413 = vmatprep.subr.mxu0 0.0
    %5414 = vmatpush1.msra.mxu0 0.0
    %5415 = vmatprep.subr.mxu0 0.0
    %5416 = vmatpush1.msra.mxu0 0.0
    %5417 = vmatprep.subr.mxu0 0.0
    %5418 = vmatpush1.msra.mxu0 0.0
    %5419 = vmatprep.subr.mxu0 0.0
    %5420 = vmatpush1.msra.mxu0 0.0
    %5421 = vmatprep.mubr.f32.mxu0 0.0
    %5422 = vmatmul.mubr.f32.gmra.mrb[0].mxu0 %v4897
    %v5423 = vpop.f32.mrb[0].mxu0
    %v5424 = vadd.f32 0.0, %v5423
    %v5425 = vpop.f32.mrb[0].mxu0
    %v5426 = vadd.f32 0.0, %v5425
    %5427 = vdwg.mxu0
    %5428 = vmatprep.subr.mxu0 %v4929
    %5429 = vmatpush1.msra.mxu0 %v4927
    %5430 = vmatprep.subr.mxu0 0.0
    %5431 = vmatpush1.msra.mxu0 0.0
    %5432 = vmatprep.subr.mxu0 0.0
    %5433 = vmatpush1.msra.mxu0 0.0
    %5434 = vmatprep.subr.mxu0 0.0
    %5435 = vmatpush1.msra.mxu0 0.0
    %5436 = vmatprep.subr.mxu0 0.0
    %5437 = vmatpush1.msra.mxu0 0.0
    %5438 = vmatprep.subr.mxu0 0.0
    %5439 = vmatpush1.msra.mxu0 0.0
    %5440 = vmatprep.subr.mxu0 0.0
    %5441 = vmatpush1.msra.mxu0 0.0
    %5442 = vmatprep.subr.mxu0 0.0
    %5443 = vmatpush1.msra.mxu0 0.0
    %5444 = vmatprep.subr.mxu0 0.0
    %5445 = vmatpush1.msra.mxu0 0.0
    %5446 = vmatprep.subr.mxu0 0.0
    %5447 = vmatpush1.msra.mxu0 0.0
    %5448 = vmatprep.subr.mxu0 0.0
    %5449 = vmatpush1.msra.mxu0 0.0
    %5450 = vmatprep.subr.mxu0 0.0
    %5451 = vmatpush1.msra.mxu0 0.0
    %5452 = vmatprep.subr.mxu0 0.0
    %5453 = vmatpush1.msra.mxu0 0.0
    %5454 = vmatprep.subr.mxu0 0.0
    %5455 = vmatpush1.msra.mxu0 0.0
    %5456 = vmatprep.subr.mxu0 0.0
    %5457 = vmatpush1.msra.mxu0 0.0
    %5458 = vmatprep.subr.mxu0 0.0
    %5459 = vmatpush1.msra.mxu0 0.0
    %5460 = vmatprep.subr.mxu0 0.0
    %5461 = vmatpush1.msra.mxu0 0.0
    %5462 = vmatprep.subr.mxu0 0.0
    %5463 = vmatpush1.msra.mxu0 0.0
    %5464 = vmatprep.subr.mxu0 0.0
    %5465 = vmatpush1.msra.mxu0 0.0
    %5466 = vmatprep.subr.mxu0 0.0
    %5467 = vmatpush1.msra.mxu0 0.0
    %5468 = vmatprep.subr.mxu0 0.0
    %5469 = vmatpush1.msra.mxu0 0.0
    %5470 = vmatprep.subr.mxu0 0.0
    %5471 = vmatpush1.msra.mxu0 0.0
    %5472 = vmatprep.subr.mxu0 0.0
    %5473 = vmatpush1.msra.mxu0 0.0
    %5474 = vmatprep.subr.mxu0 0.0
    %5475 = vmatpush1.msra.mxu0 0.0
    %5476 = vmatprep.subr.mxu0 0.0
    %5477 = vmatpush1.msra.mxu0 0.0
    %5478 = vmatprep.subr.mxu0 0.0
    %5479 = vmatpush1.msra.mxu0 0.0
    %5480 = vmatprep.subr.mxu0 0.0
    %5481 = vmatpush1.msra.mxu0 0.0
    %5482 = vmatprep.subr.mxu0 0.0
    %5483 = vmatpush1.msra.mxu0 0.0
    %5484 = vmatprep.subr.mxu0 0.0
    %5485 = vmatpush1.msra.mxu0 0.0
    %5486 = vmatprep.subr.mxu0 0.0
    %5487 = vmatpush1.msra.mxu0 0.0
    %5488 = vmatprep.subr.mxu0 0.0
    %5489 = vmatpush1.msra.mxu0 0.0
    %5490 = vmatprep.subr.mxu0 0.0
    %5491 = vmatpush1.msra.mxu0 0.0
    %5492 = vmatprep.mubr.f32.mxu0 0.0
    %5493 = vmatmul.mubr.f32.gmra.mrb[0].mxu0 %v4897
    %v5494 = vpop.f32.mrb[0].mxu0
    %v5495 = vadd.f32 0.0, %v5494
    %v5496 = vpop.f32.mrb[0].mxu0
    %v5497 = vadd.f32 0.0, %v5496
    %5498 = vdwg.mxu0
    %v5499 = vadd.f32 %v4803, %v4998
    %v5500 = vadd.f32 %v4804, %v5000
    %v5501 = vadd.f32 %v4805, %v5069
    %v5502 = vadd.f32 %v4806, %v5071
    %v5503 = vadd.f32 %v4807, %v5140
    %v5504 = vadd.f32 %v4808, %v5142
    %v5505 = vadd.f32 %v4809, %v5211
    %v5506 = vadd.f32 %v4810, %v5213
    %v5507 = vadd.f32 %v4811, %v5282
    %v5508 = vadd.f32 %v4812, %v5284
    %v5509 = vadd.f32 %v4813, %v5353
    %v5510 = vadd.f32 %v4814, %v5355
    %v5511 = vadd.f32 %v4815, %v5424
    %v5512 = vadd.f32 %v4816, %v5426
    %v5513 = vadd.f32 %v4817, %v5495
    %v5514 = vadd.f32 %v4818, %v5497
    %v5515 = vld [vmem:[%s0] sm:$0xff]
    %v5516 = vld [vmem:[%s0 + $0x8] sm:$0xff]
    %v5517 = vld [vmem:[%s0 + $0x10] sm:$0xff]
    %v5518 = vld [vmem:[%s0 + $0x18] sm:$0xff]
    %v5519 = vld [vmem:[%s0 + $0x20] sm:$0xff]
    %v5520 = vld [vmem:[%s0 + $0x28] sm:$0xff]
    %v5521 = vld [vmem:[%s0 + $0x30] sm:$0xff]
    %v5522 = vld [vmem:[%s0 + $0x38] sm:$0xff]
    %v5523 = vld [vmem:[%s0 + $0x40] sm:$0xf]
    %v5533 = vcombine.high %v5515, %v5515
    %v5534 = vcombine.high %v5516, %v5516
    %v5535 = vcombine.high %v5517, %v5517
    %v5536 = vcombine.high %v5518, %v5518
    %v5537 = vcombine.high %v5519, %v5519
    %v5538 = vcombine.high %v5520, %v5520
    %v5539 = vcombine.high %v5521, %v5521
    %v5540 = vcombine.high %v5522, %v5522
    %5541 = vrot.lane.b32.xlu0 %v5515, 90
    %v5542 = vpop.permute.xlu0 %5541
    %5543 = vrot.lane.b32.xlu0 %v5533, 90
    %v5544 = vpop.permute.xlu0 %5543
    %5545 = vrot.lane.b32.xlu0 %v5516, 90
    %v5546 = vpop.permute.xlu0 %5545
    %5547 = vrot.lane.b32.xlu0 %v5534, 90
    %v5548 = vpop.permute.xlu0 %5547
    %5549 = vrot.lane.b32.xlu0 %v5517, 90
    %v5550 = vpop.permute.xlu0 %5549
    %5551 = vrot.lane.b32.xlu0 %v5535, 90
    %v5552 = vpop.permute.xlu0 %5551
    %5553 = vrot.lane.b32.xlu0 %v5518, 90
    %v5554 = vpop.permute.xlu0 %5553
    %5555 = vrot.lane.b32.xlu0 %v5536, 90
    %v5556 = vpop.permute.xlu0 %5555
    %5557 = vrot.lane.b32.xlu0 %v5519, 90
    %v5558 = vpop.permute.xlu0 %5557
    %5559 = vrot.lane.b32.xlu0 %v5537, 90
    %v5560 = vpop.permute.xlu0 %5559
    %5561 = vrot.lane.b32.xlu0 %v5520, 90
    %v5562 = vpop.permute.xlu0 %5561
    %5563 = vrot.lane.b32.xlu0 %v5538, 90
    %v5564 = vpop.permute.xlu0 %5563
    %5565 = vrot.lane.b32.xlu0 %v5521, 90
    %v5566 = vpop.permute.xlu0 %5565
    %5567 = vrot.lane.b32.xlu0 %v5539, 90
    %v5568 = vpop.permute.xlu0 %5567
    %5569 = vrot.lane.b32.xlu0 %v5522, 90
    %v5570 = vpop.permute.xlu0 %5569
    %5571 = vrot.lane.b32.xlu0 %v5540, 90
    %v5572 = vpop.permute.xlu0 %5571
    %5573 = vrot.lane.b32.xlu0 %v5523, 90
    %v5574 = vpop.permute.xlu0 %5573
    %vm5575 = vcmask 736256
    %v5576 = vsel %vm5575, %v5542, %v5544
    %v5577 = vsel %vm5575, %v5544, %v5546
    %v5578 = vsel %vm5575, %v5546, %v5548
    %v5579 = vsel %vm5575, %v5548, %v5550
    %v5580 = vsel %vm5575, %v5550, %v5552
    %v5581 = vsel %vm5575, %v5552, %v5554
    %v5582 = vsel %vm5575, %v5554, %v5556
    %v5583 = vsel %vm5575, %v5556, %v5558
    %v5584 = vsel %vm5575, %v5558, %v5560
    %v5585 = vsel %vm5575, %v5560, %v5562
    %v5586 = vsel %vm5575, %v5562, %v5564
    %v5587 = vsel %vm5575, %v5564, %v5566
    %v5588 = vsel %vm5575, %v5566, %v5568
    %v5589 = vsel %vm5575, %v5568, %v5570
    %v5590 = vsel %vm5575, %v5570, %v5572
    %v5591 = vsel %vm5575, %v5572, %v5574
    %v5593 = vsel %vm131, %v52, 0
    %v5595 = vsel %vm135, %v5576, 0
    %v5597 = vsel %vm135, %v5577, 0
    %v5599 = vsel %vm135, %v5578, 0
    %v5601 = vsel %vm135, %v5579, 0
    %v5603 = vsel %vm135, %v5580, 0
    %v5605 = vsel %vm135, %v5581, 0
    %v5607 = vsel %vm135, %v5582, 0
    %v5609 = vsel %vm135, %v5583, 0
    %v5611 = vsel %vm135, %v5584, 0
    %v5613 = vsel %vm135, %v5585, 0
    %v5615 = vsel %vm135, %v5586, 0
    %v5617 = vsel %vm135, %v5587, 0
    %v5619 = vsel %vm135, %v5588, 0
    %v5621 = vsel %vm135, %v5589, 0
    %v5623 = vsel %vm135, %v5590, 0
    %v5625 = vsel %vm135, %v5591, 0
    %5627 = vmatprep.subr.mxu0 %v5597
    %5628 = vmatpush1.msra.mxu0 %v5595
    %5629 = vmatprep.subr.mxu0 0.0
    %5630 = vmatpush1.msra.mxu0 0.0
    %5631 = vmatprep.subr.mxu0 0.0
    %5632 = vmatpush1.msra.mxu0 0.0
    %5633 = vmatprep.subr.mxu0 0.0
    %5634 = vmatpush1.msra.mxu0 0.0
    %5635 = vmatprep.subr.mxu0 0.0
    %5636 = vmatpush1.msra.mxu0 0.0
    %5637 = vmatprep.subr.mxu0 0.0
    %5638 = vmatpush1.msra.mxu0 0.0
    %5639 = vmatprep.subr.mxu0 0.0
    %5640 = vmatpush1.msra.mxu0 0.0
    %5641 = vmatprep.subr.mxu0 0.0
    %5642 = vmatpush1.msra.mxu0 0.0
    %5643 = vmatprep.subr.mxu0 0.0
    %5644 = vmatpush1.msra.mxu0 0.0
    %5645 = vmatprep.subr.mxu0 0.0
    %5646 = vmatpush1.msra.mxu0 0.0
    %5647 = vmatprep.subr.mxu0 0.0
    %5648 = vmatpush1.msra.mxu0 0.0
    %5649 = vmatprep.subr.mxu0 0.0
    %5650 = vmatpush1.msra.mxu0 0.0
    %5651 = vmatprep.subr.mxu0 0.0
    %5652 = vmatpush1.msra.mxu0 0.0
    %5653 = vmatprep.subr.mxu0 0.0
    %5654 = vmatpush1.msra.mxu0 0.0
    %5655 = vmatprep.subr.mxu0 0.0
    %5656 = vmatpush1.msra.mxu0 0.0
    %5657 = vmatprep.subr.mxu0 0.0
    %5658 = vmatpush1.msra.mxu0 0.0
    %5659 = vmatprep.subr.mxu0 0.0
    %5660 = vmatpush1.msra.mxu0 0.0
    %5661 = vmatprep.subr.mxu0 0.0
    %5662 = vmatpush1.msra.mxu0 0.0
    %5663 = vmatprep.subr.mxu0 0.0
    %5664 = vmatpush1.msra.mxu0 0.0
    %5665 = vmatprep.subr.mxu0 0.0
    %5666 = vmatpush1.msra.mxu0 0.0
    %5667 = vmatprep.subr.mxu0 0.0
    %5668 = vmatpush1.msra.mxu0 0.0
    %5669 = vmatprep.subr.mxu0 0.0
    %5670 = vmatpush1.msra.mxu0 0.0
    %5671 = vmatprep.subr.mxu0 0.0
    %5672 = vmatpush1.msra.mxu0 0.0
    %5673 = vmatprep.subr.mxu0 0.0
    %5674 = vmatpush1.msra.mxu0 0.0
    %5675 = vmatprep.subr.mxu0 0.0
    %5676 = vmatpush1.msra.mxu0 0.0
    %5677 = vmatprep.subr.mxu0 0.0
    %5678 = vmatpush1.msra.mxu0 0.0
    %5679 = vmatprep.subr.mxu0 0.0
    %5680 = vmatpush1.msra.mxu0 0.0
    %5681 = vmatprep.subr.mxu0 0.0
    %5682 = vmatpush1.msra.mxu0 0.0
    %5683 = vmatprep.subr.mxu0 0.0
    %5684 = vmatpush1.msra.mxu0 0.0
    %5685 = vmatprep.subr.mxu0 0.0
    %5686 = vmatpush1.msra.mxu0 0.0
    %5687 = vmatprep.subr.mxu0 0.0
    %5688 = vmatpush1.msra.mxu0 0.0
    %5689 = vmatprep.subr.mxu0 0.0
    %5690 = vmatpush1.msra.mxu0 0.0
    %5691 = vmatprep.mubr.f32.mxu0 0.0
    %5692 = vmatmul.mubr.f32.gmra.mrb[0].mxu0 %v5593
    %v5693 = vpop.f32.mrb[0].mxu0
    %v5694 = vadd.f32 0.0, %v5693
    %v5695 = vpop.f32.mrb[0].mxu0
    %v5696 = vadd.f32 0.0, %v5695
    %5697 = vdwg.mxu0
    %5698 = vmatprep.subr.mxu0 %v5601
    %5699 = vmatpush1.msra.mxu0 %v5599
    %5700 = vmatprep.subr.mxu0 0.0
    %5701 = vmatpush1.msra.mxu0 0.0
    %5702 = vmatprep.subr.mxu0 0.0
    %5703 = vmatpush1.msra.mxu0 0.0
    %5704 = vmatprep.subr.mxu0 0.0
    %5705 = vmatpush1.msra.mxu0 0.0
    %5706 = vmatprep.subr.mxu0 0.0
    %5707 = vmatpush1.msra.mxu0 0.0
    %5708 = vmatprep.subr.mxu0 0.0
    %5709 = vmatpush1.msra.mxu0 0.0
    %5710 = vmatprep.subr.mxu0 0.0
    %5711 = vmatpush1.msra.mxu0 0.0
    %5712 = vmatprep.subr.mxu0 0.0
    %5713 = vmatpush1.msra.mxu0 0.0
    %5714 = vmatprep.subr.mxu0 0.0
    %5715 = vmatpush1.msra.mxu0 0.0
    %5716 = vmatprep.subr.mxu0 0.0
    %5717 = vmatpush1.msra.mxu0 0.0
    %5718 = vmatprep.subr.mxu0 0.0
    %5719 = vmatpush1.msra.mxu0 0.0
    %5720 = vmatprep.subr.mxu0 0.0
    %5721 = vmatpush1.msra.mxu0 0.0
    %5722 = vmatprep.subr.mxu0 0.0
    %5723 = vmatpush1.msra.mxu0 0.0
    %5724 = vmatprep.subr.mxu0 0.0
    %5725 = vmatpush1.msra.mxu0 0.0
    %5726 = vmatprep.subr.mxu0 0.0
    %5727 = vmatpush1.msra.mxu0 0.0
    %5728 = vmatprep.subr.mxu0 0.0
    %5729 = vmatpush1.msra.mxu0 0.0
    %5730 = vmatprep.subr.mxu0 0.0
    %5731 = vmatpush1.msra.mxu0 0.0
    %5732 = vmatprep.subr.mxu0 0.0
    %5733 = vmatpush1.msra.mxu0 0.0
    %5734 = vmatprep.subr.mxu0 0.0
    %5735 = vmatpush1.msra.mxu0 0.0
    %5736 = vmatprep.subr.mxu0 0.0
    %5737 = vmatpush1.msra.mxu0 0.0
    %5738 = vmatprep.subr.mxu0 0.0
    %5739 = vmatpush1.msra.mxu0 0.0
    %5740 = vmatprep.subr.mxu0 0.0
    %5741 = vmatpush1.msra.mxu0 0.0
    %5742 = vmatprep.subr.mxu0 0.0
    %5743 = vmatpush1.msra.mxu0 0.0
    %5744 = vmatprep.subr.mxu0 0.0
    %5745 = vmatpush1.msra.mxu0 0.0
    %5746 = vmatprep.subr.mxu0 0.0
    %5747 = vmatpush1.msra.mxu0 0.0
    %5748 = vmatprep.subr.mxu0 0.0
    %5749 = vmatpush1.msra.mxu0 0.0
    %5750 = vmatprep.subr.mxu0 0.0
    %5751 = vmatpush1.msra.mxu0 0.0
    %5752 = vmatprep.subr.mxu0 0.0
    %5753 = vmatpush1.msra.mxu0 0.0
    %5754 = vmatprep.subr.mxu0 0.0
    %5755 = vmatpush1.msra.mxu0 0.0
    %5756 = vmatprep.subr.mxu0 0.0
    %5757 = vmatpush1.msra.mxu0 0.0
    %5758 = vmatprep.subr.mxu0 0.0
    %5759 = vmatpush1.msra.mxu0 0.0
    %5760 = vmatprep.subr.mxu0 0.0
    %5761 = vmatpush1.msra.mxu0 0.0
    %5762 = vmatprep.mubr.f32.mxu0 0.0
    %5763 = vmatmul.mubr.f32.gmra.mrb[0].mxu0 %v5593
    %v5764 = vpop.f32.mrb[0].mxu0
    %v5765 = vadd.f32 0.0, %v5764
    %v5766 = vpop.f32.mrb[0].mxu0
    %v5767 = vadd.f32 0.0, %v5766
    %5768 = vdwg.mxu0
    %5769 = vmatprep.subr.mxu0 %v5605
    %5770 = vmatpush1.msra.mxu0 %v5603
    %5771 = vmatprep.subr.mxu0 0.0
    %5772 = vmatpush1.msra.mxu0 0.0
    %5773 = vmatprep.subr.mxu0 0.0
    %5774 = vmatpush1.msra.mxu0 0.0
    %5775 = vmatprep.subr.mxu0 0.0
    %5776 = vmatpush1.msra.mxu0 0.0
    %5777 = vmatprep.subr.mxu0 0.0
    %5778 = vmatpush1.msra.mxu0 0.0
    %5779 = vmatprep.subr.mxu0 0.0
    %5780 = vmatpush1.msra.mxu0 0.0
    %5781 = vmatprep.subr.mxu0 0.0
    %5782 = vmatpush1.msra.mxu0 0.0
    %5783 = vmatprep.subr.mxu0 0.0
    %5784 = vmatpush1.msra.mxu0 0.0
    %5785 = vmatprep.subr.mxu0 0.0
    %5786 = vmatpush1.msra.mxu0 0.0
    %5787 = vmatprep.subr.mxu0 0.0
    %5788 = vmatpush1.msra.mxu0 0.0
    %5789 = vmatprep.subr.mxu0 0.0
    %5790 = vmatpush1.msra.mxu0 0.0
    %5791 = vmatprep.subr.mxu0 0.0
    %5792 = vmatpush1.msra.mxu0 0.0
    %5793 = vmatprep.subr.mxu0 0.0
    %5794 = vmatpush1.msra.mxu0 0.0
    %5795 = vmatprep.subr.mxu0 0.0
    %5796 = vmatpush1.msra.mxu0 0.0
    %5797 = vmatprep.subr.mxu0 0.0
    %5798 = vmatpush1.msra.mxu0 0.0
    %5799 = vmatprep.subr.mxu0 0.0
    %5800 = vmatpush1.msra.mxu0 0.0
    %5801 = vmatprep.subr.mxu0 0.0
    %5802 = vmatpush1.msra.mxu0 0.0
    %5803 = vmatprep.subr.mxu0 0.0
    %5804 = vmatpush1.msra.mxu0 0.0
    %5805 = vmatprep.subr.mxu0 0.0
    %5806 = vmatpush1.msra.mxu0 0.0
    %5807 = vmatprep.subr.mxu0 0.0
    %5808 = vmatpush1.msra.mxu0 0.0
    %5809 = vmatprep.subr.mxu0 0.0
    %5810 = vmatpush1.msra.mxu0 0.0
    %5811 = vmatprep.subr.mxu0 0.0
    %5812 = vmatpush1.msra.mxu0 0.0
    %5813 = vmatprep.subr.mxu0 0.0
    %5814 = vmatpush1.msra.mxu0 0.0
    %5815 = vmatprep.subr.mxu0 0.0
    %5816 = vmatpush1.msra.mxu0 0.0
    %5817 = vmatprep.subr.mxu0 0.0
    %5818 = vmatpush1.msra.mxu0 0.0
    %5819 = vmatprep.subr.mxu0 0.0
    %5820 = vmatpush1.msra.mxu0 0.0
    %5821 = vmatprep.subr.mxu0 0.0
    %5822 = vmatpush1.msra.mxu0 0.0
    %5823 = vmatprep.subr.mxu0 0.0
    %5824 = vmatpush1.msra.mxu0 0.0
    %5825 = vmatprep.subr.mxu0 0.0
    %5826 = vmatpush1.msra.mxu0 0.0
    %5827 = vmatprep.subr.mxu0 0.0
    %5828 = vmatpush1.msra.mxu0 0.0
    %5829 = vmatprep.subr.mxu0 0.0
    %5830 = vmatpush1.msra.mxu0 0.0
    %5831 = vmatprep.subr.mxu0 0.0
    %5832 = vmatpush1.msra.mxu0 0.0
    %5833 = vmatprep.mubr.f32.mxu0 0.0
    %5834 = vmatmul.mubr.f32.gmra.mrb[0].mxu0 %v5593
    %v5835 = vpop.f32.mrb[0].mxu0
    %v5836 = vadd.f32 0.0, %v5835
    %v5837 = vpop.f32.mrb[0].mxu0
    %v5838 = vadd.f32 0.0, %v5837
    %5839 = vdwg.mxu0
    %5840 = vmatprep.subr.mxu0 %v5609
    %5841 = vmatpush1.msra.mxu0 %v5607
    %5842 = vmatprep.subr.mxu0 0.0
    %5843 = vmatpush1.msra.mxu0 0.0
    %5844 = vmatprep.subr.mxu0 0.0
    %5845 = vmatpush1.msra.mxu0 0.0
    %5846 = vmatprep.subr.mxu0 0.0
    %5847 = vmatpush1.msra.mxu0 0.0
    %5848 = vmatprep.subr.mxu0 0.0
    %5849 = vmatpush1.msra.mxu0 0.0
    %5850 = vmatprep.subr.mxu0 0.0
    %5851 = vmatpush1.msra.mxu0 0.0
    %5852 = vmatprep.subr.mxu0 0.0
    %5853 = vmatpush1.msra.mxu0 0.0
    %5854 = vmatprep.subr.mxu0 0.0
    %5855 = vmatpush1.msra.mxu0 0.0
    %5856 = vmatprep.subr.mxu0 0.0
    %5857 = vmatpush1.msra.mxu0 0.0
    %5858 = vmatprep.subr.mxu0 0.0
    %5859 = vmatpush1.msra.mxu0 0.0
    %5860 = vmatprep.subr.mxu0 0.0
    %5861 = vmatpush1.msra.mxu0 0.0
    %5862 = vmatprep.subr.mxu0 0.0
    %5863 = vmatpush1.msra.mxu0 0.0
    %5864 = vmatprep.subr.mxu0 0.0
    %5865 = vmatpush1.msra.mxu0 0.0
    %5866 = vmatprep.subr.mxu0 0.0
    %5867 = vmatpush1.msra.mxu0 0.0
    %5868 = vmatprep.subr.mxu0 0.0
    %5869 = vmatpush1.msra.mxu0 0.0
    %5870 = vmatprep.subr.mxu0 0.0
    %5871 = vmatpush1.msra.mxu0 0.0
    %5872 = vmatprep.subr.mxu0 0.0
    %5873 = vmatpush1.msra.mxu0 0.0
    %5874 = vmatprep.subr.mxu0 0.0
    %5875 = vmatpush1.msra.mxu0 0.0
    %5876 = vmatprep.subr.mxu0 0.0
    %5877 = vmatpush1.msra.mxu0 0.0
    %5878 = vmatprep.subr.mxu0 0.0
    %5879 = vmatpush1.msra.mxu0 0.0
    %5880 = vmatprep.subr.mxu0 0.0
    %5881 = vmatpush1.msra.mxu0 0.0
    %5882 = vmatprep.subr.mxu0 0.0
    %5883 = vmatpush1.msra.mxu0 0.0
    %5884 = vmatprep.subr.mxu0 0.0
    %5885 = vmatpush1.msra.mxu0 0.0
    %5886 = vmatprep.subr.mxu0 0.0
    %5887 = vmatpush1.msra.mxu0 0.0
    %5888 = vmatprep.subr.mxu0 0.0
    %5889 = vmatpush1.msra.mxu0 0.0
    %5890 = vmatprep.subr.mxu0 0.0
    %5891 = vmatpush1.msra.mxu0 0.0
    %5892 = vmatprep.subr.mxu0 0.0
    %5893 = vmatpush1.msra.mxu0 0.0
    %5894 = vmatprep.subr.mxu0 0.0
    %5895 = vmatpush1.msra.mxu0 0.0
    %5896 = vmatprep.subr.mxu0 0.0
    %5897 = vmatpush1.msra.mxu0 0.0
    %5898 = vmatprep.subr.mxu0 0.0
    %5899 = vmatpush1.msra.mxu0 0.0
    %5900 = vmatprep.subr.mxu0 0.0
    %5901 = vmatpush1.msra.mxu0 0.0
    %5902 = vmatprep.subr.mxu0 0.0
    %5903 = vmatpush1.msra.mxu0 0.0
    %5904 = vmatprep.mubr.f32.mxu0 0.0
    %5905 = vmatmul.mubr.f32.gmra.mrb[0].mxu0 %v5593
    %v5906 = vpop.f32.mrb[0].mxu0
    %v5907 = vadd.f32 0.0, %v5906
    %v5908 = vpop.f32.mrb[0].mxu0
    %v5909 = vadd.f32 0.0, %v5908
    %5910 = vdwg.mxu0
    %5911 = vmatprep.subr.mxu0 %v5613
    %5912 = vmatpush1.msra.mxu0 %v5611
    %5913 = vmatprep.subr.mxu0 0.0
    %5914 = vmatpush1.msra.mxu0 0.0
    %5915 = vmatprep.subr.mxu0 0.0
    %5916 = vmatpush1.msra.mxu0 0.0
    %5917 = vmatprep.subr.mxu0 0.0
    %5918 = vmatpush1.msra.mxu0 0.0
    %5919 = vmatprep.subr.mxu0 0.0
    %5920 = vmatpush1.msra.mxu0 0.0
    %5921 = vmatprep.subr.mxu0 0.0
    %5922 = vmatpush1.msra.mxu0 0.0
    %5923 = vmatprep.subr.mxu0 0.0
    %5924 = vmatpush1.msra.mxu0 0.0
    %5925 = vmatprep.subr.mxu0 0.0
    %5926 = vmatpush1.msra.mxu0 0.0
    %5927 = vmatprep.subr.mxu0 0.0
    %5928 = vmatpush1.msra.mxu0 0.0
    %5929 = vmatprep.subr.mxu0 0.0
    %5930 = vmatpush1.msra.mxu0 0.0
    %5931 = vmatprep.subr.mxu0 0.0
    %5932 = vmatpush1.msra.mxu0 0.0
    %5933 = vmatprep.subr.mxu0 0.0
    %5934 = vmatpush1.msra.mxu0 0.0
    %5935 = vmatprep.subr.mxu0 0.0
    %5936 = vmatpush1.msra.mxu0 0.0
    %5937 = vmatprep.subr.mxu0 0.0
    %5938 = vmatpush1.msra.mxu0 0.0
    %5939 = vmatprep.subr.mxu0 0.0
    %5940 = vmatpush1.msra.mxu0 0.0
    %5941 = vmatprep.subr.mxu0 0.0
    %5942 = vmatpush1.msra.mxu0 0.0
    %5943 = vmatprep.subr.mxu0 0.0
    %5944 = vmatpush1.msra.mxu0 0.0
    %5945 = vmatprep.subr.mxu0 0.0
    %5946 = vmatpush1.msra.mxu0 0.0
    %5947 = vmatprep.subr.mxu0 0.0
    %5948 = vmatpush1.msra.mxu0 0.0
    %5949 = vmatprep.subr.mxu0 0.0
    %5950 = vmatpush1.msra.mxu0 0.0
    %5951 = vmatprep.subr.mxu0 0.0
    %5952 = vmatpush1.msra.mxu0 0.0
    %5953 = vmatprep.subr.mxu0 0.0
    %5954 = vmatpush1.msra.mxu0 0.0
    %5955 = vmatprep.subr.mxu0 0.0
    %5956 = vmatpush1.msra.mxu0 0.0
    %5957 = vmatprep.subr.mxu0 0.0
    %5958 = vmatpush1.msra.mxu0 0.0
    %5959 = vmatprep.subr.mxu0 0.0
    %5960 = vmatpush1.msra.mxu0 0.0
    %5961 = vmatprep.subr.mxu0 0.0
    %5962 = vmatpush1.msra.mxu0 0.0
    %5963 = vmatprep.subr.mxu0 0.0
    %5964 = vmatpush1.msra.mxu0 0.0
    %5965 = vmatprep.subr.mxu0 0.0
    %5966 = vmatpush1.msra.mxu0 0.0
    %5967 = vmatprep.subr.mxu0 0.0
    %5968 = vmatpush1.msra.mxu0 0.0
    %5969 = vmatprep.subr.mxu0 0.0
    %5970 = vmatpush1.msra.mxu0 0.0
    %5971 = vmatprep.subr.mxu0 0.0
    %5972 = vmatpush1.msra.mxu0 0.0
    %5973 = vmatprep.subr.mxu0 0.0
    %5974 = vmatpush1.msra.mxu0 0.0
    %5975 = vmatprep.mubr.f32.mxu0 0.0
    %5976 = vmatmul.mubr.f32.gmra.mrb[0].mxu0 %v5593
    %v5977 = vpop.f32.mrb[0].mxu0
    %v5978 = vadd.f32 0.0, %v5977
    %v5979 = vpop.f32.mrb[0].mxu0
    %v5980 = vadd.f32 0.0, %v5979
    %5981 = vdwg.mxu0
    %5982 = vmatprep.subr.mxu0 %v5617
    %5983 = vmatpush1.msra.mxu0 %v5615
    %5984 = vmatprep.subr.mxu0 0.0
    %5985 = vmatpush1.msra.mxu0 0.0
    %5986 = vmatprep.subr.mxu0 0.0
    %5987 = vmatpush1.msra.mxu0 0.0
    %5988 = vmatprep.subr.mxu0 0.0
    %5989 = vmatpush1.msra.mxu0 0.0
    %5990 = vmatprep.subr.mxu0 0.0
    %5991 = vmatpush1.msra.mxu0 0.0
    %5992 = vmatprep.subr.mxu0 0.0
    %5993 = vmatpush1.msra.mxu0 0.0
    %5994 = vmatprep.subr.mxu0 0.0
    %5995 = vmatpush1.msra.mxu0 0.0
    %5996 = vmatprep.subr.mxu0 0.0
    %5997 = vmatpush1.msra.mxu0 0.0
    %5998 = vmatprep.subr.mxu0 0.0
    %5999 = vmatpush1.msra.mxu0 0.0
    %6000 = vmatprep.subr.mxu0 0.0
    %6001 = vmatpush1.msra.mxu0 0.0
    %6002 = vmatprep.subr.mxu0 0.0
    %6003 = vmatpush1.msra.mxu0 0.0
    %6004 = vmatprep.subr.mxu0 0.0
    %6005 = vmatpush1.msra.mxu0 0.0
    %6006 = vmatprep.subr.mxu0 0.0
    %6007 = vmatpush1.msra.mxu0 0.0
    %6008 = vmatprep.subr.mxu0 0.0
    %6009 = vmatpush1.msra.mxu0 0.0
    %6010 = vmatprep.subr.mxu0 0.0
    %6011 = vmatpush1.msra.mxu0 0.0
    %6012 = vmatprep.subr.mxu0 0.0
    %6013 = vmatpush1.msra.mxu0 0.0
    %6014 = vmatprep.subr.mxu0 0.0
    %6015 = vmatpush1.msra.mxu0 0.0
    %6016 = vmatprep.subr.mxu0 0.0
    %6017 = vmatpush1.msra.mxu0 0.0
    %6018 = vmatprep.subr.mxu0 0.0
    %6019 = vmatpush1.msra.mxu0 0.0
    %6020 = vmatprep.subr.mxu0 0.0
    %6021 = vmatpush1.msra.mxu0 0.0
    %6022 = vmatprep.subr.mxu0 0.0
    %6023 = vmatpush1.msra.mxu0 0.0
    %6024 = vmatprep.subr.mxu0 0.0
    %6025 = vmatpush1.msra.mxu0 0.0
    %6026 = vmatprep.subr.mxu0 0.0
    %6027 = vmatpush1.msra.mxu0 0.0
    %6028 = vmatprep.subr.mxu0 0.0
    %6029 = vmatpush1.msra.mxu0 0.0
    %6030 = vmatprep.subr.mxu0 0.0
    %6031 = vmatpush1.msra.mxu0 0.0
    %6032 = vmatprep.subr.mxu0 0.0
    %6033 = vmatpush1.msra.mxu0 0.0
    %6034 = vmatprep.subr.mxu0 0.0
    %6035 = vmatpush1.msra.mxu0 0.0
    %6036 = vmatprep.subr.mxu0 0.0
    %6037 = vmatpush1.msra.mxu0 0.0
    %6038 = vmatprep.subr.mxu0 0.0
    %6039 = vmatpush1.msra.mxu0 0.0
    %6040 = vmatprep.subr.mxu0 0.0
    %6041 = vmatpush1.msra.mxu0 0.0
    %6042 = vmatprep.subr.mxu0 0.0
    %6043 = vmatpush1.msra.mxu0 0.0
    %6044 = vmatprep.subr.mxu0 0.0
    %6045 = vmatpush1.msra.mxu0 0.0
    %6046 = vmatprep.mubr.f32.mxu0 0.0
    %6047 = vmatmul.mubr.f32.gmra.mrb[0].mxu0 %v5593
    %v6048 = vpop.f32.mrb[0].mxu0
    %v6049 = vadd.f32 0.0, %v6048
    %v6050 = vpop.f32.mrb[0].mxu0
    %v6051 = vadd.f32 0.0, %v6050
    %6052 = vdwg.mxu0
    %6053 = vmatprep.subr.mxu0 %v5621
    %6054 = vmatpush1.msra.mxu0 %v5619
    %6055 = vmatprep.subr.mxu0 0.0
    %6056 = vmatpush1.msra.mxu0 0.0
    %6057 = vmatprep.subr.mxu0 0.0
    %6058 = vmatpush1.msra.mxu0 0.0
    %6059 = vmatprep.subr.mxu0 0.0
    %6060 = vmatpush1.msra.mxu0 0.0
    %6061 = vmatprep.subr.mxu0 0.0
    %6062 = vmatpush1.msra.mxu0 0.0
    %6063 = vmatprep.subr.mxu0 0.0
    %6064 = vmatpush1.msra.mxu0 0.0
    %6065 = vmatprep.subr.mxu0 0.0
    %6066 = vmatpush1.msra.mxu0 0.0
    %6067 = vmatprep.subr.mxu0 0.0
    %6068 = vmatpush1.msra.mxu0 0.0
    %6069 = vmatprep.subr.mxu0 0.0
    %6070 = vmatpush1.msra.mxu0 0.0
    %6071 = vmatprep.subr.mxu0 0.0
    %6072 = vmatpush1.msra.mxu0 0.0
    %6073 = vmatprep.subr.mxu0 0.0
    %6074 = vmatpush1.msra.mxu0 0.0
    %6075 = vmatprep.subr.mxu0 0.0
    %6076 = vmatpush1.msra.mxu0 0.0
    %6077 = vmatprep.subr.mxu0 0.0
    %6078 = vmatpush1.msra.mxu0 0.0
    %6079 = vmatprep.subr.mxu0 0.0
    %6080 = vmatpush1.msra.mxu0 0.0
    %6081 = vmatprep.subr.mxu0 0.0
    %6082 = vmatpush1.msra.mxu0 0.0
    %6083 = vmatprep.subr.mxu0 0.0
    %6084 = vmatpush1.msra.mxu0 0.0
    %6085 = vmatprep.subr.mxu0 0.0
    %6086 = vmatpush1.msra.mxu0 0.0
    %6087 = vmatprep.subr.mxu0 0.0
    %6088 = vmatpush1.msra.mxu0 0.0
    %6089 = vmatprep.subr.mxu0 0.0
    %6090 = vmatpush1.msra.mxu0 0.0
    %6091 = vmatprep.subr.mxu0 0.0
    %6092 = vmatpush1.msra.mxu0 0.0
    %6093 = vmatprep.subr.mxu0 0.0
    %6094 = vmatpush1.msra.mxu0 0.0
    %6095 = vmatprep.subr.mxu0 0.0
    %6096 = vmatpush1.msra.mxu0 0.0
    %6097 = vmatprep.subr.mxu0 0.0
    %6098 = vmatpush1.msra.mxu0 0.0
    %6099 = vmatprep.subr.mxu0 0.0
    %6100 = vmatpush1.msra.mxu0 0.0
    %6101 = vmatprep.subr.mxu0 0.0
    %6102 = vmatpush1.msra.mxu0 0.0
    %6103 = vmatprep.subr.mxu0 0.0
    %6104 = vmatpush1.msra.mxu0 0.0
    %6105 = vmatprep.subr.mxu0 0.0
    %6106 = vmatpush1.msra.mxu0 0.0
    %6107 = vmatprep.subr.mxu0 0.0
    %6108 = vmatpush1.msra.mxu0 0.0
    %6109 = vmatprep.subr.mxu0 0.0
    %6110 = vmatpush1.msra.mxu0 0.0
    %6111 = vmatprep.subr.mxu0 0.0
    %6112 = vmatpush1.msra.mxu0 0.0
    %6113 = vmatprep.subr.mxu0 0.0
    %6114 = vmatpush1.msra.mxu0 0.0
    %6115 = vmatprep.subr.mxu0 0.0
    %6116 = vmatpush1.msra.mxu0 0.0
    %6117 = vmatprep.mubr.f32.mxu0 0.0
    %6118 = vmatmul.mubr.f32.gmra.mrb[0].mxu0 %v5593
    %v6119 = vpop.f32.mrb[0].mxu0
    %v6120 = vadd.f32 0.0, %v6119
    %v6121 = vpop.f32.mrb[0].mxu0
    %v6122 = vadd.f32 0.0, %v6121
    %6123 = vdwg.mxu0
    %6124 = vmatprep.subr.mxu0 %v5625
    %6125 = vmatpush1.msra.mxu0 %v5623
    %6126 = vmatprep.subr.mxu0 0.0
    %6127 = vmatpush1.msra.mxu0 0.0
    %6128 = vmatprep.subr.mxu0 0.0
    %6129 = vmatpush1.msra.mxu0 0.0
    %6130 = vmatprep.subr.mxu0 0.0
    %6131 = vmatpush1.msra.mxu0 0.0
    %6132 = vmatprep.subr.mxu0 0.0
    %6133 = vmatpush1.msra.mxu0 0.0
    %6134 = vmatprep.subr.mxu0 0.0
    %6135 = vmatpush1.msra.mxu0 0.0
    %6136 = vmatprep.subr.mxu0 0.0
    %6137 = vmatpush1.msra.mxu0 0.0
    %6138 = vmatprep.subr.mxu0 0.0
    %6139 = vmatpush1.msra.mxu0 0.0
    %6140 = vmatprep.subr.mxu0 0.0
    %6141 = vmatpush1.msra.mxu0 0.0
    %6142 = vmatprep.subr.mxu0 0.0
    %6143 = vmatpush1.msra.mxu0 0.0
    %6144 = vmatprep.subr.mxu0 0.0
    %6145 = vmatpush1.msra.mxu0 0.0
    %6146 = vmatprep.subr.mxu0 0.0
    %6147 = vmatpush1.msra.mxu0 0.0
    %6148 = vmatprep.subr.mxu0 0.0
    %6149 = vmatpush1.msra.mxu0 0.0
    %6150 = vmatprep.subr.mxu0 0.0
    %6151 = vmatpush1.msra.mxu0 0.0
    %6152 = vmatprep.subr.mxu0 0.0
    %6153 = vmatpush1.msra.mxu0 0.0
    %6154 = vmatprep.subr.mxu0 0.0
    %6155 = vmatpush1.msra.mxu0 0.0
    %6156 = vmatprep.subr.mxu0 0.0
    %6157 = vmatpush1.msra.mxu0 0.0
    %6158 = vmatprep.subr.mxu0 0.0
    %6159 = vmatpush1.msra.mxu0 0.0
    %6160 = vmatprep.subr.mxu0 0.0
    %6161 = vmatpush1.msra.mxu0 0.0
    %6162 = vmatprep.subr.mxu0 0.0
    %6163 = vmatpush1.msra.mxu0 0.0
    %6164 = vmatprep.subr.mxu0 0.0
    %6165 = vmatpush1.msra.mxu0 0.0
    %6166 = vmatprep.subr.mxu0 0.0
    %6167 = vmatpush1.msra.mxu0 0.0
    %6168 = vmatprep.subr.mxu0 0.0
    %6169 = vmatpush1.msra.mxu0 0.0
    %6170 = vmatprep.subr.mxu0 0.0
    %6171 = vmatpush1.msra.mxu0 0.0
    %6172 = vmatprep.subr.mxu0 0.0
    %6173 = vmatpush1.msra.mxu0 0.0
    %6174 = vmatprep.subr.mxu0 0.0
    %6175 = vmatpush1.msra.mxu0 0.0
    %6176 = vmatprep.subr.mxu0 0.0
    %6177 = vmatpush1.msra.mxu0 0.0
    %6178 = vmatprep.subr.mxu0 0.0
    %6179 = vmatpush1.msra.mxu0 0.0
    %6180 = vmatprep.subr.mxu0 0.0
    %6181 = vmatpush1.msra.mxu0 0.0
    %6182 = vmatprep.subr.mxu0 0.0
    %6183 = vmatpush1.msra.mxu0 0.0
    %6184 = vmatprep.subr.mxu0 0.0
    %6185 = vmatpush1.msra.mxu0 0.0
    %6186 = vmatprep.subr.mxu0 0.0
    %6187 = vmatpush1.msra.mxu0 0.0
    %6188 = vmatprep.mubr.f32.mxu0 0.0
    %6189 = vmatmul.mubr.f32.gmra.mrb[0].mxu0 %v5593
    %v6190 = vpop.f32.mrb[0].mxu0
    %v6191 = vadd.f32 0.0, %v6190
    %v6192 = vpop.f32.mrb[0].mxu0
    %v6193 = vadd.f32 0.0, %v6192
    %6194 = vdwg.mxu0
    %v6195 = vadd.f32 %v5499, %v5694
    %v6196 = vadd.f32 %v5500, %v5696
    %v6197 = vadd.f32 %v5501, %v5765
    %v6198 = vadd.f32 %v5502, %v5767
    %v6199 = vadd.f32 %v5503, %v5836
    %v6200 = vadd.f32 %v5504, %v5838
    %v6201 = vadd.f32 %v5505, %v5907
    %v6202 = vadd.f32 %v5506, %v5909
    %v6203 = vadd.f32 %v5507, %v5978
    %v6204 = vadd.f32 %v5508, %v5980
    %v6205 = vadd.f32 %v5509, %v6049
    %v6206 = vadd.f32 %v5510, %v6051
    %v6207 = vadd.f32 %v5511, %v6120
    %v6208 = vadd.f32 %v5512, %v6122
    %v6209 = vadd.f32 %v5513, %v6191
    %v6210 = vadd.f32 %v5514, %v6193
    %6212 = vset.pattern.permute.xlu0 0
    %6213 = vperm.xlu0 %6212, %v53
    %v6214 = vpop.permute.xlu0 %6213
    %v6216 = vadd.f32 %v6195, %v6214
    %v6217 = vadd.f32 %v6196, %v6214
    %v6218 = vadd.f32 %v6197, %v6214
    %v6219 = vadd.f32 %v6198, %v6214
    %v6220 = vadd.f32 %v6199, %v6214
    %v6221 = vadd.f32 %v6200, %v6214
    %v6222 = vadd.f32 %v6201, %v6214
    %v6223 = vadd.f32 %v6202, %v6214
    %v6224 = vadd.f32 %v6203, %v6214
    %v6225 = vadd.f32 %v6204, %v6214
    %v6226 = vadd.f32 %v6205, %v6214
    %v6227 = vadd.f32 %v6206, %v6214
    %v6228 = vadd.f32 %v6207, %v6214
    %v6229 = vadd.f32 %v6208, %v6214
    %v6230 = vadd.f32 %v6209, %v6214
    %v6231 = vadd.f32 %v6210, %v6214
    %v6232 = vmax.f32 %v6216, 0.0
    %v6233 = vmax.f32 %v6217, 0.0
    %v6234 = vmax.f32 %v6218, 0.0
    %v6235 = vmax.f32 %v6219, 0.0
    %v6236 = vmax.f32 %v6220, 0.0
    %v6237 = vmax.f32 %v6221, 0.0
    %v6238 = vmax.f32 %v6222, 0.0
    %v6239 = vmax.f32 %v6223, 0.0
    %v6240 = vmax.f32 %v6224, 0.0
    %v6241 = vmax.f32 %v6225, 0.0
    %v6242 = vmax.f32 %v6226, 0.0
    %v6243 = vmax.f32 %v6227, 0.0
    %v6244 = vmax.f32 %v6228, 0.0
    %v6245 = vmax.f32 %v6229, 0.0
    %v6246 = vmax.f32 %v6230, 0.0
    %v6247 = vmax.f32 %v6231, 0.0
    %v6248 = vld [vmem:[#allocation2] sm:$0xff]
    %v6249 = vld [vmem:[#allocation2 + $0x8] sm:$0xff]
    %v6250 = vld [vmem:[#allocation2 + $0x10] sm:$0xff]
    %v6251 = vld [vmem:[#allocation2 + $0x18] sm:$0xff]
    %v6252 = vld [vmem:[#allocation2 + $0x20] sm:$0xff]
    %v6253 = vld [vmem:[#allocation2 + $0x28] sm:$0xff]
    %v6254 = vld [vmem:[#allocation2 + $0x30] sm:$0xff]
    %v6255 = vld [vmem:[#allocation2 + $0x38] sm:$0xff]
    %v6256 = vld [vmem:[#allocation2 + $0x40] sm:$0xff]
    %v6257 = vld [vmem:[#allocation2 + $0x48] sm:$0xff]
    %v6258 = vld [vmem:[#allocation2 + $0x50] sm:$0xff]
    %v6259 = vld [vmem:[#allocation2 + $0x58] sm:$0xff]
    %v6260 = vld [vmem:[#allocation2 + $0x60] sm:$0xff]
    %v6261 = vld [vmem:[#allocation2 + $0x68] sm:$0xff]
    %v6262 = vld [vmem:[#allocation2 + $0x70] sm:$0xff]
    %v6263 = vld [vmem:[#allocation2 + $0x78] sm:$0xff]
    %v6264 = vld [vmem:[%s0 + $0x40] sm:$0xff]
    %v6265 = vld [vmem:[%s0 + $0x48] sm:$0xff]
    %v6266 = vld [vmem:[%s0 + $0x50] sm:$0xff]
    %v6267 = vld [vmem:[%s0 + $0x58] sm:$0xff]
    %v6272 = vcombine.high %v6264, %v6264
    %v6273 = vcombine.high %v6265, %v6265
    %v6274 = vcombine.high %v6266, %v6266
    %v6275 = vcombine.high %v6267, %v6267
    %6276 = vrot.lane.b32.xlu0 %v6264, 127
    %v6277 = vpop.permute.xlu0 %6276
    %6278 = vrot.lane.b32.xlu0 %v6272, 127
    %v6279 = vpop.permute.xlu0 %6278
    %6280 = vrot.lane.b32.xlu0 %v6265, 127
    %v6281 = vpop.permute.xlu0 %6280
    %6282 = vrot.lane.b32.xlu0 %v6273, 127
    %v6283 = vpop.permute.xlu0 %6282
    %6284 = vrot.lane.b32.xlu0 %v6266, 127
    %v6285 = vpop.permute.xlu0 %6284
    %6286 = vrot.lane.b32.xlu0 %v6274, 127
    %v6287 = vpop.permute.xlu0 %6286
    %6288 = vrot.lane.b32.xlu0 %v6267, 127
    %v6289 = vpop.permute.xlu0 %6288
    %6290 = vrot.lane.b32.xlu0 %v6275, 127
    %v6291 = vpop.permute.xlu0 %6290
    %v6292 = vsel %vm114, %v6277, %v6279
    %v6293 = vsel %vm114, %v6279, %v6281
    %v6294 = vsel %vm114, %v6281, %v6283
    %v6295 = vsel %vm114, %v6283, %v6285
    %v6296 = vsel %vm114, %v6285, %v6287
    %v6297 = vsel %vm114, %v6287, %v6289
    %v6298 = vsel %vm114, %v6289, %v6291
    %v6299 = vsel %vm135, %v6292, 0
    %v6301 = vsel %vm135, %v6293, 0
    %v6303 = vsel %vm135, %v6294, 0
    %v6305 = vsel %vm135, %v6295, 0
    %v6307 = vsel %vm135, %v6296, 0
    %v6309 = vsel %vm135, %v6297, 0
    %v6311 = vsel %vm135, %v6298, 0
    %v6313 = vsel %vm135, %v6291, 0
    %6315 = vmatprep.subr.mxu0 %v6301
    %6316 = vmatpush1.msra.mxu0 %v6299
    %6317 = vmatprep.subr.mxu0 0.0
    %6318 = vmatpush1.msra.mxu0 0.0
    %6319 = vmatprep.subr.mxu0 0.0
    %6320 = vmatpush1.msra.mxu0 0.0
    %6321 = vmatprep.subr.mxu0 0.0
    %6322 = vmatpush1.msra.mxu0 0.0
    %6323 = vmatprep.subr.mxu0 0.0
    %6324 = vmatpush1.msra.mxu0 0.0
    %6325 = vmatprep.subr.mxu0 0.0
    %6326 = vmatpush1.msra.mxu0 0.0
    %6327 = vmatprep.subr.mxu0 0.0
    %6328 = vmatpush1.msra.mxu0 0.0
    %6329 = vmatprep.subr.mxu0 0.0
    %6330 = vmatpush1.msra.mxu0 0.0
    %6331 = vmatprep.subr.mxu0 0.0
    %6332 = vmatpush1.msra.mxu0 0.0
    %6333 = vmatprep.subr.mxu0 0.0
    %6334 = vmatpush1.msra.mxu0 0.0
    %6335 = vmatprep.subr.mxu0 0.0
    %6336 = vmatpush1.msra.mxu0 0.0
    %6337 = vmatprep.subr.mxu0 0.0
    %6338 = vmatpush1.msra.mxu0 0.0
    %6339 = vmatprep.subr.mxu0 0.0
    %6340 = vmatpush1.msra.mxu0 0.0
    %6341 = vmatprep.subr.mxu0 0.0
    %6342 = vmatpush1.msra.mxu0 0.0
    %6343 = vmatprep.subr.mxu0 0.0
    %6344 = vmatpush1.msra.mxu0 0.0
    %6345 = vmatprep.subr.mxu0 0.0
    %6346 = vmatpush1.msra.mxu0 0.0
    %6347 = vmatprep.subr.mxu0 0.0
    %6348 = vmatpush1.msra.mxu0 0.0
    %6349 = vmatprep.subr.mxu0 0.0
    %6350 = vmatpush1.msra.mxu0 0.0
    %6351 = vmatprep.subr.mxu0 0.0
    %6352 = vmatpush1.msra.mxu0 0.0
    %6353 = vmatprep.subr.mxu0 0.0
    %6354 = vmatpush1.msra.mxu0 0.0
    %6355 = vmatprep.subr.mxu0 0.0
    %6356 = vmatpush1.msra.mxu0 0.0
    %6357 = vmatprep.subr.mxu0 0.0
    %6358 = vmatpush1.msra.mxu0 0.0
    %6359 = vmatprep.subr.mxu0 0.0
    %6360 = vmatpush1.msra.mxu0 0.0
    %6361 = vmatprep.subr.mxu0 0.0
    %6362 = vmatpush1.msra.mxu0 0.0
    %6363 = vmatprep.subr.mxu0 0.0
    %6364 = vmatpush1.msra.mxu0 0.0
    %6365 = vmatprep.subr.mxu0 0.0
    %6366 = vmatpush1.msra.mxu0 0.0
    %6367 = vmatprep.subr.mxu0 0.0
    %6368 = vmatpush1.msra.mxu0 0.0
    %6369 = vmatprep.subr.mxu0 0.0
    %6370 = vmatpush1.msra.mxu0 0.0
    %6371 = vmatprep.subr.mxu0 0.0
    %6372 = vmatpush1.msra.mxu0 0.0
    %6373 = vmatprep.subr.mxu0 0.0
    %6374 = vmatpush1.msra.mxu0 0.0
    %6375 = vmatprep.subr.mxu0 0.0
    %6376 = vmatpush1.msra.mxu0 0.0
    %6377 = vmatprep.subr.mxu0 0.0
    %6378 = vmatpush1.msra.mxu0 0.0
    %6379 = vmatprep.mubr.f32.mxu0 0.0
    %6380 = vmatmul.mubr.f32.gmra.mrb[0].mxu0 %v133
    %v6381 = vpop.f32.mrb[0].mxu0
    %v6382 = vadd.f32 0.0, %v6381
    %v6383 = vpop.f32.mrb[0].mxu0
    %v6384 = vadd.f32 0.0, %v6383
    %6385 = vdwg.mxu0
    %6386 = vmatprep.subr.mxu0 %v6305
    %6387 = vmatpush1.msra.mxu0 %v6303
    %6388 = vmatprep.subr.mxu0 0.0
    %6389 = vmatpush1.msra.mxu0 0.0
    %6390 = vmatprep.subr.mxu0 0.0
    %6391 = vmatpush1.msra.mxu0 0.0
    %6392 = vmatprep.subr.mxu0 0.0
    %6393 = vmatpush1.msra.mxu0 0.0
    %6394 = vmatprep.subr.mxu0 0.0
    %6395 = vmatpush1.msra.mxu0 0.0
    %6396 = vmatprep.subr.mxu0 0.0
    %6397 = vmatpush1.msra.mxu0 0.0
    %6398 = vmatprep.subr.mxu0 0.0
    %6399 = vmatpush1.msra.mxu0 0.0
    %6400 = vmatprep.subr.mxu0 0.0
    %6401 = vmatpush1.msra.mxu0 0.0
    %6402 = vmatprep.subr.mxu0 0.0
    %6403 = vmatpush1.msra.mxu0 0.0
    %6404 = vmatprep.subr.mxu0 0.0
    %6405 = vmatpush1.msra.mxu0 0.0
    %6406 = vmatprep.subr.mxu0 0.0
    %6407 = vmatpush1.msra.mxu0 0.0
    %6408 = vmatprep.subr.mxu0 0.0
    %6409 = vmatpush1.msra.mxu0 0.0
    %6410 = vmatprep.subr.mxu0 0.0
    %6411 = vmatpush1.msra.mxu0 0.0
    %6412 = vmatprep.subr.mxu0 0.0
    %6413 = vmatpush1.msra.mxu0 0.0
    %6414 = vmatprep.subr.mxu0 0.0
    %6415 = vmatpush1.msra.mxu0 0.0
    %6416 = vmatprep.subr.mxu0 0.0
    %6417 = vmatpush1.msra.mxu0 0.0
    %6418 = vmatprep.subr.mxu0 0.0
    %6419 = vmatpush1.msra.mxu0 0.0
    %6420 = vmatprep.subr.mxu0 0.0
    %6421 = vmatpush1.msra.mxu0 0.0
    %6422 = vmatprep.subr.mxu0 0.0
    %6423 = vmatpush1.msra.mxu0 0.0
    %6424 = vmatprep.subr.mxu0 0.0
    %6425 = vmatpush1.msra.mxu0 0.0
    %6426 = vmatprep.subr.mxu0 0.0
    %6427 = vmatpush1.msra.mxu0 0.0
    %6428 = vmatprep.subr.mxu0 0.0
    %6429 = vmatpush1.msra.mxu0 0.0
    %6430 = vmatprep.subr.mxu0 0.0
    %6431 = vmatpush1.msra.mxu0 0.0
    %6432 = vmatprep.subr.mxu0 0.0
    %6433 = vmatpush1.msra.mxu0 0.0
    %6434 = vmatprep.subr.mxu0 0.0
    %6435 = vmatpush1.msra.mxu0 0.0
    %6436 = vmatprep.subr.mxu0 0.0
    %6437 = vmatpush1.msra.mxu0 0.0
    %6438 = vmatprep.subr.mxu0 0.0
    %6439 = vmatpush1.msra.mxu0 0.0
    %6440 = vmatprep.subr.mxu0 0.0
    %6441 = vmatpush1.msra.mxu0 0.0
    %6442 = vmatprep.subr.mxu0 0.0
    %6443 = vmatpush1.msra.mxu0 0.0
    %6444 = vmatprep.subr.mxu0 0.0
    %6445 = vmatpush1.msra.mxu0 0.0
    %6446 = vmatprep.subr.mxu0 0.0
    %6447 = vmatpush1.msra.mxu0 0.0
    %6448 = vmatprep.subr.mxu0 0.0
    %6449 = vmatpush1.msra.mxu0 0.0
    %6450 = vmatprep.mubr.f32.mxu0 0.0
    %6451 = vmatmul.mubr.f32.gmra.mrb[0].mxu0 %v133
    %v6452 = vpop.f32.mrb[0].mxu0
    %v6453 = vadd.f32 0.0, %v6452
    %v6454 = vpop.f32.mrb[0].mxu0
    %v6455 = vadd.f32 0.0, %v6454
    %6456 = vdwg.mxu0
    %6457 = vmatprep.subr.mxu0 %v6309
    %6458 = vmatpush1.msra.mxu0 %v6307
    %6459 = vmatprep.subr.mxu0 0.0
    %6460 = vmatpush1.msra.mxu0 0.0
    %6461 = vmatprep.subr.mxu0 0.0
    %6462 = vmatpush1.msra.mxu0 0.0
    %6463 = vmatprep.subr.mxu0 0.0
    %6464 = vmatpush1.msra.mxu0 0.0
    %6465 = vmatprep.subr.mxu0 0.0
    %6466 = vmatpush1.msra.mxu0 0.0
    %6467 = vmatprep.subr.mxu0 0.0
    %6468 = vmatpush1.msra.mxu0 0.0
    %6469 = vmatprep.subr.mxu0 0.0
    %6470 = vmatpush1.msra.mxu0 0.0
    %6471 = vmatprep.subr.mxu0 0.0
    %6472 = vmatpush1.msra.mxu0 0.0
    %6473 = vmatprep.subr.mxu0 0.0
    %6474 = vmatpush1.msra.mxu0 0.0
    %6475 = vmatprep.subr.mxu0 0.0
    %6476 = vmatpush1.msra.mxu0 0.0
    %6477 = vmatprep.subr.mxu0 0.0
    %6478 = vmatpush1.msra.mxu0 0.0
    %6479 = vmatprep.subr.mxu0 0.0
    %6480 = vmatpush1.msra.mxu0 0.0
    %6481 = vmatprep.subr.mxu0 0.0
    %6482 = vmatpush1.msra.mxu0 0.0
    %6483 = vmatprep.subr.mxu0 0.0
    %6484 = vmatpush1.msra.mxu0 0.0
    %6485 = vmatprep.subr.mxu0 0.0
    %6486 = vmatpush1.msra.mxu0 0.0
    %6487 = vmatprep.subr.mxu0 0.0
    %6488 = vmatpush1.msra.mxu0 0.0
    %6489 = vmatprep.subr.mxu0 0.0
    %6490 = vmatpush1.msra.mxu0 0.0
    %6491 = vmatprep.subr.mxu0 0.0
    %6492 = vmatpush1.msra.mxu0 0.0
    %6493 = vmatprep.subr.mxu0 0.0
    %6494 = vmatpush1.msra.mxu0 0.0
    %6495 = vmatprep.subr.mxu0 0.0
    %6496 = vmatpush1.msra.mxu0 0.0
    %6497 = vmatprep.subr.mxu0 0.0
    %6498 = vmatpush1.msra.mxu0 0.0
    %6499 = vmatprep.subr.mxu0 0.0
    %6500 = vmatpush1.msra.mxu0 0.0
    %6501 = vmatprep.subr.mxu0 0.0
    %6502 = vmatpush1.msra.mxu0 0.0
    %6503 = vmatprep.subr.mxu0 0.0
    %6504 = vmatpush1.msra.mxu0 0.0
    %6505 = vmatprep.subr.mxu0 0.0
    %6506 = vmatpush1.msra.mxu0 0.0
    %6507 = vmatprep.subr.mxu0 0.0
    %6508 = vmatpush1.msra.mxu0 0.0
    %6509 = vmatprep.subr.mxu0 0.0
    %6510 = vmatpush1.msra.mxu0 0.0
    %6511 = vmatprep.subr.mxu0 0.0
    %6512 = vmatpush1.msra.mxu0 0.0
    %6513 = vmatprep.subr.mxu0 0.0
    %6514 = vmatpush1.msra.mxu0 0.0
    %6515 = vmatprep.subr.mxu0 0.0
    %6516 = vmatpush1.msra.mxu0 0.0
    %6517 = vmatprep.subr.mxu0 0.0
    %6518 = vmatpush1.msra.mxu0 0.0
    %6519 = vmatprep.subr.mxu0 0.0
    %6520 = vmatpush1.msra.mxu0 0.0
    %6521 = vmatprep.mubr.f32.mxu0 0.0
    %6522 = vmatmul.mubr.f32.gmra.mrb[0].mxu0 %v133
    %v6523 = vpop.f32.mrb[0].mxu0
    %v6524 = vadd.f32 0.0, %v6523
    %v6525 = vpop.f32.mrb[0].mxu0
    %v6526 = vadd.f32 0.0, %v6525
    %6527 = vdwg.mxu0
    %6528 = vmatprep.subr.mxu0 %v6313
    %6529 = vmatpush1.msra.mxu0 %v6311
    %6530 = vmatprep.subr.mxu0 0.0
    %6531 = vmatpush1.msra.mxu0 0.0
    %6532 = vmatprep.subr.mxu0 0.0
    %6533 = vmatpush1.msra.mxu0 0.0
    %6534 = vmatprep.subr.mxu0 0.0
    %6535 = vmatpush1.msra.mxu0 0.0
    %6536 = vmatprep.subr.mxu0 0.0
    %6537 = vmatpush1.msra.mxu0 0.0
    %6538 = vmatprep.subr.mxu0 0.0
    %6539 = vmatpush1.msra.mxu0 0.0
    %6540 = vmatprep.subr.mxu0 0.0
    %6541 = vmatpush1.msra.mxu0 0.0
    %6542 = vmatprep.subr.mxu0 0.0
    %6543 = vmatpush1.msra.mxu0 0.0
    %6544 = vmatprep.subr.mxu0 0.0
    %6545 = vmatpush1.msra.mxu0 0.0
    %6546 = vmatprep.subr.mxu0 0.0
    %6547 = vmatpush1.msra.mxu0 0.0
    %6548 = vmatprep.subr.mxu0 0.0
    %6549 = vmatpush1.msra.mxu0 0.0
    %6550 = vmatprep.subr.mxu0 0.0
    %6551 = vmatpush1.msra.mxu0 0.0
    %6552 = vmatprep.subr.mxu0 0.0
    %6553 = vmatpush1.msra.mxu0 0.0
    %6554 = vmatprep.subr.mxu0 0.0
    %6555 = vmatpush1.msra.mxu0 0.0
    %6556 = vmatprep.subr.mxu0 0.0
    %6557 = vmatpush1.msra.mxu0 0.0
    %6558 = vmatprep.subr.mxu0 0.0
    %6559 = vmatpush1.msra.mxu0 0.0
    %6560 = vmatprep.subr.mxu0 0.0
    %6561 = vmatpush1.msra.mxu0 0.0
    %6562 = vmatprep.subr.mxu0 0.0
    %6563 = vmatpush1.msra.mxu0 0.0
    %6564 = vmatprep.subr.mxu0 0.0
    %6565 = vmatpush1.msra.mxu0 0.0
    %6566 = vmatprep.subr.mxu0 0.0
    %6567 = vmatpush1.msra.mxu0 0.0
    %6568 = vmatprep.subr.mxu0 0.0
    %6569 = vmatpush1.msra.mxu0 0.0
    %6570 = vmatprep.subr.mxu0 0.0
    %6571 = vmatpush1.msra.mxu0 0.0
    %6572 = vmatprep.subr.mxu0 0.0
    %6573 = vmatpush1.msra.mxu0 0.0
    %6574 = vmatprep.subr.mxu0 0.0
    %6575 = vmatpush1.msra.mxu0 0.0
    %6576 = vmatprep.subr.mxu0 0.0
    %6577 = vmatpush1.msra.mxu0 0.0
    %6578 = vmatprep.subr.mxu0 0.0
    %6579 = vmatpush1.msra.mxu0 0.0
    %6580 = vmatprep.subr.mxu0 0.0
    %6581 = vmatpush1.msra.mxu0 0.0
    %6582 = vmatprep.subr.mxu0 0.0
    %6583 = vmatpush1.msra.mxu0 0.0
    %6584 = vmatprep.subr.mxu0 0.0
    %6585 = vmatpush1.msra.mxu0 0.0
    %6586 = vmatprep.subr.mxu0 0.0
    %6587 = vmatpush1.msra.mxu0 0.0
    %6588 = vmatprep.subr.mxu0 0.0
    %6589 = vmatpush1.msra.mxu0 0.0
    %6590 = vmatprep.subr.mxu0 0.0
    %6591 = vmatpush1.msra.mxu0 0.0
    %6592 = vmatprep.mubr.f32.mxu0 0.0
    %6593 = vmatmul.mubr.f32.gmra.mrb[0].mxu0 %v133
    %v6594 = vpop.f32.mrb[0].mxu0
    %v6595 = vadd.f32 0.0, %v6594
    %v6596 = vpop.f32.mrb[0].mxu0
    %v6597 = vadd.f32 0.0, %v6596
    %6598 = vdwg.mxu0
    %v6599 = vsel %vm135, %v6264, 0
    %v6601 = vsel %vm135, %v6272, 0
    %v6603 = vsel %vm135, %v6265, 0
    %v6605 = vsel %vm135, %v6273, 0
    %v6607 = vsel %vm135, %v6266, 0
    %v6609 = vsel %vm135, %v6274, 0
    %v6611 = vsel %vm135, %v6267, 0
    %v6613 = vsel %vm135, %v6275, 0
    %6615 = vmatprep.subr.mxu0 %v6601
    %6616 = vmatpush1.msra.mxu0 %v6599
    %6617 = vmatprep.subr.mxu0 0.0
    %6618 = vmatpush1.msra.mxu0 0.0
    %6619 = vmatprep.subr.mxu0 0.0
    %6620 = vmatpush1.msra.mxu0 0.0
    %6621 = vmatprep.subr.mxu0 0.0
    %6622 = vmatpush1.msra.mxu0 0.0
    %6623 = vmatprep.subr.mxu0 0.0
    %6624 = vmatpush1.msra.mxu0 0.0
    %6625 = vmatprep.subr.mxu0 0.0
    %6626 = vmatpush1.msra.mxu0 0.0
    %6627 = vmatprep.subr.mxu0 0.0
    %6628 = vmatpush1.msra.mxu0 0.0
    %6629 = vmatprep.subr.mxu0 0.0
    %6630 = vmatpush1.msra.mxu0 0.0
    %6631 = vmatprep.subr.mxu0 0.0
    %6632 = vmatpush1.msra.mxu0 0.0
    %6633 = vmatprep.subr.mxu0 0.0
    %6634 = vmatpush1.msra.mxu0 0.0
    %6635 = vmatprep.subr.mxu0 0.0
    %6636 = vmatpush1.msra.mxu0 0.0
    %6637 = vmatprep.subr.mxu0 0.0
    %6638 = vmatpush1.msra.mxu0 0.0
    %6639 = vmatprep.subr.mxu0 0.0
    %6640 = vmatpush1.msra.mxu0 0.0
    %6641 = vmatprep.subr.mxu0 0.0
    %6642 = vmatpush1.msra.mxu0 0.0
    %6643 = vmatprep.subr.mxu0 0.0
    %6644 = vmatpush1.msra.mxu0 0.0
    %6645 = vmatprep.subr.mxu0 0.0
    %6646 = vmatpush1.msra.mxu0 0.0
    %6647 = vmatprep.subr.mxu0 0.0
    %6648 = vmatpush1.msra.mxu0 0.0
    %6649 = vmatprep.subr.mxu0 0.0
    %6650 = vmatpush1.msra.mxu0 0.0
    %6651 = vmatprep.subr.mxu0 0.0
    %6652 = vmatpush1.msra.mxu0 0.0
    %6653 = vmatprep.subr.mxu0 0.0
    %6654 = vmatpush1.msra.mxu0 0.0
    %6655 = vmatprep.subr.mxu0 0.0
    %6656 = vmatpush1.msra.mxu0 0.0
    %6657 = vmatprep.subr.mxu0 0.0
    %6658 = vmatpush1.msra.mxu0 0.0
    %6659 = vmatprep.subr.mxu0 0.0
    %6660 = vmatpush1.msra.mxu0 0.0
    %6661 = vmatprep.subr.mxu0 0.0
    %6662 = vmatpush1.msra.mxu0 0.0
    %6663 = vmatprep.subr.mxu0 0.0
    %6664 = vmatpush1.msra.mxu0 0.0
    %6665 = vmatprep.subr.mxu0 0.0
    %6666 = vmatpush1.msra.mxu0 0.0
    %6667 = vmatprep.subr.mxu0 0.0
    %6668 = vmatpush1.msra.mxu0 0.0
    %6669 = vmatprep.subr.mxu0 0.0
    %6670 = vmatpush1.msra.mxu0 0.0
    %6671 = vmatprep.subr.mxu0 0.0
    %6672 = vmatpush1.msra.mxu0 0.0
    %6673 = vmatprep.subr.mxu0 0.0
    %6674 = vmatpush1.msra.mxu0 0.0
    %6675 = vmatprep.subr.mxu0 0.0
    %6676 = vmatpush1.msra.mxu0 0.0
    %6677 = vmatprep.subr.mxu0 0.0
    %6678 = vmatpush1.msra.mxu0 0.0
    %6679 = vmatprep.mubr.f32.mxu0 0.0
    %6680 = vmatmul.mubr.f32.gmra.mrb[0].mxu0 %v737
    %v6681 = vpop.f32.mrb[0].mxu0
    %v6682 = vadd.f32 %v6382, %v6681
    %v6683 = vpop.f32.mrb[0].mxu0
    %v6684 = vadd.f32 %v6384, %v6683
    %6685 = vdwg.mxu0
    %6686 = vmatprep.subr.mxu0 %v6605
    %6687 = vmatpush1.msra.mxu0 %v6603
    %6688 = vmatprep.subr.mxu0 0.0
    %6689 = vmatpush1.msra.mxu0 0.0
    %6690 = vmatprep.subr.mxu0 0.0
    %6691 = vmatpush1.msra.mxu0 0.0
    %6692 = vmatprep.subr.mxu0 0.0
    %6693 = vmatpush1.msra.mxu0 0.0
    %6694 = vmatprep.subr.mxu0 0.0
    %6695 = vmatpush1.msra.mxu0 0.0
    %6696 = vmatprep.subr.mxu0 0.0
    %6697 = vmatpush1.msra.mxu0 0.0
    %6698 = vmatprep.subr.mxu0 0.0
    %6699 = vmatpush1.msra.mxu0 0.0
    %6700 = vmatprep.subr.mxu0 0.0
    %6701 = vmatpush1.msra.mxu0 0.0
    %6702 = vmatprep.subr.mxu0 0.0
    %6703 = vmatpush1.msra.mxu0 0.0
    %6704 = vmatprep.subr.mxu0 0.0
    %6705 = vmatpush1.msra.mxu0 0.0
    %6706 = vmatprep.subr.mxu0 0.0
    %6707 = vmatpush1.msra.mxu0 0.0
    %6708 = vmatprep.subr.mxu0 0.0
    %6709 = vmatpush1.msra.mxu0 0.0
    %6710 = vmatprep.subr.mxu0 0.0
    %6711 = vmatpush1.msra.mxu0 0.0
    %6712 = vmatprep.subr.mxu0 0.0
    %6713 = vmatpush1.msra.mxu0 0.0
    %6714 = vmatprep.subr.mxu0 0.0
    %6715 = vmatpush1.msra.mxu0 0.0
    %6716 = vmatprep.subr.mxu0 0.0
    %6717 = vmatpush1.msra.mxu0 0.0
    %6718 = vmatprep.subr.mxu0 0.0
    %6719 = vmatpush1.msra.mxu0 0.0
    %6720 = vmatprep.subr.mxu0 0.0
    %6721 = vmatpush1.msra.mxu0 0.0
    %6722 = vmatprep.subr.mxu0 0.0
    %6723 = vmatpush1.msra.mxu0 0.0
    %6724 = vmatprep.subr.mxu0 0.0
    %6725 = vmatpush1.msra.mxu0 0.0
    %6726 = vmatprep.subr.mxu0 0.0
    %6727 = vmatpush1.msra.mxu0 0.0
    %6728 = vmatprep.subr.mxu0 0.0
    %6729 = vmatpush1.msra.mxu0 0.0
    %6730 = vmatprep.subr.mxu0 0.0
    %6731 = vmatpush1.msra.mxu0 0.0
    %6732 = vmatprep.subr.mxu0 0.0
    %6733 = vmatpush1.msra.mxu0 0.0
    %6734 = vmatprep.subr.mxu0 0.0
    %6735 = vmatpush1.msra.mxu0 0.0
    %6736 = vmatprep.subr.mxu0 0.0
    %6737 = vmatpush1.msra.mxu0 0.0
    %6738 = vmatprep.subr.mxu0 0.0
    %6739 = vmatpush1.msra.mxu0 0.0
    %6740 = vmatprep.subr.mxu0 0.0
    %6741 = vmatpush1.msra.mxu0 0.0
    %6742 = vmatprep.subr.mxu0 0.0
    %6743 = vmatpush1.msra.mxu0 0.0
    %6744 = vmatprep.subr.mxu0 0.0
    %6745 = vmatpush1.msra.mxu0 0.0
    %6746 = vmatprep.subr.mxu0 0.0
    %6747 = vmatpush1.msra.mxu0 0.0
    %6748 = vmatprep.subr.mxu0 0.0
    %6749 = vmatpush1.msra.mxu0 0.0
    %6750 = vmatprep.mubr.f32.mxu0 0.0
    %6751 = vmatmul.mubr.f32.gmra.mrb[0].mxu0 %v737
    %v6752 = vpop.f32.mrb[0].mxu0
    %v6753 = vadd.f32 %v6453, %v6752
    %v6754 = vpop.f32.mrb[0].mxu0
    %v6755 = vadd.f32 %v6455, %v6754
    %6756 = vdwg.mxu0
    %6757 = vmatprep.subr.mxu0 %v6609
    %6758 = vmatpush1.msra.mxu0 %v6607
    %6759 = vmatprep.subr.mxu0 0.0
    %6760 = vmatpush1.msra.mxu0 0.0
    %6761 = vmatprep.subr.mxu0 0.0
    %6762 = vmatpush1.msra.mxu0 0.0
    %6763 = vmatprep.subr.mxu0 0.0
    %6764 = vmatpush1.msra.mxu0 0.0
    %6765 = vmatprep.subr.mxu0 0.0
    %6766 = vmatpush1.msra.mxu0 0.0
    %6767 = vmatprep.subr.mxu0 0.0
    %6768 = vmatpush1.msra.mxu0 0.0
    %6769 = vmatprep.subr.mxu0 0.0
    %6770 = vmatpush1.msra.mxu0 0.0
    %6771 = vmatprep.subr.mxu0 0.0
    %6772 = vmatpush1.msra.mxu0 0.0
    %6773 = vmatprep.subr.mxu0 0.0
    %6774 = vmatpush1.msra.mxu0 0.0
    %6775 = vmatprep.subr.mxu0 0.0
    %6776 = vmatpush1.msra.mxu0 0.0
    %6777 = vmatprep.subr.mxu0 0.0
    %6778 = vmatpush1.msra.mxu0 0.0
    %6779 = vmatprep.subr.mxu0 0.0
    %6780 = vmatpush1.msra.mxu0 0.0
    %6781 = vmatprep.subr.mxu0 0.0
    %6782 = vmatpush1.msra.mxu0 0.0
    %6783 = vmatprep.subr.mxu0 0.0
    %6784 = vmatpush1.msra.mxu0 0.0
    %6785 = vmatprep.subr.mxu0 0.0
    %6786 = vmatpush1.msra.mxu0 0.0
    %6787 = vmatprep.subr.mxu0 0.0
    %6788 = vmatpush1.msra.mxu0 0.0
    %6789 = vmatprep.subr.mxu0 0.0
    %6790 = vmatpush1.msra.mxu0 0.0
    %6791 = vmatprep.subr.mxu0 0.0
    %6792 = vmatpush1.msra.mxu0 0.0
    %6793 = vmatprep.subr.mxu0 0.0
    %6794 = vmatpush1.msra.mxu0 0.0
    %6795 = vmatprep.subr.mxu0 0.0
    %6796 = vmatpush1.msra.mxu0 0.0
    %6797 = vmatprep.subr.mxu0 0.0
    %6798 = vmatpush1.msra.mxu0 0.0
    %6799 = vmatprep.subr.mxu0 0.0
    %6800 = vmatpush1.msra.mxu0 0.0
    %6801 = vmatprep.subr.mxu0 0.0
    %6802 = vmatpush1.msra.mxu0 0.0
    %6803 = vmatprep.subr.mxu0 0.0
    %6804 = vmatpush1.msra.mxu0 0.0
    %6805 = vmatprep.subr.mxu0 0.0
    %6806 = vmatpush1.msra.mxu0 0.0
    %6807 = vmatprep.subr.mxu0 0.0
    %6808 = vmatpush1.msra.mxu0 0.0
    %6809 = vmatprep.subr.mxu0 0.0
    %6810 = vmatpush1.msra.mxu0 0.0
    %6811 = vmatprep.subr.mxu0 0.0
    %6812 = vmatpush1.msra.mxu0 0.0
    %6813 = vmatprep.subr.mxu0 0.0
    %6814 = vmatpush1.msra.mxu0 0.0
    %6815 = vmatprep.subr.mxu0 0.0
    %6816 = vmatpush1.msra.mxu0 0.0
    %6817 = vmatprep.subr.mxu0 0.0
    %6818 = vmatpush1.msra.mxu0 0.0
    %6819 = vmatprep.subr.mxu0 0.0
    %6820 = vmatpush1.msra.mxu0 0.0
    %6821 = vmatprep.mubr.f32.mxu0 0.0
    %6822 = vmatmul.mubr.f32.gmra.mrb[0].mxu0 %v737
    %v6823 = vpop.f32.mrb[0].mxu0
    %v6824 = vadd.f32 %v6524, %v6823
    %v6825 = vpop.f32.mrb[0].mxu0
    %v6826 = vadd.f32 %v6526, %v6825
    %6827 = vdwg.mxu0
    %6828 = vmatprep.subr.mxu0 %v6613
    %6829 = vmatpush1.msra.mxu0 %v6611
    %6830 = vmatprep.subr.mxu0 0.0
    %6831 = vmatpush1.msra.mxu0 0.0
    %6832 = vmatprep.subr.mxu0 0.0
    %6833 = vmatpush1.msra.mxu0 0.0
    %6834 = vmatprep.subr.mxu0 0.0
    %6835 = vmatpush1.msra.mxu0 0.0
    %6836 = vmatprep.subr.mxu0 0.0
    %6837 = vmatpush1.msra.mxu0 0.0
    %6838 = vmatprep.subr.mxu0 0.0
    %6839 = vmatpush1.msra.mxu0 0.0
    %6840 = vmatprep.subr.mxu0 0.0
    %6841 = vmatpush1.msra.mxu0 0.0
    %6842 = vmatprep.subr.mxu0 0.0
    %6843 = vmatpush1.msra.mxu0 0.0
    %6844 = vmatprep.subr.mxu0 0.0
    %6845 = vmatpush1.msra.mxu0 0.0
    %6846 = vmatprep.subr.mxu0 0.0
    %6847 = vmatpush1.msra.mxu0 0.0
    %6848 = vmatprep.subr.mxu0 0.0
    %6849 = vmatpush1.msra.mxu0 0.0
    %6850 = vmatprep.subr.mxu0 0.0
    %6851 = vmatpush1.msra.mxu0 0.0
    %6852 = vmatprep.subr.mxu0 0.0
    %6853 = vmatpush1.msra.mxu0 0.0
    %6854 = vmatprep.subr.mxu0 0.0
    %6855 = vmatpush1.msra.mxu0 0.0
    %6856 = vmatprep.subr.mxu0 0.0
    %6857 = vmatpush1.msra.mxu0 0.0
    %6858 = vmatprep.subr.mxu0 0.0
    %6859 = vmatpush1.msra.mxu0 0.0
    %6860 = vmatprep.subr.mxu0 0.0
    %6861 = vmatpush1.msra.mxu0 0.0
    %6862 = vmatprep.subr.mxu0 0.0
    %6863 = vmatpush1.msra.mxu0 0.0
    %6864 = vmatprep.subr.mxu0 0.0
    %6865 = vmatpush1.msra.mxu0 0.0
    %6866 = vmatprep.subr.mxu0 0.0
    %6867 = vmatpush1.msra.mxu0 0.0
    %6868 = vmatprep.subr.mxu0 0.0
    %6869 = vmatpush1.msra.mxu0 0.0
    %6870 = vmatprep.subr.mxu0 0.0
    %6871 = vmatpush1.msra.mxu0 0.0
    %6872 = vmatprep.subr.mxu0 0.0
    %6873 = vmatpush1.msra.mxu0 0.0
    %6874 = vmatprep.subr.mxu0 0.0
    %6875 = vmatpush1.msra.mxu0 0.0
    %6876 = vmatprep.subr.mxu0 0.0
    %6877 = vmatpush1.msra.mxu0 0.0
    %6878 = vmatprep.subr.mxu0 0.0
    %6879 = vmatpush1.msra.mxu0 0.0
    %6880 = vmatprep.subr.mxu0 0.0
    %6881 = vmatpush1.msra.mxu0 0.0
    %6882 = vmatprep.subr.mxu0 0.0
    %6883 = vmatpush1.msra.mxu0 0.0
    %6884 = vmatprep.subr.mxu0 0.0
    %6885 = vmatpush1.msra.mxu0 0.0
    %6886 = vmatprep.subr.mxu0 0.0
    %6887 = vmatpush1.msra.mxu0 0.0
    %6888 = vmatprep.subr.mxu0 0.0
    %6889 = vmatpush1.msra.mxu0 0.0
    %6890 = vmatprep.subr.mxu0 0.0
    %6891 = vmatpush1.msra.mxu0 0.0
    %6892 = vmatprep.mubr.f32.mxu0 0.0
    %6893 = vmatmul.mubr.f32.gmra.mrb[0].mxu0 %v737
    %v6894 = vpop.f32.mrb[0].mxu0
    %v6895 = vadd.f32 %v6595, %v6894
    %v6896 = vpop.f32.mrb[0].mxu0
    %v6897 = vadd.f32 %v6597, %v6896
    %6898 = vdwg.mxu0
    %v6899 = vld [vmem:[%s0 + $0x40] sm:$0xff]
    %v6900 = vld [vmem:[%s0 + $0x48] sm:$0xff]
    %v6901 = vld [vmem:[%s0 + $0x50] sm:$0xff]
    %v6902 = vld [vmem:[%s0 + $0x58] sm:$0xff]
    %v6907 = vcombine.high %v6899, %v6899
    %v6908 = vcombine.high %v6900, %v6900
    %v6909 = vcombine.high %v6901, %v6901
    %v6910 = vcombine.high %v6902, %v6902
    %6911 = vrot.lane.b32.xlu0 %v6899, 126
    %v6912 = vpop.permute.xlu0 %6911
    %6913 = vrot.lane.b32.xlu0 %v6907, 126
    %v6914 = vpop.permute.xlu0 %6913
    %6915 = vrot.lane.b32.xlu0 %v6900, 126
    %v6916 = vpop.permute.xlu0 %6915
    %6917 = vrot.lane.b32.xlu0 %v6908, 126
    %v6918 = vpop.permute.xlu0 %6917
    %6919 = vrot.lane.b32.xlu0 %v6901, 126
    %v6920 = vpop.permute.xlu0 %6919
    %6921 = vrot.lane.b32.xlu0 %v6909, 126
    %v6922 = vpop.permute.xlu0 %6921
    %6923 = vrot.lane.b32.xlu0 %v6902, 126
    %v6924 = vpop.permute.xlu0 %6923
    %6925 = vrot.lane.b32.xlu0 %v6910, 126
    %v6926 = vpop.permute.xlu0 %6925
    %v6927 = vsel %vm1399, %v6912, %v6914
    %v6928 = vsel %vm1399, %v6914, %v6916
    %v6929 = vsel %vm1399, %v6916, %v6918
    %v6930 = vsel %vm1399, %v6918, %v6920
    %v6931 = vsel %vm1399, %v6920, %v6922
    %v6932 = vsel %vm1399, %v6922, %v6924
    %v6933 = vsel %vm1399, %v6924, %v6926
    %v6934 = vsel %vm135, %v6927, 0
    %v6936 = vsel %vm135, %v6928, 0
    %v6938 = vsel %vm135, %v6929, 0
    %v6940 = vsel %vm135, %v6930, 0
    %v6942 = vsel %vm135, %v6931, 0
    %v6944 = vsel %vm135, %v6932, 0
    %v6946 = vsel %vm135, %v6933, 0
    %v6948 = vsel %vm135, %v6926, 0
    %6950 = vmatprep.subr.mxu0 %v6936
    %6951 = vmatpush1.msra.mxu0 %v6934
    %6952 = vmatprep.subr.mxu0 0.0
    %6953 = vmatpush1.msra.mxu0 0.0
    %6954 = vmatprep.subr.mxu0 0.0
    %6955 = vmatpush1.msra.mxu0 0.0
    %6956 = vmatprep.subr.mxu0 0.0
    %6957 = vmatpush1.msra.mxu0 0.0
    %6958 = vmatprep.subr.mxu0 0.0
    %6959 = vmatpush1.msra.mxu0 0.0
    %6960 = vmatprep.subr.mxu0 0.0
    %6961 = vmatpush1.msra.mxu0 0.0
    %6962 = vmatprep.subr.mxu0 0.0
    %6963 = vmatpush1.msra.mxu0 0.0
    %6964 = vmatprep.subr.mxu0 0.0
    %6965 = vmatpush1.msra.mxu0 0.0
    %6966 = vmatprep.subr.mxu0 0.0
    %6967 = vmatpush1.msra.mxu0 0.0
    %6968 = vmatprep.subr.mxu0 0.0
    %6969 = vmatpush1.msra.mxu0 0.0
    %6970 = vmatprep.subr.mxu0 0.0
    %6971 = vmatpush1.msra.mxu0 0.0
    %6972 = vmatprep.subr.mxu0 0.0
    %6973 = vmatpush1.msra.mxu0 0.0
    %6974 = vmatprep.subr.mxu0 0.0
    %6975 = vmatpush1.msra.mxu0 0.0
    %6976 = vmatprep.subr.mxu0 0.0
    %6977 = vmatpush1.msra.mxu0 0.0
    %6978 = vmatprep.subr.mxu0 0.0
    %6979 = vmatpush1.msra.mxu0 0.0
    %6980 = vmatprep.subr.mxu0 0.0
    %6981 = vmatpush1.msra.mxu0 0.0
    %6982 = vmatprep.subr.mxu0 0.0
    %6983 = vmatpush1.msra.mxu0 0.0
    %6984 = vmatprep.subr.mxu0 0.0
    %6985 = vmatpush1.msra.mxu0 0.0
    %6986 = vmatprep.subr.mxu0 0.0
    %6987 = vmatpush1.msra.mxu0 0.0
    %6988 = vmatprep.subr.mxu0 0.0
    %6989 = vmatpush1.msra.mxu0 0.0
    %6990 = vmatprep.subr.mxu0 0.0
    %6991 = vmatpush1.msra.mxu0 0.0
    %6992 = vmatprep.subr.mxu0 0.0
    %6993 = vmatpush1.msra.mxu0 0.0
    %6994 = vmatprep.subr.mxu0 0.0
    %6995 = vmatpush1.msra.mxu0 0.0
    %6996 = vmatprep.subr.mxu0 0.0
    %6997 = vmatpush1.msra.mxu0 0.0
    %6998 = vmatprep.subr.mxu0 0.0
    %6999 = vmatpush1.msra.mxu0 0.0
    %7000 = vmatprep.subr.mxu0 0.0
    %7001 = vmatpush1.msra.mxu0 0.0
    %7002 = vmatprep.subr.mxu0 0.0
    %7003 = vmatpush1.msra.mxu0 0.0
    %7004 = vmatprep.subr.mxu0 0.0
    %7005 = vmatpush1.msra.mxu0 0.0
    %7006 = vmatprep.subr.mxu0 0.0
    %7007 = vmatpush1.msra.mxu0 0.0
    %7008 = vmatprep.subr.mxu0 0.0
    %7009 = vmatpush1.msra.mxu0 0.0
    %7010 = vmatprep.subr.mxu0 0.0
    %7011 = vmatpush1.msra.mxu0 0.0
    %7012 = vmatprep.subr.mxu0 0.0
    %7013 = vmatpush1.msra.mxu0 0.0
    %7014 = vmatprep.mubr.f32.mxu0 0.0
    %7015 = vmatmul.mubr.f32.gmra.mrb[0].mxu0 %v1417
    %v7016 = vpop.f32.mrb[0].mxu0
    %v7017 = vadd.f32 0.0, %v7016
    %v7018 = vpop.f32.mrb[0].mxu0
    %v7019 = vadd.f32 0.0, %v7018
    %7020 = vdwg.mxu0
    %7021 = vmatprep.subr.mxu0 %v6940
    %7022 = vmatpush1.msra.mxu0 %v6938
    %7023 = vmatprep.subr.mxu0 0.0
    %7024 = vmatpush1.msra.mxu0 0.0
    %7025 = vmatprep.subr.mxu0 0.0
    %7026 = vmatpush1.msra.mxu0 0.0
    %7027 = vmatprep.subr.mxu0 0.0
    %7028 = vmatpush1.msra.mxu0 0.0
    %7029 = vmatprep.subr.mxu0 0.0
    %7030 = vmatpush1.msra.mxu0 0.0
    %7031 = vmatprep.subr.mxu0 0.0
    %7032 = vmatpush1.msra.mxu0 0.0
    %7033 = vmatprep.subr.mxu0 0.0
    %7034 = vmatpush1.msra.mxu0 0.0
    %7035 = vmatprep.subr.mxu0 0.0
    %7036 = vmatpush1.msra.mxu0 0.0
    %7037 = vmatprep.subr.mxu0 0.0
    %7038 = vmatpush1.msra.mxu0 0.0
    %7039 = vmatprep.subr.mxu0 0.0
    %7040 = vmatpush1.msra.mxu0 0.0
    %7041 = vmatprep.subr.mxu0 0.0
    %7042 = vmatpush1.msra.mxu0 0.0
    %7043 = vmatprep.subr.mxu0 0.0
    %7044 = vmatpush1.msra.mxu0 0.0
    %7045 = vmatprep.subr.mxu0 0.0
    %7046 = vmatpush1.msra.mxu0 0.0
    %7047 = vmatprep.subr.mxu0 0.0
    %7048 = vmatpush1.msra.mxu0 0.0
    %7049 = vmatprep.subr.mxu0 0.0
    %7050 = vmatpush1.msra.mxu0 0.0
    %7051 = vmatprep.subr.mxu0 0.0
    %7052 = vmatpush1.msra.mxu0 0.0
    %7053 = vmatprep.subr.mxu0 0.0
    %7054 = vmatpush1.msra.mxu0 0.0
    %7055 = vmatprep.subr.mxu0 0.0
    %7056 = vmatpush1.msra.mxu0 0.0
    %7057 = vmatprep.subr.mxu0 0.0
    %7058 = vmatpush1.msra.mxu0 0.0
    %7059 = vmatprep.subr.mxu0 0.0
    %7060 = vmatpush1.msra.mxu0 0.0
    %7061 = vmatprep.subr.mxu0 0.0
    %7062 = vmatpush1.msra.mxu0 0.0
    %7063 = vmatprep.subr.mxu0 0.0
    %7064 = vmatpush1.msra.mxu0 0.0
    %7065 = vmatprep.subr.mxu0 0.0
    %7066 = vmatpush1.msra.mxu0 0.0
    %7067 = vmatprep.subr.mxu0 0.0
    %7068 = vmatpush1.msra.mxu0 0.0
    %7069 = vmatprep.subr.mxu0 0.0
    %7070 = vmatpush1.msra.mxu0 0.0
    %7071 = vmatprep.subr.mxu0 0.0
    %7072 = vmatpush1.msra.mxu0 0.0
    %7073 = vmatprep.subr.mxu0 0.0
    %7074 = vmatpush1.msra.mxu0 0.0
    %7075 = vmatprep.subr.mxu0 0.0
    %7076 = vmatpush1.msra.mxu0 0.0
    %7077 = vmatprep.subr.mxu0 0.0
    %7078 = vmatpush1.msra.mxu0 0.0
    %7079 = vmatprep.subr.mxu0 0.0
    %7080 = vmatpush1.msra.mxu0 0.0
    %7081 = vmatprep.subr.mxu0 0.0
    %7082 = vmatpush1.msra.mxu0 0.0
    %7083 = vmatprep.subr.mxu0 0.0
    %7084 = vmatpush1.msra.mxu0 0.0
    %7085 = vmatprep.mubr.f32.mxu0 0.0
    %7086 = vmatmul.mubr.f32.gmra.mrb[0].mxu0 %v1417
    %v7087 = vpop.f32.mrb[0].mxu0
    %v7088 = vadd.f32 0.0, %v7087
    %v7089 = vpop.f32.mrb[0].mxu0
    %v7090 = vadd.f32 0.0, %v7089
    %7091 = vdwg.mxu0
    %7092 = vmatprep.subr.mxu0 %v6944
    %7093 = vmatpush1.msra.mxu0 %v6942
    %7094 = vmatprep.subr.mxu0 0.0
    %7095 = vmatpush1.msra.mxu0 0.0
    %7096 = vmatprep.subr.mxu0 0.0
    %7097 = vmatpush1.msra.mxu0 0.0
    %7098 = vmatprep.subr.mxu0 0.0
    %7099 = vmatpush1.msra.mxu0 0.0
    %7100 = vmatprep.subr.mxu0 0.0
    %7101 = vmatpush1.msra.mxu0 0.0
    %7102 = vmatprep.subr.mxu0 0.0
    %7103 = vmatpush1.msra.mxu0 0.0
    %7104 = vmatprep.subr.mxu0 0.0
    %7105 = vmatpush1.msra.mxu0 0.0
    %7106 = vmatprep.subr.mxu0 0.0
    %7107 = vmatpush1.msra.mxu0 0.0
    %7108 = vmatprep.subr.mxu0 0.0
    %7109 = vmatpush1.msra.mxu0 0.0
    %7110 = vmatprep.subr.mxu0 0.0
    %7111 = vmatpush1.msra.mxu0 0.0
    %7112 = vmatprep.subr.mxu0 0.0
    %7113 = vmatpush1.msra.mxu0 0.0
    %7114 = vmatprep.subr.mxu0 0.0
    %7115 = vmatpush1.msra.mxu0 0.0
    %7116 = vmatprep.subr.mxu0 0.0
    %7117 = vmatpush1.msra.mxu0 0.0
    %7118 = vmatprep.subr.mxu0 0.0
    %7119 = vmatpush1.msra.mxu0 0.0
    %7120 = vmatprep.subr.mxu0 0.0
    %7121 = vmatpush1.msra.mxu0 0.0
    %7122 = vmatprep.subr.mxu0 0.0
    %7123 = vmatpush1.msra.mxu0 0.0
    %7124 = vmatprep.subr.mxu0 0.0
    %7125 = vmatpush1.msra.mxu0 0.0
    %7126 = vmatprep.subr.mxu0 0.0
    %7127 = vmatpush1.msra.mxu0 0.0
    %7128 = vmatprep.subr.mxu0 0.0
    %7129 = vmatpush1.msra.mxu0 0.0
    %7130 = vmatprep.subr.mxu0 0.0
    %7131 = vmatpush1.msra.mxu0 0.0
    %7132 = vmatprep.subr.mxu0 0.0
    %7133 = vmatpush1.msra.mxu0 0.0
    %7134 = vmatprep.subr.mxu0 0.0
    %7135 = vmatpush1.msra.mxu0 0.0
    %7136 = vmatprep.subr.mxu0 0.0
    %7137 = vmatpush1.msra.mxu0 0.0
    %7138 = vmatprep.subr.mxu0 0.0
    %7139 = vmatpush1.msra.mxu0 0.0
    %7140 = vmatprep.subr.mxu0 0.0
    %7141 = vmatpush1.msra.mxu0 0.0
    %7142 = vmatprep.subr.mxu0 0.0
    %7143 = vmatpush1.msra.mxu0 0.0
    %7144 = vmatprep.subr.mxu0 0.0
    %7145 = vmatpush1.msra.mxu0 0.0
    %7146 = vmatprep.subr.mxu0 0.0
    %7147 = vmatpush1.msra.mxu0 0.0
    %7148 = vmatprep.subr.mxu0 0.0
    %7149 = vmatpush1.msra.mxu0 0.0
    %7150 = vmatprep.subr.mxu0 0.0
    %7151 = vmatpush1.msra.mxu0 0.0
    %7152 = vmatprep.subr.mxu0 0.0
    %7153 = vmatpush1.msra.mxu0 0.0
    %7154 = vmatprep.subr.mxu0 0.0
    %7155 = vmatpush1.msra.mxu0 0.0
    %7156 = vmatprep.mubr.f32.mxu0 0.0
    %7157 = vmatmul.mubr.f32.gmra.mrb[0].mxu0 %v1417
    %v7158 = vpop.f32.mrb[0].mxu0
    %v7159 = vadd.f32 0.0, %v7158
    %v7160 = vpop.f32.mrb[0].mxu0
    %v7161 = vadd.f32 0.0, %v7160
    %7162 = vdwg.mxu0
    %7163 = vmatprep.subr.mxu0 %v6948
    %7164 = vmatpush1.msra.mxu0 %v6946
    %7165 = vmatprep.subr.mxu0 0.0
    %7166 = vmatpush1.msra.mxu0 0.0
    %7167 = vmatprep.subr.mxu0 0.0
    %7168 = vmatpush1.msra.mxu0 0.0
    %7169 = vmatprep.subr.mxu0 0.0
    %7170 = vmatpush1.msra.mxu0 0.0
    %7171 = vmatprep.subr.mxu0 0.0
    %7172 = vmatpush1.msra.mxu0 0.0
    %7173 = vmatprep.subr.mxu0 0.0
    %7174 = vmatpush1.msra.mxu0 0.0
    %7175 = vmatprep.subr.mxu0 0.0
    %7176 = vmatpush1.msra.mxu0 0.0
    %7177 = vmatprep.subr.mxu0 0.0
    %7178 = vmatpush1.msra.mxu0 0.0
    %7179 = vmatprep.subr.mxu0 0.0
    %7180 = vmatpush1.msra.mxu0 0.0
    %7181 = vmatprep.subr.mxu0 0.0
    %7182 = vmatpush1.msra.mxu0 0.0
    %7183 = vmatprep.subr.mxu0 0.0
    %7184 = vmatpush1.msra.mxu0 0.0
    %7185 = vmatprep.subr.mxu0 0.0
    %7186 = vmatpush1.msra.mxu0 0.0
    %7187 = vmatprep.subr.mxu0 0.0
    %7188 = vmatpush1.msra.mxu0 0.0
    %7189 = vmatprep.subr.mxu0 0.0
    %7190 = vmatpush1.msra.mxu0 0.0
    %7191 = vmatprep.subr.mxu0 0.0
    %7192 = vmatpush1.msra.mxu0 0.0
    %7193 = vmatprep.subr.mxu0 0.0
    %7194 = vmatpush1.msra.mxu0 0.0
    %7195 = vmatprep.subr.mxu0 0.0
    %7196 = vmatpush1.msra.mxu0 0.0
    %7197 = vmatprep.subr.mxu0 0.0
    %7198 = vmatpush1.msra.mxu0 0.0
    %7199 = vmatprep.subr.mxu0 0.0
    %7200 = vmatpush1.msra.mxu0 0.0
    %7201 = vmatprep.subr.mxu0 0.0
    %7202 = vmatpush1.msra.mxu0 0.0
    %7203 = vmatprep.subr.mxu0 0.0
    %7204 = vmatpush1.msra.mxu0 0.0
    %7205 = vmatprep.subr.mxu0 0.0
    %7206 = vmatpush1.msra.mxu0 0.0
    %7207 = vmatprep.subr.mxu0 0.0
    %7208 = vmatpush1.msra.mxu0 0.0
    %7209 = vmatprep.subr.mxu0 0.0
    %7210 = vmatpush1.msra.mxu0 0.0
    %7211 = vmatprep.subr.mxu0 0.0
    %7212 = vmatpush1.msra.mxu0 0.0
    %7213 = vmatprep.subr.mxu0 0.0
    %7214 = vmatpush1.msra.mxu0 0.0
    %7215 = vmatprep.subr.mxu0 0.0
    %7216 = vmatpush1.msra.mxu0 0.0
    %7217 = vmatprep.subr.mxu0 0.0
    %7218 = vmatpush1.msra.mxu0 0.0
    %7219 = vmatprep.subr.mxu0 0.0
    %7220 = vmatpush1.msra.mxu0 0.0
    %7221 = vmatprep.subr.mxu0 0.0
    %7222 = vmatpush1.msra.mxu0 0.0
    %7223 = vmatprep.subr.mxu0 0.0
    %7224 = vmatpush1.msra.mxu0 0.0
    %7225 = vmatprep.subr.mxu0 0.0
    %7226 = vmatpush1.msra.mxu0 0.0
    %7227 = vmatprep.mubr.f32.mxu0 0.0
    %7228 = vmatmul.mubr.f32.gmra.mrb[0].mxu0 %v1417
    %v7229 = vpop.f32.mrb[0].mxu0
    %v7230 = vadd.f32 0.0, %v7229
    %v7231 = vpop.f32.mrb[0].mxu0
    %v7232 = vadd.f32 0.0, %v7231
    %7233 = vdwg.mxu0
    %v7234 = vadd.f32 %v6682, %v7017
    %v7235 = vadd.f32 %v6684, %v7019
    %v7236 = vadd.f32 %v6753, %v7088
    %v7237 = vadd.f32 %v6755, %v7090
    %v7238 = vadd.f32 %v6824, %v7159
    %v7239 = vadd.f32 %v6826, %v7161
    %v7240 = vadd.f32 %v6895, %v7230
    %v7241 = vadd.f32 %v6897, %v7232
    %v7242 = vld [vmem:[%s0 + $0x40] sm:$0xff]
    %v7243 = vld [vmem:[%s0 + $0x48] sm:$0xff]
    %v7244 = vld [vmem:[%s0 + $0x50] sm:$0xff]
    %v7245 = vld [vmem:[%s0 + $0x58] sm:$0xff]
    %v7250 = vcombine.high %v7242, %v7242
    %v7251 = vcombine.high %v7243, %v7243
    %v7252 = vcombine.high %v7244, %v7244
    %v7253 = vcombine.high %v7245, %v7245
    %7254 = vrot.lane.b32.xlu0 %v7242, 110
    %v7255 = vpop.permute.xlu0 %7254
    %7256 = vrot.lane.b32.xlu0 %v7250, 110
    %v7257 = vpop.permute.xlu0 %7256
    %7258 = vrot.lane.b32.xlu0 %v7243, 110
    %v7259 = vpop.permute.xlu0 %7258
    %7260 = vrot.lane.b32.xlu0 %v7251, 110
    %v7261 = vpop.permute.xlu0 %7260
    %7262 = vrot.lane.b32.xlu0 %v7244, 110
    %v7263 = vpop.permute.xlu0 %7262
    %7264 = vrot.lane.b32.xlu0 %v7252, 110
    %v7265 = vpop.permute.xlu0 %7264
    %7266 = vrot.lane.b32.xlu0 %v7245, 110
    %v7267 = vpop.permute.xlu0 %7266
    %7268 = vrot.lane.b32.xlu0 %v7253, 110
    %v7269 = vpop.permute.xlu0 %7268
    %v7270 = vsel %vm2095, %v7255, %v7257
    %v7271 = vsel %vm2095, %v7257, %v7259
    %v7272 = vsel %vm2095, %v7259, %v7261
    %v7273 = vsel %vm2095, %v7261, %v7263
    %v7274 = vsel %vm2095, %v7263, %v7265
    %v7275 = vsel %vm2095, %v7265, %v7267
    %v7276 = vsel %vm2095, %v7267, %v7269
    %v7277 = vsel %vm135, %v7270, 0
    %v7279 = vsel %vm135, %v7271, 0
    %v7281 = vsel %vm135, %v7272, 0
    %v7283 = vsel %vm135, %v7273, 0
    %v7285 = vsel %vm135, %v7274, 0
    %v7287 = vsel %vm135, %v7275, 0
    %v7289 = vsel %vm135, %v7276, 0
    %v7291 = vsel %vm135, %v7269, 0
    %7293 = vmatprep.subr.mxu0 %v7279
    %7294 = vmatpush1.msra.mxu0 %v7277
    %7295 = vmatprep.subr.mxu0 0.0
    %7296 = vmatpush1.msra.mxu0 0.0
    %7297 = vmatprep.subr.mxu0 0.0
    %7298 = vmatpush1.msra.mxu0 0.0
    %7299 = vmatprep.subr.mxu0 0.0
    %7300 = vmatpush1.msra.mxu0 0.0
    %7301 = vmatprep.subr.mxu0 0.0
    %7302 = vmatpush1.msra.mxu0 0.0
    %7303 = vmatprep.subr.mxu0 0.0
    %7304 = vmatpush1.msra.mxu0 0.0
    %7305 = vmatprep.subr.mxu0 0.0
    %7306 = vmatpush1.msra.mxu0 0.0
    %7307 = vmatprep.subr.mxu0 0.0
    %7308 = vmatpush1.msra.mxu0 0.0
    %7309 = vmatprep.subr.mxu0 0.0
    %7310 = vmatpush1.msra.mxu0 0.0
    %7311 = vmatprep.subr.mxu0 0.0
    %7312 = vmatpush1.msra.mxu0 0.0
    %7313 = vmatprep.subr.mxu0 0.0
    %7314 = vmatpush1.msra.mxu0 0.0
    %7315 = vmatprep.subr.mxu0 0.0
    %7316 = vmatpush1.msra.mxu0 0.0
    %7317 = vmatprep.subr.mxu0 0.0
    %7318 = vmatpush1.msra.mxu0 0.0
    %7319 = vmatprep.subr.mxu0 0.0
    %7320 = vmatpush1.msra.mxu0 0.0
    %7321 = vmatprep.subr.mxu0 0.0
    %7322 = vmatpush1.msra.mxu0 0.0
    %7323 = vmatprep.subr.mxu0 0.0
    %7324 = vmatpush1.msra.mxu0 0.0
    %7325 = vmatprep.subr.mxu0 0.0
    %7326 = vmatpush1.msra.mxu0 0.0
    %7327 = vmatprep.subr.mxu0 0.0
    %7328 = vmatpush1.msra.mxu0 0.0
    %7329 = vmatprep.subr.mxu0 0.0
    %7330 = vmatpush1.msra.mxu0 0.0
    %7331 = vmatprep.subr.mxu0 0.0
    %7332 = vmatpush1.msra.mxu0 0.0
    %7333 = vmatprep.subr.mxu0 0.0
    %7334 = vmatpush1.msra.mxu0 0.0
    %7335 = vmatprep.subr.mxu0 0.0
    %7336 = vmatpush1.msra.mxu0 0.0
    %7337 = vmatprep.subr.mxu0 0.0
    %7338 = vmatpush1.msra.mxu0 0.0
    %7339 = vmatprep.subr.mxu0 0.0
    %7340 = vmatpush1.msra.mxu0 0.0
    %7341 = vmatprep.subr.mxu0 0.0
    %7342 = vmatpush1.msra.mxu0 0.0
    %7343 = vmatprep.subr.mxu0 0.0
    %7344 = vmatpush1.msra.mxu0 0.0
    %7345 = vmatprep.subr.mxu0 0.0
    %7346 = vmatpush1.msra.mxu0 0.0
    %7347 = vmatprep.subr.mxu0 0.0
    %7348 = vmatpush1.msra.mxu0 0.0
    %7349 = vmatprep.subr.mxu0 0.0
    %7350 = vmatpush1.msra.mxu0 0.0
    %7351 = vmatprep.subr.mxu0 0.0
    %7352 = vmatpush1.msra.mxu0 0.0
    %7353 = vmatprep.subr.mxu0 0.0
    %7354 = vmatpush1.msra.mxu0 0.0
    %7355 = vmatprep.subr.mxu0 0.0
    %7356 = vmatpush1.msra.mxu0 0.0
    %7357 = vmatprep.mubr.f32.mxu0 0.0
    %7358 = vmatmul.mubr.f32.gmra.mrb[0].mxu0 %v2113
    %v7359 = vpop.f32.mrb[0].mxu0
    %v7360 = vadd.f32 0.0, %v7359
    %v7361 = vpop.f32.mrb[0].mxu0
    %v7362 = vadd.f32 0.0, %v7361
    %7363 = vdwg.mxu0
    %7364 = vmatprep.subr.mxu0 %v7283
    %7365 = vmatpush1.msra.mxu0 %v7281
    %7366 = vmatprep.subr.mxu0 0.0
    %7367 = vmatpush1.msra.mxu0 0.0
    %7368 = vmatprep.subr.mxu0 0.0
    %7369 = vmatpush1.msra.mxu0 0.0
    %7370 = vmatprep.subr.mxu0 0.0
    %7371 = vmatpush1.msra.mxu0 0.0
    %7372 = vmatprep.subr.mxu0 0.0
    %7373 = vmatpush1.msra.mxu0 0.0
    %7374 = vmatprep.subr.mxu0 0.0
    %7375 = vmatpush1.msra.mxu0 0.0
    %7376 = vmatprep.subr.mxu0 0.0
    %7377 = vmatpush1.msra.mxu0 0.0
    %7378 = vmatprep.subr.mxu0 0.0
    %7379 = vmatpush1.msra.mxu0 0.0
    %7380 = vmatprep.subr.mxu0 0.0
    %7381 = vmatpush1.msra.mxu0 0.0
    %7382 = vmatprep.subr.mxu0 0.0
    %7383 = vmatpush1.msra.mxu0 0.0
    %7384 = vmatprep.subr.mxu0 0.0
    %7385 = vmatpush1.msra.mxu0 0.0
    %7386 = vmatprep.subr.mxu0 0.0
    %7387 = vmatpush1.msra.mxu0 0.0
    %7388 = vmatprep.subr.mxu0 0.0
    %7389 = vmatpush1.msra.mxu0 0.0
    %7390 = vmatprep.subr.mxu0 0.0
    %7391 = vmatpush1.msra.mxu0 0.0
    %7392 = vmatprep.subr.mxu0 0.0
    %7393 = vmatpush1.msra.mxu0 0.0
    %7394 = vmatprep.subr.mxu0 0.0
    %7395 = vmatpush1.msra.mxu0 0.0
    %7396 = vmatprep.subr.mxu0 0.0
    %7397 = vmatpush1.msra.mxu0 0.0
    %7398 = vmatprep.subr.mxu0 0.0
    %7399 = vmatpush1.msra.mxu0 0.0
    %7400 = vmatprep.subr.mxu0 0.0
    %7401 = vmatpush1.msra.mxu0 0.0
    %7402 = vmatprep.subr.mxu0 0.0
    %7403 = vmatpush1.msra.mxu0 0.0
    %7404 = vmatprep.subr.mxu0 0.0
    %7405 = vmatpush1.msra.mxu0 0.0
    %7406 = vmatprep.subr.mxu0 0.0
    %7407 = vmatpush1.msra.mxu0 0.0
    %7408 = vmatprep.subr.mxu0 0.0
    %7409 = vmatpush1.msra.mxu0 0.0
    %7410 = vmatprep.subr.mxu0 0.0
    %7411 = vmatpush1.msra.mxu0 0.0
    %7412 = vmatprep.subr.mxu0 0.0
    %7413 = vmatpush1.msra.mxu0 0.0
    %7414 = vmatprep.subr.mxu0 0.0
    %7415 = vmatpush1.msra.mxu0 0.0
    %7416 = vmatprep.subr.mxu0 0.0
    %7417 = vmatpush1.msra.mxu0 0.0
    %7418 = vmatprep.subr.mxu0 0.0
    %7419 = vmatpush1.msra.mxu0 0.0
    %7420 = vmatprep.subr.mxu0 0.0
    %7421 = vmatpush1.msra.mxu0 0.0
    %7422 = vmatprep.subr.mxu0 0.0
    %7423 = vmatpush1.msra.mxu0 0.0
    %7424 = vmatprep.subr.mxu0 0.0
    %7425 = vmatpush1.msra.mxu0 0.0
    %7426 = vmatprep.subr.mxu0 0.0
    %7427 = vmatpush1.msra.mxu0 0.0
    %7428 = vmatprep.mubr.f32.mxu0 0.0
    %7429 = vmatmul.mubr.f32.gmra.mrb[0].mxu0 %v2113
    %v7430 = vpop.f32.mrb[0].mxu0
    %v7431 = vadd.f32 0.0, %v7430
    %v7432 = vpop.f32.mrb[0].mxu0
    %v7433 = vadd.f32 0.0, %v7432
    %7434 = vdwg.mxu0
    %7435 = vmatprep.subr.mxu0 %v7287
    %7436 = vmatpush1.msra.mxu0 %v7285
    %7437 = vmatprep.subr.mxu0 0.0
    %7438 = vmatpush1.msra.mxu0 0.0
    %7439 = vmatprep.subr.mxu0 0.0
    %7440 = vmatpush1.msra.mxu0 0.0
    %7441 = vmatprep.subr.mxu0 0.0
    %7442 = vmatpush1.msra.mxu0 0.0
    %7443 = vmatprep.subr.mxu0 0.0
    %7444 = vmatpush1.msra.mxu0 0.0
    %7445 = vmatprep.subr.mxu0 0.0
    %7446 = vmatpush1.msra.mxu0 0.0
    %7447 = vmatprep.subr.mxu0 0.0
    %7448 = vmatpush1.msra.mxu0 0.0
    %7449 = vmatprep.subr.mxu0 0.0
    %7450 = vmatpush1.msra.mxu0 0.0
    %7451 = vmatprep.subr.mxu0 0.0
    %7452 = vmatpush1.msra.mxu0 0.0
    %7453 = vmatprep.subr.mxu0 0.0
    %7454 = vmatpush1.msra.mxu0 0.0
    %7455 = vmatprep.subr.mxu0 0.0
    %7456 = vmatpush1.msra.mxu0 0.0
    %7457 = vmatprep.subr.mxu0 0.0
    %7458 = vmatpush1.msra.mxu0 0.0
    %7459 = vmatprep.subr.mxu0 0.0
    %7460 = vmatpush1.msra.mxu0 0.0
    %7461 = vmatprep.subr.mxu0 0.0
    %7462 = vmatpush1.msra.mxu0 0.0
    %7463 = vmatprep.subr.mxu0 0.0
    %7464 = vmatpush1.msra.mxu0 0.0
    %7465 = vmatprep.subr.mxu0 0.0
    %7466 = vmatpush1.msra.mxu0 0.0
    %7467 = vmatprep.subr.mxu0 0.0
    %7468 = vmatpush1.msra.mxu0 0.0
    %7469 = vmatprep.subr.mxu0 0.0
    %7470 = vmatpush1.msra.mxu0 0.0
    %7471 = vmatprep.subr.mxu0 0.0
    %7472 = vmatpush1.msra.mxu0 0.0
    %7473 = vmatprep.subr.mxu0 0.0
    %7474 = vmatpush1.msra.mxu0 0.0
    %7475 = vmatprep.subr.mxu0 0.0
    %7476 = vmatpush1.msra.mxu0 0.0
    %7477 = vmatprep.subr.mxu0 0.0
    %7478 = vmatpush1.msra.mxu0 0.0
    %7479 = vmatprep.subr.mxu0 0.0
    %7480 = vmatpush1.msra.mxu0 0.0
    %7481 = vmatprep.subr.mxu0 0.0
    %7482 = vmatpush1.msra.mxu0 0.0
    %7483 = vmatprep.subr.mxu0 0.0
    %7484 = vmatpush1.msra.mxu0 0.0
    %7485 = vmatprep.subr.mxu0 0.0
    %7486 = vmatpush1.msra.mxu0 0.0
    %7487 = vmatprep.subr.mxu0 0.0
    %7488 = vmatpush1.msra.mxu0 0.0
    %7489 = vmatprep.subr.mxu0 0.0
    %7490 = vmatpush1.msra.mxu0 0.0
    %7491 = vmatprep.subr.mxu0 0.0
    %7492 = vmatpush1.msra.mxu0 0.0
    %7493 = vmatprep.subr.mxu0 0.0
    %7494 = vmatpush1.msra.mxu0 0.0
    %7495 = vmatprep.subr.mxu0 0.0
    %7496 = vmatpush1.msra.mxu0 0.0
    %7497 = vmatprep.subr.mxu0 0.0
    %7498 = vmatpush1.msra.mxu0 0.0
    %7499 = vmatprep.mubr.f32.mxu0 0.0
    %7500 = vmatmul.mubr.f32.gmra.mrb[0].mxu0 %v2113
    %v7501 = vpop.f32.mrb[0].mxu0
    %v7502 = vadd.f32 0.0, %v7501
    %v7503 = vpop.f32.mrb[0].mxu0
    %v7504 = vadd.f32 0.0, %v7503
    %7505 = vdwg.mxu0
    %7506 = vmatprep.subr.mxu0 %v7291
    %7507 = vmatpush1.msra.mxu0 %v7289
    %7508 = vmatprep.subr.mxu0 0.0
    %7509 = vmatpush1.msra.mxu0 0.0
    %7510 = vmatprep.subr.mxu0 0.0
    %7511 = vmatpush1.msra.mxu0 0.0
    %7512 = vmatprep.subr.mxu0 0.0
    %7513 = vmatpush1.msra.mxu0 0.0
    %7514 = vmatprep.subr.mxu0 0.0
    %7515 = vmatpush1.msra.mxu0 0.0
    %7516 = vmatprep.subr.mxu0 0.0
    %7517 = vmatpush1.msra.mxu0 0.0
    %7518 = vmatprep.subr.mxu0 0.0
    %7519 = vmatpush1.msra.mxu0 0.0
    %7520 = vmatprep.subr.mxu0 0.0
    %7521 = vmatpush1.msra.mxu0 0.0
    %7522 = vmatprep.subr.mxu0 0.0
    %7523 = vmatpush1.msra.mxu0 0.0
    %7524 = vmatprep.subr.mxu0 0.0
    %7525 = vmatpush1.msra.mxu0 0.0
    %7526 = vmatprep.subr.mxu0 0.0
    %7527 = vmatpush1.msra.mxu0 0.0
    %7528 = vmatprep.subr.mxu0 0.0
    %7529 = vmatpush1.msra.mxu0 0.0
    %7530 = vmatprep.subr.mxu0 0.0
    %7531 = vmatpush1.msra.mxu0 0.0
    %7532 = vmatprep.subr.mxu0 0.0
    %7533 = vmatpush1.msra.mxu0 0.0
    %7534 = vmatprep.subr.mxu0 0.0
    %7535 = vmatpush1.msra.mxu0 0.0
    %7536 = vmatprep.subr.mxu0 0.0
    %7537 = vmatpush1.msra.mxu0 0.0
    %7538 = vmatprep.subr.mxu0 0.0
    %7539 = vmatpush1.msra.mxu0 0.0
    %7540 = vmatprep.subr.mxu0 0.0
    %7541 = vmatpush1.msra.mxu0 0.0
    %7542 = vmatprep.subr.mxu0 0.0
    %7543 = vmatpush1.msra.mxu0 0.0
    %7544 = vmatprep.subr.mxu0 0.0
    %7545 = vmatpush1.msra.mxu0 0.0
    %7546 = vmatprep.subr.mxu0 0.0
    %7547 = vmatpush1.msra.mxu0 0.0
    %7548 = vmatprep.subr.mxu0 0.0
    %7549 = vmatpush1.msra.mxu0 0.0
    %7550 = vmatprep.subr.mxu0 0.0
    %7551 = vmatpush1.msra.mxu0 0.0
    %7552 = vmatprep.subr.mxu0 0.0
    %7553 = vmatpush1.msra.mxu0 0.0
    %7554 = vmatprep.subr.mxu0 0.0
    %7555 = vmatpush1.msra.mxu0 0.0
    %7556 = vmatprep.subr.mxu0 0.0
    %7557 = vmatpush1.msra.mxu0 0.0
    %7558 = vmatprep.subr.mxu0 0.0
    %7559 = vmatpush1.msra.mxu0 0.0
    %7560 = vmatprep.subr.mxu0 0.0
    %7561 = vmatpush1.msra.mxu0 0.0
    %7562 = vmatprep.subr.mxu0 0.0
    %7563 = vmatpush1.msra.mxu0 0.0
    %7564 = vmatprep.subr.mxu0 0.0
    %7565 = vmatpush1.msra.mxu0 0.0
    %7566 = vmatprep.subr.mxu0 0.0
    %7567 = vmatpush1.msra.mxu0 0.0
    %7568 = vmatprep.subr.mxu0 0.0
    %7569 = vmatpush1.msra.mxu0 0.0
    %7570 = vmatprep.mubr.f32.mxu0 0.0
    %7571 = vmatmul.mubr.f32.gmra.mrb[0].mxu0 %v2113
    %v7572 = vpop.f32.mrb[0].mxu0
    %v7573 = vadd.f32 0.0, %v7572
    %v7574 = vpop.f32.mrb[0].mxu0
    %v7575 = vadd.f32 0.0, %v7574
    %7576 = vdwg.mxu0
    %v7577 = vadd.f32 %v7234, %v7360
    %v7578 = vadd.f32 %v7235, %v7362
    %v7579 = vadd.f32 %v7236, %v7431
    %v7580 = vadd.f32 %v7237, %v7433
    %v7581 = vadd.f32 %v7238, %v7502
    %v7582 = vadd.f32 %v7239, %v7504
    %v7583 = vadd.f32 %v7240, %v7573
    %v7584 = vadd.f32 %v7241, %v7575
    %v7585 = vld [vmem:[%s0 + $0x40] sm:$0xff]
    %v7586 = vld [vmem:[%s0 + $0x48] sm:$0xff]
    %v7587 = vld [vmem:[%s0 + $0x50] sm:$0xff]
    %v7588 = vld [vmem:[%s0 + $0x58] sm:$0xff]
    %v7593 = vcombine.high %v7585, %v7585
    %v7594 = vcombine.high %v7586, %v7586
    %v7595 = vcombine.high %v7587, %v7587
    %v7596 = vcombine.high %v7588, %v7588
    %7597 = vrot.lane.b32.xlu0 %v7585, 109
    %v7598 = vpop.permute.xlu0 %7597
    %7599 = vrot.lane.b32.xlu0 %v7593, 109
    %v7600 = vpop.permute.xlu0 %7599
    %7601 = vrot.lane.b32.xlu0 %v7586, 109
    %v7602 = vpop.permute.xlu0 %7601
    %7603 = vrot.lane.b32.xlu0 %v7594, 109
    %v7604 = vpop.permute.xlu0 %7603
    %7605 = vrot.lane.b32.xlu0 %v7587, 109
    %v7606 = vpop.permute.xlu0 %7605
    %7607 = vrot.lane.b32.xlu0 %v7595, 109
    %v7608 = vpop.permute.xlu0 %7607
    %7609 = vrot.lane.b32.xlu0 %v7588, 109
    %v7610 = vpop.permute.xlu0 %7609
    %7611 = vrot.lane.b32.xlu0 %v7596, 109
    %v7612 = vpop.permute.xlu0 %7611
    %v7613 = vsel %vm2791, %v7598, %v7600
    %v7614 = vsel %vm2791, %v7600, %v7602
    %v7615 = vsel %vm2791, %v7602, %v7604
    %v7616 = vsel %vm2791, %v7604, %v7606
    %v7617 = vsel %vm2791, %v7606, %v7608
    %v7618 = vsel %vm2791, %v7608, %v7610
    %v7619 = vsel %vm2791, %v7610, %v7612
    %v7620 = vsel %vm135, %v7613, 0
    %v7622 = vsel %vm135, %v7614, 0
    %v7624 = vsel %vm135, %v7615, 0
    %v7626 = vsel %vm135, %v7616, 0
    %v7628 = vsel %vm135, %v7617, 0
    %v7630 = vsel %vm135, %v7618, 0
    %v7632 = vsel %vm135, %v7619, 0
    %v7634 = vsel %vm135, %v7612, 0
    %7636 = vmatprep.subr.mxu0 %v7622
    %7637 = vmatpush1.msra.mxu0 %v7620
    %7638 = vmatprep.subr.mxu0 0.0
    %7639 = vmatpush1.msra.mxu0 0.0
    %7640 = vmatprep.subr.mxu0 0.0
    %7641 = vmatpush1.msra.mxu0 0.0
    %7642 = vmatprep.subr.mxu0 0.0
    %7643 = vmatpush1.msra.mxu0 0.0
    %7644 = vmatprep.subr.mxu0 0.0
    %7645 = vmatpush1.msra.mxu0 0.0
    %7646 = vmatprep.subr.mxu0 0.0
    %7647 = vmatpush1.msra.mxu0 0.0
    %7648 = vmatprep.subr.mxu0 0.0
    %7649 = vmatpush1.msra.mxu0 0.0
    %7650 = vmatprep.subr.mxu0 0.0
    %7651 = vmatpush1.msra.mxu0 0.0
    %7652 = vmatprep.subr.mxu0 0.0
    %7653 = vmatpush1.msra.mxu0 0.0
    %7654 = vmatprep.subr.mxu0 0.0
    %7655 = vmatpush1.msra.mxu0 0.0
    %7656 = vmatprep.subr.mxu0 0.0
    %7657 = vmatpush1.msra.mxu0 0.0
    %7658 = vmatprep.subr.mxu0 0.0
    %7659 = vmatpush1.msra.mxu0 0.0
    %7660 = vmatprep.subr.mxu0 0.0
    %7661 = vmatpush1.msra.mxu0 0.0
    %7662 = vmatprep.subr.mxu0 0.0
    %7663 = vmatpush1.msra.mxu0 0.0
    %7664 = vmatprep.subr.mxu0 0.0
    %7665 = vmatpush1.msra.mxu0 0.0
    %7666 = vmatprep.subr.mxu0 0.0
    %7667 = vmatpush1.msra.mxu0 0.0
    %7668 = vmatprep.subr.mxu0 0.0
    %7669 = vmatpush1.msra.mxu0 0.0
    %7670 = vmatprep.subr.mxu0 0.0
    %7671 = vmatpush1.msra.mxu0 0.0
    %7672 = vmatprep.subr.mxu0 0.0
    %7673 = vmatpush1.msra.mxu0 0.0
    %7674 = vmatprep.subr.mxu0 0.0
    %7675 = vmatpush1.msra.mxu0 0.0
    %7676 = vmatprep.subr.mxu0 0.0
    %7677 = vmatpush1.msra.mxu0 0.0
    %7678 = vmatprep.subr.mxu0 0.0
    %7679 = vmatpush1.msra.mxu0 0.0
    %7680 = vmatprep.subr.mxu0 0.0
    %7681 = vmatpush1.msra.mxu0 0.0
    %7682 = vmatprep.subr.mxu0 0.0
    %7683 = vmatpush1.msra.mxu0 0.0
    %7684 = vmatprep.subr.mxu0 0.0
    %7685 = vmatpush1.msra.mxu0 0.0
    %7686 = vmatprep.subr.mxu0 0.0
    %7687 = vmatpush1.msra.mxu0 0.0
    %7688 = vmatprep.subr.mxu0 0.0
    %7689 = vmatpush1.msra.mxu0 0.0
    %7690 = vmatprep.subr.mxu0 0.0
    %7691 = vmatpush1.msra.mxu0 0.0
    %7692 = vmatprep.subr.mxu0 0.0
    %7693 = vmatpush1.msra.mxu0 0.0
    %7694 = vmatprep.subr.mxu0 0.0
    %7695 = vmatpush1.msra.mxu0 0.0
    %7696 = vmatprep.subr.mxu0 0.0
    %7697 = vmatpush1.msra.mxu0 0.0
    %7698 = vmatprep.subr.mxu0 0.0
    %7699 = vmatpush1.msra.mxu0 0.0
    %7700 = vmatprep.mubr.f32.mxu0 0.0
    %7701 = vmatmul.mubr.f32.gmra.mrb[0].mxu0 %v2809
    %v7702 = vpop.f32.mrb[0].mxu0
    %v7703 = vadd.f32 0.0, %v7702
    %v7704 = vpop.f32.mrb[0].mxu0
    %v7705 = vadd.f32 0.0, %v7704
    %7706 = vdwg.mxu0
    %7707 = vmatprep.subr.mxu0 %v7626
    %7708 = vmatpush1.msra.mxu0 %v7624
    %7709 = vmatprep.subr.mxu0 0.0
    %7710 = vmatpush1.msra.mxu0 0.0
    %7711 = vmatprep.subr.mxu0 0.0
    %7712 = vmatpush1.msra.mxu0 0.0
    %7713 = vmatprep.subr.mxu0 0.0
    %7714 = vmatpush1.msra.mxu0 0.0
    %7715 = vmatprep.subr.mxu0 0.0
    %7716 = vmatpush1.msra.mxu0 0.0
    %7717 = vmatprep.subr.mxu0 0.0
    %7718 = vmatpush1.msra.mxu0 0.0
    %7719 = vmatprep.subr.mxu0 0.0
    %7720 = vmatpush1.msra.mxu0 0.0
    %7721 = vmatprep.subr.mxu0 0.0
    %7722 = vmatpush1.msra.mxu0 0.0
    %7723 = vmatprep.subr.mxu0 0.0
    %7724 = vmatpush1.msra.mxu0 0.0
    %7725 = vmatprep.subr.mxu0 0.0
    %7726 = vmatpush1.msra.mxu0 0.0
    %7727 = vmatprep.subr.mxu0 0.0
    %7728 = vmatpush1.msra.mxu0 0.0
    %7729 = vmatprep.subr.mxu0 0.0
    %7730 = vmatpush1.msra.mxu0 0.0
    %7731 = vmatprep.subr.mxu0 0.0
    %7732 = vmatpush1.msra.mxu0 0.0
    %7733 = vmatprep.subr.mxu0 0.0
    %7734 = vmatpush1.msra.mxu0 0.0
    %7735 = vmatprep.subr.mxu0 0.0
    %7736 = vmatpush1.msra.mxu0 0.0
    %7737 = vmatprep.subr.mxu0 0.0
    %7738 = vmatpush1.msra.mxu0 0.0
    %7739 = vmatprep.subr.mxu0 0.0
    %7740 = vmatpush1.msra.mxu0 0.0
    %7741 = vmatprep.subr.mxu0 0.0
    %7742 = vmatpush1.msra.mxu0 0.0
    %7743 = vmatprep.subr.mxu0 0.0
    %7744 = vmatpush1.msra.mxu0 0.0
    %7745 = vmatprep.subr.mxu0 0.0
    %7746 = vmatpush1.msra.mxu0 0.0
    %7747 = vmatprep.subr.mxu0 0.0
    %7748 = vmatpush1.msra.mxu0 0.0
    %7749 = vmatprep.subr.mxu0 0.0
    %7750 = vmatpush1.msra.mxu0 0.0
    %7751 = vmatprep.subr.mxu0 0.0
    %7752 = vmatpush1.msra.mxu0 0.0
    %7753 = vmatprep.subr.mxu0 0.0
    %7754 = vmatpush1.msra.mxu0 0.0
    %7755 = vmatprep.subr.mxu0 0.0
    %7756 = vmatpush1.msra.mxu0 0.0
    %7757 = vmatprep.subr.mxu0 0.0
    %7758 = vmatpush1.msra.mxu0 0.0
    %7759 = vmatprep.subr.mxu0 0.0
    %7760 = vmatpush1.msra.mxu0 0.0
    %7761 = vmatprep.subr.mxu0 0.0
    %7762 = vmatpush1.msra.mxu0 0.0
    %7763 = vmatprep.subr.mxu0 0.0
    %7764 = vmatpush1.msra.mxu0 0.0
    %7765 = vmatprep.subr.mxu0 0.0
    %7766 = vmatpush1.msra.mxu0 0.0
    %7767 = vmatprep.subr.mxu0 0.0
    %7768 = vmatpush1.msra.mxu0 0.0
    %7769 = vmatprep.subr.mxu0 0.0
    %7770 = vmatpush1.msra.mxu0 0.0
    %7771 = vmatprep.mubr.f32.mxu0 0.0
    %7772 = vmatmul.mubr.f32.gmra.mrb[0].mxu0 %v2809
    %v7773 = vpop.f32.mrb[0].mxu0
    %v7774 = vadd.f32 0.0, %v7773
    %v7775 = vpop.f32.mrb[0].mxu0
    %v7776 = vadd.f32 0.0, %v7775
    %7777 = vdwg.mxu0
    %7778 = vmatprep.subr.mxu0 %v7630
    %7779 = vmatpush1.msra.mxu0 %v7628
    %7780 = vmatprep.subr.mxu0 0.0
    %7781 = vmatpush1.msra.mxu0 0.0
    %7782 = vmatprep.subr.mxu0 0.0
    %7783 = vmatpush1.msra.mxu0 0.0
    %7784 = vmatprep.subr.mxu0 0.0
    %7785 = vmatpush1.msra.mxu0 0.0
    %7786 = vmatprep.subr.mxu0 0.0
    %7787 = vmatpush1.msra.mxu0 0.0
    %7788 = vmatprep.subr.mxu0 0.0
    %7789 = vmatpush1.msra.mxu0 0.0
    %7790 = vmatprep.subr.mxu0 0.0
    %7791 = vmatpush1.msra.mxu0 0.0
    %7792 = vmatprep.subr.mxu0 0.0
    %7793 = vmatpush1.msra.mxu0 0.0
    %7794 = vmatprep.subr.mxu0 0.0
    %7795 = vmatpush1.msra.mxu0 0.0
    %7796 = vmatprep.subr.mxu0 0.0
    %7797 = vmatpush1.msra.mxu0 0.0
    %7798 = vmatprep.subr.mxu0 0.0
    %7799 = vmatpush1.msra.mxu0 0.0
    %7800 = vmatprep.subr.mxu0 0.0
    %7801 = vmatpush1.msra.mxu0 0.0
    %7802 = vmatprep.subr.mxu0 0.0
    %7803 = vmatpush1.msra.mxu0 0.0
    %7804 = vmatprep.subr.mxu0 0.0
    %7805 = vmatpush1.msra.mxu0 0.0
    %7806 = vmatprep.subr.mxu0 0.0
    %7807 = vmatpush1.msra.mxu0 0.0
    %7808 = vmatprep.subr.mxu0 0.0
    %7809 = vmatpush1.msra.mxu0 0.0
    %7810 = vmatprep.subr.mxu0 0.0
    %7811 = vmatpush1.msra.mxu0 0.0
    %7812 = vmatprep.subr.mxu0 0.0
    %7813 = vmatpush1.msra.mxu0 0.0
    %7814 = vmatprep.subr.mxu0 0.0
    %7815 = vmatpush1.msra.mxu0 0.0
    %7816 = vmatprep.subr.mxu0 0.0
    %7817 = vmatpush1.msra.mxu0 0.0
    %7818 = vmatprep.subr.mxu0 0.0
    %7819 = vmatpush1.msra.mxu0 0.0
    %7820 = vmatprep.subr.mxu0 0.0
    %7821 = vmatpush1.msra.mxu0 0.0
    %7822 = vmatprep.subr.mxu0 0.0
    %7823 = vmatpush1.msra.mxu0 0.0
    %7824 = vmatprep.subr.mxu0 0.0
    %7825 = vmatpush1.msra.mxu0 0.0
    %7826 = vmatprep.subr.mxu0 0.0
    %7827 = vmatpush1.msra.mxu0 0.0
    %7828 = vmatprep.subr.mxu0 0.0
    %7829 = vmatpush1.msra.mxu0 0.0
    %7830 = vmatprep.subr.mxu0 0.0
    %7831 = vmatpush1.msra.mxu0 0.0
    %7832 = vmatprep.subr.mxu0 0.0
    %7833 = vmatpush1.msra.mxu0 0.0
    %7834 = vmatprep.subr.mxu0 0.0
    %7835 = vmatpush1.msra.mxu0 0.0
    %7836 = vmatprep.subr.mxu0 0.0
    %7837 = vmatpush1.msra.mxu0 0.0
    %7838 = vmatprep.subr.mxu0 0.0
    %7839 = vmatpush1.msra.mxu0 0.0
    %7840 = vmatprep.subr.mxu0 0.0
    %7841 = vmatpush1.msra.mxu0 0.0
    %7842 = vmatprep.mubr.f32.mxu0 0.0
    %7843 = vmatmul.mubr.f32.gmra.mrb[0].mxu0 %v2809
    %v7844 = vpop.f32.mrb[0].mxu0
    %v7845 = vadd.f32 0.0, %v7844
    %v7846 = vpop.f32.mrb[0].mxu0
    %v7847 = vadd.f32 0.0, %v7846
    %7848 = vdwg.mxu0
    %7849 = vmatprep.subr.mxu0 %v7634
    %7850 = vmatpush1.msra.mxu0 %v7632
    %7851 = vmatprep.subr.mxu0 0.0
    %7852 = vmatpush1.msra.mxu0 0.0
    %7853 = vmatprep.subr.mxu0 0.0
    %7854 = vmatpush1.msra.mxu0 0.0
    %7855 = vmatprep.subr.mxu0 0.0
    %7856 = vmatpush1.msra.mxu0 0.0
    %7857 = vmatprep.subr.mxu0 0.0
    %7858 = vmatpush1.msra.mxu0 0.0
    %7859 = vmatprep.subr.mxu0 0.0
    %7860 = vmatpush1.msra.mxu0 0.0
    %7861 = vmatprep.subr.mxu0 0.0
    %7862 = vmatpush1.msra.mxu0 0.0
    %7863 = vmatprep.subr.mxu0 0.0
    %7864 = vmatpush1.msra.mxu0 0.0
    %7865 = vmatprep.subr.mxu0 0.0
    %7866 = vmatpush1.msra.mxu0 0.0
    %7867 = vmatprep.subr.mxu0 0.0
    %7868 = vmatpush1.msra.mxu0 0.0
    %7869 = vmatprep.subr.mxu0 0.0
    %7870 = vmatpush1.msra.mxu0 0.0
    %7871 = vmatprep.subr.mxu0 0.0
    %7872 = vmatpush1.msra.mxu0 0.0
    %7873 = vmatprep.subr.mxu0 0.0
    %7874 = vmatpush1.msra.mxu0 0.0
    %7875 = vmatprep.subr.mxu0 0.0
    %7876 = vmatpush1.msra.mxu0 0.0
    %7877 = vmatprep.subr.mxu0 0.0
    %7878 = vmatpush1.msra.mxu0 0.0
    %7879 = vmatprep.subr.mxu0 0.0
    %7880 = vmatpush1.msra.mxu0 0.0
    %7881 = vmatprep.subr.mxu0 0.0
    %7882 = vmatpush1.msra.mxu0 0.0
    %7883 = vmatprep.subr.mxu0 0.0
    %7884 = vmatpush1.msra.mxu0 0.0
    %7885 = vmatprep.subr.mxu0 0.0
    %7886 = vmatpush1.msra.mxu0 0.0
    %7887 = vmatprep.subr.mxu0 0.0
    %7888 = vmatpush1.msra.mxu0 0.0
    %7889 = vmatprep.subr.mxu0 0.0
    %7890 = vmatpush1.msra.mxu0 0.0
    %7891 = vmatprep.subr.mxu0 0.0
    %7892 = vmatpush1.msra.mxu0 0.0
    %7893 = vmatprep.subr.mxu0 0.0
    %7894 = vmatpush1.msra.mxu0 0.0
    %7895 = vmatprep.subr.mxu0 0.0
    %7896 = vmatpush1.msra.mxu0 0.0
    %7897 = vmatprep.subr.mxu0 0.0
    %7898 = vmatpush1.msra.mxu0 0.0
    %7899 = vmatprep.subr.mxu0 0.0
    %7900 = vmatpush1.msra.mxu0 0.0
    %7901 = vmatprep.subr.mxu0 0.0
    %7902 = vmatpush1.msra.mxu0 0.0
    %7903 = vmatprep.subr.mxu0 0.0
    %7904 = vmatpush1.msra.mxu0 0.0
    %7905 = vmatprep.subr.mxu0 0.0
    %7906 = vmatpush1.msra.mxu0 0.0
    %7907 = vmatprep.subr.mxu0 0.0
    %7908 = vmatpush1.msra.mxu0 0.0
    %7909 = vmatprep.subr.mxu0 0.0
    %7910 = vmatpush1.msra.mxu0 0.0
    %7911 = vmatprep.subr.mxu0 0.0
    %7912 = vmatpush1.msra.mxu0 0.0
    %7913 = vmatprep.mubr.f32.mxu0 0.0
    %7914 = vmatmul.mubr.f32.gmra.mrb[0].mxu0 %v2809
    %v7915 = vpop.f32.mrb[0].mxu0
    %v7916 = vadd.f32 0.0, %v7915
    %v7917 = vpop.f32.mrb[0].mxu0
    %v7918 = vadd.f32 0.0, %v7917
    %7919 = vdwg.mxu0
    %v7920 = vadd.f32 %v7577, %v7703
    %v7921 = vadd.f32 %v7578, %v7705
    %v7922 = vadd.f32 %v7579, %v7774
    %v7923 = vadd.f32 %v7580, %v7776
    %v7924 = vadd.f32 %v7581, %v7845
    %v7925 = vadd.f32 %v7582, %v7847
    %v7926 = vadd.f32 %v7583, %v7916
    %v7927 = vadd.f32 %v7584, %v7918
    %v7928 = vld [vmem:[%s0 + $0x40] sm:$0xff]
    %v7929 = vld [vmem:[%s0 + $0x48] sm:$0xff]
    %v7930 = vld [vmem:[%s0 + $0x50] sm:$0xff]
    %v7931 = vld [vmem:[%s0 + $0x58] sm:$0xff]
    %v7936 = vcombine.high %v7928, %v7928
    %v7937 = vcombine.high %v7929, %v7929
    %v7938 = vcombine.high %v7930, %v7930
    %v7939 = vcombine.high %v7931, %v7931
    %7940 = vrot.lane.b32.xlu0 %v7928, 108
    %v7941 = vpop.permute.xlu0 %7940
    %7942 = vrot.lane.b32.xlu0 %v7936, 108
    %v7943 = vpop.permute.xlu0 %7942
    %7944 = vrot.lane.b32.xlu0 %v7929, 108
    %v7945 = vpop.permute.xlu0 %7944
    %7946 = vrot.lane.b32.xlu0 %v7937, 108
    %v7947 = vpop.permute.xlu0 %7946
    %7948 = vrot.lane.b32.xlu0 %v7930, 108
    %v7949 = vpop.permute.xlu0 %7948
    %7950 = vrot.lane.b32.xlu0 %v7938, 108
    %v7951 = vpop.permute.xlu0 %7950
    %7952 = vrot.lane.b32.xlu0 %v7931, 108
    %v7953 = vpop.permute.xlu0 %7952
    %7954 = vrot.lane.b32.xlu0 %v7939, 108
    %v7955 = vpop.permute.xlu0 %7954
    %v7956 = vsel %vm3487, %v7941, %v7943
    %v7957 = vsel %vm3487, %v7943, %v7945
    %v7958 = vsel %vm3487, %v7945, %v7947
    %v7959 = vsel %vm3487, %v7947, %v7949
    %v7960 = vsel %vm3487, %v7949, %v7951
    %v7961 = vsel %vm3487, %v7951, %v7953
    %v7962 = vsel %vm3487, %v7953, %v7955
    %v7963 = vsel %vm135, %v7956, 0
    %v7965 = vsel %vm135, %v7957, 0
    %v7967 = vsel %vm135, %v7958, 0
    %v7969 = vsel %vm135, %v7959, 0
    %v7971 = vsel %vm135, %v7960, 0
    %v7973 = vsel %vm135, %v7961, 0
    %v7975 = vsel %vm135, %v7962, 0
    %v7977 = vsel %vm135, %v7955, 0
    %7979 = vmatprep.subr.mxu0 %v7965
    %7980 = vmatpush1.msra.mxu0 %v7963
    %7981 = vmatprep.subr.mxu0 0.0
    %7982 = vmatpush1.msra.mxu0 0.0
    %7983 = vmatprep.subr.mxu0 0.0
    %7984 = vmatpush1.msra.mxu0 0.0
    %7985 = vmatprep.subr.mxu0 0.0
    %7986 = vmatpush1.msra.mxu0 0.0
    %7987 = vmatprep.subr.mxu0 0.0
    %7988 = vmatpush1.msra.mxu0 0.0
    %7989 = vmatprep.subr.mxu0 0.0
    %7990 = vmatpush1.msra.mxu0 0.0
    %7991 = vmatprep.subr.mxu0 0.0
    %7992 = vmatpush1.msra.mxu0 0.0
    %7993 = vmatprep.subr.mxu0 0.0
    %7994 = vmatpush1.msra.mxu0 0.0
    %7995 = vmatprep.subr.mxu0 0.0
    %7996 = vmatpush1.msra.mxu0 0.0
    %7997 = vmatprep.subr.mxu0 0.0
    %7998 = vmatpush1.msra.mxu0 0.0
    %7999 = vmatprep.subr.mxu0 0.0
    %8000 = vmatpush1.msra.mxu0 0.0
    %8001 = vmatprep.subr.mxu0 0.0
    %8002 = vmatpush1.msra.mxu0 0.0
    %8003 = vmatprep.subr.mxu0 0.0
    %8004 = vmatpush1.msra.mxu0 0.0
    %8005 = vmatprep.subr.mxu0 0.0
    %8006 = vmatpush1.msra.mxu0 0.0
    %8007 = vmatprep.subr.mxu0 0.0
    %8008 = vmatpush1.msra.mxu0 0.0
    %8009 = vmatprep.subr.mxu0 0.0
    %8010 = vmatpush1.msra.mxu0 0.0
    %8011 = vmatprep.subr.mxu0 0.0
    %8012 = vmatpush1.msra.mxu0 0.0
    %8013 = vmatprep.subr.mxu0 0.0
    %8014 = vmatpush1.msra.mxu0 0.0
    %8015 = vmatprep.subr.mxu0 0.0
    %8016 = vmatpush1.msra.mxu0 0.0
    %8017 = vmatprep.subr.mxu0 0.0
    %8018 = vmatpush1.msra.mxu0 0.0
    %8019 = vmatprep.subr.mxu0 0.0
    %8020 = vmatpush1.msra.mxu0 0.0
    %8021 = vmatprep.subr.mxu0 0.0
    %8022 = vmatpush1.msra.mxu0 0.0
    %8023 = vmatprep.subr.mxu0 0.0
    %8024 = vmatpush1.msra.mxu0 0.0
    %8025 = vmatprep.subr.mxu0 0.0
    %8026 = vmatpush1.msra.mxu0 0.0
    %8027 = vmatprep.subr.mxu0 0.0
    %8028 = vmatpush1.msra.mxu0 0.0
    %8029 = vmatprep.subr.mxu0 0.0
    %8030 = vmatpush1.msra.mxu0 0.0
    %8031 = vmatprep.subr.mxu0 0.0
    %8032 = vmatpush1.msra.mxu0 0.0
    %8033 = vmatprep.subr.mxu0 0.0
    %8034 = vmatpush1.msra.mxu0 0.0
    %8035 = vmatprep.subr.mxu0 0.0
    %8036 = vmatpush1.msra.mxu0 0.0
    %8037 = vmatprep.subr.mxu0 0.0
    %8038 = vmatpush1.msra.mxu0 0.0
    %8039 = vmatprep.subr.mxu0 0.0
    %8040 = vmatpush1.msra.mxu0 0.0
    %8041 = vmatprep.subr.mxu0 0.0
    %8042 = vmatpush1.msra.mxu0 0.0
    %8043 = vmatprep.mubr.f32.mxu0 0.0
    %8044 = vmatmul.mubr.f32.gmra.mrb[0].mxu0 %v3505
    %v8045 = vpop.f32.mrb[0].mxu0
    %v8046 = vadd.f32 0.0, %v8045
    %v8047 = vpop.f32.mrb[0].mxu0
    %v8048 = vadd.f32 0.0, %v8047
    %8049 = vdwg.mxu0
    %8050 = vmatprep.subr.mxu0 %v7969
    %8051 = vmatpush1.msra.mxu0 %v7967
    %8052 = vmatprep.subr.mxu0 0.0
    %8053 = vmatpush1.msra.mxu0 0.0
    %8054 = vmatprep.subr.mxu0 0.0
    %8055 = vmatpush1.msra.mxu0 0.0
    %8056 = vmatprep.subr.mxu0 0.0
    %8057 = vmatpush1.msra.mxu0 0.0
    %8058 = vmatprep.subr.mxu0 0.0
    %8059 = vmatpush1.msra.mxu0 0.0
    %8060 = vmatprep.subr.mxu0 0.0
    %8061 = vmatpush1.msra.mxu0 0.0
    %8062 = vmatprep.subr.mxu0 0.0
    %8063 = vmatpush1.msra.mxu0 0.0
    %8064 = vmatprep.subr.mxu0 0.0
    %8065 = vmatpush1.msra.mxu0 0.0
    %8066 = vmatprep.subr.mxu0 0.0
    %8067 = vmatpush1.msra.mxu0 0.0
    %8068 = vmatprep.subr.mxu0 0.0
    %8069 = vmatpush1.msra.mxu0 0.0
    %8070 = vmatprep.subr.mxu0 0.0
    %8071 = vmatpush1.msra.mxu0 0.0
    %8072 = vmatprep.subr.mxu0 0.0
    %8073 = vmatpush1.msra.mxu0 0.0
    %8074 = vmatprep.subr.mxu0 0.0
    %8075 = vmatpush1.msra.mxu0 0.0
    %8076 = vmatprep.subr.mxu0 0.0
    %8077 = vmatpush1.msra.mxu0 0.0
    %8078 = vmatprep.subr.mxu0 0.0
    %8079 = vmatpush1.msra.mxu0 0.0
    %8080 = vmatprep.subr.mxu0 0.0
    %8081 = vmatpush1.msra.mxu0 0.0
    %8082 = vmatprep.subr.mxu0 0.0
    %8083 = vmatpush1.msra.mxu0 0.0
    %8084 = vmatprep.subr.mxu0 0.0
    %8085 = vmatpush1.msra.mxu0 0.0
    %8086 = vmatprep.subr.mxu0 0.0
    %8087 = vmatpush1.msra.mxu0 0.0
    %8088 = vmatprep.subr.mxu0 0.0
    %8089 = vmatpush1.msra.mxu0 0.0
    %8090 = vmatprep.subr.mxu0 0.0
    %8091 = vmatpush1.msra.mxu0 0.0
    %8092 = vmatprep.subr.mxu0 0.0
    %8093 = vmatpush1.msra.mxu0 0.0
    %8094 = vmatprep.subr.mxu0 0.0
    %8095 = vmatpush1.msra.mxu0 0.0
    %8096 = vmatprep.subr.mxu0 0.0
    %8097 = vmatpush1.msra.mxu0 0.0
    %8098 = vmatprep.subr.mxu0 0.0
    %8099 = vmatpush1.msra.mxu0 0.0
    %8100 = vmatprep.subr.mxu0 0.0
    %8101 = vmatpush1.msra.mxu0 0.0
    %8102 = vmatprep.subr.mxu0 0.0
    %8103 = vmatpush1.msra.mxu0 0.0
    %8104 = vmatprep.subr.mxu0 0.0
    %8105 = vmatpush1.msra.mxu0 0.0
    %8106 = vmatprep.subr.mxu0 0.0
    %8107 = vmatpush1.msra.mxu0 0.0
    %8108 = vmatprep.subr.mxu0 0.0
    %8109 = vmatpush1.msra.mxu0 0.0
    %8110 = vmatprep.subr.mxu0 0.0
    %8111 = vmatpush1.msra.mxu0 0.0
    %8112 = vmatprep.subr.mxu0 0.0
    %8113 = vmatpush1.msra.mxu0 0.0
    %8114 = vmatprep.mubr.f32.mxu0 0.0
    %8115 = vmatmul.mubr.f32.gmra.mrb[0].mxu0 %v3505
    %v8116 = vpop.f32.mrb[0].mxu0
    %v8117 = vadd.f32 0.0, %v8116
    %v8118 = vpop.f32.mrb[0].mxu0
    %v8119 = vadd.f32 0.0, %v8118
    %8120 = vdwg.mxu0
    %8121 = vmatprep.subr.mxu0 %v7973
    %8122 = vmatpush1.msra.mxu0 %v7971
    %8123 = vmatprep.subr.mxu0 0.0
    %8124 = vmatpush1.msra.mxu0 0.0
    %8125 = vmatprep.subr.mxu0 0.0
    %8126 = vmatpush1.msra.mxu0 0.0
    %8127 = vmatprep.subr.mxu0 0.0
    %8128 = vmatpush1.msra.mxu0 0.0
    %8129 = vmatprep.subr.mxu0 0.0
    %8130 = vmatpush1.msra.mxu0 0.0
    %8131 = vmatprep.subr.mxu0 0.0
    %8132 = vmatpush1.msra.mxu0 0.0
    %8133 = vmatprep.subr.mxu0 0.0
    %8134 = vmatpush1.msra.mxu0 0.0
    %8135 = vmatprep.subr.mxu0 0.0
    %8136 = vmatpush1.msra.mxu0 0.0
    %8137 = vmatprep.subr.mxu0 0.0
    %8138 = vmatpush1.msra.mxu0 0.0
    %8139 = vmatprep.subr.mxu0 0.0
    %8140 = vmatpush1.msra.mxu0 0.0
    %8141 = vmatprep.subr.mxu0 0.0
    %8142 = vmatpush1.msra.mxu0 0.0
    %8143 = vmatprep.subr.mxu0 0.0
    %8144 = vmatpush1.msra.mxu0 0.0
    %8145 = vmatprep.subr.mxu0 0.0
    %8146 = vmatpush1.msra.mxu0 0.0
    %8147 = vmatprep.subr.mxu0 0.0
    %8148 = vmatpush1.msra.mxu0 0.0
    %8149 = vmatprep.subr.mxu0 0.0
    %8150 = vmatpush1.msra.mxu0 0.0
    %8151 = vmatprep.subr.mxu0 0.0
    %8152 = vmatpush1.msra.mxu0 0.0
    %8153 = vmatprep.subr.mxu0 0.0
    %8154 = vmatpush1.msra.mxu0 0.0
    %8155 = vmatprep.subr.mxu0 0.0
    %8156 = vmatpush1.msra.mxu0 0.0
    %8157 = vmatprep.subr.mxu0 0.0
    %8158 = vmatpush1.msra.mxu0 0.0
    %8159 = vmatprep.subr.mxu0 0.0
    %8160 = vmatpush1.msra.mxu0 0.0
    %8161 = vmatprep.subr.mxu0 0.0
    %8162 = vmatpush1.msra.mxu0 0.0
    %8163 = vmatprep.subr.mxu0 0.0
    %8164 = vmatpush1.msra.mxu0 0.0
    %8165 = vmatprep.subr.mxu0 0.0
    %8166 = vmatpush1.msra.mxu0 0.0
    %8167 = vmatprep.subr.mxu0 0.0
    %8168 = vmatpush1.msra.mxu0 0.0
    %8169 = vmatprep.subr.mxu0 0.0
    %8170 = vmatpush1.msra.mxu0 0.0
    %8171 = vmatprep.subr.mxu0 0.0
    %8172 = vmatpush1.msra.mxu0 0.0
    %8173 = vmatprep.subr.mxu0 0.0
    %8174 = vmatpush1.msra.mxu0 0.0
    %8175 = vmatprep.subr.mxu0 0.0
    %8176 = vmatpush1.msra.mxu0 0.0
    %8177 = vmatprep.subr.mxu0 0.0
    %8178 = vmatpush1.msra.mxu0 0.0
    %8179 = vmatprep.subr.mxu0 0.0
    %8180 = vmatpush1.msra.mxu0 0.0
    %8181 = vmatprep.subr.mxu0 0.0
    %8182 = vmatpush1.msra.mxu0 0.0
    %8183 = vmatprep.subr.mxu0 0.0
    %8184 = vmatpush1.msra.mxu0 0.0
    %8185 = vmatprep.mubr.f32.mxu0 0.0
    %8186 = vmatmul.mubr.f32.gmra.mrb[0].mxu0 %v3505
    %v8187 = vpop.f32.mrb[0].mxu0
    %v8188 = vadd.f32 0.0, %v8187
    %v8189 = vpop.f32.mrb[0].mxu0
    %v8190 = vadd.f32 0.0, %v8189
    %8191 = vdwg.mxu0
    %8192 = vmatprep.subr.mxu0 %v7977
    %8193 = vmatpush1.msra.mxu0 %v7975
    %8194 = vmatprep.subr.mxu0 0.0
    %8195 = vmatpush1.msra.mxu0 0.0
    %8196 = vmatprep.subr.mxu0 0.0
    %8197 = vmatpush1.msra.mxu0 0.0
    %8198 = vmatprep.subr.mxu0 0.0
    %8199 = vmatpush1.msra.mxu0 0.0
    %8200 = vmatprep.subr.mxu0 0.0
    %8201 = vmatpush1.msra.mxu0 0.0
    %8202 = vmatprep.subr.mxu0 0.0
    %8203 = vmatpush1.msra.mxu0 0.0
    %8204 = vmatprep.subr.mxu0 0.0
    %8205 = vmatpush1.msra.mxu0 0.0
    %8206 = vmatprep.subr.mxu0 0.0
    %8207 = vmatpush1.msra.mxu0 0.0
    %8208 = vmatprep.subr.mxu0 0.0
    %8209 = vmatpush1.msra.mxu0 0.0
    %8210 = vmatprep.subr.mxu0 0.0
    %8211 = vmatpush1.msra.mxu0 0.0
    %8212 = vmatprep.subr.mxu0 0.0
    %8213 = vmatpush1.msra.mxu0 0.0
    %8214 = vmatprep.subr.mxu0 0.0
    %8215 = vmatpush1.msra.mxu0 0.0
    %8216 = vmatprep.subr.mxu0 0.0
    %8217 = vmatpush1.msra.mxu0 0.0
    %8218 = vmatprep.subr.mxu0 0.0
    %8219 = vmatpush1.msra.mxu0 0.0
    %8220 = vmatprep.subr.mxu0 0.0
    %8221 = vmatpush1.msra.mxu0 0.0
    %8222 = vmatprep.subr.mxu0 0.0
    %8223 = vmatpush1.msra.mxu0 0.0
    %8224 = vmatprep.subr.mxu0 0.0
    %8225 = vmatpush1.msra.mxu0 0.0
    %8226 = vmatprep.subr.mxu0 0.0
    %8227 = vmatpush1.msra.mxu0 0.0
    %8228 = vmatprep.subr.mxu0 0.0
    %8229 = vmatpush1.msra.mxu0 0.0
    %8230 = vmatprep.subr.mxu0 0.0
    %8231 = vmatpush1.msra.mxu0 0.0
    %8232 = vmatprep.subr.mxu0 0.0
    %8233 = vmatpush1.msra.mxu0 0.0
    %8234 = vmatprep.subr.mxu0 0.0
    %8235 = vmatpush1.msra.mxu0 0.0
    %8236 = vmatprep.subr.mxu0 0.0
    %8237 = vmatpush1.msra.mxu0 0.0
    %8238 = vmatprep.subr.mxu0 0.0
    %8239 = vmatpush1.msra.mxu0 0.0
    %8240 = vmatprep.subr.mxu0 0.0
    %8241 = vmatpush1.msra.mxu0 0.0
    %8242 = vmatprep.subr.mxu0 0.0
    %8243 = vmatpush1.msra.mxu0 0.0
    %8244 = vmatprep.subr.mxu0 0.0
    %8245 = vmatpush1.msra.mxu0 0.0
    %8246 = vmatprep.subr.mxu0 0.0
    %8247 = vmatpush1.msra.mxu0 0.0
    %8248 = vmatprep.subr.mxu0 0.0
    %8249 = vmatpush1.msra.mxu0 0.0
    %8250 = vmatprep.subr.mxu0 0.0
    %8251 = vmatpush1.msra.mxu0 0.0
    %8252 = vmatprep.subr.mxu0 0.0
    %8253 = vmatpush1.msra.mxu0 0.0
    %8254 = vmatprep.subr.mxu0 0.0
    %8255 = vmatpush1.msra.mxu0 0.0
    %8256 = vmatprep.mubr.f32.mxu0 0.0
    %8257 = vmatmul.mubr.f32.gmra.mrb[0].mxu0 %v3505
    %v8258 = vpop.f32.mrb[0].mxu0
    %v8259 = vadd.f32 0.0, %v8258
    %v8260 = vpop.f32.mrb[0].mxu0
    %v8261 = vadd.f32 0.0, %v8260
    %8262 = vdwg.mxu0
    %v8263 = vadd.f32 %v7920, %v8046
    %v8264 = vadd.f32 %v7921, %v8048
    %v8265 = vadd.f32 %v7922, %v8117
    %v8266 = vadd.f32 %v7923, %v8119
    %v8267 = vadd.f32 %v7924, %v8188
    %v8268 = vadd.f32 %v7925, %v8190
    %v8269 = vadd.f32 %v7926, %v8259
    %v8270 = vadd.f32 %v7927, %v8261
    %v8271 = vld [vmem:[%s0 + $0x40] sm:$0xff]
    %v8272 = vld [vmem:[%s0 + $0x48] sm:$0xff]
    %v8273 = vld [vmem:[%s0 + $0x50] sm:$0xff]
    %v8274 = vld [vmem:[%s0 + $0x58] sm:$0xff]
    %v8279 = vcombine.high %v8271, %v8271
    %v8280 = vcombine.high %v8272, %v8272
    %v8281 = vcombine.high %v8273, %v8273
    %v8282 = vcombine.high %v8274, %v8274
    %8283 = vrot.lane.b32.xlu0 %v8271, 92
    %v8284 = vpop.permute.xlu0 %8283
    %8285 = vrot.lane.b32.xlu0 %v8279, 92
    %v8286 = vpop.permute.xlu0 %8285
    %8287 = vrot.lane.b32.xlu0 %v8272, 92
    %v8288 = vpop.permute.xlu0 %8287
    %8289 = vrot.lane.b32.xlu0 %v8280, 92
    %v8290 = vpop.permute.xlu0 %8289
    %8291 = vrot.lane.b32.xlu0 %v8273, 92
    %v8292 = vpop.permute.xlu0 %8291
    %8293 = vrot.lane.b32.xlu0 %v8281, 92
    %v8294 = vpop.permute.xlu0 %8293
    %8295 = vrot.lane.b32.xlu0 %v8274, 92
    %v8296 = vpop.permute.xlu0 %8295
    %8297 = vrot.lane.b32.xlu0 %v8282, 92
    %v8298 = vpop.permute.xlu0 %8297
    %v8299 = vsel %vm4183, %v8284, %v8286
    %v8300 = vsel %vm4183, %v8286, %v8288
    %v8301 = vsel %vm4183, %v8288, %v8290
    %v8302 = vsel %vm4183, %v8290, %v8292
    %v8303 = vsel %vm4183, %v8292, %v8294
    %v8304 = vsel %vm4183, %v8294, %v8296
    %v8305 = vsel %vm4183, %v8296, %v8298
    %v8306 = vsel %vm135, %v8299, 0
    %v8308 = vsel %vm135, %v8300, 0
    %v8310 = vsel %vm135, %v8301, 0
    %v8312 = vsel %vm135, %v8302, 0
    %v8314 = vsel %vm135, %v8303, 0
    %v8316 = vsel %vm135, %v8304, 0
    %v8318 = vsel %vm135, %v8305, 0
    %v8320 = vsel %vm135, %v8298, 0
    %8322 = vmatprep.subr.mxu0 %v8308
    %8323 = vmatpush1.msra.mxu0 %v8306
    %8324 = vmatprep.subr.mxu0 0.0
    %8325 = vmatpush1.msra.mxu0 0.0
    %8326 = vmatprep.subr.mxu0 0.0
    %8327 = vmatpush1.msra.mxu0 0.0
    %8328 = vmatprep.subr.mxu0 0.0
    %8329 = vmatpush1.msra.mxu0 0.0
    %8330 = vmatprep.subr.mxu0 0.0
    %8331 = vmatpush1.msra.mxu0 0.0
    %8332 = vmatprep.subr.mxu0 0.0
    %8333 = vmatpush1.msra.mxu0 0.0
    %8334 = vmatprep.subr.mxu0 0.0
    %8335 = vmatpush1.msra.mxu0 0.0
    %8336 = vmatprep.subr.mxu0 0.0
    %8337 = vmatpush1.msra.mxu0 0.0
    %8338 = vmatprep.subr.mxu0 0.0
    %8339 = vmatpush1.msra.mxu0 0.0
    %8340 = vmatprep.subr.mxu0 0.0
    %8341 = vmatpush1.msra.mxu0 0.0
    %8342 = vmatprep.subr.mxu0 0.0
    %8343 = vmatpush1.msra.mxu0 0.0
    %8344 = vmatprep.subr.mxu0 0.0
    %8345 = vmatpush1.msra.mxu0 0.0
    %8346 = vmatprep.subr.mxu0 0.0
    %8347 = vmatpush1.msra.mxu0 0.0
    %8348 = vmatprep.subr.mxu0 0.0
    %8349 = vmatpush1.msra.mxu0 0.0
    %8350 = vmatprep.subr.mxu0 0.0
    %8351 = vmatpush1.msra.mxu0 0.0
    %8352 = vmatprep.subr.mxu0 0.0
    %8353 = vmatpush1.msra.mxu0 0.0
    %8354 = vmatprep.subr.mxu0 0.0
    %8355 = vmatpush1.msra.mxu0 0.0
    %8356 = vmatprep.subr.mxu0 0.0
    %8357 = vmatpush1.msra.mxu0 0.0
    %8358 = vmatprep.subr.mxu0 0.0
    %8359 = vmatpush1.msra.mxu0 0.0
    %8360 = vmatprep.subr.mxu0 0.0
    %8361 = vmatpush1.msra.mxu0 0.0
    %8362 = vmatprep.subr.mxu0 0.0
    %8363 = vmatpush1.msra.mxu0 0.0
    %8364 = vmatprep.subr.mxu0 0.0
    %8365 = vmatpush1.msra.mxu0 0.0
    %8366 = vmatprep.subr.mxu0 0.0
    %8367 = vmatpush1.msra.mxu0 0.0
    %8368 = vmatprep.subr.mxu0 0.0
    %8369 = vmatpush1.msra.mxu0 0.0
    %8370 = vmatprep.subr.mxu0 0.0
    %8371 = vmatpush1.msra.mxu0 0.0
    %8372 = vmatprep.subr.mxu0 0.0
    %8373 = vmatpush1.msra.mxu0 0.0
    %8374 = vmatprep.subr.mxu0 0.0
    %8375 = vmatpush1.msra.mxu0 0.0
    %8376 = vmatprep.subr.mxu0 0.0
    %8377 = vmatpush1.msra.mxu0 0.0
    %8378 = vmatprep.subr.mxu0 0.0
    %8379 = vmatpush1.msra.mxu0 0.0
    %8380 = vmatprep.subr.mxu0 0.0
    %8381 = vmatpush1.msra.mxu0 0.0
    %8382 = vmatprep.subr.mxu0 0.0
    %8383 = vmatpush1.msra.mxu0 0.0
    %8384 = vmatprep.subr.mxu0 0.0
    %8385 = vmatpush1.msra.mxu0 0.0
    %8386 = vmatprep.mubr.f32.mxu0 0.0
    %8387 = vmatmul.mubr.f32.gmra.mrb[0].mxu0 %v4201
    %v8388 = vpop.f32.mrb[0].mxu0
    %v8389 = vadd.f32 0.0, %v8388
    %v8390 = vpop.f32.mrb[0].mxu0
    %v8391 = vadd.f32 0.0, %v8390
    %8392 = vdwg.mxu0
    %8393 = vmatprep.subr.mxu0 %v8312
    %8394 = vmatpush1.msra.mxu0 %v8310
    %8395 = vmatprep.subr.mxu0 0.0
    %8396 = vmatpush1.msra.mxu0 0.0
    %8397 = vmatprep.subr.mxu0 0.0
    %8398 = vmatpush1.msra.mxu0 0.0
    %8399 = vmatprep.subr.mxu0 0.0
    %8400 = vmatpush1.msra.mxu0 0.0
    %8401 = vmatprep.subr.mxu0 0.0
    %8402 = vmatpush1.msra.mxu0 0.0
    %8403 = vmatprep.subr.mxu0 0.0
    %8404 = vmatpush1.msra.mxu0 0.0
    %8405 = vmatprep.subr.mxu0 0.0
    %8406 = vmatpush1.msra.mxu0 0.0
    %8407 = vmatprep.subr.mxu0 0.0
    %8408 = vmatpush1.msra.mxu0 0.0
    %8409 = vmatprep.subr.mxu0 0.0
    %8410 = vmatpush1.msra.mxu0 0.0
    %8411 = vmatprep.subr.mxu0 0.0
    %8412 = vmatpush1.msra.mxu0 0.0
    %8413 = vmatprep.subr.mxu0 0.0
    %8414 = vmatpush1.msra.mxu0 0.0
    %8415 = vmatprep.subr.mxu0 0.0
    %8416 = vmatpush1.msra.mxu0 0.0
    %8417 = vmatprep.subr.mxu0 0.0
    %8418 = vmatpush1.msra.mxu0 0.0
    %8419 = vmatprep.subr.mxu0 0.0
    %8420 = vmatpush1.msra.mxu0 0.0
    %8421 = vmatprep.subr.mxu0 0.0
    %8422 = vmatpush1.msra.mxu0 0.0
    %8423 = vmatprep.subr.mxu0 0.0
    %8424 = vmatpush1.msra.mxu0 0.0
    %8425 = vmatprep.subr.mxu0 0.0
    %8426 = vmatpush1.msra.mxu0 0.0
    %8427 = vmatprep.subr.mxu0 0.0
    %8428 = vmatpush1.msra.mxu0 0.0
    %8429 = vmatprep.subr.mxu0 0.0
    %8430 = vmatpush1.msra.mxu0 0.0
    %8431 = vmatprep.subr.mxu0 0.0
    %8432 = vmatpush1.msra.mxu0 0.0
    %8433 = vmatprep.subr.mxu0 0.0
    %8434 = vmatpush1.msra.mxu0 0.0
    %8435 = vmatprep.subr.mxu0 0.0
    %8436 = vmatpush1.msra.mxu0 0.0
    %8437 = vmatprep.subr.mxu0 0.0
    %8438 = vmatpush1.msra.mxu0 0.0
    %8439 = vmatprep.subr.mxu0 0.0
    %8440 = vmatpush1.msra.mxu0 0.0
    %8441 = vmatprep.subr.mxu0 0.0
    %8442 = vmatpush1.msra.mxu0 0.0
    %8443 = vmatprep.subr.mxu0 0.0
    %8444 = vmatpush1.msra.mxu0 0.0
    %8445 = vmatprep.subr.mxu0 0.0
    %8446 = vmatpush1.msra.mxu0 0.0
    %8447 = vmatprep.subr.mxu0 0.0
    %8448 = vmatpush1.msra.mxu0 0.0
    %8449 = vmatprep.subr.mxu0 0.0
    %8450 = vmatpush1.msra.mxu0 0.0
    %8451 = vmatprep.subr.mxu0 0.0
    %8452 = vmatpush1.msra.mxu0 0.0
    %8453 = vmatprep.subr.mxu0 0.0
    %8454 = vmatpush1.msra.mxu0 0.0
    %8455 = vmatprep.subr.mxu0 0.0
    %8456 = vmatpush1.msra.mxu0 0.0
    %8457 = vmatprep.mubr.f32.mxu0 0.0
    %8458 = vmatmul.mubr.f32.gmra.mrb[0].mxu0 %v4201
    %v8459 = vpop.f32.mrb[0].mxu0
    %v8460 = vadd.f32 0.0, %v8459
    %v8461 = vpop.f32.mrb[0].mxu0
    %v8462 = vadd.f32 0.0, %v8461
    %8463 = vdwg.mxu0
    %8464 = vmatprep.subr.mxu0 %v8316
    %8465 = vmatpush1.msra.mxu0 %v8314
    %8466 = vmatprep.subr.mxu0 0.0
    %8467 = vmatpush1.msra.mxu0 0.0
    %8468 = vmatprep.subr.mxu0 0.0
    %8469 = vmatpush1.msra.mxu0 0.0
    %8470 = vmatprep.subr.mxu0 0.0
    %8471 = vmatpush1.msra.mxu0 0.0
    %8472 = vmatprep.subr.mxu0 0.0
    %8473 = vmatpush1.msra.mxu0 0.0
    %8474 = vmatprep.subr.mxu0 0.0
    %8475 = vmatpush1.msra.mxu0 0.0
    %8476 = vmatprep.subr.mxu0 0.0
    %8477 = vmatpush1.msra.mxu0 0.0
    %8478 = vmatprep.subr.mxu0 0.0
    %8479 = vmatpush1.msra.mxu0 0.0
    %8480 = vmatprep.subr.mxu0 0.0
    %8481 = vmatpush1.msra.mxu0 0.0
    %8482 = vmatprep.subr.mxu0 0.0
    %8483 = vmatpush1.msra.mxu0 0.0
    %8484 = vmatprep.subr.mxu0 0.0
    %8485 = vmatpush1.msra.mxu0 0.0
    %8486 = vmatprep.subr.mxu0 0.0
    %8487 = vmatpush1.msra.mxu0 0.0
    %8488 = vmatprep.subr.mxu0 0.0
    %8489 = vmatpush1.msra.mxu0 0.0
    %8490 = vmatprep.subr.mxu0 0.0
    %8491 = vmatpush1.msra.mxu0 0.0
    %8492 = vmatprep.subr.mxu0 0.0
    %8493 = vmatpush1.msra.mxu0 0.0
    %8494 = vmatprep.subr.mxu0 0.0
    %8495 = vmatpush1.msra.mxu0 0.0
    %8496 = vmatprep.subr.mxu0 0.0
    %8497 = vmatpush1.msra.mxu0 0.0
    %8498 = vmatprep.subr.mxu0 0.0
    %8499 = vmatpush1.msra.mxu0 0.0
    %8500 = vmatprep.subr.mxu0 0.0
    %8501 = vmatpush1.msra.mxu0 0.0
    %8502 = vmatprep.subr.mxu0 0.0
    %8503 = vmatpush1.msra.mxu0 0.0
    %8504 = vmatprep.subr.mxu0 0.0
    %8505 = vmatpush1.msra.mxu0 0.0
    %8506 = vmatprep.subr.mxu0 0.0
    %8507 = vmatpush1.msra.mxu0 0.0
    %8508 = vmatprep.subr.mxu0 0.0
    %8509 = vmatpush1.msra.mxu0 0.0
    %8510 = vmatprep.subr.mxu0 0.0
    %8511 = vmatpush1.msra.mxu0 0.0
    %8512 = vmatprep.subr.mxu0 0.0
    %8513 = vmatpush1.msra.mxu0 0.0
    %8514 = vmatprep.subr.mxu0 0.0
    %8515 = vmatpush1.msra.mxu0 0.0
    %8516 = vmatprep.subr.mxu0 0.0
    %8517 = vmatpush1.msra.mxu0 0.0
    %8518 = vmatprep.subr.mxu0 0.0
    %8519 = vmatpush1.msra.mxu0 0.0
    %8520 = vmatprep.subr.mxu0 0.0
    %8521 = vmatpush1.msra.mxu0 0.0
    %8522 = vmatprep.subr.mxu0 0.0
    %8523 = vmatpush1.msra.mxu0 0.0
    %8524 = vmatprep.subr.mxu0 0.0
    %8525 = vmatpush1.msra.mxu0 0.0
    %8526 = vmatprep.subr.mxu0 0.0
    %8527 = vmatpush1.msra.mxu0 0.0
    %8528 = vmatprep.mubr.f32.mxu0 0.0
    %8529 = vmatmul.mubr.f32.gmra.mrb[0].mxu0 %v4201
    %v8530 = vpop.f32.mrb[0].mxu0
    %v8531 = vadd.f32 0.0, %v8530
    %v8532 = vpop.f32.mrb[0].mxu0
    %v8533 = vadd.f32 0.0, %v8532
    %8534 = vdwg.mxu0
    %8535 = vmatprep.subr.mxu0 %v8320
    %8536 = vmatpush1.msra.mxu0 %v8318
    %8537 = vmatprep.subr.mxu0 0.0
    %8538 = vmatpush1.msra.mxu0 0.0
    %8539 = vmatprep.subr.mxu0 0.0
    %8540 = vmatpush1.msra.mxu0 0.0
    %8541 = vmatprep.subr.mxu0 0.0
    %8542 = vmatpush1.msra.mxu0 0.0
    %8543 = vmatprep.subr.mxu0 0.0
    %8544 = vmatpush1.msra.mxu0 0.0
    %8545 = vmatprep.subr.mxu0 0.0
    %8546 = vmatpush1.msra.mxu0 0.0
    %8547 = vmatprep.subr.mxu0 0.0
    %8548 = vmatpush1.msra.mxu0 0.0
    %8549 = vmatprep.subr.mxu0 0.0
    %8550 = vmatpush1.msra.mxu0 0.0
    %8551 = vmatprep.subr.mxu0 0.0
    %8552 = vmatpush1.msra.mxu0 0.0
    %8553 = vmatprep.subr.mxu0 0.0
    %8554 = vmatpush1.msra.mxu0 0.0
    %8555 = vmatprep.subr.mxu0 0.0
    %8556 = vmatpush1.msra.mxu0 0.0
    %8557 = vmatprep.subr.mxu0 0.0
    %8558 = vmatpush1.msra.mxu0 0.0
    %8559 = vmatprep.subr.mxu0 0.0
    %8560 = vmatpush1.msra.mxu0 0.0
    %8561 = vmatprep.subr.mxu0 0.0
    %8562 = vmatpush1.msra.mxu0 0.0
    %8563 = vmatprep.subr.mxu0 0.0
    %8564 = vmatpush1.msra.mxu0 0.0
    %8565 = vmatprep.subr.mxu0 0.0
    %8566 = vmatpush1.msra.mxu0 0.0
    %8567 = vmatprep.subr.mxu0 0.0
    %8568 = vmatpush1.msra.mxu0 0.0
    %8569 = vmatprep.subr.mxu0 0.0
    %8570 = vmatpush1.msra.mxu0 0.0
    %8571 = vmatprep.subr.mxu0 0.0
    %8572 = vmatpush1.msra.mxu0 0.0
    %8573 = vmatprep.subr.mxu0 0.0
    %8574 = vmatpush1.msra.mxu0 0.0
    %8575 = vmatprep.subr.mxu0 0.0
    %8576 = vmatpush1.msra.mxu0 0.0
    %8577 = vmatprep.subr.mxu0 0.0
    %8578 = vmatpush1.msra.mxu0 0.0
    %8579 = vmatprep.subr.mxu0 0.0
    %8580 = vmatpush1.msra.mxu0 0.0
    %8581 = vmatprep.subr.mxu0 0.0
    %8582 = vmatpush1.msra.mxu0 0.0
    %8583 = vmatprep.subr.mxu0 0.0
    %8584 = vmatpush1.msra.mxu0 0.0
    %8585 = vmatprep.subr.mxu0 0.0
    %8586 = vmatpush1.msra.mxu0 0.0
    %8587 = vmatprep.subr.mxu0 0.0
    %8588 = vmatpush1.msra.mxu0 0.0
    %8589 = vmatprep.subr.mxu0 0.0
    %8590 = vmatpush1.msra.mxu0 0.0
    %8591 = vmatprep.subr.mxu0 0.0
    %8592 = vmatpush1.msra.mxu0 0.0
    %8593 = vmatprep.subr.mxu0 0.0
    %8594 = vmatpush1.msra.mxu0 0.0
    %8595 = vmatprep.subr.mxu0 0.0
    %8596 = vmatpush1.msra.mxu0 0.0
    %8597 = vmatprep.subr.mxu0 0.0
    %8598 = vmatpush1.msra.mxu0 0.0
    %8599 = vmatprep.mubr.f32.mxu0 0.0
    %8600 = vmatmul.mubr.f32.gmra.mrb[0].mxu0 %v4201
    %v8601 = vpop.f32.mrb[0].mxu0
    %v8602 = vadd.f32 0.0, %v8601
    %v8603 = vpop.f32.mrb[0].mxu0
    %v8604 = vadd.f32 0.0, %v8603
    %8605 = vdwg.mxu0
    %v8606 = vadd.f32 %v8263, %v8389
    %v8607 = vadd.f32 %v8264, %v8391
    %v8608 = vadd.f32 %v8265, %v8460
    %v8609 = vadd.f32 %v8266, %v8462
    %v8610 = vadd.f32 %v8267, %v8531
    %v8611 = vadd.f32 %v8268, %v8533
    %v8612 = vadd.f32 %v8269, %v8602
    %v8613 = vadd.f32 %v8270, %v8604
    %v8614 = vld [vmem:[%s0 + $0x40] sm:$0xff]
    %v8615 = vld [vmem:[%s0 + $0x48] sm:$0xff]
    %v8616 = vld [vmem:[%s0 + $0x50] sm:$0xff]
    %v8617 = vld [vmem:[%s0 + $0x58] sm:$0xff]
    %v8622 = vcombine.high %v8614, %v8614
    %v8623 = vcombine.high %v8615, %v8615
    %v8624 = vcombine.high %v8616, %v8616
    %v8625 = vcombine.high %v8617, %v8617
    %8626 = vrot.lane.b32.xlu0 %v8614, 91
    %v8627 = vpop.permute.xlu0 %8626
    %8628 = vrot.lane.b32.xlu0 %v8622, 91
    %v8629 = vpop.permute.xlu0 %8628
    %8630 = vrot.lane.b32.xlu0 %v8615, 91
    %v8631 = vpop.permute.xlu0 %8630
    %8632 = vrot.lane.b32.xlu0 %v8623, 91
    %v8633 = vpop.permute.xlu0 %8632
    %8634 = vrot.lane.b32.xlu0 %v8616, 91
    %v8635 = vpop.permute.xlu0 %8634
    %8636 = vrot.lane.b32.xlu0 %v8624, 91
    %v8637 = vpop.permute.xlu0 %8636
    %8638 = vrot.lane.b32.xlu0 %v8617, 91
    %v8639 = vpop.permute.xlu0 %8638
    %8640 = vrot.lane.b32.xlu0 %v8625, 91
    %v8641 = vpop.permute.xlu0 %8640
    %v8642 = vsel %vm4879, %v8627, %v8629
    %v8643 = vsel %vm4879, %v8629, %v8631
    %v8644 = vsel %vm4879, %v8631, %v8633
    %v8645 = vsel %vm4879, %v8633, %v8635
    %v8646 = vsel %vm4879, %v8635, %v8637
    %v8647 = vsel %vm4879, %v8637, %v8639
    %v8648 = vsel %vm4879, %v8639, %v8641
    %v8649 = vsel %vm135, %v8642, 0
    %v8651 = vsel %vm135, %v8643, 0
    %v8653 = vsel %vm135, %v8644, 0
    %v8655 = vsel %vm135, %v8645, 0
    %v8657 = vsel %vm135, %v8646, 0
    %v8659 = vsel %vm135, %v8647, 0
    %v8661 = vsel %vm135, %v8648, 0
    %v8663 = vsel %vm135, %v8641, 0
    %8665 = vmatprep.subr.mxu0 %v8651
    %8666 = vmatpush1.msra.mxu0 %v8649
    %8667 = vmatprep.subr.mxu0 0.0
    %8668 = vmatpush1.msra.mxu0 0.0
    %8669 = vmatprep.subr.mxu0 0.0
    %8670 = vmatpush1.msra.mxu0 0.0
    %8671 = vmatprep.subr.mxu0 0.0
    %8672 = vmatpush1.msra.mxu0 0.0
    %8673 = vmatprep.subr.mxu0 0.0
    %8674 = vmatpush1.msra.mxu0 0.0
    %8675 = vmatprep.subr.mxu0 0.0
    %8676 = vmatpush1.msra.mxu0 0.0
    %8677 = vmatprep.subr.mxu0 0.0
    %8678 = vmatpush1.msra.mxu0 0.0
    %8679 = vmatprep.subr.mxu0 0.0
    %8680 = vmatpush1.msra.mxu0 0.0
    %8681 = vmatprep.subr.mxu0 0.0
    %8682 = vmatpush1.msra.mxu0 0.0
    %8683 = vmatprep.subr.mxu0 0.0
    %8684 = vmatpush1.msra.mxu0 0.0
    %8685 = vmatprep.subr.mxu0 0.0
    %8686 = vmatpush1.msra.mxu0 0.0
    %8687 = vmatprep.subr.mxu0 0.0
    %8688 = vmatpush1.msra.mxu0 0.0
    %8689 = vmatprep.subr.mxu0 0.0
    %8690 = vmatpush1.msra.mxu0 0.0
    %8691 = vmatprep.subr.mxu0 0.0
    %8692 = vmatpush1.msra.mxu0 0.0
    %8693 = vmatprep.subr.mxu0 0.0
    %8694 = vmatpush1.msra.mxu0 0.0
    %8695 = vmatprep.subr.mxu0 0.0
    %8696 = vmatpush1.msra.mxu0 0.0
    %8697 = vmatprep.subr.mxu0 0.0
    %8698 = vmatpush1.msra.mxu0 0.0
    %8699 = vmatprep.subr.mxu0 0.0
    %8700 = vmatpush1.msra.mxu0 0.0
    %8701 = vmatprep.subr.mxu0 0.0
    %8702 = vmatpush1.msra.mxu0 0.0
    %8703 = vmatprep.subr.mxu0 0.0
    %8704 = vmatpush1.msra.mxu0 0.0
    %8705 = vmatprep.subr.mxu0 0.0
    %8706 = vmatpush1.msra.mxu0 0.0
    %8707 = vmatprep.subr.mxu0 0.0
    %8708 = vmatpush1.msra.mxu0 0.0
    %8709 = vmatprep.subr.mxu0 0.0
    %8710 = vmatpush1.msra.mxu0 0.0
    %8711 = vmatprep.subr.mxu0 0.0
    %8712 = vmatpush1.msra.mxu0 0.0
    %8713 = vmatprep.subr.mxu0 0.0
    %8714 = vmatpush1.msra.mxu0 0.0
    %8715 = vmatprep.subr.mxu0 0.0
    %8716 = vmatpush1.msra.mxu0 0.0
    %8717 = vmatprep.subr.mxu0 0.0
    %8718 = vmatpush1.msra.mxu0 0.0
    %8719 = vmatprep.subr.mxu0 0.0
    %8720 = vmatpush1.msra.mxu0 0.0
    %8721 = vmatprep.subr.mxu0 0.0
    %8722 = vmatpush1.msra.mxu0 0.0
    %8723 = vmatprep.subr.mxu0 0.0
    %8724 = vmatpush1.msra.mxu0 0.0
    %8725 = vmatprep.subr.mxu0 0.0
    %8726 = vmatpush1.msra.mxu0 0.0
    %8727 = vmatprep.subr.mxu0 0.0
    %8728 = vmatpush1.msra.mxu0 0.0
    %8729 = vmatprep.mubr.f32.mxu0 0.0
    %8730 = vmatmul.mubr.f32.gmra.mrb[0].mxu0 %v4897
    %v8731 = vpop.f32.mrb[0].mxu0
    %v8732 = vadd.f32 0.0, %v8731
    %v8733 = vpop.f32.mrb[0].mxu0
    %v8734 = vadd.f32 0.0, %v8733
    %8735 = vdwg.mxu0
    %8736 = vmatprep.subr.mxu0 %v8655
    %8737 = vmatpush1.msra.mxu0 %v8653
    %8738 = vmatprep.subr.mxu0 0.0
    %8739 = vmatpush1.msra.mxu0 0.0
    %8740 = vmatprep.subr.mxu0 0.0
    %8741 = vmatpush1.msra.mxu0 0.0
    %8742 = vmatprep.subr.mxu0 0.0
    %8743 = vmatpush1.msra.mxu0 0.0
    %8744 = vmatprep.subr.mxu0 0.0
    %8745 = vmatpush1.msra.mxu0 0.0
    %8746 = vmatprep.subr.mxu0 0.0
    %8747 = vmatpush1.msra.mxu0 0.0
    %8748 = vmatprep.subr.mxu0 0.0
    %8749 = vmatpush1.msra.mxu0 0.0
    %8750 = vmatprep.subr.mxu0 0.0
    %8751 = vmatpush1.msra.mxu0 0.0
    %8752 = vmatprep.subr.mxu0 0.0
    %8753 = vmatpush1.msra.mxu0 0.0
    %8754 = vmatprep.subr.mxu0 0.0
    %8755 = vmatpush1.msra.mxu0 0.0
    %8756 = vmatprep.subr.mxu0 0.0
    %8757 = vmatpush1.msra.mxu0 0.0
    %8758 = vmatprep.subr.mxu0 0.0
    %8759 = vmatpush1.msra.mxu0 0.0
    %8760 = vmatprep.subr.mxu0 0.0
    %8761 = vmatpush1.msra.mxu0 0.0
    %8762 = vmatprep.subr.mxu0 0.0
    %8763 = vmatpush1.msra.mxu0 0.0
    %8764 = vmatprep.subr.mxu0 0.0
    %8765 = vmatpush1.msra.mxu0 0.0
    %8766 = vmatprep.subr.mxu0 0.0
    %8767 = vmatpush1.msra.mxu0 0.0
    %8768 = vmatprep.subr.mxu0 0.0
    %8769 = vmatpush1.msra.mxu0 0.0
    %8770 = vmatprep.subr.mxu0 0.0
    %8771 = vmatpush1.msra.mxu0 0.0
    %8772 = vmatprep.subr.mxu0 0.0
    %8773 = vmatpush1.msra.mxu0 0.0
    %8774 = vmatprep.subr.mxu0 0.0
    %8775 = vmatpush1.msra.mxu0 0.0
    %8776 = vmatprep.subr.mxu0 0.0
    %8777 = vmatpush1.msra.mxu0 0.0
    %8778 = vmatprep.subr.mxu0 0.0
    %8779 = vmatpush1.msra.mxu0 0.0
    %8780 = vmatprep.subr.mxu0 0.0
    %8781 = vmatpush1.msra.mxu0 0.0
    %8782 = vmatprep.subr.mxu0 0.0
    %8783 = vmatpush1.msra.mxu0 0.0
    %8784 = vmatprep.subr.mxu0 0.0
    %8785 = vmatpush1.msra.mxu0 0.0
    %8786 = vmatprep.subr.mxu0 0.0
    %8787 = vmatpush1.msra.mxu0 0.0
    %8788 = vmatprep.subr.mxu0 0.0
    %8789 = vmatpush1.msra.mxu0 0.0
    %8790 = vmatprep.subr.mxu0 0.0
    %8791 = vmatpush1.msra.mxu0 0.0
    %8792 = vmatprep.subr.mxu0 0.0
    %8793 = vmatpush1.msra.mxu0 0.0
    %8794 = vmatprep.subr.mxu0 0.0
    %8795 = vmatpush1.msra.mxu0 0.0
    %8796 = vmatprep.subr.mxu0 0.0
    %8797 = vmatpush1.msra.mxu0 0.0
    %8798 = vmatprep.subr.mxu0 0.0
    %8799 = vmatpush1.msra.mxu0 0.0
    %8800 = vmatprep.mubr.f32.mxu0 0.0
    %8801 = vmatmul.mubr.f32.gmra.mrb[0].mxu0 %v4897
    %v8802 = vpop.f32.mrb[0].mxu0
    %v8803 = vadd.f32 0.0, %v8802
    %v8804 = vpop.f32.mrb[0].mxu0
    %v8805 = vadd.f32 0.0, %v8804
    %8806 = vdwg.mxu0
    %8807 = vmatprep.subr.mxu0 %v8659
    %8808 = vmatpush1.msra.mxu0 %v8657
    %8809 = vmatprep.subr.mxu0 0.0
    %8810 = vmatpush1.msra.mxu0 0.0
    %8811 = vmatprep.subr.mxu0 0.0
    %8812 = vmatpush1.msra.mxu0 0.0
    %8813 = vmatprep.subr.mxu0 0.0
    %8814 = vmatpush1.msra.mxu0 0.0
    %8815 = vmatprep.subr.mxu0 0.0
    %8816 = vmatpush1.msra.mxu0 0.0
    %8817 = vmatprep.subr.mxu0 0.0
    %8818 = vmatpush1.msra.mxu0 0.0
    %8819 = vmatprep.subr.mxu0 0.0
    %8820 = vmatpush1.msra.mxu0 0.0
    %8821 = vmatprep.subr.mxu0 0.0
    %8822 = vmatpush1.msra.mxu0 0.0
    %8823 = vmatprep.subr.mxu0 0.0
    %8824 = vmatpush1.msra.mxu0 0.0
    %8825 = vmatprep.subr.mxu0 0.0
    %8826 = vmatpush1.msra.mxu0 0.0
    %8827 = vmatprep.subr.mxu0 0.0
    %8828 = vmatpush1.msra.mxu0 0.0
    %8829 = vmatprep.subr.mxu0 0.0
    %8830 = vmatpush1.msra.mxu0 0.0
    %8831 = vmatprep.subr.mxu0 0.0
    %8832 = vmatpush1.msra.mxu0 0.0
    %8833 = vmatprep.subr.mxu0 0.0
    %8834 = vmatpush1.msra.mxu0 0.0
    %8835 = vmatprep.subr.mxu0 0.0
    %8836 = vmatpush1.msra.mxu0 0.0
    %8837 = vmatprep.subr.mxu0 0.0
    %8838 = vmatpush1.msra.mxu0 0.0
    %8839 = vmatprep.subr.mxu0 0.0
    %8840 = vmatpush1.msra.mxu0 0.0
    %8841 = vmatprep.subr.mxu0 0.0
    %8842 = vmatpush1.msra.mxu0 0.0
    %8843 = vmatprep.subr.mxu0 0.0
    %8844 = vmatpush1.msra.mxu0 0.0
    %8845 = vmatprep.subr.mxu0 0.0
    %8846 = vmatpush1.msra.mxu0 0.0
    %8847 = vmatprep.subr.mxu0 0.0
    %8848 = vmatpush1.msra.mxu0 0.0
    %8849 = vmatprep.subr.mxu0 0.0
    %8850 = vmatpush1.msra.mxu0 0.0
    %8851 = vmatprep.subr.mxu0 0.0
    %8852 = vmatpush1.msra.mxu0 0.0
    %8853 = vmatprep.subr.mxu0 0.0
    %8854 = vmatpush1.msra.mxu0 0.0
    %8855 = vmatprep.subr.mxu0 0.0
    %8856 = vmatpush1.msra.mxu0 0.0
    %8857 = vmatprep.subr.mxu0 0.0
    %8858 = vmatpush1.msra.mxu0 0.0
    %8859 = vmatprep.subr.mxu0 0.0
    %8860 = vmatpush1.msra.mxu0 0.0
    %8861 = vmatprep.subr.mxu0 0.0
    %8862 = vmatpush1.msra.mxu0 0.0
    %8863 = vmatprep.subr.mxu0 0.0
    %8864 = vmatpush1.msra.mxu0 0.0
    %8865 = vmatprep.subr.mxu0 0.0
    %8866 = vmatpush1.msra.mxu0 0.0
    %8867 = vmatprep.subr.mxu0 0.0
    %8868 = vmatpush1.msra.mxu0 0.0
    %8869 = vmatprep.subr.mxu0 0.0
    %8870 = vmatpush1.msra.mxu0 0.0
    %8871 = vmatprep.mubr.f32.mxu0 0.0
    %8872 = vmatmul.mubr.f32.gmra.mrb[0].mxu0 %v4897
    %v8873 = vpop.f32.mrb[0].mxu0
    %v8874 = vadd.f32 0.0, %v8873
    %v8875 = vpop.f32.mrb[0].mxu0
    %v8876 = vadd.f32 0.0, %v8875
    %8877 = vdwg.mxu0
    %8878 = vmatprep.subr.mxu0 %v8663
    %8879 = vmatpush1.msra.mxu0 %v8661
    %8880 = vmatprep.subr.mxu0 0.0
    %8881 = vmatpush1.msra.mxu0 0.0
    %8882 = vmatprep.subr.mxu0 0.0
    %8883 = vmatpush1.msra.mxu0 0.0
    %8884 = vmatprep.subr.mxu0 0.0
    %8885 = vmatpush1.msra.mxu0 0.0
    %8886 = vmatprep.subr.mxu0 0.0
    %8887 = vmatpush1.msra.mxu0 0.0
    %8888 = vmatprep.subr.mxu0 0.0
    %8889 = vmatpush1.msra.mxu0 0.0
    %8890 = vmatprep.subr.mxu0 0.0
    %8891 = vmatpush1.msra.mxu0 0.0
    %8892 = vmatprep.subr.mxu0 0.0
    %8893 = vmatpush1.msra.mxu0 0.0
    %8894 = vmatprep.subr.mxu0 0.0
    %8895 = vmatpush1.msra.mxu0 0.0
    %8896 = vmatprep.subr.mxu0 0.0
    %8897 = vmatpush1.msra.mxu0 0.0
    %8898 = vmatprep.subr.mxu0 0.0
    %8899 = vmatpush1.msra.mxu0 0.0
    %8900 = vmatprep.subr.mxu0 0.0
    %8901 = vmatpush1.msra.mxu0 0.0
    %8902 = vmatprep.subr.mxu0 0.0
    %8903 = vmatpush1.msra.mxu0 0.0
    %8904 = vmatprep.subr.mxu0 0.0
    %8905 = vmatpush1.msra.mxu0 0.0
    %8906 = vmatprep.subr.mxu0 0.0
    %8907 = vmatpush1.msra.mxu0 0.0
    %8908 = vmatprep.subr.mxu0 0.0
    %8909 = vmatpush1.msra.mxu0 0.0
    %8910 = vmatprep.subr.mxu0 0.0
    %8911 = vmatpush1.msra.mxu0 0.0
    %8912 = vmatprep.subr.mxu0 0.0
    %8913 = vmatpush1.msra.mxu0 0.0
    %8914 = vmatprep.subr.mxu0 0.0
    %8915 = vmatpush1.msra.mxu0 0.0
    %8916 = vmatprep.subr.mxu0 0.0
    %8917 = vmatpush1.msra.mxu0 0.0
    %8918 = vmatprep.subr.mxu0 0.0
    %8919 = vmatpush1.msra.mxu0 0.0
    %8920 = vmatprep.subr.mxu0 0.0
    %8921 = vmatpush1.msra.mxu0 0.0
    %8922 = vmatprep.subr.mxu0 0.0
    %8923 = vmatpush1.msra.mxu0 0.0
    %8924 = vmatprep.subr.mxu0 0.0
    %8925 = vmatpush1.msra.mxu0 0.0
    %8926 = vmatprep.subr.mxu0 0.0
    %8927 = vmatpush1.msra.mxu0 0.0
    %8928 = vmatprep.subr.mxu0 0.0
    %8929 = vmatpush1.msra.mxu0 0.0
    %8930 = vmatprep.subr.mxu0 0.0
    %8931 = vmatpush1.msra.mxu0 0.0
    %8932 = vmatprep.subr.mxu0 0.0
    %8933 = vmatpush1.msra.mxu0 0.0
    %8934 = vmatprep.subr.mxu0 0.0
    %8935 = vmatpush1.msra.mxu0 0.0
    %8936 = vmatprep.subr.mxu0 0.0
    %8937 = vmatpush1.msra.mxu0 0.0
    %8938 = vmatprep.subr.mxu0 0.0
    %8939 = vmatpush1.msra.mxu0 0.0
    %8940 = vmatprep.subr.mxu0 0.0
    %8941 = vmatpush1.msra.mxu0 0.0
    %8942 = vmatprep.mubr.f32.mxu0 0.0
    %8943 = vmatmul.mubr.f32.gmra.mrb[0].mxu0 %v4897
    %v8944 = vpop.f32.mrb[0].mxu0
    %v8945 = vadd.f32 0.0, %v8944
    %v8946 = vpop.f32.mrb[0].mxu0
    %v8947 = vadd.f32 0.0, %v8946
    %8948 = vdwg.mxu0
    %v8949 = vadd.f32 %v8606, %v8732
    %v8950 = vadd.f32 %v8607, %v8734
    %v8951 = vadd.f32 %v8608, %v8803
    %v8952 = vadd.f32 %v8609, %v8805
    %v8953 = vadd.f32 %v8610, %v8874
    %v8954 = vadd.f32 %v8611, %v8876
    %v8955 = vadd.f32 %v8612, %v8945
    %v8956 = vadd.f32 %v8613, %v8947
    %v8957 = vld [vmem:[%s0 + $0x40] sm:$0xff]
    %v8958 = vld [vmem:[%s0 + $0x48] sm:$0xff]
    %v8959 = vld [vmem:[%s0 + $0x50] sm:$0xff]
    %v8960 = vld [vmem:[%s0 + $0x58] sm:$0xff]
    %v8965 = vcombine.high %v8957, %v8957
    %v8966 = vcombine.high %v8958, %v8958
    %v8967 = vcombine.high %v8959, %v8959
    %v8968 = vcombine.high %v8960, %v8960
    %8969 = vrot.lane.b32.xlu0 %v8957, 90
    %v8970 = vpop.permute.xlu0 %8969
    %8971 = vrot.lane.b32.xlu0 %v8965, 90
    %v8972 = vpop.permute.xlu0 %8971
    %8973 = vrot.lane.b32.xlu0 %v8958, 90
    %v8974 = vpop.permute.xlu0 %8973
    %8975 = vrot.lane.b32.xlu0 %v8966, 90
    %v8976 = vpop.permute.xlu0 %8975
    %8977 = vrot.lane.b32.xlu0 %v8959, 90
    %v8978 = vpop.permute.xlu0 %8977
    %8979 = vrot.lane.b32.xlu0 %v8967, 90
    %v8980 = vpop.permute.xlu0 %8979
    %8981 = vrot.lane.b32.xlu0 %v8960, 90
    %v8982 = vpop.permute.xlu0 %8981
    %8983 = vrot.lane.b32.xlu0 %v8968, 90
    %v8984 = vpop.permute.xlu0 %8983
    %v8985 = vsel %vm5575, %v8970, %v8972
    %v8986 = vsel %vm5575, %v8972, %v8974
    %v8987 = vsel %vm5575, %v8974, %v8976
    %v8988 = vsel %vm5575, %v8976, %v8978
    %v8989 = vsel %vm5575, %v8978, %v8980
    %v8990 = vsel %vm5575, %v8980, %v8982
    %v8991 = vsel %vm5575, %v8982, %v8984
    %v8992 = vsel %vm135, %v8985, 0
    %v8994 = vsel %vm135, %v8986, 0
    %v8996 = vsel %vm135, %v8987, 0
    %v8998 = vsel %vm135, %v8988, 0
    %v9000 = vsel %vm135, %v8989, 0
    %v9002 = vsel %vm135, %v8990, 0
    %v9004 = vsel %vm135, %v8991, 0
    %v9006 = vsel %vm135, %v8984, 0
    %9008 = vmatprep.subr.mxu0 %v8994
    %9009 = vmatpush1.msra.mxu0 %v8992
    %9010 = vmatprep.subr.mxu0 0.0
    %9011 = vmatpush1.msra.mxu0 0.0
    %9012 = vmatprep.subr.mxu0 0.0
    %9013 = vmatpush1.msra.mxu0 0.0
    %9014 = vmatprep.subr.mxu0 0.0
    %9015 = vmatpush1.msra.mxu0 0.0
    %9016 = vmatprep.subr.mxu0 0.0
    %9017 = vmatpush1.msra.mxu0 0.0
    %9018 = vmatprep.subr.mxu0 0.0
    %9019 = vmatpush1.msra.mxu0 0.0
    %9020 = vmatprep.subr.mxu0 0.0
    %9021 = vmatpush1.msra.mxu0 0.0
    %9022 = vmatprep.subr.mxu0 0.0
    %9023 = vmatpush1.msra.mxu0 0.0
    %9024 = vmatprep.subr.mxu0 0.0
    %9025 = vmatpush1.msra.mxu0 0.0
    %9026 = vmatprep.subr.mxu0 0.0
    %9027 = vmatpush1.msra.mxu0 0.0
    %9028 = vmatprep.subr.mxu0 0.0
    %9029 = vmatpush1.msra.mxu0 0.0
    %9030 = vmatprep.subr.mxu0 0.0
    %9031 = vmatpush1.msra.mxu0 0.0
    %9032 = vmatprep.subr.mxu0 0.0
    %9033 = vmatpush1.msra.mxu0 0.0
    %9034 = vmatprep.subr.mxu0 0.0
    %9035 = vmatpush1.msra.mxu0 0.0
    %9036 = vmatprep.subr.mxu0 0.0
    %9037 = vmatpush1.msra.mxu0 0.0
    %9038 = vmatprep.subr.mxu0 0.0
    %9039 = vmatpush1.msra.mxu0 0.0
    %9040 = vmatprep.subr.mxu0 0.0
    %9041 = vmatpush1.msra.mxu0 0.0
    %9042 = vmatprep.subr.mxu0 0.0
    %9043 = vmatpush1.msra.mxu0 0.0
    %9044 = vmatprep.subr.mxu0 0.0
    %9045 = vmatpush1.msra.mxu0 0.0
    %9046 = vmatprep.subr.mxu0 0.0
    %9047 = vmatpush1.msra.mxu0 0.0
    %9048 = vmatprep.subr.mxu0 0.0
    %9049 = vmatpush1.msra.mxu0 0.0
    %9050 = vmatprep.subr.mxu0 0.0
    %9051 = vmatpush1.msra.mxu0 0.0
    %9052 = vmatprep.subr.mxu0 0.0
    %9053 = vmatpush1.msra.mxu0 0.0
    %9054 = vmatprep.subr.mxu0 0.0
    %9055 = vmatpush1.msra.mxu0 0.0
    %9056 = vmatprep.subr.mxu0 0.0
    %9057 = vmatpush1.msra.mxu0 0.0
    %9058 = vmatprep.subr.mxu0 0.0
    %9059 = vmatpush1.msra.mxu0 0.0
    %9060 = vmatprep.subr.mxu0 0.0
    %9061 = vmatpush1.msra.mxu0 0.0
    %9062 = vmatprep.subr.mxu0 0.0
    %9063 = vmatpush1.msra.mxu0 0.0
    %9064 = vmatprep.subr.mxu0 0.0
    %9065 = vmatpush1.msra.mxu0 0.0
    %9066 = vmatprep.subr.mxu0 0.0
    %9067 = vmatpush1.msra.mxu0 0.0
    %9068 = vmatprep.subr.mxu0 0.0
    %9069 = vmatpush1.msra.mxu0 0.0
    %9070 = vmatprep.subr.mxu0 0.0
    %9071 = vmatpush1.msra.mxu0 0.0
    %9072 = vmatprep.mubr.f32.mxu0 0.0
    %9073 = vmatmul.mubr.f32.gmra.mrb[0].mxu0 %v5593
    %v9074 = vpop.f32.mrb[0].mxu0
    %v9075 = vadd.f32 0.0, %v9074
    %v9076 = vpop.f32.mrb[0].mxu0
    %v9077 = vadd.f32 0.0, %v9076
    %9078 = vdwg.mxu0
    %9079 = vmatprep.subr.mxu0 %v8998
    %9080 = vmatpush1.msra.mxu0 %v8996
    %9081 = vmatprep.subr.mxu0 0.0
    %9082 = vmatpush1.msra.mxu0 0.0
    %9083 = vmatprep.subr.mxu0 0.0
    %9084 = vmatpush1.msra.mxu0 0.0
    %9085 = vmatprep.subr.mxu0 0.0
    %9086 = vmatpush1.msra.mxu0 0.0
    %9087 = vmatprep.subr.mxu0 0.0
    %9088 = vmatpush1.msra.mxu0 0.0
    %9089 = vmatprep.subr.mxu0 0.0
    %9090 = vmatpush1.msra.mxu0 0.0
    %9091 = vmatprep.subr.mxu0 0.0
    %9092 = vmatpush1.msra.mxu0 0.0
    %9093 = vmatprep.subr.mxu0 0.0
    %9094 = vmatpush1.msra.mxu0 0.0
    %9095 = vmatprep.subr.mxu0 0.0
    %9096 = vmatpush1.msra.mxu0 0.0
    %9097 = vmatprep.subr.mxu0 0.0
    %9098 = vmatpush1.msra.mxu0 0.0
    %9099 = vmatprep.subr.mxu0 0.0
    %9100 = vmatpush1.msra.mxu0 0.0
    %9101 = vmatprep.subr.mxu0 0.0
    %9102 = vmatpush1.msra.mxu0 0.0
    %9103 = vmatprep.subr.mxu0 0.0
    %9104 = vmatpush1.msra.mxu0 0.0
    %9105 = vmatprep.subr.mxu0 0.0
    %9106 = vmatpush1.msra.mxu0 0.0
    %9107 = vmatprep.subr.mxu0 0.0
    %9108 = vmatpush1.msra.mxu0 0.0
    %9109 = vmatprep.subr.mxu0 0.0
    %9110 = vmatpush1.msra.mxu0 0.0
    %9111 = vmatprep.subr.mxu0 0.0
    %9112 = vmatpush1.msra.mxu0 0.0
    %9113 = vmatprep.subr.mxu0 0.0
    %9114 = vmatpush1.msra.mxu0 0.0
    %9115 = vmatprep.subr.mxu0 0.0
    %9116 = vmatpush1.msra.mxu0 0.0
    %9117 = vmatprep.subr.mxu0 0.0
    %9118 = vmatpush1.msra.mxu0 0.0
    %9119 = vmatprep.subr.mxu0 0.0
    %9120 = vmatpush1.msra.mxu0 0.0
    %9121 = vmatprep.subr.mxu0 0.0
    %9122 = vmatpush1.msra.mxu0 0.0
    %9123 = vmatprep.subr.mxu0 0.0
    %9124 = vmatpush1.msra.mxu0 0.0
    %9125 = vmatprep.subr.mxu0 0.0
    %9126 = vmatpush1.msra.mxu0 0.0
    %9127 = vmatprep.subr.mxu0 0.0
    %9128 = vmatpush1.msra.mxu0 0.0
    %9129 = vmatprep.subr.mxu0 0.0
    %9130 = vmatpush1.msra.mxu0 0.0
    %9131 = vmatprep.subr.mxu0 0.0
    %9132 = vmatpush1.msra.mxu0 0.0
    %9133 = vmatprep.subr.mxu0 0.0
    %9134 = vmatpush1.msra.mxu0 0.0
    %9135 = vmatprep.subr.mxu0 0.0
    %9136 = vmatpush1.msra.mxu0 0.0
    %9137 = vmatprep.subr.mxu0 0.0
    %9138 = vmatpush1.msra.mxu0 0.0
    %9139 = vmatprep.subr.mxu0 0.0
    %9140 = vmatpush1.msra.mxu0 0.0
    %9141 = vmatprep.subr.mxu0 0.0
    %9142 = vmatpush1.msra.mxu0 0.0
    %9143 = vmatprep.mubr.f32.mxu0 0.0
    %9144 = vmatmul.mubr.f32.gmra.mrb[0].mxu0 %v5593
    %v9145 = vpop.f32.mrb[0].mxu0
    %v9146 = vadd.f32 0.0, %v9145
    %v9147 = vpop.f32.mrb[0].mxu0
    %v9148 = vadd.f32 0.0, %v9147
    %9149 = vdwg.mxu0
    %9150 = vmatprep.subr.mxu0 %v9002
    %9151 = vmatpush1.msra.mxu0 %v9000
    %9152 = vmatprep.subr.mxu0 0.0
    %9153 = vmatpush1.msra.mxu0 0.0
    %9154 = vmatprep.subr.mxu0 0.0
    %9155 = vmatpush1.msra.mxu0 0.0
    %9156 = vmatprep.subr.mxu0 0.0
    %9157 = vmatpush1.msra.mxu0 0.0
    %9158 = vmatprep.subr.mxu0 0.0
    %9159 = vmatpush1.msra.mxu0 0.0
    %9160 = vmatprep.subr.mxu0 0.0
    %9161 = vmatpush1.msra.mxu0 0.0
    %9162 = vmatprep.subr.mxu0 0.0
    %9163 = vmatpush1.msra.mxu0 0.0
    %9164 = vmatprep.subr.mxu0 0.0
    %9165 = vmatpush1.msra.mxu0 0.0
    %9166 = vmatprep.subr.mxu0 0.0
    %9167 = vmatpush1.msra.mxu0 0.0
    %9168 = vmatprep.subr.mxu0 0.0
    %9169 = vmatpush1.msra.mxu0 0.0
    %9170 = vmatprep.subr.mxu0 0.0
    %9171 = vmatpush1.msra.mxu0 0.0
    %9172 = vmatprep.subr.mxu0 0.0
    %9173 = vmatpush1.msra.mxu0 0.0
    %9174 = vmatprep.subr.mxu0 0.0
    %9175 = vmatpush1.msra.mxu0 0.0
    %9176 = vmatprep.subr.mxu0 0.0
    %9177 = vmatpush1.msra.mxu0 0.0
    %9178 = vmatprep.subr.mxu0 0.0
    %9179 = vmatpush1.msra.mxu0 0.0
    %9180 = vmatprep.subr.mxu0 0.0
    %9181 = vmatpush1.msra.mxu0 0.0
    %9182 = vmatprep.subr.mxu0 0.0
    %9183 = vmatpush1.msra.mxu0 0.0
    %9184 = vmatprep.subr.mxu0 0.0
    %9185 = vmatpush1.msra.mxu0 0.0
    %9186 = vmatprep.subr.mxu0 0.0
    %9187 = vmatpush1.msra.mxu0 0.0
    %9188 = vmatprep.subr.mxu0 0.0
    %9189 = vmatpush1.msra.mxu0 0.0
    %9190 = vmatprep.subr.mxu0 0.0
    %9191 = vmatpush1.msra.mxu0 0.0
    %9192 = vmatprep.subr.mxu0 0.0
    %9193 = vmatpush1.msra.mxu0 0.0
    %9194 = vmatprep.subr.mxu0 0.0
    %9195 = vmatpush1.msra.mxu0 0.0
    %9196 = vmatprep.subr.mxu0 0.0
    %9197 = vmatpush1.msra.mxu0 0.0
    %9198 = vmatprep.subr.mxu0 0.0
    %9199 = vmatpush1.msra.mxu0 0.0
    %9200 = vmatprep.subr.mxu0 0.0
    %9201 = vmatpush1.msra.mxu0 0.0
    %9202 = vmatprep.subr.mxu0 0.0
    %9203 = vmatpush1.msra.mxu0 0.0
    %9204 = vmatprep.subr.mxu0 0.0
    %9205 = vmatpush1.msra.mxu0 0.0
    %9206 = vmatprep.subr.mxu0 0.0
    %9207 = vmatpush1.msra.mxu0 0.0
    %9208 = vmatprep.subr.mxu0 0.0
    %9209 = vmatpush1.msra.mxu0 0.0
    %9210 = vmatprep.subr.mxu0 0.0
    %9211 = vmatpush1.msra.mxu0 0.0
    %9212 = vmatprep.subr.mxu0 0.0
    %9213 = vmatpush1.msra.mxu0 0.0
    %9214 = vmatprep.mubr.f32.mxu0 0.0
    %9215 = vmatmul.mubr.f32.gmra.mrb[0].mxu0 %v5593
    %v9216 = vpop.f32.mrb[0].mxu0
    %v9217 = vadd.f32 0.0, %v9216
    %v9218 = vpop.f32.mrb[0].mxu0
    %v9219 = vadd.f32 0.0, %v9218
    %9220 = vdwg.mxu0
    %9221 = vmatprep.subr.mxu0 %v9006
    %9222 = vmatpush1.msra.mxu0 %v9004
    %9223 = vmatprep.subr.mxu0 0.0
    %9224 = vmatpush1.msra.mxu0 0.0
    %9225 = vmatprep.subr.mxu0 0.0
    %9226 = vmatpush1.msra.mxu0 0.0
    %9227 = vmatprep.subr.mxu0 0.0
    %9228 = vmatpush1.msra.mxu0 0.0
    %9229 = vmatprep.subr.mxu0 0.0
    %9230 = vmatpush1.msra.mxu0 0.0
    %9231 = vmatprep.subr.mxu0 0.0
    %9232 = vmatpush1.msra.mxu0 0.0
    %9233 = vmatprep.subr.mxu0 0.0
    %9234 = vmatpush1.msra.mxu0 0.0
    %9235 = vmatprep.subr.mxu0 0.0
    %9236 = vmatpush1.msra.mxu0 0.0
    %9237 = vmatprep.subr.mxu0 0.0
    %9238 = vmatpush1.msra.mxu0 0.0
    %9239 = vmatprep.subr.mxu0 0.0
    %9240 = vmatpush1.msra.mxu0 0.0
    %9241 = vmatprep.subr.mxu0 0.0
    %9242 = vmatpush1.msra.mxu0 0.0
    %9243 = vmatprep.subr.mxu0 0.0
    %9244 = vmatpush1.msra.mxu0 0.0
    %9245 = vmatprep.subr.mxu0 0.0
    %9246 = vmatpush1.msra.mxu0 0.0
    %9247 = vmatprep.subr.mxu0 0.0
    %9248 = vmatpush1.msra.mxu0 0.0
    %9249 = vmatprep.subr.mxu0 0.0
    %9250 = vmatpush1.msra.mxu0 0.0
    %9251 = vmatprep.subr.mxu0 0.0
    %9252 = vmatpush1.msra.mxu0 0.0
    %9253 = vmatprep.subr.mxu0 0.0
    %9254 = vmatpush1.msra.mxu0 0.0
    %9255 = vmatprep.subr.mxu0 0.0
    %9256 = vmatpush1.msra.mxu0 0.0
    %9257 = vmatprep.subr.mxu0 0.0
    %9258 = vmatpush1.msra.mxu0 0.0
    %9259 = vmatprep.subr.mxu0 0.0
    %9260 = vmatpush1.msra.mxu0 0.0
    %9261 = vmatprep.subr.mxu0 0.0
    %9262 = vmatpush1.msra.mxu0 0.0
    %9263 = vmatprep.subr.mxu0 0.0
    %9264 = vmatpush1.msra.mxu0 0.0
    %9265 = vmatprep.subr.mxu0 0.0
    %9266 = vmatpush1.msra.mxu0 0.0
    %9267 = vmatprep.subr.mxu0 0.0
    %9268 = vmatpush1.msra.mxu0 0.0
    %9269 = vmatprep.subr.mxu0 0.0
    %9270 = vmatpush1.msra.mxu0 0.0
    %9271 = vmatprep.subr.mxu0 0.0
    %9272 = vmatpush1.msra.mxu0 0.0
    %9273 = vmatprep.subr.mxu0 0.0
    %9274 = vmatpush1.msra.mxu0 0.0
    %9275 = vmatprep.subr.mxu0 0.0
    %9276 = vmatpush1.msra.mxu0 0.0
    %9277 = vmatprep.subr.mxu0 0.0
    %9278 = vmatpush1.msra.mxu0 0.0
    %9279 = vmatprep.subr.mxu0 0.0
    %9280 = vmatpush1.msra.mxu0 0.0
    %9281 = vmatprep.subr.mxu0 0.0
    %9282 = vmatpush1.msra.mxu0 0.0
    %9283 = vmatprep.subr.mxu0 0.0
    %9284 = vmatpush1.msra.mxu0 0.0
    %9285 = vmatprep.mubr.f32.mxu0 0.0
    %9286 = vmatmul.mubr.f32.gmra.mrb[0].mxu0 %v5593
    %v9287 = vpop.f32.mrb[0].mxu0
    %v9288 = vadd.f32 0.0, %v9287
    %v9289 = vpop.f32.mrb[0].mxu0
    %v9290 = vadd.f32 0.0, %v9289
    %9291 = vdwg.mxu0
    %v9292 = vadd.f32 %v8949, %v9075
    %v9293 = vadd.f32 %v8950, %v9077
    %v9294 = vadd.f32 %v8951, %v9146
    %v9295 = vadd.f32 %v8952, %v9148
    %v9296 = vadd.f32 %v8953, %v9217
    %v9297 = vadd.f32 %v8954, %v9219
    %v9298 = vadd.f32 %v8955, %v9288
    %v9299 = vadd.f32 %v8956, %v9290
    %v9300 = vadd.f32 %v9292, %v6214
    %v9301 = vadd.f32 %v9293, %v6214
    %v9302 = vadd.f32 %v9294, %v6214
    %v9303 = vadd.f32 %v9295, %v6214
    %v9304 = vadd.f32 %v9296, %v6214
    %v9305 = vadd.f32 %v9297, %v6214
    %v9306 = vadd.f32 %v9298, %v6214
    %v9307 = vadd.f32 %v9299, %v6214
    %v9308 = vmax.f32 %v9300, 0.0
    %v9309 = vmax.f32 %v9301, 0.0
    %v9310 = vmax.f32 %v9302, 0.0
    %v9311 = vmax.f32 %v9303, 0.0
    %v9312 = vmax.f32 %v9304, 0.0
    %v9313 = vmax.f32 %v9305, 0.0
    %v9314 = vmax.f32 %v9306, 0.0
    %v9315 = vmax.f32 %v9307, 0.0
    %v9316 = vld [vmem:[#allocation2 + $0x80] sm:$0xff]
    %v9317 = vld [vmem:[#allocation2 + $0x88] sm:$0xff]
    %v9318 = vld [vmem:[#allocation2 + $0x90] sm:$0xff]
    %v9319 = vld [vmem:[#allocation2 + $0x98] sm:$0xff]
    %v9320 = vld [vmem:[#allocation2 + $0xa0] sm:$0xff]
    %v9321 = vld [vmem:[#allocation2 + $0xa8] sm:$0xff]
    %v9322 = vld [vmem:[#allocation2 + $0xb0] sm:$0xff]
    %v9323 = vld [vmem:[#allocation2 + $0xb8] sm:$0xff]
    %vm9324 = vcmask 244736
    %v9326 = vsel %vm9324, %v9323, 0
    %v9329 = vsel %vm9324, %v9315, 0
    %9331 = vmatprep.subr.mxu0 %v9309
    %9332 = vmatpush1.xpose.msra.mxu0 %v9308
    %9333 = vmatprep.subr.mxu0 0.0
    %9334 = vmatpush1.xpose.msra.mxu0 0.0
    %9335 = vmatprep.subr.mxu0 0.0
    %9336 = vmatpush1.xpose.msra.mxu0 0.0
    %9337 = vmatprep.subr.mxu0 0.0
    %9338 = vmatpush1.xpose.msra.mxu0 0.0
    %9339 = vmatprep.subr.mxu0 0.0
    %9340 = vmatpush1.xpose.msra.mxu0 0.0
    %9341 = vmatprep.subr.mxu0 0.0
    %9342 = vmatpush1.xpose.msra.mxu0 0.0
    %9343 = vmatprep.subr.mxu0 0.0
    %9344 = vmatpush1.xpose.msra.mxu0 0.0
    %9345 = vmatprep.subr.mxu0 0.0
    %9346 = vmatpush1.xpose.msra.mxu0 0.0
    %9347 = vmatprep.subr.mxu0 0.0
    %9348 = vmatpush1.xpose.msra.mxu0 0.0
    %9349 = vmatprep.subr.mxu0 0.0
    %9350 = vmatpush1.xpose.msra.mxu0 0.0
    %9351 = vmatprep.subr.mxu0 0.0
    %9352 = vmatpush1.xpose.msra.mxu0 0.0
    %9353 = vmatprep.subr.mxu0 0.0
    %9354 = vmatpush1.xpose.msra.mxu0 0.0
    %9355 = vmatprep.subr.mxu0 0.0
    %9356 = vmatpush1.xpose.msra.mxu0 0.0
    %9357 = vmatprep.subr.mxu0 0.0
    %9358 = vmatpush1.xpose.msra.mxu0 0.0
    %9359 = vmatprep.subr.mxu0 0.0
    %9360 = vmatpush1.xpose.msra.mxu0 0.0
    %9361 = vmatprep.subr.mxu0 0.0
    %9362 = vmatpush1.xpose.msra.mxu0 0.0
    %9363 = vmatprep.subr.mxu0 0.0
    %9364 = vmatpush1.xpose.msra.mxu0 0.0
    %9365 = vmatprep.subr.mxu0 0.0
    %9366 = vmatpush1.xpose.msra.mxu0 0.0
    %9367 = vmatprep.subr.mxu0 0.0
    %9368 = vmatpush1.xpose.msra.mxu0 0.0
    %9369 = vmatprep.subr.mxu0 0.0
    %9370 = vmatpush1.xpose.msra.mxu0 0.0
    %9371 = vmatprep.subr.mxu0 0.0
    %9372 = vmatpush1.xpose.msra.mxu0 0.0
    %9373 = vmatprep.subr.mxu0 0.0
    %9374 = vmatpush1.xpose.msra.mxu0 0.0
    %9375 = vmatprep.subr.mxu0 0.0
    %9376 = vmatpush1.xpose.msra.mxu0 0.0
    %9377 = vmatprep.subr.mxu0 0.0
    %9378 = vmatpush1.xpose.msra.mxu0 0.0
    %9379 = vmatprep.subr.mxu0 0.0
    %9380 = vmatpush1.xpose.msra.mxu0 0.0
    %9381 = vmatprep.subr.mxu0 0.0
    %9382 = vmatpush1.xpose.msra.mxu0 0.0
    %9383 = vmatprep.subr.mxu0 0.0
    %9384 = vmatpush1.xpose.msra.mxu0 0.0
    %9385 = vmatprep.subr.mxu0 0.0
    %9386 = vmatpush1.xpose.msra.mxu0 0.0
    %9387 = vmatprep.subr.mxu0 0.0
    %9388 = vmatpush1.xpose.msra.mxu0 0.0
    %9389 = vmatprep.subr.mxu0 0.0
    %9390 = vmatpush1.xpose.msra.mxu0 0.0
    %9391 = vmatprep.subr.mxu0 0.0
    %9392 = vmatpush1.xpose.msra.mxu0 0.0
    %9393 = vmatprep.subr.mxu0 0.0
    %9394 = vmatpush1.xpose.msra.mxu0 0.0
    %9395 = vmatprep.mubr.f32.mxu0 %v9317
    %9396 = vmatmul.mubr.f32.gmra.mrb[0].mxu0 %v9316
    %v9397 = vpop.f32.mrb[0].mxu0
    %v9398 = vadd.f32 0.0, %v9397
    %v9399 = vpop.f32.mrb[0].mxu0
    %9400 = vdwg.mxu0
    %9401 = vmatprep.subr.mxu0 %v9311
    %9402 = vmatpush1.xpose.msra.mxu0 %v9310
    %9403 = vmatprep.subr.mxu0 0.0
    %9404 = vmatpush1.xpose.msra.mxu0 0.0
    %9405 = vmatprep.subr.mxu0 0.0
    %9406 = vmatpush1.xpose.msra.mxu0 0.0
    %9407 = vmatprep.subr.mxu0 0.0
    %9408 = vmatpush1.xpose.msra.mxu0 0.0
    %9409 = vmatprep.subr.mxu0 0.0
    %9410 = vmatpush1.xpose.msra.mxu0 0.0
    %9411 = vmatprep.subr.mxu0 0.0
    %9412 = vmatpush1.xpose.msra.mxu0 0.0
    %9413 = vmatprep.subr.mxu0 0.0
    %9414 = vmatpush1.xpose.msra.mxu0 0.0
    %9415 = vmatprep.subr.mxu0 0.0
    %9416 = vmatpush1.xpose.msra.mxu0 0.0
    %9417 = vmatprep.subr.mxu0 0.0
    %9418 = vmatpush1.xpose.msra.mxu0 0.0
    %9419 = vmatprep.subr.mxu0 0.0
    %9420 = vmatpush1.xpose.msra.mxu0 0.0
    %9421 = vmatprep.subr.mxu0 0.0
    %9422 = vmatpush1.xpose.msra.mxu0 0.0
    %9423 = vmatprep.subr.mxu0 0.0
    %9424 = vmatpush1.xpose.msra.mxu0 0.0
    %9425 = vmatprep.subr.mxu0 0.0
    %9426 = vmatpush1.xpose.msra.mxu0 0.0
    %9427 = vmatprep.subr.mxu0 0.0
    %9428 = vmatpush1.xpose.msra.mxu0 0.0
    %9429 = vmatprep.subr.mxu0 0.0
    %9430 = vmatpush1.xpose.msra.mxu0 0.0
    %9431 = vmatprep.subr.mxu0 0.0
    %9432 = vmatpush1.xpose.msra.mxu0 0.0
    %9433 = vmatprep.subr.mxu0 0.0
    %9434 = vmatpush1.xpose.msra.mxu0 0.0
    %9435 = vmatprep.subr.mxu0 0.0
    %9436 = vmatpush1.xpose.msra.mxu0 0.0
    %9437 = vmatprep.subr.mxu0 0.0
    %9438 = vmatpush1.xpose.msra.mxu0 0.0
    %9439 = vmatprep.subr.mxu0 0.0
    %9440 = vmatpush1.xpose.msra.mxu0 0.0
    %9441 = vmatprep.subr.mxu0 0.0
    %9442 = vmatpush1.xpose.msra.mxu0 0.0
    %9443 = vmatprep.subr.mxu0 0.0
    %9444 = vmatpush1.xpose.msra.mxu0 0.0
    %9445 = vmatprep.subr.mxu0 0.0
    %9446 = vmatpush1.xpose.msra.mxu0 0.0
    %9447 = vmatprep.subr.mxu0 0.0
    %9448 = vmatpush1.xpose.msra.mxu0 0.0
    %9449 = vmatprep.subr.mxu0 0.0
    %9450 = vmatpush1.xpose.msra.mxu0 0.0
    %9451 = vmatprep.subr.mxu0 0.0
    %9452 = vmatpush1.xpose.msra.mxu0 0.0
    %9453 = vmatprep.subr.mxu0 0.0
    %9454 = vmatpush1.xpose.msra.mxu0 0.0
    %9455 = vmatprep.subr.mxu0 0.0
    %9456 = vmatpush1.xpose.msra.mxu0 0.0
    %9457 = vmatprep.subr.mxu0 0.0
    %9458 = vmatpush1.xpose.msra.mxu0 0.0
    %9459 = vmatprep.subr.mxu0 0.0
    %9460 = vmatpush1.xpose.msra.mxu0 0.0
    %9461 = vmatprep.subr.mxu0 0.0
    %9462 = vmatpush1.xpose.msra.mxu0 0.0
    %9463 = vmatprep.subr.mxu0 0.0
    %9464 = vmatpush1.xpose.msra.mxu0 0.0
    %9465 = vmatprep.mubr.f32.mxu0 %v9319
    %9466 = vmatmul.mubr.f32.gmra.mrb[0].mxu0 %v9318
    %v9467 = vpop.f32.mrb[0].mxu0
    %v9468 = vadd.f32 %v9398, %v9467
    %v9469 = vpop.f32.mrb[0].mxu0
    %9470 = vdwg.mxu0
    %9471 = vmatprep.subr.mxu0 %v9313
    %9472 = vmatpush1.xpose.msra.mxu0 %v9312
    %9473 = vmatprep.subr.mxu0 0.0
    %9474 = vmatpush1.xpose.msra.mxu0 0.0
    %9475 = vmatprep.subr.mxu0 0.0
    %9476 = vmatpush1.xpose.msra.mxu0 0.0
    %9477 = vmatprep.subr.mxu0 0.0
    %9478 = vmatpush1.xpose.msra.mxu0 0.0
    %9479 = vmatprep.subr.mxu0 0.0
    %9480 = vmatpush1.xpose.msra.mxu0 0.0
    %9481 = vmatprep.subr.mxu0 0.0
    %9482 = vmatpush1.xpose.msra.mxu0 0.0
    %9483 = vmatprep.subr.mxu0 0.0
    %9484 = vmatpush1.xpose.msra.mxu0 0.0
    %9485 = vmatprep.subr.mxu0 0.0
    %9486 = vmatpush1.xpose.msra.mxu0 0.0
    %9487 = vmatprep.subr.mxu0 0.0
    %9488 = vmatpush1.xpose.msra.mxu0 0.0
    %9489 = vmatprep.subr.mxu0 0.0
    %9490 = vmatpush1.xpose.msra.mxu0 0.0
    %9491 = vmatprep.subr.mxu0 0.0
    %9492 = vmatpush1.xpose.msra.mxu0 0.0
    %9493 = vmatprep.subr.mxu0 0.0
    %9494 = vmatpush1.xpose.msra.mxu0 0.0
    %9495 = vmatprep.subr.mxu0 0.0
    %9496 = vmatpush1.xpose.msra.mxu0 0.0
    %9497 = vmatprep.subr.mxu0 0.0
    %9498 = vmatpush1.xpose.msra.mxu0 0.0
    %9499 = vmatprep.subr.mxu0 0.0
    %9500 = vmatpush1.xpose.msra.mxu0 0.0
    %9501 = vmatprep.subr.mxu0 0.0
    %9502 = vmatpush1.xpose.msra.mxu0 0.0
    %9503 = vmatprep.subr.mxu0 0.0
    %9504 = vmatpush1.xpose.msra.mxu0 0.0
    %9505 = vmatprep.subr.mxu0 0.0
    %9506 = vmatpush1.xpose.msra.mxu0 0.0
    %9507 = vmatprep.subr.mxu0 0.0
    %9508 = vmatpush1.xpose.msra.mxu0 0.0
    %9509 = vmatprep.subr.mxu0 0.0
    %9510 = vmatpush1.xpose.msra.mxu0 0.0
    %9511 = vmatprep.subr.mxu0 0.0
    %9512 = vmatpush1.xpose.msra.mxu0 0.0
    %9513 = vmatprep.subr.mxu0 0.0
    %9514 = vmatpush1.xpose.msra.mxu0 0.0
    %9515 = vmatprep.subr.mxu0 0.0
    %9516 = vmatpush1.xpose.msra.mxu0 0.0
    %9517 = vmatprep.subr.mxu0 0.0
    %9518 = vmatpush1.xpose.msra.mxu0 0.0
    %9519 = vmatprep.subr.mxu0 0.0
    %9520 = vmatpush1.xpose.msra.mxu0 0.0
    %9521 = vmatprep.subr.mxu0 0.0
    %9522 = vmatpush1.xpose.msra.mxu0 0.0
    %9523 = vmatprep.subr.mxu0 0.0
    %9524 = vmatpush1.xpose.msra.mxu0 0.0
    %9525 = vmatprep.subr.mxu0 0.0
    %9526 = vmatpush1.xpose.msra.mxu0 0.0
    %9527 = vmatprep.subr.mxu0 0.0
    %9528 = vmatpush1.xpose.msra.mxu0 0.0
    %9529 = vmatprep.subr.mxu0 0.0
    %9530 = vmatpush1.xpose.msra.mxu0 0.0
    %9531 = vmatprep.subr.mxu0 0.0
    %9532 = vmatpush1.xpose.msra.mxu0 0.0
    %9533 = vmatprep.subr.mxu0 0.0
    %9534 = vmatpush1.xpose.msra.mxu0 0.0
    %9535 = vmatprep.mubr.f32.mxu0 %v9321
    %9536 = vmatmul.mubr.f32.gmra.mrb[0].mxu0 %v9320
    %v9537 = vpop.f32.mrb[0].mxu0
    %v9538 = vadd.f32 %v9468, %v9537
    %v9539 = vpop.f32.mrb[0].mxu0
    %9540 = vdwg.mxu0
    %9541 = vmatprep.subr.mxu0 %v9329
    %9542 = vmatpush1.xpose.msra.mxu0 %v9314
    %9543 = vmatprep.subr.mxu0 0.0
    %9544 = vmatpush1.xpose.msra.mxu0 0.0
    %9545 = vmatprep.subr.mxu0 0.0
    %9546 = vmatpush1.xpose.msra.mxu0 0.0
    %9547 = vmatprep.subr.mxu0 0.0
    %9548 = vmatpush1.xpose.msra.mxu0 0.0
    %9549 = vmatprep.subr.mxu0 0.0
    %9550 = vmatpush1.xpose.msra.mxu0 0.0
    %9551 = vmatprep.subr.mxu0 0.0
    %9552 = vmatpush1.xpose.msra.mxu0 0.0
    %9553 = vmatprep.subr.mxu0 0.0
    %9554 = vmatpush1.xpose.msra.mxu0 0.0
    %9555 = vmatprep.subr.mxu0 0.0
    %9556 = vmatpush1.xpose.msra.mxu0 0.0
    %9557 = vmatprep.subr.mxu0 0.0
    %9558 = vmatpush1.xpose.msra.mxu0 0.0
    %9559 = vmatprep.subr.mxu0 0.0
    %9560 = vmatpush1.xpose.msra.mxu0 0.0
    %9561 = vmatprep.subr.mxu0 0.0
    %9562 = vmatpush1.xpose.msra.mxu0 0.0
    %9563 = vmatprep.subr.mxu0 0.0
    %9564 = vmatpush1.xpose.msra.mxu0 0.0
    %9565 = vmatprep.subr.mxu0 0.0
    %9566 = vmatpush1.xpose.msra.mxu0 0.0
    %9567 = vmatprep.subr.mxu0 0.0
    %9568 = vmatpush1.xpose.msra.mxu0 0.0
    %9569 = vmatprep.subr.mxu0 0.0
    %9570 = vmatpush1.xpose.msra.mxu0 0.0
    %9571 = vmatprep.subr.mxu0 0.0
    %9572 = vmatpush1.xpose.msra.mxu0 0.0
    %9573 = vmatprep.subr.mxu0 0.0
    %9574 = vmatpush1.xpose.msra.mxu0 0.0
    %9575 = vmatprep.subr.mxu0 0.0
    %9576 = vmatpush1.xpose.msra.mxu0 0.0
    %9577 = vmatprep.subr.mxu0 0.0
    %9578 = vmatpush1.xpose.msra.mxu0 0.0
    %9579 = vmatprep.subr.mxu0 0.0
    %9580 = vmatpush1.xpose.msra.mxu0 0.0
    %9581 = vmatprep.subr.mxu0 0.0
    %9582 = vmatpush1.xpose.msra.mxu0 0.0
    %9583 = vmatprep.subr.mxu0 0.0
    %9584 = vmatpush1.xpose.msra.mxu0 0.0
    %9585 = vmatprep.subr.mxu0 0.0
    %9586 = vmatpush1.xpose.msra.mxu0 0.0
    %9587 = vmatprep.subr.mxu0 0.0
    %9588 = vmatpush1.xpose.msra.mxu0 0.0
    %9589 = vmatprep.subr.mxu0 0.0
    %9590 = vmatpush1.xpose.msra.mxu0 0.0
    %9591 = vmatprep.subr.mxu0 0.0
    %9592 = vmatpush1.xpose.msra.mxu0 0.0
    %9593 = vmatprep.subr.mxu0 0.0
    %9594 = vmatpush1.xpose.msra.mxu0 0.0
    %9595 = vmatprep.subr.mxu0 0.0
    %9596 = vmatpush1.xpose.msra.mxu0 0.0
    %9597 = vmatprep.subr.mxu0 0.0
    %9598 = vmatpush1.xpose.msra.mxu0 0.0
    %9599 = vmatprep.subr.mxu0 0.0
    %9600 = vmatpush1.xpose.msra.mxu0 0.0
    %9601 = vmatprep.subr.mxu0 0.0
    %9602 = vmatpush1.xpose.msra.mxu0 0.0
    %9603 = vmatprep.subr.mxu0 0.0
    %9604 = vmatpush1.xpose.msra.mxu0 0.0
    %9605 = vmatprep.mubr.f32.mxu0 %v9326
    %9606 = vmatmul.mubr.f32.gmra.mrb[0].mxu0 %v9322
    %v9607 = vpop.f32.mrb[0].mxu0
    %v9608 = vadd.f32 %v9538, %v9607
    %v9609 = vpop.f32.mrb[0].mxu0
    %9610 = vdwg.mxu0
    %9611 = vmatprep.subr.mxu0 %v6233
    %9612 = vmatpush1.xpose.msra.mxu0 %v6232
    %9613 = vmatprep.subr.mxu0 0.0
    %9614 = vmatpush1.xpose.msra.mxu0 0.0
    %9615 = vmatprep.subr.mxu0 0.0
    %9616 = vmatpush1.xpose.msra.mxu0 0.0
    %9617 = vmatprep.subr.mxu0 0.0
    %9618 = vmatpush1.xpose.msra.mxu0 0.0
    %9619 = vmatprep.subr.mxu0 0.0
    %9620 = vmatpush1.xpose.msra.mxu0 0.0
    %9621 = vmatprep.subr.mxu0 0.0
    %9622 = vmatpush1.xpose.msra.mxu0 0.0
    %9623 = vmatprep.subr.mxu0 0.0
    %9624 = vmatpush1.xpose.msra.mxu0 0.0
    %9625 = vmatprep.subr.mxu0 0.0
    %9626 = vmatpush1.xpose.msra.mxu0 0.0
    %9627 = vmatprep.subr.mxu0 0.0
    %9628 = vmatpush1.xpose.msra.mxu0 0.0
    %9629 = vmatprep.subr.mxu0 0.0
    %9630 = vmatpush1.xpose.msra.mxu0 0.0
    %9631 = vmatprep.subr.mxu0 0.0
    %9632 = vmatpush1.xpose.msra.mxu0 0.0
    %9633 = vmatprep.subr.mxu0 0.0
    %9634 = vmatpush1.xpose.msra.mxu0 0.0
    %9635 = vmatprep.subr.mxu0 0.0
    %9636 = vmatpush1.xpose.msra.mxu0 0.0
    %9637 = vmatprep.subr.mxu0 0.0
    %9638 = vmatpush1.xpose.msra.mxu0 0.0
    %9639 = vmatprep.subr.mxu0 0.0
    %9640 = vmatpush1.xpose.msra.mxu0 0.0
    %9641 = vmatprep.subr.mxu0 0.0
    %9642 = vmatpush1.xpose.msra.mxu0 0.0
    %9643 = vmatprep.subr.mxu0 0.0
    %9644 = vmatpush1.xpose.msra.mxu0 0.0
    %9645 = vmatprep.subr.mxu0 0.0
    %9646 = vmatpush1.xpose.msra.mxu0 0.0
    %9647 = vmatprep.subr.mxu0 0.0
    %9648 = vmatpush1.xpose.msra.mxu0 0.0
    %9649 = vmatprep.subr.mxu0 0.0
    %9650 = vmatpush1.xpose.msra.mxu0 0.0
    %9651 = vmatprep.subr.mxu0 0.0
    %9652 = vmatpush1.xpose.msra.mxu0 0.0
    %9653 = vmatprep.subr.mxu0 0.0
    %9654 = vmatpush1.xpose.msra.mxu0 0.0
    %9655 = vmatprep.subr.mxu0 0.0
    %9656 = vmatpush1.xpose.msra.mxu0 0.0
    %9657 = vmatprep.subr.mxu0 0.0
    %9658 = vmatpush1.xpose.msra.mxu0 0.0
    %9659 = vmatprep.subr.mxu0 0.0
    %9660 = vmatpush1.xpose.msra.mxu0 0.0
    %9661 = vmatprep.subr.mxu0 0.0
    %9662 = vmatpush1.xpose.msra.mxu0 0.0
    %9663 = vmatprep.subr.mxu0 0.0
    %9664 = vmatpush1.xpose.msra.mxu0 0.0
    %9665 = vmatprep.subr.mxu0 0.0
    %9666 = vmatpush1.xpose.msra.mxu0 0.0
    %9667 = vmatprep.subr.mxu0 0.0
    %9668 = vmatpush1.xpose.msra.mxu0 0.0
    %9669 = vmatprep.subr.mxu0 0.0
    %9670 = vmatpush1.xpose.msra.mxu0 0.0
    %9671 = vmatprep.subr.mxu0 0.0
    %9672 = vmatpush1.xpose.msra.mxu0 0.0
    %9673 = vmatprep.subr.mxu0 0.0
    %9674 = vmatpush1.xpose.msra.mxu0 0.0
    %9675 = vmatprep.mubr.f32.mxu0 %v6249
    %9676 = vmatmul.mubr.f32.gmra.mrb[0].mxu0 %v6248
    %v9677 = vpop.f32.mrb[0].mxu0
    %v9678 = vadd.f32 %v9608, %v9677
    %v9679 = vpop.f32.mrb[0].mxu0
    %9680 = vdwg.mxu0
    %9681 = vmatprep.subr.mxu0 %v6235
    %9682 = vmatpush1.xpose.msra.mxu0 %v6234
    %9683 = vmatprep.subr.mxu0 0.0
    %9684 = vmatpush1.xpose.msra.mxu0 0.0
    %9685 = vmatprep.subr.mxu0 0.0
    %9686 = vmatpush1.xpose.msra.mxu0 0.0
    %9687 = vmatprep.subr.mxu0 0.0
    %9688 = vmatpush1.xpose.msra.mxu0 0.0
    %9689 = vmatprep.subr.mxu0 0.0
    %9690 = vmatpush1.xpose.msra.mxu0 0.0
    %9691 = vmatprep.subr.mxu0 0.0
    %9692 = vmatpush1.xpose.msra.mxu0 0.0
    %9693 = vmatprep.subr.mxu0 0.0
    %9694 = vmatpush1.xpose.msra.mxu0 0.0
    %9695 = vmatprep.subr.mxu0 0.0
    %9696 = vmatpush1.xpose.msra.mxu0 0.0
    %9697 = vmatprep.subr.mxu0 0.0
    %9698 = vmatpush1.xpose.msra.mxu0 0.0
    %9699 = vmatprep.subr.mxu0 0.0
    %9700 = vmatpush1.xpose.msra.mxu0 0.0
    %9701 = vmatprep.subr.mxu0 0.0
    %9702 = vmatpush1.xpose.msra.mxu0 0.0
    %9703 = vmatprep.subr.mxu0 0.0
    %9704 = vmatpush1.xpose.msra.mxu0 0.0
    %9705 = vmatprep.subr.mxu0 0.0
    %9706 = vmatpush1.xpose.msra.mxu0 0.0
    %9707 = vmatprep.subr.mxu0 0.0
    %9708 = vmatpush1.xpose.msra.mxu0 0.0
    %9709 = vmatprep.subr.mxu0 0.0
    %9710 = vmatpush1.xpose.msra.mxu0 0.0
    %9711 = vmatprep.subr.mxu0 0.0
    %9712 = vmatpush1.xpose.msra.mxu0 0.0
    %9713 = vmatprep.subr.mxu0 0.0
    %9714 = vmatpush1.xpose.msra.mxu0 0.0
    %9715 = vmatprep.subr.mxu0 0.0
    %9716 = vmatpush1.xpose.msra.mxu0 0.0
    %9717 = vmatprep.subr.mxu0 0.0
    %9718 = vmatpush1.xpose.msra.mxu0 0.0
    %9719 = vmatprep.subr.mxu0 0.0
    %9720 = vmatpush1.xpose.msra.mxu0 0.0
    %9721 = vmatprep.subr.mxu0 0.0
    %9722 = vmatpush1.xpose.msra.mxu0 0.0
    %9723 = vmatprep.subr.mxu0 0.0
    %9724 = vmatpush1.xpose.msra.mxu0 0.0
    %9725 = vmatprep.subr.mxu0 0.0
    %9726 = vmatpush1.xpose.msra.mxu0 0.0
    %9727 = vmatprep.subr.mxu0 0.0
    %9728 = vmatpush1.xpose.msra.mxu0 0.0
    %9729 = vmatprep.subr.mxu0 0.0
    %9730 = vmatpush1.xpose.msra.mxu0 0.0
    %9731 = vmatprep.subr.mxu0 0.0
    %9732 = vmatpush1.xpose.msra.mxu0 0.0
    %9733 = vmatprep.subr.mxu0 0.0
    %9734 = vmatpush1.xpose.msra.mxu0 0.0
    %9735 = vmatprep.subr.mxu0 0.0
    %9736 = vmatpush1.xpose.msra.mxu0 0.0
    %9737 = vmatprep.subr.mxu0 0.0
    %9738 = vmatpush1.xpose.msra.mxu0 0.0
    %9739 = vmatprep.subr.mxu0 0.0
    %9740 = vmatpush1.xpose.msra.mxu0 0.0
    %9741 = vmatprep.subr.mxu0 0.0
    %9742 = vmatpush1.xpose.msra.mxu0 0.0
    %9743 = vmatprep.subr.mxu0 0.0
    %9744 = vmatpush1.xpose.msra.mxu0 0.0
    %9745 = vmatprep.mubr.f32.mxu0 %v6251
    %9746 = vmatmul.mubr.f32.gmra.mrb[0].mxu0 %v6250
    %v9747 = vpop.f32.mrb[0].mxu0
    %v9748 = vadd.f32 %v9678, %v9747
    %v9749 = vpop.f32.mrb[0].mxu0
    %9750 = vdwg.mxu0
    %9751 = vmatprep.subr.mxu0 %v6237
    %9752 = vmatpush1.xpose.msra.mxu0 %v6236
    %9753 = vmatprep.subr.mxu0 0.0
    %9754 = vmatpush1.xpose.msra.mxu0 0.0
    %9755 = vmatprep.subr.mxu0 0.0
    %9756 = vmatpush1.xpose.msra.mxu0 0.0
    %9757 = vmatprep.subr.mxu0 0.0
    %9758 = vmatpush1.xpose.msra.mxu0 0.0
    %9759 = vmatprep.subr.mxu0 0.0
    %9760 = vmatpush1.xpose.msra.mxu0 0.0
    %9761 = vmatprep.subr.mxu0 0.0
    %9762 = vmatpush1.xpose.msra.mxu0 0.0
    %9763 = vmatprep.subr.mxu0 0.0
    %9764 = vmatpush1.xpose.msra.mxu0 0.0
    %9765 = vmatprep.subr.mxu0 0.0
    %9766 = vmatpush1.xpose.msra.mxu0 0.0
    %9767 = vmatprep.subr.mxu0 0.0
    %9768 = vmatpush1.xpose.msra.mxu0 0.0
    %9769 = vmatprep.subr.mxu0 0.0
    %9770 = vmatpush1.xpose.msra.mxu0 0.0
    %9771 = vmatprep.subr.mxu0 0.0
    %9772 = vmatpush1.xpose.msra.mxu0 0.0
    %9773 = vmatprep.subr.mxu0 0.0
    %9774 = vmatpush1.xpose.msra.mxu0 0.0
    %9775 = vmatprep.subr.mxu0 0.0
    %9776 = vmatpush1.xpose.msra.mxu0 0.0
    %9777 = vmatprep.subr.mxu0 0.0
    %9778 = vmatpush1.xpose.msra.mxu0 0.0
    %9779 = vmatprep.subr.mxu0 0.0
    %9780 = vmatpush1.xpose.msra.mxu0 0.0
    %9781 = vmatprep.subr.mxu0 0.0
    %9782 = vmatpush1.xpose.msra.mxu0 0.0
    %9783 = vmatprep.subr.mxu0 0.0
    %9784 = vmatpush1.xpose.msra.mxu0 0.0
    %9785 = vmatprep.subr.mxu0 0.0
    %9786 = vmatpush1.xpose.msra.mxu0 0.0
    %9787 = vmatprep.subr.mxu0 0.0
    %9788 = vmatpush1.xpose.msra.mxu0 0.0
    %9789 = vmatprep.subr.mxu0 0.0
    %9790 = vmatpush1.xpose.msra.mxu0 0.0
    %9791 = vmatprep.subr.mxu0 0.0
    %9792 = vmatpush1.xpose.msra.mxu0 0.0
    %9793 = vmatprep.subr.mxu0 0.0
    %9794 = vmatpush1.xpose.msra.mxu0 0.0
    %9795 = vmatprep.subr.mxu0 0.0
    %9796 = vmatpush1.xpose.msra.mxu0 0.0
    %9797 = vmatprep.subr.mxu0 0.0
    %9798 = vmatpush1.xpose.msra.mxu0 0.0
    %9799 = vmatprep.subr.mxu0 0.0
    %9800 = vmatpush1.xpose.msra.mxu0 0.0
    %9801 = vmatprep.subr.mxu0 0.0
    %9802 = vmatpush1.xpose.msra.mxu0 0.0
    %9803 = vmatprep.subr.mxu0 0.0
    %9804 = vmatpush1.xpose.msra.mxu0 0.0
    %9805 = vmatprep.subr.mxu0 0.0
    %9806 = vmatpush1.xpose.msra.mxu0 0.0
    %9807 = vmatprep.subr.mxu0 0.0
    %9808 = vmatpush1.xpose.msra.mxu0 0.0
    %9809 = vmatprep.subr.mxu0 0.0
    %9810 = vmatpush1.xpose.msra.mxu0 0.0
    %9811 = vmatprep.subr.mxu0 0.0
    %9812 = vmatpush1.xpose.msra.mxu0 0.0
    %9813 = vmatprep.subr.mxu0 0.0
    %9814 = vmatpush1.xpose.msra.mxu0 0.0
    %9815 = vmatprep.mubr.f32.mxu0 %v6253
    %9816 = vmatmul.mubr.f32.gmra.mrb[0].mxu0 %v6252
    %v9817 = vpop.f32.mrb[0].mxu0
    %v9818 = vadd.f32 %v9748, %v9817
    %v9819 = vpop.f32.mrb[0].mxu0
    %9820 = vdwg.mxu0
    %9821 = vmatprep.subr.mxu0 %v6239
    %9822 = vmatpush1.xpose.msra.mxu0 %v6238
    %9823 = vmatprep.subr.mxu0 0.0
    %9824 = vmatpush1.xpose.msra.mxu0 0.0
    %9825 = vmatprep.subr.mxu0 0.0
    %9826 = vmatpush1.xpose.msra.mxu0 0.0
    %9827 = vmatprep.subr.mxu0 0.0
    %9828 = vmatpush1.xpose.msra.mxu0 0.0
    %9829 = vmatprep.subr.mxu0 0.0
    %9830 = vmatpush1.xpose.msra.mxu0 0.0
    %9831 = vmatprep.subr.mxu0 0.0
    %9832 = vmatpush1.xpose.msra.mxu0 0.0
    %9833 = vmatprep.subr.mxu0 0.0
    %9834 = vmatpush1.xpose.msra.mxu0 0.0
    %9835 = vmatprep.subr.mxu0 0.0
    %9836 = vmatpush1.xpose.msra.mxu0 0.0
    %9837 = vmatprep.subr.mxu0 0.0
    %9838 = vmatpush1.xpose.msra.mxu0 0.0
    %9839 = vmatprep.subr.mxu0 0.0
    %9840 = vmatpush1.xpose.msra.mxu0 0.0
    %9841 = vmatprep.subr.mxu0 0.0
    %9842 = vmatpush1.xpose.msra.mxu0 0.0
    %9843 = vmatprep.subr.mxu0 0.0
    %9844 = vmatpush1.xpose.msra.mxu0 0.0
    %9845 = vmatprep.subr.mxu0 0.0
    %9846 = vmatpush1.xpose.msra.mxu0 0.0
    %9847 = vmatprep.subr.mxu0 0.0
    %9848 = vmatpush1.xpose.msra.mxu0 0.0
    %9849 = vmatprep.subr.mxu0 0.0
    %9850 = vmatpush1.xpose.msra.mxu0 0.0
    %9851 = vmatprep.subr.mxu0 0.0
    %9852 = vmatpush1.xpose.msra.mxu0 0.0
    %9853 = vmatprep.subr.mxu0 0.0
    %9854 = vmatpush1.xpose.msra.mxu0 0.0
    %9855 = vmatprep.subr.mxu0 0.0
    %9856 = vmatpush1.xpose.msra.mxu0 0.0
    %9857 = vmatprep.subr.mxu0 0.0
    %9858 = vmatpush1.xpose.msra.mxu0 0.0
    %9859 = vmatprep.subr.mxu0 0.0
    %9860 = vmatpush1.xpose.msra.mxu0 0.0
    %9861 = vmatprep.subr.mxu0 0.0
    %9862 = vmatpush1.xpose.msra.mxu0 0.0
    %9863 = vmatprep.subr.mxu0 0.0
    %9864 = vmatpush1.xpose.msra.mxu0 0.0
    %9865 = vmatprep.subr.mxu0 0.0
    %9866 = vmatpush1.xpose.msra.mxu0 0.0
    %9867 = vmatprep.subr.mxu0 0.0
    %9868 = vmatpush1.xpose.msra.mxu0 0.0
    %9869 = vmatprep.subr.mxu0 0.0
    %9870 = vmatpush1.xpose.msra.mxu0 0.0
    %9871 = vmatprep.subr.mxu0 0.0
    %9872 = vmatpush1.xpose.msra.mxu0 0.0
    %9873 = vmatprep.subr.mxu0 0.0
    %9874 = vmatpush1.xpose.msra.mxu0 0.0
    %9875 = vmatprep.subr.mxu0 0.0
    %9876 = vmatpush1.xpose.msra.mxu0 0.0
    %9877 = vmatprep.subr.mxu0 0.0
    %9878 = vmatpush1.xpose.msra.mxu0 0.0
    %9879 = vmatprep.subr.mxu0 0.0
    %9880 = vmatpush1.xpose.msra.mxu0 0.0
    %9881 = vmatprep.subr.mxu0 0.0
    %9882 = vmatpush1.xpose.msra.mxu0 0.0
    %9883 = vmatprep.subr.mxu0 0.0
    %9884 = vmatpush1.xpose.msra.mxu0 0.0
    %9885 = vmatprep.mubr.f32.mxu0 %v6255
    %9886 = vmatmul.mubr.f32.gmra.mrb[0].mxu0 %v6254
    %v9887 = vpop.f32.mrb[0].mxu0
    %v9888 = vadd.f32 %v9818, %v9887
    %v9889 = vpop.f32.mrb[0].mxu0
    %9890 = vdwg.mxu0
    %9891 = vmatprep.subr.mxu0 %v6241
    %9892 = vmatpush1.xpose.msra.mxu0 %v6240
    %9893 = vmatprep.subr.mxu0 0.0
    %9894 = vmatpush1.xpose.msra.mxu0 0.0
    %9895 = vmatprep.subr.mxu0 0.0
    %9896 = vmatpush1.xpose.msra.mxu0 0.0
    %9897 = vmatprep.subr.mxu0 0.0
    %9898 = vmatpush1.xpose.msra.mxu0 0.0
    %9899 = vmatprep.subr.mxu0 0.0
    %9900 = vmatpush1.xpose.msra.mxu0 0.0
    %9901 = vmatprep.subr.mxu0 0.0
    %9902 = vmatpush1.xpose.msra.mxu0 0.0
    %9903 = vmatprep.subr.mxu0 0.0
    %9904 = vmatpush1.xpose.msra.mxu0 0.0
    %9905 = vmatprep.subr.mxu0 0.0
    %9906 = vmatpush1.xpose.msra.mxu0 0.0
    %9907 = vmatprep.subr.mxu0 0.0
    %9908 = vmatpush1.xpose.msra.mxu0 0.0
    %9909 = vmatprep.subr.mxu0 0.0
    %9910 = vmatpush1.xpose.msra.mxu0 0.0
    %9911 = vmatprep.subr.mxu0 0.0
    %9912 = vmatpush1.xpose.msra.mxu0 0.0
    %9913 = vmatprep.subr.mxu0 0.0
    %9914 = vmatpush1.xpose.msra.mxu0 0.0
    %9915 = vmatprep.subr.mxu0 0.0
    %9916 = vmatpush1.xpose.msra.mxu0 0.0
    %9917 = vmatprep.subr.mxu0 0.0
    %9918 = vmatpush1.xpose.msra.mxu0 0.0
    %9919 = vmatprep.subr.mxu0 0.0
    %9920 = vmatpush1.xpose.msra.mxu0 0.0
    %9921 = vmatprep.subr.mxu0 0.0
    %9922 = vmatpush1.xpose.msra.mxu0 0.0
    %9923 = vmatprep.subr.mxu0 0.0
    %9924 = vmatpush1.xpose.msra.mxu0 0.0
    %9925 = vmatprep.subr.mxu0 0.0
    %9926 = vmatpush1.xpose.msra.mxu0 0.0
    %9927 = vmatprep.subr.mxu0 0.0
    %9928 = vmatpush1.xpose.msra.mxu0 0.0
    %9929 = vmatprep.subr.mxu0 0.0
    %9930 = vmatpush1.xpose.msra.mxu0 0.0
    %9931 = vmatprep.subr.mxu0 0.0
    %9932 = vmatpush1.xpose.msra.mxu0 0.0
    %9933 = vmatprep.subr.mxu0 0.0
    %9934 = vmatpush1.xpose.msra.mxu0 0.0
    %9935 = vmatprep.subr.mxu0 0.0
    %9936 = vmatpush1.xpose.msra.mxu0 0.0
    %9937 = vmatprep.subr.mxu0 0.0
    %9938 = vmatpush1.xpose.msra.mxu0 0.0
    %9939 = vmatprep.subr.mxu0 0.0
    %9940 = vmatpush1.xpose.msra.mxu0 0.0
    %9941 = vmatprep.subr.mxu0 0.0
    %9942 = vmatpush1.xpose.msra.mxu0 0.0
    %9943 = vmatprep.subr.mxu0 0.0
    %9944 = vmatpush1.xpose.msra.mxu0 0.0
    %9945 = vmatprep.subr.mxu0 0.0
    %9946 = vmatpush1.xpose.msra.mxu0 0.0
    %9947 = vmatprep.subr.mxu0 0.0
    %9948 = vmatpush1.xpose.msra.mxu0 0.0
    %9949 = vmatprep.subr.mxu0 0.0
    %9950 = vmatpush1.xpose.msra.mxu0 0.0
    %9951 = vmatprep.subr.mxu0 0.0
    %9952 = vmatpush1.xpose.msra.mxu0 0.0
    %9953 = vmatprep.subr.mxu0 0.0
    %9954 = vmatpush1.xpose.msra.mxu0 0.0
    %9955 = vmatprep.mubr.f32.mxu0 %v6257
    %9956 = vmatmul.mubr.f32.gmra.mrb[0].mxu0 %v6256
    %v9957 = vpop.f32.mrb[0].mxu0
    %v9958 = vadd.f32 %v9888, %v9957
    %v9959 = vpop.f32.mrb[0].mxu0
    %9960 = vdwg.mxu0
    %9961 = vmatprep.subr.mxu0 %v6243
    %9962 = vmatpush1.xpose.msra.mxu0 %v6242
    %9963 = vmatprep.subr.mxu0 0.0
    %9964 = vmatpush1.xpose.msra.mxu0 0.0
    %9965 = vmatprep.subr.mxu0 0.0
    %9966 = vmatpush1.xpose.msra.mxu0 0.0
    %9967 = vmatprep.subr.mxu0 0.0
    %9968 = vmatpush1.xpose.msra.mxu0 0.0
    %9969 = vmatprep.subr.mxu0 0.0
    %9970 = vmatpush1.xpose.msra.mxu0 0.0
    %9971 = vmatprep.subr.mxu0 0.0
    %9972 = vmatpush1.xpose.msra.mxu0 0.0
    %9973 = vmatprep.subr.mxu0 0.0
    %9974 = vmatpush1.xpose.msra.mxu0 0.0
    %9975 = vmatprep.subr.mxu0 0.0
    %9976 = vmatpush1.xpose.msra.mxu0 0.0
    %9977 = vmatprep.subr.mxu0 0.0
    %9978 = vmatpush1.xpose.msra.mxu0 0.0
    %9979 = vmatprep.subr.mxu0 0.0
    %9980 = vmatpush1.xpose.msra.mxu0 0.0
    %9981 = vmatprep.subr.mxu0 0.0
    %9982 = vmatpush1.xpose.msra.mxu0 0.0
    %9983 = vmatprep.subr.mxu0 0.0
    %9984 = vmatpush1.xpose.msra.mxu0 0.0
    %9985 = vmatprep.subr.mxu0 0.0
    %9986 = vmatpush1.xpose.msra.mxu0 0.0
    %9987 = vmatprep.subr.mxu0 0.0
    %9988 = vmatpush1.xpose.msra.mxu0 0.0
    %9989 = vmatprep.subr.mxu0 0.0
    %9990 = vmatpush1.xpose.msra.mxu0 0.0
    %9991 = vmatprep.subr.mxu0 0.0
    %9992 = vmatpush1.xpose.msra.mxu0 0.0
    %9993 = vmatprep.subr.mxu0 0.0
    %9994 = vmatpush1.xpose.msra.mxu0 0.0
    %9995 = vmatprep.subr.mxu0 0.0
    %9996 = vmatpush1.xpose.msra.mxu0 0.0
    %9997 = vmatprep.subr.mxu0 0.0
    %9998 = vmatpush1.xpose.msra.mxu0 0.0
    %9999 = vmatprep.subr.mxu0 0.0
    %10000 = vmatpush1.xpose.msra.mxu0 0.0
    %10001 = vmatprep.subr.mxu0 0.0
    %10002 = vmatpush1.xpose.msra.mxu0 0.0
    %10003 = vmatprep.subr.mxu0 0.0
    %10004 = vmatpush1.xpose.msra.mxu0 0.0
    %10005 = vmatprep.subr.mxu0 0.0
    %10006 = vmatpush1.xpose.msra.mxu0 0.0
    %10007 = vmatprep.subr.mxu0 0.0
    %10008 = vmatpush1.xpose.msra.mxu0 0.0
    %10009 = vmatprep.subr.mxu0 0.0
    %10010 = vmatpush1.xpose.msra.mxu0 0.0
    %10011 = vmatprep.subr.mxu0 0.0
    %10012 = vmatpush1.xpose.msra.mxu0 0.0
    %10013 = vmatprep.subr.mxu0 0.0
    %10014 = vmatpush1.xpose.msra.mxu0 0.0
    %10015 = vmatprep.subr.mxu0 0.0
    %10016 = vmatpush1.xpose.msra.mxu0 0.0
    %10017 = vmatprep.subr.mxu0 0.0
    %10018 = vmatpush1.xpose.msra.mxu0 0.0
    %10019 = vmatprep.subr.mxu0 0.0
    %10020 = vmatpush1.xpose.msra.mxu0 0.0
    %10021 = vmatprep.subr.mxu0 0.0
    %10022 = vmatpush1.xpose.msra.mxu0 0.0
    %10023 = vmatprep.subr.mxu0 0.0
    %10024 = vmatpush1.xpose.msra.mxu0 0.0
    %10025 = vmatprep.mubr.f32.mxu0 %v6259
    %10026 = vmatmul.mubr.f32.gmra.mrb[0].mxu0 %v6258
    %v10027 = vpop.f32.mrb[0].mxu0
    %v10028 = vadd.f32 %v9958, %v10027
    %v10029 = vpop.f32.mrb[0].mxu0
    %10030 = vdwg.mxu0
    %10031 = vmatprep.subr.mxu0 %v6245
    %10032 = vmatpush1.xpose.msra.mxu0 %v6244
    %10033 = vmatprep.subr.mxu0 0.0
    %10034 = vmatpush1.xpose.msra.mxu0 0.0
    %10035 = vmatprep.subr.mxu0 0.0
    %10036 = vmatpush1.xpose.msra.mxu0 0.0
    %10037 = vmatprep.subr.mxu0 0.0
    %10038 = vmatpush1.xpose.msra.mxu0 0.0
    %10039 = vmatprep.subr.mxu0 0.0
    %10040 = vmatpush1.xpose.msra.mxu0 0.0
    %10041 = vmatprep.subr.mxu0 0.0
    %10042 = vmatpush1.xpose.msra.mxu0 0.0
    %10043 = vmatprep.subr.mxu0 0.0
    %10044 = vmatpush1.xpose.msra.mxu0 0.0
    %10045 = vmatprep.subr.mxu0 0.0
    %10046 = vmatpush1.xpose.msra.mxu0 0.0
    %10047 = vmatprep.subr.mxu0 0.0
    %10048 = vmatpush1.xpose.msra.mxu0 0.0
    %10049 = vmatprep.subr.mxu0 0.0
    %10050 = vmatpush1.xpose.msra.mxu0 0.0
    %10051 = vmatprep.subr.mxu0 0.0
    %10052 = vmatpush1.xpose.msra.mxu0 0.0
    %10053 = vmatprep.subr.mxu0 0.0
    %10054 = vmatpush1.xpose.msra.mxu0 0.0
    %10055 = vmatprep.subr.mxu0 0.0
    %10056 = vmatpush1.xpose.msra.mxu0 0.0
    %10057 = vmatprep.subr.mxu0 0.0
    %10058 = vmatpush1.xpose.msra.mxu0 0.0
    %10059 = vmatprep.subr.mxu0 0.0
    %10060 = vmatpush1.xpose.msra.mxu0 0.0
    %10061 = vmatprep.subr.mxu0 0.0
    %10062 = vmatpush1.xpose.msra.mxu0 0.0
    %10063 = vmatprep.subr.mxu0 0.0
    %10064 = vmatpush1.xpose.msra.mxu0 0.0
    %10065 = vmatprep.subr.mxu0 0.0
    %10066 = vmatpush1.xpose.msra.mxu0 0.0
    %10067 = vmatprep.subr.mxu0 0.0
    %10068 = vmatpush1.xpose.msra.mxu0 0.0
    %10069 = vmatprep.subr.mxu0 0.0
    %10070 = vmatpush1.xpose.msra.mxu0 0.0
    %10071 = vmatprep.subr.mxu0 0.0
    %10072 = vmatpush1.xpose.msra.mxu0 0.0
    %10073 = vmatprep.subr.mxu0 0.0
    %10074 = vmatpush1.xpose.msra.mxu0 0.0
    %10075 = vmatprep.subr.mxu0 0.0
    %10076 = vmatpush1.xpose.msra.mxu0 0.0
    %10077 = vmatprep.subr.mxu0 0.0
    %10078 = vmatpush1.xpose.msra.mxu0 0.0
    %10079 = vmatprep.subr.mxu0 0.0
    %10080 = vmatpush1.xpose.msra.mxu0 0.0
    %10081 = vmatprep.subr.mxu0 0.0
    %10082 = vmatpush1.xpose.msra.mxu0 0.0
    %10083 = vmatprep.subr.mxu0 0.0
    %10084 = vmatpush1.xpose.msra.mxu0 0.0
    %10085 = vmatprep.subr.mxu0 0.0
    %10086 = vmatpush1.xpose.msra.mxu0 0.0
    %10087 = vmatprep.subr.mxu0 0.0
    %10088 = vmatpush1.xpose.msra.mxu0 0.0
    %10089 = vmatprep.subr.mxu0 0.0
    %10090 = vmatpush1.xpose.msra.mxu0 0.0
    %10091 = vmatprep.subr.mxu0 0.0
    %10092 = vmatpush1.xpose.msra.mxu0 0.0
    %10093 = vmatprep.subr.mxu0 0.0
    %10094 = vmatpush1.xpose.msra.mxu0 0.0
    %10095 = vmatprep.mubr.f32.mxu0 %v6261
    %10096 = vmatmul.mubr.f32.gmra.mrb[0].mxu0 %v6260
    %v10097 = vpop.f32.mrb[0].mxu0
    %v10098 = vadd.f32 %v10028, %v10097
    %v10099 = vpop.f32.mrb[0].mxu0
    %10100 = vdwg.mxu0
    %10101 = vmatprep.subr.mxu0 %v6247
    %10102 = vmatpush1.xpose.msra.mxu0 %v6246
    %10103 = vmatprep.subr.mxu0 0.0
    %10104 = vmatpush1.xpose.msra.mxu0 0.0
    %10105 = vmatprep.subr.mxu0 0.0
    %10106 = vmatpush1.xpose.msra.mxu0 0.0
    %10107 = vmatprep.subr.mxu0 0.0
    %10108 = vmatpush1.xpose.msra.mxu0 0.0
    %10109 = vmatprep.subr.mxu0 0.0
    %10110 = vmatpush1.xpose.msra.mxu0 0.0
    %10111 = vmatprep.subr.mxu0 0.0
    %10112 = vmatpush1.xpose.msra.mxu0 0.0
    %10113 = vmatprep.subr.mxu0 0.0
    %10114 = vmatpush1.xpose.msra.mxu0 0.0
    %10115 = vmatprep.subr.mxu0 0.0
    %10116 = vmatpush1.xpose.msra.mxu0 0.0
    %10117 = vmatprep.subr.mxu0 0.0
    %10118 = vmatpush1.xpose.msra.mxu0 0.0
    %10119 = vmatprep.subr.mxu0 0.0
    %10120 = vmatpush1.xpose.msra.mxu0 0.0
    %10121 = vmatprep.subr.mxu0 0.0
    %10122 = vmatpush1.xpose.msra.mxu0 0.0
    %10123 = vmatprep.subr.mxu0 0.0
    %10124 = vmatpush1.xpose.msra.mxu0 0.0
    %10125 = vmatprep.subr.mxu0 0.0
    %10126 = vmatpush1.xpose.msra.mxu0 0.0
    %10127 = vmatprep.subr.mxu0 0.0
    %10128 = vmatpush1.xpose.msra.mxu0 0.0
    %10129 = vmatprep.subr.mxu0 0.0
    %10130 = vmatpush1.xpose.msra.mxu0 0.0
    %10131 = vmatprep.subr.mxu0 0.0
    %10132 = vmatpush1.xpose.msra.mxu0 0.0
    %10133 = vmatprep.subr.mxu0 0.0
    %10134 = vmatpush1.xpose.msra.mxu0 0.0
    %10135 = vmatprep.subr.mxu0 0.0
    %10136 = vmatpush1.xpose.msra.mxu0 0.0
    %10137 = vmatprep.subr.mxu0 0.0
    %10138 = vmatpush1.xpose.msra.mxu0 0.0
    %10139 = vmatprep.subr.mxu0 0.0
    %10140 = vmatpush1.xpose.msra.mxu0 0.0
    %10141 = vmatprep.subr.mxu0 0.0
    %10142 = vmatpush1.xpose.msra.mxu0 0.0
    %10143 = vmatprep.subr.mxu0 0.0
    %10144 = vmatpush1.xpose.msra.mxu0 0.0
    %10145 = vmatprep.subr.mxu0 0.0
    %10146 = vmatpush1.xpose.msra.mxu0 0.0
    %10147 = vmatprep.subr.mxu0 0.0
    %10148 = vmatpush1.xpose.msra.mxu0 0.0
    %10149 = vmatprep.subr.mxu0 0.0
    %10150 = vmatpush1.xpose.msra.mxu0 0.0
    %10151 = vmatprep.subr.mxu0 0.0
    %10152 = vmatpush1.xpose.msra.mxu0 0.0
    %10153 = vmatprep.subr.mxu0 0.0
    %10154 = vmatpush1.xpose.msra.mxu0 0.0
    %10155 = vmatprep.subr.mxu0 0.0
    %10156 = vmatpush1.xpose.msra.mxu0 0.0
    %10157 = vmatprep.subr.mxu0 0.0
    %10158 = vmatpush1.xpose.msra.mxu0 0.0
    %10159 = vmatprep.subr.mxu0 0.0
    %10160 = vmatpush1.xpose.msra.mxu0 0.0
    %10161 = vmatprep.subr.mxu0 0.0
    %10162 = vmatpush1.xpose.msra.mxu0 0.0
    %10163 = vmatprep.subr.mxu0 0.0
    %10164 = vmatpush1.xpose.msra.mxu0 0.0
    %10165 = vmatprep.mubr.f32.mxu0 %v6263
    %10166 = vmatmul.mubr.f32.gmra.mrb[0].mxu0 %v6262
    %v10167 = vpop.f32.mrb[0].mxu0
    %v10168 = vadd.f32 %v10098, %v10167
    %v10169 = vpop.f32.mrb[0].mxu0
    %10170 = vdwg.mxu0
    %v10171 = vld [vmem:[%s4] sm:$0xff]
    %v10172 = vld [vmem:[%s5] sm:$0x1]
    %v10174 = vlaneseq
    %v10175 = vshrl.u32 %v10174, 7
    %v10176 = vsub.s32 0, %v10175
    %v10177 = vrot.slane %v10172, %v10176
    %vm10179 = vcmask 64512
    %v10181 = vsel %vm10179, %v10168, 0
    %10183 = vmatprep.subr.mxu0 0.0
    %10184 = vmatpush1.msra.mxu0 %v10171
    %10185 = vmatprep.subr.mxu0 0.0
    %10186 = vmatpush1.msra.mxu0 0.0
    %10187 = vmatprep.subr.mxu0 0.0
    %10188 = vmatpush1.msra.mxu0 0.0
    %10189 = vmatprep.subr.mxu0 0.0
    %10190 = vmatpush1.msra.mxu0 0.0
    %10191 = vmatprep.subr.mxu0 0.0
    %10192 = vmatpush1.msra.mxu0 0.0
    %10193 = vmatprep.subr.mxu0 0.0
    %10194 = vmatpush1.msra.mxu0 0.0
    %10195 = vmatprep.subr.mxu0 0.0
    %10196 = vmatpush1.msra.mxu0 0.0
    %10197 = vmatprep.subr.mxu0 0.0
    %10198 = vmatpush1.msra.mxu0 0.0
    %10199 = vmatprep.subr.mxu0 0.0
    %10200 = vmatpush1.msra.mxu0 0.0
    %10201 = vmatprep.subr.mxu0 0.0
    %10202 = vmatpush1.msra.mxu0 0.0
    %10203 = vmatprep.subr.mxu0 0.0
    %10204 = vmatpush1.msra.mxu0 0.0
    %10205 = vmatprep.subr.mxu0 0.0
    %10206 = vmatpush1.msra.mxu0 0.0
    %10207 = vmatprep.subr.mxu0 0.0
    %10208 = vmatpush1.msra.mxu0 0.0
    %10209 = vmatprep.subr.mxu0 0.0
    %10210 = vmatpush1.msra.mxu0 0.0
    %10211 = vmatprep.subr.mxu0 0.0
    %10212 = vmatpush1.msra.mxu0 0.0
    %10213 = vmatprep.subr.mxu0 0.0
    %10214 = vmatpush1.msra.mxu0 0.0
    %10215 = vmatprep.subr.mxu0 0.0
    %10216 = vmatpush1.msra.mxu0 0.0
    %10217 = vmatprep.subr.mxu0 0.0
    %10218 = vmatpush1.msra.mxu0 0.0
    %10219 = vmatprep.subr.mxu0 0.0
    %10220 = vmatpush1.msra.mxu0 0.0
    %10221 = vmatprep.subr.mxu0 0.0
    %10222 = vmatpush1.msra.mxu0 0.0
    %10223 = vmatprep.subr.mxu0 0.0
    %10224 = vmatpush1.msra.mxu0 0.0
    %10225 = vmatprep.subr.mxu0 0.0
    %10226 = vmatpush1.msra.mxu0 0.0
    %10227 = vmatprep.subr.mxu0 0.0
    %10228 = vmatpush1.msra.mxu0 0.0
    %10229 = vmatprep.subr.mxu0 0.0
    %10230 = vmatpush1.msra.mxu0 0.0
    %10231 = vmatprep.subr.mxu0 0.0
    %10232 = vmatpush1.msra.mxu0 0.0
    %10233 = vmatprep.subr.mxu0 0.0
    %10234 = vmatpush1.msra.mxu0 0.0
    %10235 = vmatprep.subr.mxu0 0.0
    %10236 = vmatpush1.msra.mxu0 0.0
    %10237 = vmatprep.subr.mxu0 0.0
    %10238 = vmatpush1.msra.mxu0 0.0
    %10239 = vmatprep.subr.mxu0 0.0
    %10240 = vmatpush1.msra.mxu0 0.0
    %10241 = vmatprep.subr.mxu0 0.0
    %10242 = vmatpush1.msra.mxu0 0.0
    %10243 = vmatprep.subr.mxu0 0.0
    %10244 = vmatpush1.msra.mxu0 0.0
    %10245 = vmatprep.subr.mxu0 0.0
    %10246 = vmatpush1.msra.mxu0 0.0
    %10247 = vmatprep.mubr.f32.mxu0 0.0
    %10248 = vmatmul.mubr.f32.gmra.mrb[0].mxu0 %v10181
    %v10249 = vpop.f32.mrb[0].mxu0
    %v10250 = vadd.f32 %v10177, %v10249
    %v10251 = vpop.f32.mrb[0].mxu0
    %10252 = vdwg.mxu0
    %10253 = vst [vmem:[#allocation5] sm:$0xff] %v10250
    // Predicated region
    $region30: #{tpu_custom_call.1} parent=1 // pred_check
      _
    $region31: #{tpu_custom_call.1} parent=1 // pred_check_branch
      %10255 = sbr.rel (0) target = $region33
    $region32: #{tpu_custom_call.1} parent=1 // pred_region
      %s10257 = ssub.s32 128, 128
      %10258 = vsyncadd [#allocation4], %s10257
      %s10260 = sshll.u32 [#allocation5], 4
      %s10261 = int_to_ptr.vmem [resolvable:$true] %s10260
      %10263 = dma.vmem_to_hbm [thread:$0]  %s10261, 128, %s6, [#allocation4]
    $region33: #{tpu_custom_call.1} parent=1 // pred_fallthru
      _
    // Predicated region
    $region34: #{tpu_custom_call.1} parent=1 // pred_check
      _
    $region35: #{tpu_custom_call.1} parent=1 // pred_check_branch
      %10265 = sbr.rel (0) target = $region37
    $region36: #{tpu_custom_call.1} parent=1 // pred_region
      %10266 = dma.done [#allocation4], 128
    $region37: #{tpu_custom_call.1} parent=1 // pred_fallthru
      _
    %10267 = vsyncpa [#allocation3], 1
    %10268 = vsyncpa [#allocation4], 1

</llo_original>
